<compile_context>
chip_gen: v6e
topology: v6e:2x2x1
jax: 0.10.0
libtpu: 0.0.40
codegen_flags: <defaults>
</compile_context>

<pallas_src>
import functools

import jax
import jax.numpy as jnp
from jax.experimental import pallas as pl
from jax.experimental.pallas import tpu as pltpu

NUM_FILTERS = 4
LATENT_DIM = 16


# ----------------------------------------------------------------------------
# Pallas kernel: fused (channel-first) GEMM + shift + activation
#   out(C, tm) = act( W(C, K) @ X(K, tm) + shift(C, 1) )
# ----------------------------------------------------------------------------
def _gemm_act_kernel(x_ref, w_ref, shift_ref, o_ref, *, act, slope):
    acc = jnp.dot(w_ref[...], x_ref[...], preferred_element_type=jnp.float32)
    y = acc + shift_ref[...]                      # lane-broadcast of (C, 1)
    if act == "leaky_relu":
        y = jnp.where(y >= 0.0, y, slope * y)
    elif act == "sigmoid":
        y = 1.0 / (1.0 + jnp.exp(-y))
    o_ref[...] = y.astype(o_ref.dtype)


def gemm_act(x, w, shift, *, act="none", slope=0.01, out_dtype=jnp.bfloat16):
    """act(w @ x + shift) with lane-dense output. x:(K,M) w:(C,K) shift:(C,)."""
    K, M = x.shape
    C, K2 = w.shape
    assert K == K2, (K, K2)
    # <=2 grid steps: both v7x TensorCores get a tile, per-step overhead stays
    # negligible, and the weight block (constant index_map) remains resident.
    nsteps = 2 if (M % 256 == 0) else 1
    tm = M // nsteps
    shift2 = shift.astype(jnp.float32).reshape(C, 1)
    kernel = functools.partial(_gemm_act_kernel, act=act, slope=slope)
    return pl.pallas_call(
        kernel,
        out_shape=jax.ShapeDtypeStruct((C, M), out_dtype),
        grid_spec=pltpu.PrefetchScalarGridSpec(
            num_scalar_prefetch=0,
            grid=(nsteps,),
            in_specs=[
                pl.BlockSpec((K, tm), lambda i: (0, i)),   # patches, lane-dense
                pl.BlockSpec((C, K), lambda i: (0, 0)),    # weights (resident)
                pl.BlockSpec((C, 1), lambda i: (0, 0)),    # per-channel shift
            ],
            out_specs=pl.BlockSpec((C, tm), lambda i: (0, i)),
        ),
        compiler_params=pltpu.CompilerParams(
            dimension_semantics=("parallel",)),
    )(x, w, shift2)


# ----------------------------------------------------------------------------
# Pallas kernel: fused fc_mean + fc_var + reparametrize + df_pre + LeakyReLU
# ----------------------------------------------------------------------------
def _latent_kernel(feat_ref, wmu_ref, bmu_ref, wvar_ref, bvar_ref, eps_ref,
                   wpre_ref, bpre_ref, mu_ref, var_ref, h_ref, *, slope):
    feat = feat_ref[...].astype(jnp.float32)
    mu = jnp.dot(feat, wmu_ref[...], preferred_element_type=jnp.float32) + bmu_ref[...]
    var = jnp.dot(feat, wvar_ref[...], preferred_element_type=jnp.float32) + bvar_ref[...]
    latent = eps_ref[...] * jnp.exp(0.5 * var) + mu          # reparametrize
    h = jnp.dot(latent, wpre_ref[...], preferred_element_type=jnp.float32) + bpre_ref[...]
    h = jnp.where(h >= 0.0, h, slope * h)                     # LeakyReLU(0.01)
    mu_ref[...] = mu
    var_ref[...] = var
    h_ref[...] = h.astype(h_ref.dtype)


def latent_block(feat, eps, params):
    n = feat.shape[0]
    latent = eps.shape[1]
    pre_dim = params["df_pre"]["w"].shape[1]
    bmu = params["fc_mean"]["b"].reshape(1, latent)
    bvar = params["fc_var"]["b"].reshape(1, latent)
    bpre = params["df_pre"]["b"].reshape(1, pre_dim)
    kernel = functools.partial(_latent_kernel, slope=0.01)
    return pl.pallas_call(
        kernel,
        out_shape=(jax.ShapeDtypeStruct((n, latent), jnp.float32),
                   jax.ShapeDtypeStruct((n, latent), jnp.float32),
                   jax.ShapeDtypeStruct((n, pre_dim), jnp.bfloat16)),
    )(feat, params["fc_mean"]["w"], bmu, params["fc_var"]["w"], bvar,
      eps, params["df_pre"]["w"], bpre)


# ----------------------------------------------------------------------------
# Patch construction (pure XLA data movement, channel-first / lane-dense)
# ----------------------------------------------------------------------------
def conv_patches_cf(x, kh, kw, stride, pad):
    """x:(C,N,H,W) -> patches (kh*kw*C, N*Hout*Wout), row order = tap-major."""
    c, n, h, w = x.shape
    hout = (h + 2 * pad - kh) // stride + 1
    wout = (w + 2 * pad - kw) // stride + 1
    xp = jnp.pad(x, ((0, 0), (0, 0), (pad, pad), (pad, pad)))
    taps = []
    for ky in range(kh):
        for kx in range(kw):
            taps.append(xp[:, :, ky:ky + stride * (hout - 1) + 1:stride,
                              kx:kx + stride * (wout - 1) + 1:stride])
    p = jnp.stack(taps, axis=0)                       # (kh*kw, C, N, Hout, Wout)
    return p.reshape(kh * kw * c, n * hout * wout), (n, hout, wout)


def convt_phase_patches(x):
    """Sub-pixel ConvT(k4,s2,p1): 9 unit-stride taps over the (pad=1) input.

    x:(C,N,H,W) -> patches (9*C, N*H*W); the 4 output phases share this matrix.
    """
    c, n, h, w = x.shape
    xp = jnp.pad(x, ((0, 0), (0, 0), (1, 1), (1, 1)))
    taps = []
    for d in (-1, 0, 1):
        for e in (-1, 0, 1):
            taps.append(xp[:, :, 1 + d:1 + d + h, 1 + e:1 + e + w])
    p = jnp.stack(taps, axis=0)                       # (9, C, N, H, W)
    return p.reshape(9 * c, n * h * w), (n, h, w)


def convt_phase_weight(w_pt):
    """PyTorch ConvTranspose2d weight (C_in,C_out,4,4) -> (4*C_out, 9*C_in).

    Rows are the 4 output phases (ph_h, ph_w), columns are the 9 (d,e) taps used
    by `convt_phase_patches` (tap-major, C_in minor).  stride=2, padding=1.
    """
    cin, cout = w_pt.shape[0], w_pt.shape[1]
    k_of = ({-1: 3, 0: 1, 1: None},    # ky for even output rows
            {-1: None, 0: 2, 1: 0})    # ky for odd output rows
    zeros = jnp.zeros((cout, cin), jnp.float32)
    rows = []
    for ph_h in (0, 1):
        for ph_w in (0, 1):
            taps = []
            for d in (-1, 0, 1):
                for e in (-1, 0, 1):
                    ky, kx = k_of[ph_h][d], k_of[ph_w][e]
                    taps.append(zeros if (ky is None or kx is None)
                                else w_pt[:, :, ky, kx].T)       # (cout, cin)
            rows.append(jnp.stack(taps, axis=1).reshape(cout, 9 * cin))
    return jnp.concatenate(rows, axis=0)              # (4*cout, 9*cin)


def interleave_phases(y, n, h, w):
    """(4*C, N*H*W) phase-stacked GEMM output -> (C, N, 2H, 2W)."""
    c = y.shape[0] // 4
    y = y.reshape(2, 2, c, n, h, w)                   # (ph_h, ph_w, C, N, H, W)
    y = y.transpose(2, 3, 4, 0, 5, 1)                 # (C, N, H, ph_h, W, ph_w)
    return y.reshape(c, n, 2 * h, 2 * w)


# ----------------------------------------------------------------------------
# Deterministic parameter construction (bias + inference-BN folded into W/shift)
# ----------------------------------------------------------------------------
def init_params(key, nf, latent):
    keys = iter(jax.random.split(key, 64))

    def bn_fold(cout, b, use_bn, gk, bek, mk, vk):
        if use_bn:
            gamma = 1.0 + 0.1 * jax.random.normal(gk, (cout,), jnp.float32)
            beta = 0.1 * jax.random.normal(bek, (cout,), jnp.float32)
            rmean = 0.1 * jax.random.normal(mk, (cout,), jnp.float32)
            rvar = 1.0 + 0.1 * jnp.abs(jax.random.normal(vk, (cout,), jnp.float32))
            scale = gamma / jnp.sqrt(rvar + 1e-5)
            shift = beta + (b - rmean) * scale
        else:
            scale = jnp.ones((cout,), jnp.float32)
            shift = b
        return scale, shift

    def enc_block(cin, cout, k=3):
        wk, bk, gk, bek, mk, vk = (next(keys) for _ in range(6))
        w_pt = 0.05 * jax.random.normal(wk, (cout, cin, k, k), jnp.float32)
        b = 0.05 * jax.random.normal(bk, (cout,), jnp.float32)
        scale, shift = bn_fold(cout, b, True, gk, bek, mk, vk)
        w = w_pt.transpose(0, 2, 3, 1).reshape(cout, k * k * cin)   # (C_out, 9*C_in)
        w = (w * scale[:, None]).astype(jnp.bfloat16)               # fold BN scale
        return {"w": w, "shift": shift}

    def dec_block(cin, cout, bn=True):
        wk, bk, gk, bek, mk, vk = (next(keys) for _ in range(6))
        w_pt = 0.05 * jax.random.normal(wk, (cin, cout, 4, 4), jnp.float32)
        b = 0.05 * jax.random.normal(bk, (cout,), jnp.float32)
        scale, shift = bn_fold(cout, b, bn, gk, bek, mk, vk)
        w_ph = convt_phase_weight(w_pt)                              # (4*C_out, 9*C_in)
        w_ph = (w_ph * jnp.tile(scale, 4)[:, None]).astype(jnp.bfloat16)
        return {"w": w_ph, "shift": jnp.tile(shift, 4)}

    def linear(cin, cout):
        wk, bk = next(keys), next(keys)
        w = 0.05 * jax.random.normal(wk, (cin, cout), jnp.float32)
        b = 0.05 * jax.random.normal(bk, (cout,), jnp.float32)
        return {"w": w, "b": b}

    return {
        "ec1": enc_block(3, nf),
        "ec2": enc_block(nf, nf * 2),
        "ec3": enc_block(nf * 2, nf * 4),
        "ec4": enc_block(nf * 4, nf * 8),
        "fc_mean": linear(nf * 8 * 8 * 8, latent),
        "fc_var": linear(nf * 8 * 8 * 8, latent),
        "df_pre": linear(latent, nf * 8 * 8 * 8),
        "dc1": dec_block(nf * 8, nf * 4),
        "dc2": dec_block(nf * 4, nf * 2),
        "dc3": dec_block(nf * 2, nf),
        "dc4": dec_block(nf, 3, bn=False),
    }


# ----------------------------------------------------------------------------
# Forward pass (mirrors Model.forward)
# ----------------------------------------------------------------------------
def model_forward(params, x_nchw, eps):
    nf = NUM_FILTERS
    n = x_nchw.shape[0]
    # NCHW -> channel-first (C, N, H, W), bf16 streaming
    x = jnp.transpose(x_nchw, (1, 0, 2, 3)).astype(jnp.bfloat16)

    # --- encoder: 4x (Conv(k3,s2,p1) + BN + LeakyReLU(0.01) [+ Dropout=id]) ---
    for name in ("ec1", "ec2", "ec3", "ec4"):
        p = params[name]
        patches, (n_, hp, wp) = conv_patches_cf(x, 3, 3, 2, 1)
        y = gemm_act(patches, p["w"], p["shift"], act="leaky_relu", slope=0.01)
        x = y.reshape(-1, n_, hp, wp)

    # flatten in PyTorch NCHW order: view(-1, nf*8 * 8 * 8)
    c_enc, _, h8, w8 = x.shape
    feat = x.transpose(1, 0, 2, 3).reshape(n, c_enc * h8 * w8)

    # --- fc_mean + fc_var + reparametrize + df_pre + LeakyReLU (one kernel) ---
    mu, var, h = latent_block(feat, eps, params)

    # view(-1, nf*8, 8, 8) then to channel-first
    x = h.reshape(n, nf * 8, 8, 8).transpose(1, 0, 2, 3)

    # --- decoder: 3x (ConvT(k4,s2,p1) + BN + LeakyReLU) then ConvT + Sigmoid ---
    for i, name in enumerate(("dc1", "dc2", "dc3", "dc4")):
        p = params[name]
        patches, (n_, hh, ww) = convt_phase_patches(x)
        last = (i == 3)
        y = gemm_act(patches, p["w"], p["shift"],
                     act="sigmoid" if last else "leaky_relu", slope=0.01,
                     out_dtype=jnp.float32 if last else jnp.bfloat16)
        x = interleave_phases(y, n_, hh, ww)

    x_recon = jnp.transpose(x, (1, 0, 2, 3))   # back to NCHW, f32
    return x_recon, mu, var


if __name__ == "__main__":
    batch = 2
    params = init_params(jax.random.PRNGKey(0), NUM_FILTERS, LATENT_DIM)

    kx, keps = jax.random.split(jax.random.PRNGKey(0))
    # fc_mean expects nf*8 * 8 * 8 features => 4 stride-2 convs => input is 128x128
    x = jax.random.normal(kx, (batch, 3, 128, 128), jnp.float32)
    eps = jax.random.normal(keps, (batch, LATENT_DIM), jnp.float32)

    fwd = jax.jit(model_forward)
    x_recon, mu, var = fwd(params, x, eps)
    jax.block_until_ready((x_recon, mu, var))

    assert x_recon.shape == (batch, 3, 128, 128)
    assert mu.shape == (batch, LATENT_DIM)
    assert var.shape == (batch, LATENT_DIM)
    assert bool(jnp.all(jnp.isfinite(x_recon)))
    assert bool(jnp.all(jnp.isfinite(mu))) and bool(jnp.all(jnp.isfinite(var)))
    assert bool(jnp.all((x_recon >= 0.0) & (x_recon <= 1.0)))  # sigmoid output
    print("KERNEL_OK")
</pallas_src>

<mosaic_0001>
module attributes {stable_mosaic.version = 11 : i64} {
  func.func @_gemm_act_kernel(%arg0: i32, %arg1: memref<27x4096xbf16, #tpu.memory_space<vmem>>, %arg2: memref<4x27xbf16, #tpu.memory_space<vmem>>, %arg3: memref<4x1xf32, #tpu.memory_space<vmem>>, %arg4: memref<4x4096xbf16, #tpu.memory_space<vmem>>) attributes {dimension_semantics = [#tpu.dimension_semantics<parallel>], iteration_bounds = array<i64: 2>, scalar_prefetch = 0 : i64, scratch_operands = 0 : i64, tpu.core_type = #tpu.core_type<tc>, window_params = [{transform_indices = @transform_0, window_bounds = array<i64: 27, 4096>}, {pipeline_mode = #tpu.pipeline_mode<synchronous>, transform_indices = @transform_1, window_bounds = array<i64: 4, 27>}, {pipeline_mode = #tpu.pipeline_mode<synchronous>, transform_indices = @transform_2, window_bounds = array<i64: 4, 1>}, {transform_indices = @transform_3, window_bounds = array<i64: 4, 4096>}]} {
    %c0 = arith.constant 0 : index
    %c0_0 = arith.constant 0 : index
    %0 = vector.load %arg2[%c0, %c0_0] : memref<4x27xbf16, #tpu.memory_space<vmem>>, vector<4x27xbf16>
    %c0_1 = arith.constant 0 : index
    %c0_2 = arith.constant 0 : index
    %1 = vector.load %arg1[%c0_1, %c0_2] : memref<27x4096xbf16, #tpu.memory_space<vmem>>, vector<27x4096xbf16>
    %cst = arith.constant dense<0.000000e+00> : vector<4x4096xf32>
    %2 = tpu.matmul %0, %1, %cst {dimension_numbers = #tpu.dot_dimension_numbers<[1], [0], [0], [1], [0, 0, 1, 1], [], []>} : vector<4x27xbf16>, vector<27x4096xbf16>, vector<4x4096xf32> -> vector<4x4096xf32>
    %c0_3 = arith.constant 0 : index
    %c0_4 = arith.constant 0 : index
    %3 = vector.load %arg3[%c0_3, %c0_4] : memref<4x1xf32, #tpu.memory_space<vmem>>, vector<4x1xf32>
    %4 = vector.broadcast %3 : vector<4x1xf32> to vector<4x4096xf32>
    %5 = arith.addf %2, %4 : vector<4x4096xf32>
    %cst_5 = arith.constant 0.000000e+00 : f32
    %6 = vector.broadcast %cst_5 : f32 to vector<4x4096xf32>
    %7 = arith.cmpf oge, %5, %6 : vector<4x4096xf32>
    %cst_6 = arith.constant 0.00999999977 : f32
    %8 = vector.broadcast %cst_6 : f32 to vector<4x4096xf32>
    %9 = arith.mulf %8, %5 : vector<4x4096xf32>
    %10 = arith.select %7, %5, %9 : vector<4x4096xi1>, vector<4x4096xf32>
    %11 = arith.truncf %10 : vector<4x4096xf32> to vector<4x4096xbf16>
    %c0_7 = arith.constant 0 : index
    %c0_8 = arith.constant 0 : index
    %12 = vector.load %arg4[%c0_7, %c0_8] : memref<4x4096xbf16, #tpu.memory_space<vmem>>, vector<4x4096xbf16>
    tpu.vector_store %arg4[%c0_7, %c0_8], %11 {strides = array<i32>} : memref<4x4096xbf16, #tpu.memory_space<vmem>>, vector<4x4096xbf16>,
    return
  }
  func.func @transform_0(%arg0: i32) -> (i32, i32) {
    %c0_i32 = arith.constant 0 : i32
    %c0_i32_0 = arith.constant 0 : i32
    return %c0_i32, %arg0 : i32, i32
  }
  func.func @transform_1(%arg0: i32) -> (i32, i32) {
    %c0_i32 = arith.constant 0 : i32
    %c0_i32_0 = arith.constant 0 : i32
    %c0_i32_1 = arith.constant 0 : i32
    return %c0_i32, %c0_i32_0 : i32, i32
  }
  func.func @transform_2(%arg0: i32) -> (i32, i32) {
    %c0_i32 = arith.constant 0 : i32
    %c0_i32_0 = arith.constant 0 : i32
    %c0_i32_1 = arith.constant 0 : i32
    return %c0_i32, %c0_i32_0 : i32, i32
  }
  func.func @transform_3(%arg0: i32) -> (i32, i32) {
    %c0_i32 = arith.constant 0 : i32
    %c0_i32_0 = arith.constant 0 : i32
    return %c0_i32, %arg0 : i32, i32
  }
}

module attributes {stable_mosaic.version = 11 : i64} {
  func.func @_gemm_act_kernel(%arg0: i32, %arg1: memref<36x1024xbf16, #tpu.memory_space<vmem>>, %arg2: memref<8x36xbf16, #tpu.memory_space<vmem>>, %arg3: memref<8x1xf32, #tpu.memory_space<vmem>>, %arg4: memref<8x1024xbf16, #tpu.memory_space<vmem>>) attributes {dimension_semantics = [#tpu.dimension_semantics<parallel>], iteration_bounds = array<i64: 2>, scalar_prefetch = 0 : i64, scratch_operands = 0 : i64, tpu.core_type = #tpu.core_type<tc>, window_params = [{transform_indices = @transform_0, window_bounds = array<i64: 36, 1024>}, {pipeline_mode = #tpu.pipeline_mode<synchronous>, transform_indices = @transform_1, window_bounds = array<i64: 8, 36>}, {pipeline_mode = #tpu.pipeline_mode<synchronous>, transform_indices = @transform_2, window_bounds = array<i64: 8, 1>}, {transform_indices = @transform_3, window_bounds = array<i64: 8, 1024>}]} {
    %c0 = arith.constant 0 : index
    %c0_0 = arith.constant 0 : index
    %0 = vector.load %arg2[%c0, %c0_0] : memref<8x36xbf16, #tpu.memory_space<vmem>>, vector<8x36xbf16>
    %c0_1 = arith.constant 0 : index
    %c0_2 = arith.constant 0 : index
    %1 = vector.load %arg1[%c0_1, %c0_2] : memref<36x1024xbf16, #tpu.memory_space<vmem>>, vector<36x1024xbf16>
    %cst = arith.constant dense<0.000000e+00> : vector<8x1024xf32>
    %2 = tpu.matmul %0, %1, %cst {dimension_numbers = #tpu.dot_dimension_numbers<[1], [0], [0], [1], [0, 0, 1, 1], [], []>} : vector<8x36xbf16>, vector<36x1024xbf16>, vector<8x1024xf32> -> vector<8x1024xf32>
    %c0_3 = arith.constant 0 : index
    %c0_4 = arith.constant 0 : index
    %3 = vector.load %arg3[%c0_3, %c0_4] : memref<8x1xf32, #tpu.memory_space<vmem>>, vector<8x1xf32>
    %4 = vector.broadcast %3 : vector<8x1xf32> to vector<8x1024xf32>
    %5 = arith.addf %2, %4 : vector<8x1024xf32>
    %cst_5 = arith.constant 0.000000e+00 : f32
    %6 = vector.broadcast %cst_5 : f32 to vector<8x1024xf32>
    %7 = arith.cmpf oge, %5, %6 : vector<8x1024xf32>
    %cst_6 = arith.constant 0.00999999977 : f32
    %8 = vector.broadcast %cst_6 : f32 to vector<8x1024xf32>
    %9 = arith.mulf %8, %5 : vector<8x1024xf32>
    %10 = arith.select %7, %5, %9 : vector<8x1024xi1>, vector<8x1024xf32>
    %11 = arith.truncf %10 : vector<8x1024xf32> to vector<8x1024xbf16>
    %c0_7 = arith.constant 0 : index
    %c0_8 = arith.constant 0 : index
    %12 = vector.load %arg4[%c0_7, %c0_8] : memref<8x1024xbf16, #tpu.memory_space<vmem>>, vector<8x1024xbf16>
    tpu.vector_store %arg4[%c0_7, %c0_8], %11 {strides = array<i32>} : memref<8x1024xbf16, #tpu.memory_space<vmem>>, vector<8x1024xbf16>,
    return
  }
  func.func @transform_0(%arg0: i32) -> (i32, i32) {
    %c0_i32 = arith.constant 0 : i32
    %c0_i32_0 = arith.constant 0 : i32
    return %c0_i32, %arg0 : i32, i32
  }
  func.func @transform_1(%arg0: i32) -> (i32, i32) {
    %c0_i32 = arith.constant 0 : i32
    %c0_i32_0 = arith.constant 0 : i32
    %c0_i32_1 = arith.constant 0 : i32
    return %c0_i32, %c0_i32_0 : i32, i32
  }
  func.func @transform_2(%arg0: i32) -> (i32, i32) {
    %c0_i32 = arith.constant 0 : i32
    %c0_i32_0 = arith.constant 0 : i32
    %c0_i32_1 = arith.constant 0 : i32
    return %c0_i32, %c0_i32_0 : i32, i32
  }
  func.func @transform_3(%arg0: i32) -> (i32, i32) {
    %c0_i32 = arith.constant 0 : i32
    %c0_i32_0 = arith.constant 0 : i32
    return %c0_i32, %arg0 : i32, i32
  }
}

module attributes {stable_mosaic.version = 11 : i64} {
  func.func @_gemm_act_kernel(%arg0: i32, %arg1: memref<72x256xbf16, #tpu.memory_space<vmem>>, %arg2: memref<16x72xbf16, #tpu.memory_space<vmem>>, %arg3: memref<16x1xf32, #tpu.memory_space<vmem>>, %arg4: memref<16x256xbf16, #tpu.memory_space<vmem>>) attributes {dimension_semantics = [#tpu.dimension_semantics<parallel>], iteration_bounds = array<i64: 2>, scalar_prefetch = 0 : i64, scratch_operands = 0 : i64, tpu.core_type = #tpu.core_type<tc>, window_params = [{transform_indices = @transform_0, window_bounds = array<i64: 72, 256>}, {pipeline_mode = #tpu.pipeline_mode<synchronous>, transform_indices = @transform_1, window_bounds = array<i64: 16, 72>}, {pipeline_mode = #tpu.pipeline_mode<synchronous>, transform_indices = @transform_2, window_bounds = array<i64: 16, 1>}, {transform_indices = @transform_3, window_bounds = array<i64: 16, 256>}]} {
    %c0 = arith.constant 0 : index
    %c0_0 = arith.constant 0 : index
    %0 = vector.load %arg2[%c0, %c0_0] : memref<16x72xbf16, #tpu.memory_space<vmem>>, vector<16x72xbf16>
    %c0_1 = arith.constant 0 : index
    %c0_2 = arith.constant 0 : index
    %1 = vector.load %arg1[%c0_1, %c0_2] : memref<72x256xbf16, #tpu.memory_space<vmem>>, vector<72x256xbf16>
    %cst = arith.constant dense<0.000000e+00> : vector<16x256xf32>
    %2 = tpu.matmul %0, %1, %cst {dimension_numbers = #tpu.dot_dimension_numbers<[1], [0], [0], [1], [0, 0, 1, 1], [], []>} : vector<16x72xbf16>, vector<72x256xbf16>, vector<16x256xf32> -> vector<16x256xf32>
    %c0_3 = arith.constant 0 : index
    %c0_4 = arith.constant 0 : index
    %3 = vector.load %arg3[%c0_3, %c0_4] : memref<16x1xf32, #tpu.memory_space<vmem>>, vector<16x1xf32>
    %4 = vector.broadcast %3 : vector<16x1xf32> to vector<16x256xf32>
    %5 = arith.addf %2, %4 : vector<16x256xf32>
    %cst_5 = arith.constant 0.000000e+00 : f32
    %6 = vector.broadcast %cst_5 : f32 to vector<16x256xf32>
    %7 = arith.cmpf oge, %5, %6 : vector<16x256xf32>
    %cst_6 = arith.constant 0.00999999977 : f32
    %8 = vector.broadcast %cst_6 : f32 to vector<16x256xf32>
    %9 = arith.mulf %8, %5 : vector<16x256xf32>
    %10 = arith.select %7, %5, %9 : vector<16x256xi1>, vector<16x256xf32>
    %11 = arith.truncf %10 : vector<16x256xf32> to vector<16x256xbf16>
    %c0_7 = arith.constant 0 : index
    %c0_8 = arith.constant 0 : index
    %12 = vector.load %arg4[%c0_7, %c0_8] : memref<16x256xbf16, #tpu.memory_space<vmem>>, vector<16x256xbf16>
    tpu.vector_store %arg4[%c0_7, %c0_8], %11 {strides = array<i32>} : memref<16x256xbf16, #tpu.memory_space<vmem>>, vector<16x256xbf16>,
    return
  }
  func.func @transform_0(%arg0: i32) -> (i32, i32) {
    %c0_i32 = arith.constant 0 : i32
    %c0_i32_0 = arith.constant 0 : i32
    return %c0_i32, %arg0 : i32, i32
  }
  func.func @transform_1(%arg0: i32) -> (i32, i32) {
    %c0_i32 = arith.constant 0 : i32
    %c0_i32_0 = arith.constant 0 : i32
    %c0_i32_1 = arith.constant 0 : i32
    return %c0_i32, %c0_i32_0 : i32, i32
  }
  func.func @transform_2(%arg0: i32) -> (i32, i32) {
    %c0_i32 = arith.constant 0 : i32
    %c0_i32_0 = arith.constant 0 : i32
    %c0_i32_1 = arith.constant 0 : i32
    return %c0_i32, %c0_i32_0 : i32, i32
  }
  func.func @transform_3(%arg0: i32) -> (i32, i32) {
    %c0_i32 = arith.constant 0 : i32
    %c0_i32_0 = arith.constant 0 : i32
    return %c0_i32, %arg0 : i32, i32
  }
}

module attributes {stable_mosaic.version = 11 : i64} {
  func.func @_gemm_act_kernel(%arg0: i32, %arg1: memref<144x128xbf16, #tpu.memory_space<vmem>>, %arg2: memref<32x144xbf16, #tpu.memory_space<vmem>>, %arg3: memref<32x1xf32, #tpu.memory_space<vmem>>, %arg4: memref<32x128xbf16, #tpu.memory_space<vmem>>) attributes {dimension_semantics = [#tpu.dimension_semantics<parallel>], iteration_bounds = array<i64: 1>, scalar_prefetch = 0 : i64, scratch_operands = 0 : i64, tpu.core_type = #tpu.core_type<tc>, window_params = [{transform_indices = @transform_0, window_bounds = array<i64: 144, 128>}, {pipeline_mode = #tpu.pipeline_mode<synchronous>, transform_indices = @transform_1, window_bounds = array<i64: 32, 144>}, {pipeline_mode = #tpu.pipeline_mode<synchronous>, transform_indices = @transform_2, window_bounds = array<i64: 32, 1>}, {transform_indices = @transform_3, window_bounds = array<i64: 32, 128>}]} {
    %c0 = arith.constant 0 : index
    %c0_0 = arith.constant 0 : index
    %0 = vector.load %arg2[%c0, %c0_0] : memref<32x144xbf16, #tpu.memory_space<vmem>>, vector<32x144xbf16>
    %c0_1 = arith.constant 0 : index
    %c0_2 = arith.constant 0 : index
    %1 = vector.load %arg1[%c0_1, %c0_2] : memref<144x128xbf16, #tpu.memory_space<vmem>>, vector<144x128xbf16>
    %cst = arith.constant dense<0.000000e+00> : vector<32x128xf32>
    %2 = tpu.matmul %0, %1, %cst {dimension_numbers = #tpu.dot_dimension_numbers<[1], [0], [0], [1], [0, 0, 1, 1], [], []>} : vector<32x144xbf16>, vector<144x128xbf16>, vector<32x128xf32> -> vector<32x128xf32>
    %c0_3 = arith.constant 0 : index
    %c0_4 = arith.constant 0 : index
    %3 = vector.load %arg3[%c0_3, %c0_4] : memref<32x1xf32, #tpu.memory_space<vmem>>, vector<32x1xf32>
    %4 = vector.broadcast %3 : vector<32x1xf32> to vector<32x128xf32>
    %5 = arith.addf %2, %4 : vector<32x128xf32>
    %cst_5 = arith.constant 0.000000e+00 : f32
    %6 = vector.broadcast %cst_5 : f32 to vector<32x128xf32>
    %7 = arith.cmpf oge, %5, %6 : vector<32x128xf32>
    %cst_6 = arith.constant 0.00999999977 : f32
    %8 = vector.broadcast %cst_6 : f32 to vector<32x128xf32>
    %9 = arith.mulf %8, %5 : vector<32x128xf32>
    %10 = arith.select %7, %5, %9 : vector<32x128xi1>, vector<32x128xf32>
    %11 = arith.truncf %10 : vector<32x128xf32> to vector<32x128xbf16>
    %c0_7 = arith.constant 0 : index
    %c0_8 = arith.constant 0 : index
    %12 = vector.load %arg4[%c0_7, %c0_8] : memref<32x128xbf16, #tpu.memory_space<vmem>>, vector<32x128xbf16>
    tpu.vector_store %arg4[%c0_7, %c0_8], %11 {strides = array<i32>} : memref<32x128xbf16, #tpu.memory_space<vmem>>, vector<32x128xbf16>,
    return
  }
  func.func @transform_0(%arg0: i32) -> (i32, i32) {
    %c0_i32 = arith.constant 0 : i32
    %c0_i32_0 = arith.constant 0 : i32
    return %c0_i32, %arg0 : i32, i32
  }
  func.func @transform_1(%arg0: i32) -> (i32, i32) {
    %c0_i32 = arith.constant 0 : i32
    %c0_i32_0 = arith.constant 0 : i32
    %c0_i32_1 = arith.constant 0 : i32
    return %c0_i32, %c0_i32_0 : i32, i32
  }
  func.func @transform_2(%arg0: i32) -> (i32, i32) {
    %c0_i32 = arith.constant 0 : i32
    %c0_i32_0 = arith.constant 0 : i32
    %c0_i32_1 = arith.constant 0 : i32
    return %c0_i32, %c0_i32_0 : i32, i32
  }
  func.func @transform_3(%arg0: i32) -> (i32, i32) {
    %c0_i32 = arith.constant 0 : i32
    %c0_i32_0 = arith.constant 0 : i32
    return %c0_i32, %arg0 : i32, i32
  }
}

module attributes {stable_mosaic.version = 11 : i64} {
  func.func @_latent_kernel(%arg0: memref<2x2048xbf16, #tpu.memory_space<vmem>>, %arg1: memref<2048x16xf32, #tpu.memory_space<vmem>>, %arg2: memref<1x16xf32, #tpu.memory_space<vmem>>, %arg3: memref<2048x16xf32, #tpu.memory_space<vmem>>, %arg4: memref<1x16xf32, #tpu.memory_space<vmem>>, %arg5: memref<2x16xf32, #tpu.memory_space<vmem>>, %arg6: memref<16x2048xf32, #tpu.memory_space<vmem>>, %arg7: memref<1x2048xf32, #tpu.memory_space<vmem>>, %arg8: memref<2x16xf32, #tpu.memory_space<vmem>>, %arg9: memref<2x16xf32, #tpu.memory_space<vmem>>, %arg10: memref<2x2048xbf16, #tpu.memory_space<vmem>>) attributes {dimension_semantics = [], scalar_prefetch = 0 : i64, scratch_operands = 0 : i64, tpu.core_type = #tpu.core_type<tc>} {
    %c0 = arith.constant 0 : index
    %c0_0 = arith.constant 0 : index
    %0 = vector.load %arg0[%c0, %c0_0] : memref<2x2048xbf16, #tpu.memory_space<vmem>>, vector<2x2048xbf16>
    %1 = arith.extf %0 : vector<2x2048xbf16> to vector<2x2048xf32>
    %c0_1 = arith.constant 0 : index
    %c0_2 = arith.constant 0 : index
    %2 = vector.load %arg1[%c0_1, %c0_2] : memref<2048x16xf32, #tpu.memory_space<vmem>>, vector<2048x16xf32>
    %cst = arith.constant dense<0.000000e+00> : vector<2x16xf32>
    %3 = tpu.matmul %1, %2, %cst {dimension_numbers = #tpu.dot_dimension_numbers<[1], [0], [0], [1], [0, 0, 1, 1], [], []>} : vector<2x2048xf32>, vector<2048x16xf32>, vector<2x16xf32> -> vector<2x16xf32>
    %c0_3 = arith.constant 0 : index
    %c0_4 = arith.constant 0 : index
    %4 = vector.load %arg2[%c0_3, %c0_4] : memref<1x16xf32, #tpu.memory_space<vmem>>, vector<1x16xf32>
    %5 = vector.broadcast %4 : vector<1x16xf32> to vector<2x16xf32>
    %6 = arith.addf %3, %5 : vector<2x16xf32>
    %c0_5 = arith.constant 0 : index
    %c0_6 = arith.constant 0 : index
    %7 = vector.load %arg3[%c0_5, %c0_6] : memref<2048x16xf32, #tpu.memory_space<vmem>>, vector<2048x16xf32>
    %cst_7 = arith.constant dense<0.000000e+00> : vector<2x16xf32>
    %8 = tpu.matmul %1, %7, %cst_7 {dimension_numbers = #tpu.dot_dimension_numbers<[1], [0], [0], [1], [0, 0, 1, 1], [], []>} : vector<2x2048xf32>, vector<2048x16xf32>, vector<2x16xf32> -> vector<2x16xf32>
    %c0_8 = arith.constant 0 : index
    %c0_9 = arith.constant 0 : index
    %9 = vector.load %arg4[%c0_8, %c0_9] : memref<1x16xf32, #tpu.memory_space<vmem>>, vector<1x16xf32>
    %10 = vector.broadcast %9 : vector<1x16xf32> to vector<2x16xf32>
    %11 = arith.addf %8, %10 : vector<2x16xf32>
    %c0_10 = arith.constant 0 : index
    %c0_11 = arith.constant 0 : index
    %12 = vector.load %arg5[%c0_10, %c0_11] : memref<2x16xf32, #tpu.memory_space<vmem>>, vector<2x16xf32>
    %cst_12 = arith.constant 5.000000e-01 : f32
    %13 = vector.broadcast %cst_12 : f32 to vector<2x16xf32>
    %14 = arith.mulf %13, %11 : vector<2x16xf32>
    %15 = math.exp %14 : vector<2x16xf32>
    %16 = arith.mulf %12, %15 : vector<2x16xf32>
    %17 = arith.addf %16, %6 : vector<2x16xf32>
    %c0_13 = arith.constant 0 : index
    %c0_14 = arith.constant 0 : index
    %18 = vector.load %arg6[%c0_13, %c0_14] : memref<16x2048xf32, #tpu.memory_space<vmem>>, vector<16x2048xf32>
    %cst_15 = arith.constant dense<0.000000e+00> : vector<2x2048xf32>
    %19 = tpu.matmul %17, %18, %cst_15 {dimension_numbers = #tpu.dot_dimension_numbers<[1], [0], [0], [1], [0, 0, 1, 1], [], []>} : vector<2x16xf32>, vector<16x2048xf32>, vector<2x2048xf32> -> vector<2x2048xf32>
    %c0_16 = arith.constant 0 : index
    %c0_17 = arith.constant 0 : index
    %20 = vector.load %arg7[%c0_16, %c0_17] : memref<1x2048xf32, #tpu.memory_space<vmem>>, vector<1x2048xf32>
    %21 = vector.broadcast %20 : vector<1x2048xf32> to vector<2x2048xf32>
    %22 = arith.addf %19, %21 : vector<2x2048xf32>
    %cst_18 = arith.constant 0.000000e+00 : f32
    %23 = vector.broadcast %cst_18 : f32 to vector<2x2048xf32>
    %24 = arith.cmpf oge, %22, %23 : vector<2x2048xf32>
    %cst_19 = arith.constant 0.00999999977 : f32
    %25 = vector.broadcast %cst_19 : f32 to vector<2x2048xf32>
    %26 = arith.mulf %25, %22 : vector<2x2048xf32>
    %27 = arith.select %24, %22, %26 : vector<2x2048xi1>, vector<2x2048xf32>
    %c0_20 = arith.constant 0 : index
    %c0_21 = arith.constant 0 : index
    %28 = vector.load %arg8[%c0_20, %c0_21] : memref<2x16xf32, #tpu.memory_space<vmem>>, vector<2x16xf32>
    tpu.vector_store %arg8[%c0_20, %c0_21], %6 {strides = array<i32>} : memref<2x16xf32, #tpu.memory_space<vmem>>, vector<2x16xf32>,
    %c0_22 = arith.constant 0 : index
    %c0_23 = arith.constant 0 : index
    %29 = vector.load %arg9[%c0_22, %c0_23] : memref<2x16xf32, #tpu.memory_space<vmem>>, vector<2x16xf32>
    tpu.vector_store %arg9[%c0_22, %c0_23], %11 {strides = array<i32>} : memref<2x16xf32, #tpu.memory_space<vmem>>, vector<2x16xf32>,
    %30 = arith.truncf %27 : vector<2x2048xf32> to vector<2x2048xbf16>
    %c0_24 = arith.constant 0 : index
    %c0_25 = arith.constant 0 : index
    %31 = vector.load %arg10[%c0_24, %c0_25] : memref<2x2048xbf16, #tpu.memory_space<vmem>>, vector<2x2048xbf16>
    tpu.vector_store %arg10[%c0_24, %c0_25], %30 {strides = array<i32>} : memref<2x2048xbf16, #tpu.memory_space<vmem>>, vector<2x2048xbf16>,
    return
  }
}

module attributes {stable_mosaic.version = 11 : i64} {
  func.func @_gemm_act_kernel(%arg0: i32, %arg1: memref<288x128xbf16, #tpu.memory_space<vmem>>, %arg2: memref<64x288xbf16, #tpu.memory_space<vmem>>, %arg3: memref<64x1xf32, #tpu.memory_space<vmem>>, %arg4: memref<64x128xbf16, #tpu.memory_space<vmem>>) attributes {dimension_semantics = [#tpu.dimension_semantics<parallel>], iteration_bounds = array<i64: 1>, scalar_prefetch = 0 : i64, scratch_operands = 0 : i64, tpu.core_type = #tpu.core_type<tc>, window_params = [{transform_indices = @transform_0, window_bounds = array<i64: 288, 128>}, {pipeline_mode = #tpu.pipeline_mode<synchronous>, transform_indices = @transform_1, window_bounds = array<i64: 64, 288>}, {pipeline_mode = #tpu.pipeline_mode<synchronous>, transform_indices = @transform_2, window_bounds = array<i64: 64, 1>}, {transform_indices = @transform_3, window_bounds = array<i64: 64, 128>}]} {
    %c0 = arith.constant 0 : index
    %c0_0 = arith.constant 0 : index
    %0 = vector.load %arg2[%c0, %c0_0] : memref<64x288xbf16, #tpu.memory_space<vmem>>, vector<64x288xbf16>
    %c0_1 = arith.constant 0 : index
    %c0_2 = arith.constant 0 : index
    %1 = vector.load %arg1[%c0_1, %c0_2] : memref<288x128xbf16, #tpu.memory_space<vmem>>, vector<288x128xbf16>
    %cst = arith.constant dense<0.000000e+00> : vector<64x128xf32>
    %2 = tpu.matmul %0, %1, %cst {dimension_numbers = #tpu.dot_dimension_numbers<[1], [0], [0], [1], [0, 0, 1, 1], [], []>} : vector<64x288xbf16>, vector<288x128xbf16>, vector<64x128xf32> -> vector<64x128xf32>
    %c0_3 = arith.constant 0 : index
    %c0_4 = arith.constant 0 : index
    %3 = vector.load %arg3[%c0_3, %c0_4] : memref<64x1xf32, #tpu.memory_space<vmem>>, vector<64x1xf32>
    %4 = vector.broadcast %3 : vector<64x1xf32> to vector<64x128xf32>
    %5 = arith.addf %2, %4 : vector<64x128xf32>
    %cst_5 = arith.constant 0.000000e+00 : f32
    %6 = vector.broadcast %cst_5 : f32 to vector<64x128xf32>
    %7 = arith.cmpf oge, %5, %6 : vector<64x128xf32>
    %cst_6 = arith.constant 0.00999999977 : f32
    %8 = vector.broadcast %cst_6 : f32 to vector<64x128xf32>
    %9 = arith.mulf %8, %5 : vector<64x128xf32>
    %10 = arith.select %7, %5, %9 : vector<64x128xi1>, vector<64x128xf32>
    %11 = arith.truncf %10 : vector<64x128xf32> to vector<64x128xbf16>
    %c0_7 = arith.constant 0 : index
    %c0_8 = arith.constant 0 : index
    %12 = vector.load %arg4[%c0_7, %c0_8] : memref<64x128xbf16, #tpu.memory_space<vmem>>, vector<64x128xbf16>
    tpu.vector_store %arg4[%c0_7, %c0_8], %11 {strides = array<i32>} : memref<64x128xbf16, #tpu.memory_space<vmem>>, vector<64x128xbf16>,
    return
  }
  func.func @transform_0(%arg0: i32) -> (i32, i32) {
    %c0_i32 = arith.constant 0 : i32
    %c0_i32_0 = arith.constant 0 : i32
    return %c0_i32, %arg0 : i32, i32
  }
  func.func @transform_1(%arg0: i32) -> (i32, i32) {
    %c0_i32 = arith.constant 0 : i32
    %c0_i32_0 = arith.constant 0 : i32
    %c0_i32_1 = arith.constant 0 : i32
    return %c0_i32, %c0_i32_0 : i32, i32
  }
  func.func @transform_2(%arg0: i32) -> (i32, i32) {
    %c0_i32 = arith.constant 0 : i32
    %c0_i32_0 = arith.constant 0 : i32
    %c0_i32_1 = arith.constant 0 : i32
    return %c0_i32, %c0_i32_0 : i32, i32
  }
  func.func @transform_3(%arg0: i32) -> (i32, i32) {
    %c0_i32 = arith.constant 0 : i32
    %c0_i32_0 = arith.constant 0 : i32
    return %c0_i32, %arg0 : i32, i32
  }
}

module attributes {stable_mosaic.version = 11 : i64} {
  func.func @_gemm_act_kernel(%arg0: i32, %arg1: memref<144x256xbf16, #tpu.memory_space<vmem>>, %arg2: memref<32x144xbf16, #tpu.memory_space<vmem>>, %arg3: memref<32x1xf32, #tpu.memory_space<vmem>>, %arg4: memref<32x256xbf16, #tpu.memory_space<vmem>>) attributes {dimension_semantics = [#tpu.dimension_semantics<parallel>], iteration_bounds = array<i64: 2>, scalar_prefetch = 0 : i64, scratch_operands = 0 : i64, tpu.core_type = #tpu.core_type<tc>, window_params = [{transform_indices = @transform_0, window_bounds = array<i64: 144, 256>}, {pipeline_mode = #tpu.pipeline_mode<synchronous>, transform_indices = @transform_1, window_bounds = array<i64: 32, 144>}, {pipeline_mode = #tpu.pipeline_mode<synchronous>, transform_indices = @transform_2, window_bounds = array<i64: 32, 1>}, {transform_indices = @transform_3, window_bounds = array<i64: 32, 256>}]} {
    %c0 = arith.constant 0 : index
    %c0_0 = arith.constant 0 : index
    %0 = vector.load %arg2[%c0, %c0_0] : memref<32x144xbf16, #tpu.memory_space<vmem>>, vector<32x144xbf16>
    %c0_1 = arith.constant 0 : index
    %c0_2 = arith.constant 0 : index
    %1 = vector.load %arg1[%c0_1, %c0_2] : memref<144x256xbf16, #tpu.memory_space<vmem>>, vector<144x256xbf16>
    %cst = arith.constant dense<0.000000e+00> : vector<32x256xf32>
    %2 = tpu.matmul %0, %1, %cst {dimension_numbers = #tpu.dot_dimension_numbers<[1], [0], [0], [1], [0, 0, 1, 1], [], []>} : vector<32x144xbf16>, vector<144x256xbf16>, vector<32x256xf32> -> vector<32x256xf32>
    %c0_3 = arith.constant 0 : index
    %c0_4 = arith.constant 0 : index
    %3 = vector.load %arg3[%c0_3, %c0_4] : memref<32x1xf32, #tpu.memory_space<vmem>>, vector<32x1xf32>
    %4 = vector.broadcast %3 : vector<32x1xf32> to vector<32x256xf32>
    %5 = arith.addf %2, %4 : vector<32x256xf32>
    %cst_5 = arith.constant 0.000000e+00 : f32
    %6 = vector.broadcast %cst_5 : f32 to vector<32x256xf32>
    %7 = arith.cmpf oge, %5, %6 : vector<32x256xf32>
    %cst_6 = arith.constant 0.00999999977 : f32
    %8 = vector.broadcast %cst_6 : f32 to vector<32x256xf32>
    %9 = arith.mulf %8, %5 : vector<32x256xf32>
    %10 = arith.select %7, %5, %9 : vector<32x256xi1>, vector<32x256xf32>
    %11 = arith.truncf %10 : vector<32x256xf32> to vector<32x256xbf16>
    %c0_7 = arith.constant 0 : index
    %c0_8 = arith.constant 0 : index
    %12 = vector.load %arg4[%c0_7, %c0_8] : memref<32x256xbf16, #tpu.memory_space<vmem>>, vector<32x256xbf16>
    tpu.vector_store %arg4[%c0_7, %c0_8], %11 {strides = array<i32>} : memref<32x256xbf16, #tpu.memory_space<vmem>>, vector<32x256xbf16>,
    return
  }
  func.func @transform_0(%arg0: i32) -> (i32, i32) {
    %c0_i32 = arith.constant 0 : i32
    %c0_i32_0 = arith.constant 0 : i32
    return %c0_i32, %arg0 : i32, i32
  }
  func.func @transform_1(%arg0: i32) -> (i32, i32) {
    %c0_i32 = arith.constant 0 : i32
    %c0_i32_0 = arith.constant 0 : i32
    %c0_i32_1 = arith.constant 0 : i32
    return %c0_i32, %c0_i32_0 : i32, i32
  }
  func.func @transform_2(%arg0: i32) -> (i32, i32) {
    %c0_i32 = arith.constant 0 : i32
    %c0_i32_0 = arith.constant 0 : i32
    %c0_i32_1 = arith.constant 0 : i32
    return %c0_i32, %c0_i32_0 : i32, i32
  }
  func.func @transform_3(%arg0: i32) -> (i32, i32) {
    %c0_i32 = arith.constant 0 : i32
    %c0_i32_0 = arith.constant 0 : i32
    return %c0_i32, %arg0 : i32, i32
  }
}

module attributes {stable_mosaic.version = 11 : i64} {
  func.func @_gemm_act_kernel(%arg0: i32, %arg1: memref<72x1024xbf16, #tpu.memory_space<vmem>>, %arg2: memref<16x72xbf16, #tpu.memory_space<vmem>>, %arg3: memref<16x1xf32, #tpu.memory_space<vmem>>, %arg4: memref<16x1024xbf16, #tpu.memory_space<vmem>>) attributes {dimension_semantics = [#tpu.dimension_semantics<parallel>], iteration_bounds = array<i64: 2>, scalar_prefetch = 0 : i64, scratch_operands = 0 : i64, tpu.core_type = #tpu.core_type<tc>, window_params = [{transform_indices = @transform_0, window_bounds = array<i64: 72, 1024>}, {pipeline_mode = #tpu.pipeline_mode<synchronous>, transform_indices = @transform_1, window_bounds = array<i64: 16, 72>}, {pipeline_mode = #tpu.pipeline_mode<synchronous>, transform_indices = @transform_2, window_bounds = array<i64: 16, 1>}, {transform_indices = @transform_3, window_bounds = array<i64: 16, 1024>}]} {
    %c0 = arith.constant 0 : index
    %c0_0 = arith.constant 0 : index
    %0 = vector.load %arg2[%c0, %c0_0] : memref<16x72xbf16, #tpu.memory_space<vmem>>, vector<16x72xbf16>
    %c0_1 = arith.constant 0 : index
    %c0_2 = arith.constant 0 : index
    %1 = vector.load %arg1[%c0_1, %c0_2] : memref<72x1024xbf16, #tpu.memory_space<vmem>>, vector<72x1024xbf16>
    %cst = arith.constant dense<0.000000e+00> : vector<16x1024xf32>
    %2 = tpu.matmul %0, %1, %cst {dimension_numbers = #tpu.dot_dimension_numbers<[1], [0], [0], [1], [0, 0, 1, 1], [], []>} : vector<16x72xbf16>, vector<72x1024xbf16>, vector<16x1024xf32> -> vector<16x1024xf32>
    %c0_3 = arith.constant 0 : index
    %c0_4 = arith.constant 0 : index
    %3 = vector.load %arg3[%c0_3, %c0_4] : memref<16x1xf32, #tpu.memory_space<vmem>>, vector<16x1xf32>
    %4 = vector.broadcast %3 : vector<16x1xf32> to vector<16x1024xf32>
    %5 = arith.addf %2, %4 : vector<16x1024xf32>
    %cst_5 = arith.constant 0.000000e+00 : f32
    %6 = vector.broadcast %cst_5 : f32 to vector<16x1024xf32>
    %7 = arith.cmpf oge, %5, %6 : vector<16x1024xf32>
    %cst_6 = arith.constant 0.00999999977 : f32
    %8 = vector.broadcast %cst_6 : f32 to vector<16x1024xf32>
    %9 = arith.mulf %8, %5 : vector<16x1024xf32>
    %10 = arith.select %7, %5, %9 : vector<16x1024xi1>, vector<16x1024xf32>
    %11 = arith.truncf %10 : vector<16x1024xf32> to vector<16x1024xbf16>
    %c0_7 = arith.constant 0 : index
    %c0_8 = arith.constant 0 : index
    %12 = vector.load %arg4[%c0_7, %c0_8] : memref<16x1024xbf16, #tpu.memory_space<vmem>>, vector<16x1024xbf16>
    tpu.vector_store %arg4[%c0_7, %c0_8], %11 {strides = array<i32>} : memref<16x1024xbf16, #tpu.memory_space<vmem>>, vector<16x1024xbf16>,
    return
  }
  func.func @transform_0(%arg0: i32) -> (i32, i32) {
    %c0_i32 = arith.constant 0 : i32
    %c0_i32_0 = arith.constant 0 : i32
    return %c0_i32, %arg0 : i32, i32
  }
  func.func @transform_1(%arg0: i32) -> (i32, i32) {
    %c0_i32 = arith.constant 0 : i32
    %c0_i32_0 = arith.constant 0 : i32
    %c0_i32_1 = arith.constant 0 : i32
    return %c0_i32, %c0_i32_0 : i32, i32
  }
  func.func @transform_2(%arg0: i32) -> (i32, i32) {
    %c0_i32 = arith.constant 0 : i32
    %c0_i32_0 = arith.constant 0 : i32
    %c0_i32_1 = arith.constant 0 : i32
    return %c0_i32, %c0_i32_0 : i32, i32
  }
  func.func @transform_3(%arg0: i32) -> (i32, i32) {
    %c0_i32 = arith.constant 0 : i32
    %c0_i32_0 = arith.constant 0 : i32
    return %c0_i32, %arg0 : i32, i32
  }
}

module attributes {stable_mosaic.version = 11 : i64} {
  func.func @_gemm_act_kernel(%arg0: i32, %arg1: memref<36x4096xbf16, #tpu.memory_space<vmem>>, %arg2: memref<12x36xbf16, #tpu.memory_space<vmem>>, %arg3: memref<12x1xf32, #tpu.memory_space<vmem>>, %arg4: memref<12x4096xf32, #tpu.memory_space<vmem>>) attributes {dimension_semantics = [#tpu.dimension_semantics<parallel>], iteration_bounds = array<i64: 2>, scalar_prefetch = 0 : i64, scratch_operands = 0 : i64, tpu.core_type = #tpu.core_type<tc>, window_params = [{transform_indices = @transform_0, window_bounds = array<i64: 36, 4096>}, {pipeline_mode = #tpu.pipeline_mode<synchronous>, transform_indices = @transform_1, window_bounds = array<i64: 12, 36>}, {pipeline_mode = #tpu.pipeline_mode<synchronous>, transform_indices = @transform_2, window_bounds = array<i64: 12, 1>}, {transform_indices = @transform_3, window_bounds = array<i64: 12, 4096>}]} {
    %c0 = arith.constant 0 : index
    %c0_0 = arith.constant 0 : index
    %0 = vector.load %arg2[%c0, %c0_0] : memref<12x36xbf16, #tpu.memory_space<vmem>>, vector<12x36xbf16>
    %c0_1 = arith.constant 0 : index
    %c0_2 = arith.constant 0 : index
    %1 = vector.load %arg1[%c0_1, %c0_2] : memref<36x4096xbf16, #tpu.memory_space<vmem>>, vector<36x4096xbf16>
    %cst = arith.constant dense<0.000000e+00> : vector<12x4096xf32>
    %2 = tpu.matmul %0, %1, %cst {dimension_numbers = #tpu.dot_dimension_numbers<[1], [0], [0], [1], [0, 0, 1, 1], [], []>} : vector<12x36xbf16>, vector<36x4096xbf16>, vector<12x4096xf32> -> vector<12x4096xf32>
    %c0_3 = arith.constant 0 : index
    %c0_4 = arith.constant 0 : index
    %3 = vector.load %arg3[%c0_3, %c0_4] : memref<12x1xf32, #tpu.memory_space<vmem>>, vector<12x1xf32>
    %4 = vector.broadcast %3 : vector<12x1xf32> to vector<12x4096xf32>
    %5 = arith.addf %2, %4 : vector<12x4096xf32>
    %cst_5 = arith.constant 0.000000e+00 : f32
    %6 = vector.broadcast %cst_5 : f32 to vector<12x4096xf32>
    %7 = arith.subf %6, %5 : vector<12x4096xf32>
    %8 = math.exp %7 : vector<12x4096xf32>
    %cst_6 = arith.constant 1.000000e+00 : f32
    %9 = vector.broadcast %cst_6 : f32 to vector<12x4096xf32>
    %10 = arith.addf %9, %8 : vector<12x4096xf32>
    %cst_7 = arith.constant 1.000000e+00 : f32
    %11 = vector.broadcast %cst_7 : f32 to vector<12x4096xf32>
    %12 = arith.divf %11, %10 : vector<12x4096xf32>
    %c0_8 = arith.constant 0 : index
    %c0_9 = arith.constant 0 : index
    %13 = vector.load %arg4[%c0_8, %c0_9] : memref<12x4096xf32, #tpu.memory_space<vmem>>, vector<12x4096xf32>
    tpu.vector_store %arg4[%c0_8, %c0_9], %12 {strides = array<i32>} : memref<12x4096xf32, #tpu.memory_space<vmem>>, vector<12x4096xf32>,
    return
  }
  func.func @transform_0(%arg0: i32) -> (i32, i32) {
    %c0_i32 = arith.constant 0 : i32
    %c0_i32_0 = arith.constant 0 : i32
    return %c0_i32, %arg0 : i32, i32
  }
  func.func @transform_1(%arg0: i32) -> (i32, i32) {
    %c0_i32 = arith.constant 0 : i32
    %c0_i32_0 = arith.constant 0 : i32
    %c0_i32_1 = arith.constant 0 : i32
    return %c0_i32, %c0_i32_0 : i32, i32
  }
  func.func @transform_2(%arg0: i32) -> (i32, i32) {
    %c0_i32 = arith.constant 0 : i32
    %c0_i32_0 = arith.constant 0 : i32
    %c0_i32_1 = arith.constant 0 : i32
    return %c0_i32, %c0_i32_0 : i32, i32
  }
  func.func @transform_3(%arg0: i32) -> (i32, i32) {
    %c0_i32 = arith.constant 0 : i32
    %c0_i32_0 = arith.constant 0 : i32
    return %c0_i32, %arg0 : i32, i32
  }
}

</mosaic_0001>

<llo_original>
// kernel: model_forward.9
$region0: #{model_forward.9}
  #allocation0 [shape = 'u32[]', space=smem, size = 0x4, offset = 0x4, fixed_abs, tag = 'smem constant byte address 0x4 - core index']
  #allocation1 [shape = 'u32[144,128]{1,0:T(1,128)}', space=vmem, size = 0x12000, scoped, tag = 'internal scratch']
  %s0 = inlined_call_operand.vmem [shape: bf16[27,8192], index: 0, kind: input, shape index: {}]
  %s1 = inlined_call_operand.vmem [shape: bf16[4,27], index: 1, kind: input, shape index: {}]
  %s2 = inlined_call_operand.vmem [shape: f32[4,1], index: 2, kind: input, shape index: {}]
  %s3 = inlined_call_operand.vmem [shape: bf16[4,8192], index: 3, kind: output, shape index: {}]
  %s4 = sld [smem:[#allocation0]]
  $region68: #{model_forward.9} parent=0
    _
  %s6 = ssub.s32 1, %s4
  %s7 = scalar_select 0, %s6, %s4
  $region1: #{model_forward.9} parent=0
    #allocation2 [shape = 'u8[524288]{0}', space=vmem, size = 0x80000, scoped, tag = 'input window, operand 0']
    loop: start=0, step=1, limit=4
    $region2: #{model_forward.9} parent=1 // loop_pre_header
      _
    $region3: #{model_forward.9} parent=1 // loop_header
      %s9 = sphi 0, %s13
      %p10 = scmp.ge.s32.totalorder %s9, 4
      %s19 = sphi 0, %s21
      %s22 = sphi 0, %s19
      %s23 = sphi 0, %s22
      %s39 = sphi 0, %s23
      %s43 = sphi 0, %s43
      %s45 = sphi 0, %s43
      %s46 = sphi 0, %s45
      %s60 = sphi 0, %s46
      %s64 = sphi 0, %s64
      %s66 = sphi 0, %s64
      %s67 = sphi 0, %s66
      %s81 = sphi 0, %s67
      %s87 = sphi 0, %s89
      %s90 = sphi 0, %s87
      %s91 = sphi 0, %s90
      %s107 = sphi 0, %s91
    $region4: #{model_forward.9} parent=1 // loop_header_branch
      %12 = sbr.rel (%p10) target = $region8
    $region5: #{model_forward.9} parent=1 // loop_body
      %s14 = ssub.s32 %s9, 1
      %s15 = ssub.s32 %s9, 2
      %s16 = sadd.s32 %s9, 1
      %s17 = ssub.s32 %s9, %s16
      %p18 = scmp.eq.s32.totalorder %s17, 0
      %s20 = sadd.s32 %s19, 1
      %s21 = scalar_select %p18, %s19, %s20
      %p24 = pneg %p18
      %p25 = scmp.eq.s32.totalorder %s9, 1
      %p26 = por %p24, %p25
      %p27 = scmp.ne.s32.totalorder %s19, %s22
      %p28 = scmp.eq.s32.totalorder %s9, 0
      %p29 = por %p27, %p28
      %p30 = scmp.ne.s32.totalorder %s19, %s22
      %p31 = scmp.eq.s32.totalorder %s14, 1
      %p32 = por %p30, %p31
      %p33 = scmp.ne.s32.totalorder %s22, %s23
      %p34 = scmp.eq.s32.totalorder %s14, 0
      %p35 = por %p33, %p34
      %p36 = scmp.ne.s32.totalorder %s22, %s23
      %p37 = scmp.eq.s32.totalorder %s15, 1
      %p38 = por %p36, %p37
      %p40 = scmp.ne.s32.totalorder %s23, %s39
      %p41 = scmp.eq.s32.totalorder %s15, 0
      %p42 = por %p40, %p41
      %s44 = sadd.s32 %s43, 1
      %p47 = scmp.eq.s32.totalorder %s9, 1
      %p48 = scmp.ne.s32.totalorder %s43, %s45
      %p49 = scmp.eq.s32.totalorder %s9, 0
      %p50 = por %p48, %p49
      %p51 = scmp.ne.s32.totalorder %s43, %s45
      %p52 = scmp.eq.s32.totalorder %s14, 1
      %p53 = por %p51, %p52
      %p54 = scmp.ne.s32.totalorder %s45, %s46
      %p55 = scmp.eq.s32.totalorder %s14, 0
      %p56 = por %p54, %p55
      %p57 = scmp.ne.s32.totalorder %s45, %s46
      %p58 = scmp.eq.s32.totalorder %s15, 1
      %p59 = por %p57, %p58
      %p61 = scmp.ne.s32.totalorder %s46, %s60
      %p62 = scmp.eq.s32.totalorder %s15, 0
      %p63 = por %p61, %p62
      %s65 = sadd.s32 %s64, 1
      %p68 = scmp.eq.s32.totalorder %s9, 1
      %p69 = scmp.ne.s32.totalorder %s64, %s66
      %p70 = scmp.eq.s32.totalorder %s9, 0
      %p71 = por %p69, %p70
      %p72 = scmp.ne.s32.totalorder %s64, %s66
      %p73 = scmp.eq.s32.totalorder %s14, 1
      %p74 = por %p72, %p73
      %p75 = scmp.ne.s32.totalorder %s66, %s67
      %p76 = scmp.eq.s32.totalorder %s14, 0
      %p77 = por %p75, %p76
      %p78 = scmp.ne.s32.totalorder %s66, %s67
      %p79 = scmp.eq.s32.totalorder %s15, 1
      %p80 = por %p78, %p79
      %p82 = scmp.ne.s32.totalorder %s67, %s81
      %p83 = scmp.eq.s32.totalorder %s15, 0
      %p84 = por %p82, %p83
      %s85 = ssub.s32 %s9, %s16
      %p86 = scmp.eq.s32.totalorder %s85, 0
      %s88 = sadd.s32 %s87, 1
      %s89 = scalar_select %p86, %s87, %s88
      %p92 = pneg %p86
      %p93 = scmp.eq.s32.totalorder %s9, 1
      %p94 = por %p92, %p93
      %p95 = scmp.ne.s32.totalorder %s87, %s90
      %p96 = scmp.eq.s32.totalorder %s9, 0
      %p97 = por %p95, %p96
      %p98 = scmp.ne.s32.totalorder %s87, %s90
      %p99 = scmp.eq.s32.totalorder %s14, 1
      %p100 = por %p98, %p99
      %p101 = scmp.ne.s32.totalorder %s90, %s91
      %p102 = scmp.eq.s32.totalorder %s14, 0
      %p103 = por %p101, %p102
      %p104 = scmp.ne.s32.totalorder %s90, %s91
      %p105 = scmp.eq.s32.totalorder %s15, 1
      %p106 = por %p104, %p105
      %p108 = scmp.ne.s32.totalorder %s91, %s107
      %p109 = scmp.eq.s32.totalorder %s15, 0
      %p110 = por %p108, %p109
      %p111 = scmp.le.s32.totalorder 1, %s9
      %p112 = scmp.lt.s32.totalorder %s9, 3
      %p113 = pnand %p111, %p112
      %p114 = pneg %p113
      // Predicated region
      $region9: #{model_forward.9} parent=5 // pred_check
        _
      $region10: #{model_forward.9} parent=5 // pred_check_branch
        %116 = sbr.rel (%p113) target = $region12
      $region11: #{model_forward.9} parent=5 // pred_region
        %s117 = ssub.s32 %s9, 1
        // Predicated region
        $region13: #{model_forward.9} parent=11 // pred_check
          %p118 = pneg %p56
        $region14: #{model_forward.9} parent=11 // pred_check_branch
          %120 = sbr.rel (%p118) target = $region16
        $region15: #{model_forward.9} parent=11 // pred_region
          _
        $region16: #{model_forward.9} parent=11 // pred_fallthru
          _
        // Predicated region
        $region17: #{model_forward.9} parent=11 // pred_check
          %p121 = pneg %p77
        $region18: #{model_forward.9} parent=11 // pred_check_branch
          %123 = sbr.rel (%p121) target = $region20
        $region19: #{model_forward.9} parent=11 // pred_region
          _
        $region20: #{model_forward.9} parent=11 // pred_fallthru
          _
      $region12: #{model_forward.9} parent=5 // pred_fallthru
        _
      %p124 = scmp.lt.s32.totalorder %s9, 2
      // Predicated region
      $region21: #{model_forward.9} parent=5 // pred_check
        %p125 = pneg %p124
      $region22: #{model_forward.9} parent=5 // pred_check_branch
        %127 = sbr.rel (%p125) target = $region24
      $region23: #{model_forward.9} parent=5 // pred_region
        // Predicated region
        $region25: #{model_forward.9} parent=23 // pred_check
          %p128 = pneg %p29
        $region26: #{model_forward.9} parent=23 // pred_check_branch
          %130 = sbr.rel (%p128) target = $region28
        $region27: #{model_forward.9} parent=23 // pred_region
          %s131 = sand.u32 %s19, 1
          %s132 = sand.u32 %s19, 1
          %s133 = smul.addr %s132, 512
          %s134 = scalar_lea.vmem [#allocation2], %s133
          %s135 = smul.u32 32, %s9
          %s136 = smul.addr %s135, 4
          %s137 = scalar_lea.vmem %s0, %s136
          // Predicated region
          $region29: #{model_forward.9} parent=27 // pred_check
            _
          $region30: #{model_forward.9} parent=27 // pred_check_branch
            %139 = sbr.rel (0) target = $region32
          $region31: #{model_forward.9} parent=27 // pred_region
            // Predicated region
            $region33: #{model_forward.9} parent=31 // pred_check
              _
            $region34: #{model_forward.9} parent=31 // pred_check_branch
              %141 = sbr.rel (0) target = $region36
            $region35: #{model_forward.9} parent=31 // pred_region
              loop: start=0, step=1, limit=1
              $region37: #{model_forward.9} parent=35 // loop_pre_header
                _
              $region38: #{model_forward.9} parent=35 // loop_header
                %s143 = sphi 0, %s147
                %p144 = scmp.ge.s32.totalorder %s143, 1
                %s148 = sphi %s137, %s137
                %s149 = sphi %s134, %s134
              $region39: #{model_forward.9} parent=35 // loop_header_branch
                %146 = sbr.rel (%p144) target = $region43
              $region40: #{model_forward.9} parent=35 // loop_body
                %v150 = vld [vmem:[%s148] sm:$0xff]
                %151 = vst [vmem:[%s149] sm:$0xff] %v150
                %v152 = vld [vmem:[%s148 + $0x8] sm:$0xff]
                %153 = vst [vmem:[%s149 + $0x8] sm:$0xff] %v152
                %v154 = vld [vmem:[%s148 + $0x10] sm:$0xff]
                %155 = vst [vmem:[%s149 + $0x10] sm:$0xff] %v154
                %v156 = vld [vmem:[%s148 + $0x18] sm:$0xff]
                %157 = vst [vmem:[%s149 + $0x18] sm:$0xff] %v156
                %v158 = vld [vmem:[%s148 + $0x20] sm:$0xff]
                %159 = vst [vmem:[%s149 + $0x20] sm:$0xff] %v158
                %v160 = vld [vmem:[%s148 + $0x28] sm:$0xff]
                %161 = vst [vmem:[%s149 + $0x28] sm:$0xff] %v160
                %v162 = vld [vmem:[%s148 + $0x30] sm:$0xff]
                %163 = vst [vmem:[%s149 + $0x30] sm:$0xff] %v162
                %v164 = vld [vmem:[%s148 + $0x38] sm:$0xff]
                %165 = vst [vmem:[%s149 + $0x38] sm:$0xff] %v164
                %v166 = vld [vmem:[%s148 + $0x40] sm:$0xff]
                %167 = vst [vmem:[%s149 + $0x40] sm:$0xff] %v166
                %v168 = vld [vmem:[%s148 + $0x48] sm:$0xff]
                %169 = vst [vmem:[%s149 + $0x48] sm:$0xff] %v168
                %v170 = vld [vmem:[%s148 + $0x50] sm:$0xff]
                %171 = vst [vmem:[%s149 + $0x50] sm:$0xff] %v170
                %v172 = vld [vmem:[%s148 + $0x58] sm:$0xff]
                %173 = vst [vmem:[%s149 + $0x58] sm:$0xff] %v172
                %v174 = vld [vmem:[%s148 + $0x60] sm:$0xff]
                %175 = vst [vmem:[%s149 + $0x60] sm:$0xff] %v174
                %v176 = vld [vmem:[%s148 + $0x68] sm:$0xff]
                %177 = vst [vmem:[%s149 + $0x68] sm:$0xff] %v176
                %v178 = vld [vmem:[%s148 + $0x70] sm:$0xff]
                %179 = vst [vmem:[%s149 + $0x70] sm:$0xff] %v178
                %v180 = vld [vmem:[%s148 + $0x78] sm:$0xff]
                %181 = vst [vmem:[%s149 + $0x78] sm:$0xff] %v180
                %v182 = vld [vmem:[%s148 + $0x100] sm:$0xff]
                %183 = vst [vmem:[%s149 + $0x80] sm:$0xff] %v182
                %v184 = vld [vmem:[%s148 + $0x108] sm:$0xff]
                %185 = vst [vmem:[%s149 + $0x88] sm:$0xff] %v184
                %v186 = vld [vmem:[%s148 + $0x110] sm:$0xff]
                %187 = vst [vmem:[%s149 + $0x90] sm:$0xff] %v186
                %v188 = vld [vmem:[%s148 + $0x118] sm:$0xff]
                %189 = vst [vmem:[%s149 + $0x98] sm:$0xff] %v188
                %v190 = vld [vmem:[%s148 + $0x120] sm:$0xff]
                %191 = vst [vmem:[%s149 + $0xa0] sm:$0xff] %v190
                %v192 = vld [vmem:[%s148 + $0x128] sm:$0xff]
                %193 = vst [vmem:[%s149 + $0xa8] sm:$0xff] %v192
                %v194 = vld [vmem:[%s148 + $0x130] sm:$0xff]
                %195 = vst [vmem:[%s149 + $0xb0] sm:$0xff] %v194
                %v196 = vld [vmem:[%s148 + $0x138] sm:$0xff]
                %197 = vst [vmem:[%s149 + $0xb8] sm:$0xff] %v196
                %v198 = vld [vmem:[%s148 + $0x140] sm:$0xff]
                %199 = vst [vmem:[%s149 + $0xc0] sm:$0xff] %v198
                %v200 = vld [vmem:[%s148 + $0x148] sm:$0xff]
                %201 = vst [vmem:[%s149 + $0xc8] sm:$0xff] %v200
                %v202 = vld [vmem:[%s148 + $0x150] sm:$0xff]
                %203 = vst [vmem:[%s149 + $0xd0] sm:$0xff] %v202
                %v204 = vld [vmem:[%s148 + $0x158] sm:$0xff]
                %205 = vst [vmem:[%s149 + $0xd8] sm:$0xff] %v204
                %v206 = vld [vmem:[%s148 + $0x160] sm:$0xff]
                %207 = vst [vmem:[%s149 + $0xe0] sm:$0xff] %v206
                %v208 = vld [vmem:[%s148 + $0x168] sm:$0xff]
                %209 = vst [vmem:[%s149 + $0xe8] sm:$0xff] %v208
                %v210 = vld [vmem:[%s148 + $0x170] sm:$0xff]
                %211 = vst [vmem:[%s149 + $0xf0] sm:$0xff] %v210
                %v212 = vld [vmem:[%s148 + $0x178] sm:$0xff]
                %213 = vst [vmem:[%s149 + $0xf8] sm:$0xff] %v212
                %v214 = vld [vmem:[%s148 + $0x200] sm:$0xff]
                %215 = vst [vmem:[%s149 + $0x100] sm:$0xff] %v214
                %v216 = vld [vmem:[%s148 + $0x208] sm:$0xff]
                %217 = vst [vmem:[%s149 + $0x108] sm:$0xff] %v216
                %v218 = vld [vmem:[%s148 + $0x210] sm:$0xff]
                %219 = vst [vmem:[%s149 + $0x110] sm:$0xff] %v218
                %v220 = vld [vmem:[%s148 + $0x218] sm:$0xff]
                %221 = vst [vmem:[%s149 + $0x118] sm:$0xff] %v220
                %v222 = vld [vmem:[%s148 + $0x220] sm:$0xff]
                %223 = vst [vmem:[%s149 + $0x120] sm:$0xff] %v222
                %v224 = vld [vmem:[%s148 + $0x228] sm:$0xff]
                %225 = vst [vmem:[%s149 + $0x128] sm:$0xff] %v224
                %v226 = vld [vmem:[%s148 + $0x230] sm:$0xff]
                %227 = vst [vmem:[%s149 + $0x130] sm:$0xff] %v226
                %v228 = vld [vmem:[%s148 + $0x238] sm:$0xff]
                %229 = vst [vmem:[%s149 + $0x138] sm:$0xff] %v228
                %v230 = vld [vmem:[%s148 + $0x240] sm:$0xff]
                %231 = vst [vmem:[%s149 + $0x140] sm:$0xff] %v230
                %v232 = vld [vmem:[%s148 + $0x248] sm:$0xff]
                %233 = vst [vmem:[%s149 + $0x148] sm:$0xff] %v232
                %v234 = vld [vmem:[%s148 + $0x250] sm:$0xff]
                %235 = vst [vmem:[%s149 + $0x150] sm:$0xff] %v234
                %v236 = vld [vmem:[%s148 + $0x258] sm:$0xff]
                %237 = vst [vmem:[%s149 + $0x158] sm:$0xff] %v236
                %v238 = vld [vmem:[%s148 + $0x260] sm:$0xff]
                %239 = vst [vmem:[%s149 + $0x160] sm:$0xff] %v238
                %v240 = vld [vmem:[%s148 + $0x268] sm:$0xff]
                %241 = vst [vmem:[%s149 + $0x168] sm:$0xff] %v240
                %v242 = vld [vmem:[%s148 + $0x270] sm:$0xff]
                %243 = vst [vmem:[%s149 + $0x170] sm:$0xff] %v242
                %v244 = vld [vmem:[%s148 + $0x278] sm:$0xff]
                %245 = vst [vmem:[%s149 + $0x178] sm:$0xff] %v244
                %v246 = vld [vmem:[%s148 + $0x300] sm:$0xff]
                %247 = vst [vmem:[%s149 + $0x180] sm:$0xff] %v246
                %v248 = vld [vmem:[%s148 + $0x308] sm:$0xff]
                %249 = vst [vmem:[%s149 + $0x188] sm:$0xff] %v248
                %v250 = vld [vmem:[%s148 + $0x310] sm:$0xff]
                %251 = vst [vmem:[%s149 + $0x190] sm:$0xff] %v250
                %v252 = vld [vmem:[%s148 + $0x318] sm:$0xff]
                %253 = vst [vmem:[%s149 + $0x198] sm:$0xff] %v252
                %v254 = vld [vmem:[%s148 + $0x320] sm:$0xff]
                %255 = vst [vmem:[%s149 + $0x1a0] sm:$0xff] %v254
                %v256 = vld [vmem:[%s148 + $0x328] sm:$0xff]
                %257 = vst [vmem:[%s149 + $0x1a8] sm:$0xff] %v256
                %v258 = vld [vmem:[%s148 + $0x330] sm:$0xff]
                %259 = vst [vmem:[%s149 + $0x1b0] sm:$0xff] %v258
                %v260 = vld [vmem:[%s148 + $0x338] sm:$0xff]
                %261 = vst [vmem:[%s149 + $0x1b8] sm:$0xff] %v260
                %v262 = vld [vmem:[%s148 + $0x340] sm:$0xff]
                %263 = vst [vmem:[%s149 + $0x1c0] sm:$0xff] %v262
                %v264 = vld [vmem:[%s148 + $0x348] sm:$0xff]
                %265 = vst [vmem:[%s149 + $0x1c8] sm:$0xff] %v264
                %v266 = vld [vmem:[%s148 + $0x350] sm:$0xff]
                %267 = vst [vmem:[%s149 + $0x1d0] sm:$0xff] %v266
                %v268 = vld [vmem:[%s148 + $0x358] sm:$0xff]
                %269 = vst [vmem:[%s149 + $0x1d8] sm:$0xff] %v268
                %v270 = vld [vmem:[%s148 + $0x360] sm:$0xff]
                %271 = vst [vmem:[%s149 + $0x1e0] sm:$0xff] %v270
                %v272 = vld [vmem:[%s148 + $0x368] sm:$0xff]
                %273 = vst [vmem:[%s149 + $0x1e8] sm:$0xff] %v272
                %v274 = vld [vmem:[%s148 + $0x370] sm:$0xff]
                %275 = vst [vmem:[%s149 + $0x1f0] sm:$0xff] %v274
                %v276 = vld [vmem:[%s148 + $0x378] sm:$0xff]
                %277 = vst [vmem:[%s149 + $0x1f8] sm:$0xff] %v276
              $region41: #{model_forward.9} parent=35 // loop_footer
                %s147 = sadd.s32 1, %s143
              $region42: #{model_forward.9} parent=35 // loop_footer_branch
                %142 = sbr.rel target = $region38
              $region43: #{model_forward.9} parent=35 // loop_exit
                _
            $region36: #{model_forward.9} parent=31 // pred_fallthru
              _
            // Predicated region
            $region44: #{model_forward.9} parent=31 // pred_check
              _
            $region45: #{model_forward.9} parent=31 // pred_check_branch
              %279 = sbr.rel target = $region47
            $region46: #{model_forward.9} parent=31 // pred_region
              _
            $region47: #{model_forward.9} parent=31 // pred_fallthru
              _
          $region32: #{model_forward.9} parent=27 // pred_fallthru
            _
          %280 = vnop
        $region28: #{model_forward.9} parent=23 // pred_fallthru
          _
      $region24: #{model_forward.9} parent=5 // pred_fallthru
        _
      %p281 = scmp.le.s32.totalorder 1, %s9
      %p282 = scmp.lt.s32.totalorder %s9, 3
      %p283 = pnand %p281, %p282
      %p284 = pneg %p283
      // Predicated region
      $region48: #{model_forward.9} parent=5 // pred_check
        _
      $region49: #{model_forward.9} parent=5 // pred_check_branch
        %286 = sbr.rel (%p283) target = $region51
      $region50: #{model_forward.9} parent=5 // pred_region
        %s287 = ssub.s32 %s9, 1
        %s288 = sand.u32 %s22, 1
        %s289 = sand.u32 %s22, 1
        %s290 = smul.addr %s289, 512
        %s291 = scalar_lea.vmem [#allocation2], %s290
        // Predicated region
        $region52: #{model_forward.9} parent=50 // pred_check
          %p292 = pneg %p35
        $region53: #{model_forward.9} parent=50 // pred_check_branch
          %294 = sbr.rel (%p292) target = $region55
        $region54: #{model_forward.9} parent=50 // pred_region
          _
        $region55: #{model_forward.9} parent=50 // pred_fallthru
          _
        %s295 = sand.u32 %s22, 1
        %s296 = sand.u32 %s22, 1
        %s297 = smul.addr %s296, 512
        %s298 = scalar_lea.vmem [#allocation2], %s297
        %p299 = pneg %p35
        %p300 = pneg %p32
        %p301 = pneg %p56
        %p302 = pneg %p53
        %p303 = pneg %p77
        %p304 = pneg %p74
        %p305 = pneg %p103
        %p306 = pneg %p100
        %s307 = smul.u32 32, %s14
        %p308 = scmp.lt.s32.totalorder %s307, 63
        %s309 = scalar_select %p308, %s307, 63
        %s310 = smul.addr %s309, 2
        %s311 = scalar_lea.vmem %s3, %s310
        %s312 = smul.u32 32, %s14
        %s313 = smul.u32 32, %s14
        %p314 = scmp.lt.s32.totalorder %s313, 63
        %s315 = scalar_select %p314, %s313, 63
        %s316 = smul.addr %s315, 2
        %s317 = scalar_lea.vmem %s3, %s316
        %s318 = smul.u32 32, %s14
        %v320 = vld [vmem:[%s1] sm:$0x3]
        %v321 = vld [vmem:[%s291] sm:$0xff]
        %v322 = vld [vmem:[%s291 + $0x8] sm:$0xff]
        %v323 = vld [vmem:[%s291 + $0x10] sm:$0xff]
        %v324 = vld [vmem:[%s291 + $0x18] sm:$0xff]
        %v325 = vld [vmem:[%s291 + $0x20] sm:$0xff]
        %v326 = vld [vmem:[%s291 + $0x28] sm:$0xff]
        %v327 = vld [vmem:[%s291 + $0x30] sm:$0xff]
        %v328 = vld [vmem:[%s291 + $0x38] sm:$0xff]
        %v329 = vld [vmem:[%s291 + $0x40] sm:$0xff]
        %v330 = vld [vmem:[%s291 + $0x48] sm:$0xff]
        %v331 = vld [vmem:[%s291 + $0x50] sm:$0xff]
        %v332 = vld [vmem:[%s291 + $0x58] sm:$0xff]
        %v333 = vld [vmem:[%s291 + $0x60] sm:$0xff]
        %v334 = vld [vmem:[%s291 + $0x68] sm:$0xff]
        %v335 = vld [vmem:[%s291 + $0x70] sm:$0xff]
        %v336 = vld [vmem:[%s291 + $0x78] sm:$0xff]
        %v337 = vld [vmem:[%s291 + $0x80] sm:$0xff]
        %v338 = vld [vmem:[%s291 + $0x88] sm:$0xff]
        %v339 = vld [vmem:[%s291 + $0x90] sm:$0xff]
        %v340 = vld [vmem:[%s291 + $0x98] sm:$0xff]
        %v341 = vld [vmem:[%s291 + $0xa0] sm:$0xff]
        %v342 = vld [vmem:[%s291 + $0xa8] sm:$0xff]
        %v343 = vld [vmem:[%s291 + $0xb0] sm:$0xff]
        %v344 = vld [vmem:[%s291 + $0xb8] sm:$0xff]
        %v345 = vld [vmem:[%s291 + $0xc0] sm:$0xff]
        %v346 = vld [vmem:[%s291 + $0xc8] sm:$0xff]
        %v347 = vld [vmem:[%s291 + $0xd0] sm:$0xff]
        %v348 = vld [vmem:[%s291 + $0xd8] sm:$0xff]
        %v349 = vld [vmem:[%s291 + $0xe0] sm:$0xff]
        %v350 = vld [vmem:[%s291 + $0xe8] sm:$0xff]
        %v351 = vld [vmem:[%s291 + $0xf0] sm:$0xff]
        %v352 = vld [vmem:[%s291 + $0xf8] sm:$0xff]
        %v353 = vld [vmem:[%s291 + $0x100] sm:$0xff]
        %v354 = vld [vmem:[%s291 + $0x108] sm:$0xff]
        %v355 = vld [vmem:[%s291 + $0x110] sm:$0xff]
        %v356 = vld [vmem:[%s291 + $0x118] sm:$0xff]
        %v357 = vld [vmem:[%s291 + $0x120] sm:$0xff]
        %v358 = vld [vmem:[%s291 + $0x128] sm:$0xff]
        %v359 = vld [vmem:[%s291 + $0x130] sm:$0xff]
        %v360 = vld [vmem:[%s291 + $0x138] sm:$0xff]
        %v361 = vld [vmem:[%s291 + $0x140] sm:$0xff]
        %v362 = vld [vmem:[%s291 + $0x148] sm:$0xff]
        %v363 = vld [vmem:[%s291 + $0x150] sm:$0xff]
        %v364 = vld [vmem:[%s291 + $0x158] sm:$0xff]
        %v365 = vld [vmem:[%s291 + $0x160] sm:$0xff]
        %v366 = vld [vmem:[%s291 + $0x168] sm:$0xff]
        %v367 = vld [vmem:[%s291 + $0x170] sm:$0xff]
        %v368 = vld [vmem:[%s291 + $0x178] sm:$0xff]
        %v369 = vld [vmem:[%s291 + $0x180] sm:$0x33]
        %v370 = vld [vmem:[%s291 + $0x188] sm:$0x33]
        %v371 = vld [vmem:[%s291 + $0x190] sm:$0x33]
        %v372 = vld [vmem:[%s291 + $0x198] sm:$0x33]
        %v373 = vld [vmem:[%s291 + $0x1a0] sm:$0x33]
        %v374 = vld [vmem:[%s291 + $0x1a8] sm:$0x33]
        %v375 = vld [vmem:[%s291 + $0x1b0] sm:$0x33]
        %v376 = vld [vmem:[%s291 + $0x1b8] sm:$0x33]
        %v377 = vld [vmem:[%s291 + $0x1c0] sm:$0x33]
        %v378 = vld [vmem:[%s291 + $0x1c8] sm:$0x33]
        %v379 = vld [vmem:[%s291 + $0x1d0] sm:$0x33]
        %v380 = vld [vmem:[%s291 + $0x1d8] sm:$0x33]
        %v381 = vld [vmem:[%s291 + $0x1e0] sm:$0x33]
        %v382 = vld [vmem:[%s291 + $0x1e8] sm:$0x33]
        %v383 = vld [vmem:[%s291 + $0x1f0] sm:$0x33]
        %v384 = vld [vmem:[%s291 + $0x1f8] sm:$0x33]
        %v385 = vld [vmem:[%s2] sm:$0xf]
        %387 = vset.pattern.permute.xlu0 0
        %388 = vperm.xlu0 %387, %v385
        %v389 = vpop.permute.xlu0 %388
        %v455 = vunpack.c.l.b16 %v321
        %v456 = vunpack.c.h.b16 %v321
        %v457 = vunpack.c.l.b16 %v322
        %v458 = vunpack.c.h.b16 %v322
        %v459 = vunpack.c.l.b16 %v323
        %v460 = vunpack.c.h.b16 %v323
        %v461 = vunpack.c.l.b16 %v324
        %v462 = vunpack.c.h.b16 %v324
        %v463 = vunpack.c.l.b16 %v325
        %v464 = vunpack.c.h.b16 %v325
        %v465 = vunpack.c.l.b16 %v326
        %v466 = vunpack.c.h.b16 %v326
        %v467 = vunpack.c.l.b16 %v327
        %v468 = vunpack.c.h.b16 %v327
        %v469 = vunpack.c.l.b16 %v328
        %v470 = vunpack.c.h.b16 %v328
        %v471 = vunpack.c.l.b16 %v329
        %v472 = vunpack.c.h.b16 %v329
        %v473 = vunpack.c.l.b16 %v330
        %v474 = vunpack.c.h.b16 %v330
        %v475 = vunpack.c.l.b16 %v331
        %v476 = vunpack.c.h.b16 %v331
        %v477 = vunpack.c.l.b16 %v332
        %v478 = vunpack.c.h.b16 %v332
        %v479 = vunpack.c.l.b16 %v333
        %v480 = vunpack.c.h.b16 %v333
        %v481 = vunpack.c.l.b16 %v334
        %v482 = vunpack.c.h.b16 %v334
        %v483 = vunpack.c.l.b16 %v335
        %v484 = vunpack.c.h.b16 %v335
        %v485 = vunpack.c.l.b16 %v336
        %v486 = vunpack.c.h.b16 %v336
        %v487 = vunpack.c.l.b16 %v337
        %v488 = vunpack.c.h.b16 %v337
        %v489 = vunpack.c.l.b16 %v338
        %v490 = vunpack.c.h.b16 %v338
        %v491 = vunpack.c.l.b16 %v339
        %v492 = vunpack.c.h.b16 %v339
        %v493 = vunpack.c.l.b16 %v340
        %v494 = vunpack.c.h.b16 %v340
        %v495 = vunpack.c.l.b16 %v341
        %v496 = vunpack.c.h.b16 %v341
        %v497 = vunpack.c.l.b16 %v342
        %v498 = vunpack.c.h.b16 %v342
        %v499 = vunpack.c.l.b16 %v343
        %v500 = vunpack.c.h.b16 %v343
        %v501 = vunpack.c.l.b16 %v344
        %v502 = vunpack.c.h.b16 %v344
        %v503 = vunpack.c.l.b16 %v345
        %v504 = vunpack.c.h.b16 %v345
        %v505 = vunpack.c.l.b16 %v346
        %v506 = vunpack.c.h.b16 %v346
        %v507 = vunpack.c.l.b16 %v347
        %v508 = vunpack.c.h.b16 %v347
        %v509 = vunpack.c.l.b16 %v348
        %v510 = vunpack.c.h.b16 %v348
        %v511 = vunpack.c.l.b16 %v349
        %v512 = vunpack.c.h.b16 %v349
        %v513 = vunpack.c.l.b16 %v350
        %v514 = vunpack.c.h.b16 %v350
        %v515 = vunpack.c.l.b16 %v351
        %v516 = vunpack.c.h.b16 %v351
        %v517 = vunpack.c.l.b16 %v352
        %v518 = vunpack.c.h.b16 %v352
        %v519 = vunpack.c.l.b16 %v353
        %v520 = vunpack.c.h.b16 %v353
        %v521 = vunpack.c.l.b16 %v354
        %v522 = vunpack.c.h.b16 %v354
        %v523 = vunpack.c.l.b16 %v355
        %v524 = vunpack.c.h.b16 %v355
        %v525 = vunpack.c.l.b16 %v356
        %v526 = vunpack.c.h.b16 %v356
        %v527 = vunpack.c.l.b16 %v357
        %v528 = vunpack.c.h.b16 %v357
        %v529 = vunpack.c.l.b16 %v358
        %v530 = vunpack.c.h.b16 %v358
        %v531 = vunpack.c.l.b16 %v359
        %v532 = vunpack.c.h.b16 %v359
        %v533 = vunpack.c.l.b16 %v360
        %v534 = vunpack.c.h.b16 %v360
        %v535 = vunpack.c.l.b16 %v361
        %v536 = vunpack.c.h.b16 %v361
        %v537 = vunpack.c.l.b16 %v362
        %v538 = vunpack.c.h.b16 %v362
        %v539 = vunpack.c.l.b16 %v363
        %v540 = vunpack.c.h.b16 %v363
        %v541 = vunpack.c.l.b16 %v364
        %v542 = vunpack.c.h.b16 %v364
        %v543 = vunpack.c.l.b16 %v365
        %v544 = vunpack.c.h.b16 %v365
        %v545 = vunpack.c.l.b16 %v366
        %v546 = vunpack.c.h.b16 %v366
        %v547 = vunpack.c.l.b16 %v367
        %v548 = vunpack.c.h.b16 %v367
        %v549 = vunpack.c.l.b16 %v368
        %v550 = vunpack.c.h.b16 %v368
        %v551 = vunpack.c.l.b16 %v369
        %v552 = vunpack.c.h.b16 %v369
        %v553 = vunpack.c.l.b16 %v370
        %v554 = vunpack.c.h.b16 %v370
        %v555 = vunpack.c.l.b16 %v371
        %v556 = vunpack.c.h.b16 %v371
        %v557 = vunpack.c.l.b16 %v372
        %v558 = vunpack.c.h.b16 %v372
        %v559 = vunpack.c.l.b16 %v373
        %v560 = vunpack.c.h.b16 %v373
        %v561 = vunpack.c.l.b16 %v374
        %v562 = vunpack.c.h.b16 %v374
        %v563 = vunpack.c.l.b16 %v375
        %v564 = vunpack.c.h.b16 %v375
        %v565 = vunpack.c.l.b16 %v376
        %v566 = vunpack.c.h.b16 %v376
        %v567 = vunpack.c.l.b16 %v377
        %v568 = vunpack.c.h.b16 %v377
        %v569 = vunpack.c.l.b16 %v378
        %v570 = vunpack.c.h.b16 %v378
        %v571 = vunpack.c.l.b16 %v379
        %v572 = vunpack.c.h.b16 %v379
        %v573 = vunpack.c.l.b16 %v380
        %v574 = vunpack.c.h.b16 %v380
        %v575 = vunpack.c.l.b16 %v381
        %v576 = vunpack.c.h.b16 %v381
        %v577 = vunpack.c.l.b16 %v382
        %v578 = vunpack.c.h.b16 %v382
        %v579 = vunpack.c.l.b16 %v383
        %v580 = vunpack.c.h.b16 %v383
        %v581 = vunpack.c.l.b16 %v384
        %v582 = vunpack.c.h.b16 %v384
        %v583 = vpack.c.b16 %v487, %v455
        %v584 = vpack.c.b16 %v488, %v456
        %v585 = vpack.c.b16 %v489, %v457
        %v586 = vpack.c.b16 %v490, %v458
        %v587 = vpack.c.b16 %v491, %v459
        %v588 = vpack.c.b16 %v492, %v460
        %v589 = vpack.c.b16 %v493, %v461
        %v590 = vpack.c.b16 %v494, %v462
        %v591 = vpack.c.b16 %v495, %v463
        %v592 = vpack.c.b16 %v496, %v464
        %v593 = vpack.c.b16 %v497, %v465
        %v594 = vpack.c.b16 %v498, %v466
        %v595 = vpack.c.b16 %v499, %v467
        %v596 = vpack.c.b16 %v500, %v468
        %v597 = vpack.c.b16 %v501, %v469
        %v598 = vpack.c.b16 %v502, %v470
        %v599 = vpack.c.b16 %v503, %v471
        %v600 = vpack.c.b16 %v504, %v472
        %v601 = vpack.c.b16 %v505, %v473
        %v602 = vpack.c.b16 %v506, %v474
        %v603 = vpack.c.b16 %v507, %v475
        %v604 = vpack.c.b16 %v508, %v476
        %v605 = vpack.c.b16 %v509, %v477
        %v606 = vpack.c.b16 %v510, %v478
        %v607 = vpack.c.b16 %v511, %v479
        %v608 = vpack.c.b16 %v512, %v480
        %v609 = vpack.c.b16 %v513, %v481
        %v610 = vpack.c.b16 %v514, %v482
        %v611 = vpack.c.b16 %v515, %v483
        %v612 = vpack.c.b16 %v516, %v484
        %v613 = vpack.c.b16 %v517, %v485
        %v614 = vpack.c.b16 %v518, %v486
        %v615 = vpack.c.b16 %v551, %v519
        %v616 = vpack.c.b16 %v552, %v520
        %v617 = vpack.c.b16 %v553, %v521
        %v618 = vpack.c.b16 %v554, %v522
        %v619 = vpack.c.b16 %v555, %v523
        %v620 = vpack.c.b16 %v556, %v524
        %v621 = vpack.c.b16 %v557, %v525
        %v622 = vpack.c.b16 %v558, %v526
        %v623 = vpack.c.b16 %v559, %v527
        %v624 = vpack.c.b16 %v560, %v528
        %v625 = vpack.c.b16 %v561, %v529
        %v626 = vpack.c.b16 %v562, %v530
        %v627 = vpack.c.b16 %v563, %v531
        %v628 = vpack.c.b16 %v564, %v532
        %v629 = vpack.c.b16 %v565, %v533
        %v630 = vpack.c.b16 %v566, %v534
        %v631 = vpack.c.b16 %v567, %v535
        %v632 = vpack.c.b16 %v568, %v536
        %v633 = vpack.c.b16 %v569, %v537
        %v634 = vpack.c.b16 %v570, %v538
        %v635 = vpack.c.b16 %v571, %v539
        %v636 = vpack.c.b16 %v572, %v540
        %v637 = vpack.c.b16 %v573, %v541
        %v638 = vpack.c.b16 %v574, %v542
        %v639 = vpack.c.b16 %v575, %v543
        %v640 = vpack.c.b16 %v576, %v544
        %v641 = vpack.c.b16 %v577, %v545
        %v642 = vpack.c.b16 %v578, %v546
        %v643 = vpack.c.b16 %v579, %v547
        %v644 = vpack.c.b16 %v580, %v548
        %v645 = vpack.c.b16 %v581, %v549
        %v646 = vpack.c.b16 %v582, %v550
        %vm679 = vcmask 220160
        %v681 = vsel %vm679, %v320, 0
        %vm683 = vcmask 1044480
        %vm684 = vcmask 1045504
        %v685 = vsel %vm683, 4294967295, 65535
        %v686 = vsel %vm684, %v685, 0
        %v688 = vand.u32 %v615, %v686
        %v691 = vand.u32 %v616, %v686
        %v694 = vand.u32 %v617, %v686
        %v697 = vand.u32 %v618, %v686
        %v700 = vand.u32 %v619, %v686
        %v703 = vand.u32 %v620, %v686
        %v706 = vand.u32 %v621, %v686
        %v709 = vand.u32 %v622, %v686
        %v712 = vand.u32 %v623, %v686
        %v715 = vand.u32 %v624, %v686
        %v718 = vand.u32 %v625, %v686
        %v721 = vand.u32 %v626, %v686
        %v724 = vand.u32 %v627, %v686
        %v727 = vand.u32 %v628, %v686
        %v730 = vand.u32 %v629, %v686
        %v733 = vand.u32 %v630, %v686
        %v736 = vand.u32 %v631, %v686
        %v739 = vand.u32 %v632, %v686
        %v742 = vand.u32 %v633, %v686
        %v745 = vand.u32 %v634, %v686
        %v748 = vand.u32 %v635, %v686
        %v751 = vand.u32 %v636, %v686
        %v754 = vand.u32 %v637, %v686
        %v757 = vand.u32 %v638, %v686
        %v760 = vand.u32 %v639, %v686
        %v763 = vand.u32 %v640, %v686
        %v766 = vand.u32 %v641, %v686
        %v769 = vand.u32 %v642, %v686
        %v772 = vand.u32 %v643, %v686
        %v775 = vand.u32 %v644, %v686
        %v778 = vand.u32 %v645, %v686
        %v781 = vand.u32 %v646, %v686
        %783 = vmatprep.subr.bf16.mxu0 0
        %784 = vmatpush1.bf16.msra.mxu0 0
        %785 = vmatprep.subr.bf16.mxu0 0
        %786 = vmatpush1.bf16.msra.mxu0 0
        %787 = vmatprep.subr.bf16.mxu0 0
        %788 = vmatpush1.bf16.msra.mxu0 0
        %789 = vmatprep.subr.bf16.mxu0 0
        %790 = vmatpush1.bf16.msra.mxu0 0
        %791 = vmatprep.subr.bf16.mxu0 0
        %792 = vmatpush1.bf16.msra.mxu0 0
        %793 = vmatprep.subr.bf16.mxu0 0
        %794 = vmatpush1.bf16.msra.mxu0 0
        %795 = vmatprep.subr.bf16.mxu0 %v691
        %796 = vmatpush1.bf16.msra.mxu0 %v688
        %797 = vmatprep.subr.bf16.mxu0 %v584
        %798 = vmatpush1.bf16.msra.mxu0 %v583
        %799 = vmatprep.subr.bf16.mxu0 0
        %800 = vmatpush2.bf16.msra.mxu0 0
        %801 = vmatprep.subr.bf16.mxu0 0
        %802 = vmatpush2.bf16.msra.mxu0 0
        %803 = vmatprep.subr.bf16.mxu0 0
        %804 = vmatpush2.bf16.msra.mxu0 0
        %805 = vmatprep.subr.bf16.mxu0 0
        %806 = vmatpush2.bf16.msra.mxu0 0
        %807 = vmatprep.subr.bf16.mxu0 0
        %808 = vmatpush2.bf16.msra.mxu0 0
        %809 = vmatprep.subr.bf16.mxu0 0
        %810 = vmatpush2.bf16.msra.mxu0 0
        %811 = vmatprep.subr.bf16.mxu0 0
        %812 = vmatpush2.bf16.msra.mxu0 0
        %813 = vmatprep.subr.bf16.mxu0 0
        %814 = vmatpush2.bf16.msra.mxu0 0
        %815 = vmatprep.mubr.bf16.mxu0 0
        %816 = vmatmul.mubr.bf16.gmra.mxu0 %v681
        %v817 = vpop.f32.mrf.mxu0
        %v818 = vadd.f32 %v389, %v817
        %v819 = vpop.f32.mrf.mxu0
        %v820 = vadd.f32 %v389, %v819
        %v821 = vpop.f32.mrf.mxu0
        %v822 = vpop.f32.mrf.mxu0
        %823 = vdwg.mxu0
        %824 = vmatprep.subr.bf16.mxu0 0
        %825 = vmatpush1.bf16.msra.mxu0 0
        %826 = vmatprep.subr.bf16.mxu0 0
        %827 = vmatpush1.bf16.msra.mxu0 0
        %828 = vmatprep.subr.bf16.mxu0 0
        %829 = vmatpush1.bf16.msra.mxu0 0
        %830 = vmatprep.subr.bf16.mxu0 0
        %831 = vmatpush1.bf16.msra.mxu0 0
        %832 = vmatprep.subr.bf16.mxu0 0
        %833 = vmatpush1.bf16.msra.mxu0 0
        %834 = vmatprep.subr.bf16.mxu0 0
        %835 = vmatpush1.bf16.msra.mxu0 0
        %836 = vmatprep.subr.bf16.mxu0 %v697
        %837 = vmatpush1.bf16.msra.mxu0 %v694
        %838 = vmatprep.subr.bf16.mxu0 %v586
        %839 = vmatpush1.bf16.msra.mxu0 %v585
        %840 = vmatprep.subr.bf16.mxu0 0
        %841 = vmatpush2.bf16.msra.mxu0 0
        %842 = vmatprep.subr.bf16.mxu0 0
        %843 = vmatpush2.bf16.msra.mxu0 0
        %844 = vmatprep.subr.bf16.mxu0 0
        %845 = vmatpush2.bf16.msra.mxu0 0
        %846 = vmatprep.subr.bf16.mxu0 0
        %847 = vmatpush2.bf16.msra.mxu0 0
        %848 = vmatprep.subr.bf16.mxu0 0
        %849 = vmatpush2.bf16.msra.mxu0 0
        %850 = vmatprep.subr.bf16.mxu0 0
        %851 = vmatpush2.bf16.msra.mxu0 0
        %852 = vmatprep.subr.bf16.mxu0 0
        %853 = vmatpush2.bf16.msra.mxu0 0
        %854 = vmatprep.subr.bf16.mxu0 0
        %855 = vmatpush2.bf16.msra.mxu0 0
        %856 = vmatprep.mubr.bf16.mxu0 0
        %857 = vmatmul.mubr.bf16.gmra.mxu0 %v681
        %v858 = vpop.f32.mrf.mxu0
        %v859 = vadd.f32 %v389, %v858
        %v860 = vpop.f32.mrf.mxu0
        %v861 = vadd.f32 %v389, %v860
        %v862 = vpop.f32.mrf.mxu0
        %v863 = vpop.f32.mrf.mxu0
        %864 = vdwg.mxu0
        %865 = vmatprep.subr.bf16.mxu0 0
        %866 = vmatpush1.bf16.msra.mxu0 0
        %867 = vmatprep.subr.bf16.mxu0 0
        %868 = vmatpush1.bf16.msra.mxu0 0
        %869 = vmatprep.subr.bf16.mxu0 0
        %870 = vmatpush1.bf16.msra.mxu0 0
        %871 = vmatprep.subr.bf16.mxu0 0
        %872 = vmatpush1.bf16.msra.mxu0 0
        %873 = vmatprep.subr.bf16.mxu0 0
        %874 = vmatpush1.bf16.msra.mxu0 0
        %875 = vmatprep.subr.bf16.mxu0 0
        %876 = vmatpush1.bf16.msra.mxu0 0
        %877 = vmatprep.subr.bf16.mxu0 %v703
        %878 = vmatpush1.bf16.msra.mxu0 %v700
        %879 = vmatprep.subr.bf16.mxu0 %v588
        %880 = vmatpush1.bf16.msra.mxu0 %v587
        %881 = vmatprep.subr.bf16.mxu0 0
        %882 = vmatpush2.bf16.msra.mxu0 0
        %883 = vmatprep.subr.bf16.mxu0 0
        %884 = vmatpush2.bf16.msra.mxu0 0
        %885 = vmatprep.subr.bf16.mxu0 0
        %886 = vmatpush2.bf16.msra.mxu0 0
        %887 = vmatprep.subr.bf16.mxu0 0
        %888 = vmatpush2.bf16.msra.mxu0 0
        %889 = vmatprep.subr.bf16.mxu0 0
        %890 = vmatpush2.bf16.msra.mxu0 0
        %891 = vmatprep.subr.bf16.mxu0 0
        %892 = vmatpush2.bf16.msra.mxu0 0
        %893 = vmatprep.subr.bf16.mxu0 0
        %894 = vmatpush2.bf16.msra.mxu0 0
        %895 = vmatprep.subr.bf16.mxu0 0
        %896 = vmatpush2.bf16.msra.mxu0 0
        %897 = vmatprep.mubr.bf16.mxu0 0
        %898 = vmatmul.mubr.bf16.gmra.mxu0 %v681
        %v899 = vpop.f32.mrf.mxu0
        %v900 = vadd.f32 %v389, %v899
        %v901 = vpop.f32.mrf.mxu0
        %v902 = vadd.f32 %v389, %v901
        %v903 = vpop.f32.mrf.mxu0
        %v904 = vpop.f32.mrf.mxu0
        %905 = vdwg.mxu0
        %906 = vmatprep.subr.bf16.mxu0 0
        %907 = vmatpush1.bf16.msra.mxu0 0
        %908 = vmatprep.subr.bf16.mxu0 0
        %909 = vmatpush1.bf16.msra.mxu0 0
        %910 = vmatprep.subr.bf16.mxu0 0
        %911 = vmatpush1.bf16.msra.mxu0 0
        %912 = vmatprep.subr.bf16.mxu0 0
        %913 = vmatpush1.bf16.msra.mxu0 0
        %914 = vmatprep.subr.bf16.mxu0 0
        %915 = vmatpush1.bf16.msra.mxu0 0
        %916 = vmatprep.subr.bf16.mxu0 0
        %917 = vmatpush1.bf16.msra.mxu0 0
        %918 = vmatprep.subr.bf16.mxu0 %v709
        %919 = vmatpush1.bf16.msra.mxu0 %v706
        %920 = vmatprep.subr.bf16.mxu0 %v590
        %921 = vmatpush1.bf16.msra.mxu0 %v589
        %922 = vmatprep.subr.bf16.mxu0 0
        %923 = vmatpush2.bf16.msra.mxu0 0
        %924 = vmatprep.subr.bf16.mxu0 0
        %925 = vmatpush2.bf16.msra.mxu0 0
        %926 = vmatprep.subr.bf16.mxu0 0
        %927 = vmatpush2.bf16.msra.mxu0 0
        %928 = vmatprep.subr.bf16.mxu0 0
        %929 = vmatpush2.bf16.msra.mxu0 0
        %930 = vmatprep.subr.bf16.mxu0 0
        %931 = vmatpush2.bf16.msra.mxu0 0
        %932 = vmatprep.subr.bf16.mxu0 0
        %933 = vmatpush2.bf16.msra.mxu0 0
        %934 = vmatprep.subr.bf16.mxu0 0
        %935 = vmatpush2.bf16.msra.mxu0 0
        %936 = vmatprep.subr.bf16.mxu0 0
        %937 = vmatpush2.bf16.msra.mxu0 0
        %938 = vmatprep.mubr.bf16.mxu0 0
        %939 = vmatmul.mubr.bf16.gmra.mxu0 %v681
        %v940 = vpop.f32.mrf.mxu0
        %v941 = vadd.f32 %v389, %v940
        %v942 = vpop.f32.mrf.mxu0
        %v943 = vadd.f32 %v389, %v942
        %v944 = vpop.f32.mrf.mxu0
        %v945 = vpop.f32.mrf.mxu0
        %946 = vdwg.mxu0
        %947 = vmatprep.subr.bf16.mxu0 0
        %948 = vmatpush1.bf16.msra.mxu0 0
        %949 = vmatprep.subr.bf16.mxu0 0
        %950 = vmatpush1.bf16.msra.mxu0 0
        %951 = vmatprep.subr.bf16.mxu0 0
        %952 = vmatpush1.bf16.msra.mxu0 0
        %953 = vmatprep.subr.bf16.mxu0 0
        %954 = vmatpush1.bf16.msra.mxu0 0
        %955 = vmatprep.subr.bf16.mxu0 0
        %956 = vmatpush1.bf16.msra.mxu0 0
        %957 = vmatprep.subr.bf16.mxu0 0
        %958 = vmatpush1.bf16.msra.mxu0 0
        %959 = vmatprep.subr.bf16.mxu0 %v715
        %960 = vmatpush1.bf16.msra.mxu0 %v712
        %961 = vmatprep.subr.bf16.mxu0 %v592
        %962 = vmatpush1.bf16.msra.mxu0 %v591
        %963 = vmatprep.subr.bf16.mxu0 0
        %964 = vmatpush2.bf16.msra.mxu0 0
        %965 = vmatprep.subr.bf16.mxu0 0
        %966 = vmatpush2.bf16.msra.mxu0 0
        %967 = vmatprep.subr.bf16.mxu0 0
        %968 = vmatpush2.bf16.msra.mxu0 0
        %969 = vmatprep.subr.bf16.mxu0 0
        %970 = vmatpush2.bf16.msra.mxu0 0
        %971 = vmatprep.subr.bf16.mxu0 0
        %972 = vmatpush2.bf16.msra.mxu0 0
        %973 = vmatprep.subr.bf16.mxu0 0
        %974 = vmatpush2.bf16.msra.mxu0 0
        %975 = vmatprep.subr.bf16.mxu0 0
        %976 = vmatpush2.bf16.msra.mxu0 0
        %977 = vmatprep.subr.bf16.mxu0 0
        %978 = vmatpush2.bf16.msra.mxu0 0
        %979 = vmatprep.mubr.bf16.mxu0 0
        %980 = vmatmul.mubr.bf16.gmra.mxu0 %v681
        %v981 = vpop.f32.mrf.mxu0
        %v982 = vadd.f32 %v389, %v981
        %v983 = vpop.f32.mrf.mxu0
        %v984 = vadd.f32 %v389, %v983
        %v985 = vpop.f32.mrf.mxu0
        %v986 = vpop.f32.mrf.mxu0
        %987 = vdwg.mxu0
        %988 = vmatprep.subr.bf16.mxu0 0
        %989 = vmatpush1.bf16.msra.mxu0 0
        %990 = vmatprep.subr.bf16.mxu0 0
        %991 = vmatpush1.bf16.msra.mxu0 0
        %992 = vmatprep.subr.bf16.mxu0 0
        %993 = vmatpush1.bf16.msra.mxu0 0
        %994 = vmatprep.subr.bf16.mxu0 0
        %995 = vmatpush1.bf16.msra.mxu0 0
        %996 = vmatprep.subr.bf16.mxu0 0
        %997 = vmatpush1.bf16.msra.mxu0 0
        %998 = vmatprep.subr.bf16.mxu0 0
        %999 = vmatpush1.bf16.msra.mxu0 0
        %1000 = vmatprep.subr.bf16.mxu0 %v721
        %1001 = vmatpush1.bf16.msra.mxu0 %v718
        %1002 = vmatprep.subr.bf16.mxu0 %v594
        %1003 = vmatpush1.bf16.msra.mxu0 %v593
        %1004 = vmatprep.subr.bf16.mxu0 0
        %1005 = vmatpush2.bf16.msra.mxu0 0
        %1006 = vmatprep.subr.bf16.mxu0 0
        %1007 = vmatpush2.bf16.msra.mxu0 0
        %1008 = vmatprep.subr.bf16.mxu0 0
        %1009 = vmatpush2.bf16.msra.mxu0 0
        %1010 = vmatprep.subr.bf16.mxu0 0
        %1011 = vmatpush2.bf16.msra.mxu0 0
        %1012 = vmatprep.subr.bf16.mxu0 0
        %1013 = vmatpush2.bf16.msra.mxu0 0
        %1014 = vmatprep.subr.bf16.mxu0 0
        %1015 = vmatpush2.bf16.msra.mxu0 0
        %1016 = vmatprep.subr.bf16.mxu0 0
        %1017 = vmatpush2.bf16.msra.mxu0 0
        %1018 = vmatprep.subr.bf16.mxu0 0
        %1019 = vmatpush2.bf16.msra.mxu0 0
        %1020 = vmatprep.mubr.bf16.mxu0 0
        %1021 = vmatmul.mubr.bf16.gmra.mxu0 %v681
        %v1022 = vpop.f32.mrf.mxu0
        %v1023 = vadd.f32 %v389, %v1022
        %v1024 = vpop.f32.mrf.mxu0
        %v1025 = vadd.f32 %v389, %v1024
        %v1026 = vpop.f32.mrf.mxu0
        %v1027 = vpop.f32.mrf.mxu0
        %1028 = vdwg.mxu0
        %1029 = vmatprep.subr.bf16.mxu0 0
        %1030 = vmatpush1.bf16.msra.mxu0 0
        %1031 = vmatprep.subr.bf16.mxu0 0
        %1032 = vmatpush1.bf16.msra.mxu0 0
        %1033 = vmatprep.subr.bf16.mxu0 0
        %1034 = vmatpush1.bf16.msra.mxu0 0
        %1035 = vmatprep.subr.bf16.mxu0 0
        %1036 = vmatpush1.bf16.msra.mxu0 0
        %1037 = vmatprep.subr.bf16.mxu0 0
        %1038 = vmatpush1.bf16.msra.mxu0 0
        %1039 = vmatprep.subr.bf16.mxu0 0
        %1040 = vmatpush1.bf16.msra.mxu0 0
        %1041 = vmatprep.subr.bf16.mxu0 %v727
        %1042 = vmatpush1.bf16.msra.mxu0 %v724
        %1043 = vmatprep.subr.bf16.mxu0 %v596
        %1044 = vmatpush1.bf16.msra.mxu0 %v595
        %1045 = vmatprep.subr.bf16.mxu0 0
        %1046 = vmatpush2.bf16.msra.mxu0 0
        %1047 = vmatprep.subr.bf16.mxu0 0
        %1048 = vmatpush2.bf16.msra.mxu0 0
        %1049 = vmatprep.subr.bf16.mxu0 0
        %1050 = vmatpush2.bf16.msra.mxu0 0
        %1051 = vmatprep.subr.bf16.mxu0 0
        %1052 = vmatpush2.bf16.msra.mxu0 0
        %1053 = vmatprep.subr.bf16.mxu0 0
        %1054 = vmatpush2.bf16.msra.mxu0 0
        %1055 = vmatprep.subr.bf16.mxu0 0
        %1056 = vmatpush2.bf16.msra.mxu0 0
        %1057 = vmatprep.subr.bf16.mxu0 0
        %1058 = vmatpush2.bf16.msra.mxu0 0
        %1059 = vmatprep.subr.bf16.mxu0 0
        %1060 = vmatpush2.bf16.msra.mxu0 0
        %1061 = vmatprep.mubr.bf16.mxu0 0
        %1062 = vmatmul.mubr.bf16.gmra.mxu0 %v681
        %v1063 = vpop.f32.mrf.mxu0
        %v1064 = vadd.f32 %v389, %v1063
        %v1065 = vpop.f32.mrf.mxu0
        %v1066 = vadd.f32 %v389, %v1065
        %v1067 = vpop.f32.mrf.mxu0
        %v1068 = vpop.f32.mrf.mxu0
        %1069 = vdwg.mxu0
        %1070 = vmatprep.subr.bf16.mxu0 0
        %1071 = vmatpush1.bf16.msra.mxu0 0
        %1072 = vmatprep.subr.bf16.mxu0 0
        %1073 = vmatpush1.bf16.msra.mxu0 0
        %1074 = vmatprep.subr.bf16.mxu0 0
        %1075 = vmatpush1.bf16.msra.mxu0 0
        %1076 = vmatprep.subr.bf16.mxu0 0
        %1077 = vmatpush1.bf16.msra.mxu0 0
        %1078 = vmatprep.subr.bf16.mxu0 0
        %1079 = vmatpush1.bf16.msra.mxu0 0
        %1080 = vmatprep.subr.bf16.mxu0 0
        %1081 = vmatpush1.bf16.msra.mxu0 0
        %1082 = vmatprep.subr.bf16.mxu0 %v733
        %1083 = vmatpush1.bf16.msra.mxu0 %v730
        %1084 = vmatprep.subr.bf16.mxu0 %v598
        %1085 = vmatpush1.bf16.msra.mxu0 %v597
        %1086 = vmatprep.subr.bf16.mxu0 0
        %1087 = vmatpush2.bf16.msra.mxu0 0
        %1088 = vmatprep.subr.bf16.mxu0 0
        %1089 = vmatpush2.bf16.msra.mxu0 0
        %1090 = vmatprep.subr.bf16.mxu0 0
        %1091 = vmatpush2.bf16.msra.mxu0 0
        %1092 = vmatprep.subr.bf16.mxu0 0
        %1093 = vmatpush2.bf16.msra.mxu0 0
        %1094 = vmatprep.subr.bf16.mxu0 0
        %1095 = vmatpush2.bf16.msra.mxu0 0
        %1096 = vmatprep.subr.bf16.mxu0 0
        %1097 = vmatpush2.bf16.msra.mxu0 0
        %1098 = vmatprep.subr.bf16.mxu0 0
        %1099 = vmatpush2.bf16.msra.mxu0 0
        %1100 = vmatprep.subr.bf16.mxu0 0
        %1101 = vmatpush2.bf16.msra.mxu0 0
        %1102 = vmatprep.mubr.bf16.mxu0 0
        %1103 = vmatmul.mubr.bf16.gmra.mxu0 %v681
        %v1104 = vpop.f32.mrf.mxu0
        %v1105 = vadd.f32 %v389, %v1104
        %v1106 = vpop.f32.mrf.mxu0
        %v1107 = vadd.f32 %v389, %v1106
        %v1108 = vpop.f32.mrf.mxu0
        %v1109 = vpop.f32.mrf.mxu0
        %1110 = vdwg.mxu0
        %1111 = vmatprep.subr.bf16.mxu0 0
        %1112 = vmatpush1.bf16.msra.mxu0 0
        %1113 = vmatprep.subr.bf16.mxu0 0
        %1114 = vmatpush1.bf16.msra.mxu0 0
        %1115 = vmatprep.subr.bf16.mxu0 0
        %1116 = vmatpush1.bf16.msra.mxu0 0
        %1117 = vmatprep.subr.bf16.mxu0 0
        %1118 = vmatpush1.bf16.msra.mxu0 0
        %1119 = vmatprep.subr.bf16.mxu0 0
        %1120 = vmatpush1.bf16.msra.mxu0 0
        %1121 = vmatprep.subr.bf16.mxu0 0
        %1122 = vmatpush1.bf16.msra.mxu0 0
        %1123 = vmatprep.subr.bf16.mxu0 %v739
        %1124 = vmatpush1.bf16.msra.mxu0 %v736
        %1125 = vmatprep.subr.bf16.mxu0 %v600
        %1126 = vmatpush1.bf16.msra.mxu0 %v599
        %1127 = vmatprep.subr.bf16.mxu0 0
        %1128 = vmatpush2.bf16.msra.mxu0 0
        %1129 = vmatprep.subr.bf16.mxu0 0
        %1130 = vmatpush2.bf16.msra.mxu0 0
        %1131 = vmatprep.subr.bf16.mxu0 0
        %1132 = vmatpush2.bf16.msra.mxu0 0
        %1133 = vmatprep.subr.bf16.mxu0 0
        %1134 = vmatpush2.bf16.msra.mxu0 0
        %1135 = vmatprep.subr.bf16.mxu0 0
        %1136 = vmatpush2.bf16.msra.mxu0 0
        %1137 = vmatprep.subr.bf16.mxu0 0
        %1138 = vmatpush2.bf16.msra.mxu0 0
        %1139 = vmatprep.subr.bf16.mxu0 0
        %1140 = vmatpush2.bf16.msra.mxu0 0
        %1141 = vmatprep.subr.bf16.mxu0 0
        %1142 = vmatpush2.bf16.msra.mxu0 0
        %1143 = vmatprep.mubr.bf16.mxu0 0
        %1144 = vmatmul.mubr.bf16.gmra.mxu0 %v681
        %v1145 = vpop.f32.mrf.mxu0
        %v1146 = vadd.f32 %v389, %v1145
        %v1147 = vpop.f32.mrf.mxu0
        %v1148 = vadd.f32 %v389, %v1147
        %v1149 = vpop.f32.mrf.mxu0
        %v1150 = vpop.f32.mrf.mxu0
        %1151 = vdwg.mxu0
        %1152 = vmatprep.subr.bf16.mxu0 0
        %1153 = vmatpush1.bf16.msra.mxu0 0
        %1154 = vmatprep.subr.bf16.mxu0 0
        %1155 = vmatpush1.bf16.msra.mxu0 0
        %1156 = vmatprep.subr.bf16.mxu0 0
        %1157 = vmatpush1.bf16.msra.mxu0 0
        %1158 = vmatprep.subr.bf16.mxu0 0
        %1159 = vmatpush1.bf16.msra.mxu0 0
        %1160 = vmatprep.subr.bf16.mxu0 0
        %1161 = vmatpush1.bf16.msra.mxu0 0
        %1162 = vmatprep.subr.bf16.mxu0 0
        %1163 = vmatpush1.bf16.msra.mxu0 0
        %1164 = vmatprep.subr.bf16.mxu0 %v745
        %1165 = vmatpush1.bf16.msra.mxu0 %v742
        %1166 = vmatprep.subr.bf16.mxu0 %v602
        %1167 = vmatpush1.bf16.msra.mxu0 %v601
        %1168 = vmatprep.subr.bf16.mxu0 0
        %1169 = vmatpush2.bf16.msra.mxu0 0
        %1170 = vmatprep.subr.bf16.mxu0 0
        %1171 = vmatpush2.bf16.msra.mxu0 0
        %1172 = vmatprep.subr.bf16.mxu0 0
        %1173 = vmatpush2.bf16.msra.mxu0 0
        %1174 = vmatprep.subr.bf16.mxu0 0
        %1175 = vmatpush2.bf16.msra.mxu0 0
        %1176 = vmatprep.subr.bf16.mxu0 0
        %1177 = vmatpush2.bf16.msra.mxu0 0
        %1178 = vmatprep.subr.bf16.mxu0 0
        %1179 = vmatpush2.bf16.msra.mxu0 0
        %1180 = vmatprep.subr.bf16.mxu0 0
        %1181 = vmatpush2.bf16.msra.mxu0 0
        %1182 = vmatprep.subr.bf16.mxu0 0
        %1183 = vmatpush2.bf16.msra.mxu0 0
        %1184 = vmatprep.mubr.bf16.mxu0 0
        %1185 = vmatmul.mubr.bf16.gmra.mxu0 %v681
        %v1186 = vpop.f32.mrf.mxu0
        %v1187 = vadd.f32 %v389, %v1186
        %v1188 = vpop.f32.mrf.mxu0
        %v1189 = vadd.f32 %v389, %v1188
        %v1190 = vpop.f32.mrf.mxu0
        %v1191 = vpop.f32.mrf.mxu0
        %1192 = vdwg.mxu0
        %1193 = vmatprep.subr.bf16.mxu0 0
        %1194 = vmatpush1.bf16.msra.mxu0 0
        %1195 = vmatprep.subr.bf16.mxu0 0
        %1196 = vmatpush1.bf16.msra.mxu0 0
        %1197 = vmatprep.subr.bf16.mxu0 0
        %1198 = vmatpush1.bf16.msra.mxu0 0
        %1199 = vmatprep.subr.bf16.mxu0 0
        %1200 = vmatpush1.bf16.msra.mxu0 0
        %1201 = vmatprep.subr.bf16.mxu0 0
        %1202 = vmatpush1.bf16.msra.mxu0 0
        %1203 = vmatprep.subr.bf16.mxu0 0
        %1204 = vmatpush1.bf16.msra.mxu0 0
        %1205 = vmatprep.subr.bf16.mxu0 %v751
        %1206 = vmatpush1.bf16.msra.mxu0 %v748
        %1207 = vmatprep.subr.bf16.mxu0 %v604
        %1208 = vmatpush1.bf16.msra.mxu0 %v603
        %1209 = vmatprep.subr.bf16.mxu0 0
        %1210 = vmatpush2.bf16.msra.mxu0 0
        %1211 = vmatprep.subr.bf16.mxu0 0
        %1212 = vmatpush2.bf16.msra.mxu0 0
        %1213 = vmatprep.subr.bf16.mxu0 0
        %1214 = vmatpush2.bf16.msra.mxu0 0
        %1215 = vmatprep.subr.bf16.mxu0 0
        %1216 = vmatpush2.bf16.msra.mxu0 0
        %1217 = vmatprep.subr.bf16.mxu0 0
        %1218 = vmatpush2.bf16.msra.mxu0 0
        %1219 = vmatprep.subr.bf16.mxu0 0
        %1220 = vmatpush2.bf16.msra.mxu0 0
        %1221 = vmatprep.subr.bf16.mxu0 0
        %1222 = vmatpush2.bf16.msra.mxu0 0
        %1223 = vmatprep.subr.bf16.mxu0 0
        %1224 = vmatpush2.bf16.msra.mxu0 0
        %1225 = vmatprep.mubr.bf16.mxu0 0
        %1226 = vmatmul.mubr.bf16.gmra.mxu0 %v681
        %v1227 = vpop.f32.mrf.mxu0
        %v1228 = vadd.f32 %v389, %v1227
        %v1229 = vpop.f32.mrf.mxu0
        %v1230 = vadd.f32 %v389, %v1229
        %v1231 = vpop.f32.mrf.mxu0
        %v1232 = vpop.f32.mrf.mxu0
        %1233 = vdwg.mxu0
        %1234 = vmatprep.subr.bf16.mxu0 0
        %1235 = vmatpush1.bf16.msra.mxu0 0
        %1236 = vmatprep.subr.bf16.mxu0 0
        %1237 = vmatpush1.bf16.msra.mxu0 0
        %1238 = vmatprep.subr.bf16.mxu0 0
        %1239 = vmatpush1.bf16.msra.mxu0 0
        %1240 = vmatprep.subr.bf16.mxu0 0
        %1241 = vmatpush1.bf16.msra.mxu0 0
        %1242 = vmatprep.subr.bf16.mxu0 0
        %1243 = vmatpush1.bf16.msra.mxu0 0
        %1244 = vmatprep.subr.bf16.mxu0 0
        %1245 = vmatpush1.bf16.msra.mxu0 0
        %1246 = vmatprep.subr.bf16.mxu0 %v757
        %1247 = vmatpush1.bf16.msra.mxu0 %v754
        %1248 = vmatprep.subr.bf16.mxu0 %v606
        %1249 = vmatpush1.bf16.msra.mxu0 %v605
        %1250 = vmatprep.subr.bf16.mxu0 0
        %1251 = vmatpush2.bf16.msra.mxu0 0
        %1252 = vmatprep.subr.bf16.mxu0 0
        %1253 = vmatpush2.bf16.msra.mxu0 0
        %1254 = vmatprep.subr.bf16.mxu0 0
        %1255 = vmatpush2.bf16.msra.mxu0 0
        %1256 = vmatprep.subr.bf16.mxu0 0
        %1257 = vmatpush2.bf16.msra.mxu0 0
        %1258 = vmatprep.subr.bf16.mxu0 0
        %1259 = vmatpush2.bf16.msra.mxu0 0
        %1260 = vmatprep.subr.bf16.mxu0 0
        %1261 = vmatpush2.bf16.msra.mxu0 0
        %1262 = vmatprep.subr.bf16.mxu0 0
        %1263 = vmatpush2.bf16.msra.mxu0 0
        %1264 = vmatprep.subr.bf16.mxu0 0
        %1265 = vmatpush2.bf16.msra.mxu0 0
        %1266 = vmatprep.mubr.bf16.mxu0 0
        %1267 = vmatmul.mubr.bf16.gmra.mxu0 %v681
        %v1268 = vpop.f32.mrf.mxu0
        %v1269 = vadd.f32 %v389, %v1268
        %v1270 = vpop.f32.mrf.mxu0
        %v1271 = vadd.f32 %v389, %v1270
        %v1272 = vpop.f32.mrf.mxu0
        %v1273 = vpop.f32.mrf.mxu0
        %1274 = vdwg.mxu0
        %1275 = vmatprep.subr.bf16.mxu0 0
        %1276 = vmatpush1.bf16.msra.mxu0 0
        %1277 = vmatprep.subr.bf16.mxu0 0
        %1278 = vmatpush1.bf16.msra.mxu0 0
        %1279 = vmatprep.subr.bf16.mxu0 0
        %1280 = vmatpush1.bf16.msra.mxu0 0
        %1281 = vmatprep.subr.bf16.mxu0 0
        %1282 = vmatpush1.bf16.msra.mxu0 0
        %1283 = vmatprep.subr.bf16.mxu0 0
        %1284 = vmatpush1.bf16.msra.mxu0 0
        %1285 = vmatprep.subr.bf16.mxu0 0
        %1286 = vmatpush1.bf16.msra.mxu0 0
        %1287 = vmatprep.subr.bf16.mxu0 %v763
        %1288 = vmatpush1.bf16.msra.mxu0 %v760
        %1289 = vmatprep.subr.bf16.mxu0 %v608
        %1290 = vmatpush1.bf16.msra.mxu0 %v607
        %1291 = vmatprep.subr.bf16.mxu0 0
        %1292 = vmatpush2.bf16.msra.mxu0 0
        %1293 = vmatprep.subr.bf16.mxu0 0
        %1294 = vmatpush2.bf16.msra.mxu0 0
        %1295 = vmatprep.subr.bf16.mxu0 0
        %1296 = vmatpush2.bf16.msra.mxu0 0
        %1297 = vmatprep.subr.bf16.mxu0 0
        %1298 = vmatpush2.bf16.msra.mxu0 0
        %1299 = vmatprep.subr.bf16.mxu0 0
        %1300 = vmatpush2.bf16.msra.mxu0 0
        %1301 = vmatprep.subr.bf16.mxu0 0
        %1302 = vmatpush2.bf16.msra.mxu0 0
        %1303 = vmatprep.subr.bf16.mxu0 0
        %1304 = vmatpush2.bf16.msra.mxu0 0
        %1305 = vmatprep.subr.bf16.mxu0 0
        %1306 = vmatpush2.bf16.msra.mxu0 0
        %1307 = vmatprep.mubr.bf16.mxu0 0
        %1308 = vmatmul.mubr.bf16.gmra.mxu0 %v681
        %v1309 = vpop.f32.mrf.mxu0
        %v1310 = vadd.f32 %v389, %v1309
        %v1311 = vpop.f32.mrf.mxu0
        %v1312 = vadd.f32 %v389, %v1311
        %v1313 = vpop.f32.mrf.mxu0
        %v1314 = vpop.f32.mrf.mxu0
        %1315 = vdwg.mxu0
        %1316 = vmatprep.subr.bf16.mxu0 0
        %1317 = vmatpush1.bf16.msra.mxu0 0
        %1318 = vmatprep.subr.bf16.mxu0 0
        %1319 = vmatpush1.bf16.msra.mxu0 0
        %1320 = vmatprep.subr.bf16.mxu0 0
        %1321 = vmatpush1.bf16.msra.mxu0 0
        %1322 = vmatprep.subr.bf16.mxu0 0
        %1323 = vmatpush1.bf16.msra.mxu0 0
        %1324 = vmatprep.subr.bf16.mxu0 0
        %1325 = vmatpush1.bf16.msra.mxu0 0
        %1326 = vmatprep.subr.bf16.mxu0 0
        %1327 = vmatpush1.bf16.msra.mxu0 0
        %1328 = vmatprep.subr.bf16.mxu0 %v769
        %1329 = vmatpush1.bf16.msra.mxu0 %v766
        %1330 = vmatprep.subr.bf16.mxu0 %v610
        %1331 = vmatpush1.bf16.msra.mxu0 %v609
        %1332 = vmatprep.subr.bf16.mxu0 0
        %1333 = vmatpush2.bf16.msra.mxu0 0
        %1334 = vmatprep.subr.bf16.mxu0 0
        %1335 = vmatpush2.bf16.msra.mxu0 0
        %1336 = vmatprep.subr.bf16.mxu0 0
        %1337 = vmatpush2.bf16.msra.mxu0 0
        %1338 = vmatprep.subr.bf16.mxu0 0
        %1339 = vmatpush2.bf16.msra.mxu0 0
        %1340 = vmatprep.subr.bf16.mxu0 0
        %1341 = vmatpush2.bf16.msra.mxu0 0
        %1342 = vmatprep.subr.bf16.mxu0 0
        %1343 = vmatpush2.bf16.msra.mxu0 0
        %1344 = vmatprep.subr.bf16.mxu0 0
        %1345 = vmatpush2.bf16.msra.mxu0 0
        %1346 = vmatprep.subr.bf16.mxu0 0
        %1347 = vmatpush2.bf16.msra.mxu0 0
        %1348 = vmatprep.mubr.bf16.mxu0 0
        %1349 = vmatmul.mubr.bf16.gmra.mxu0 %v681
        %v1350 = vpop.f32.mrf.mxu0
        %v1351 = vadd.f32 %v389, %v1350
        %v1352 = vpop.f32.mrf.mxu0
        %v1353 = vadd.f32 %v389, %v1352
        %v1354 = vpop.f32.mrf.mxu0
        %v1355 = vpop.f32.mrf.mxu0
        %1356 = vdwg.mxu0
        %1357 = vmatprep.subr.bf16.mxu0 0
        %1358 = vmatpush1.bf16.msra.mxu0 0
        %1359 = vmatprep.subr.bf16.mxu0 0
        %1360 = vmatpush1.bf16.msra.mxu0 0
        %1361 = vmatprep.subr.bf16.mxu0 0
        %1362 = vmatpush1.bf16.msra.mxu0 0
        %1363 = vmatprep.subr.bf16.mxu0 0
        %1364 = vmatpush1.bf16.msra.mxu0 0
        %1365 = vmatprep.subr.bf16.mxu0 0
        %1366 = vmatpush1.bf16.msra.mxu0 0
        %1367 = vmatprep.subr.bf16.mxu0 0
        %1368 = vmatpush1.bf16.msra.mxu0 0
        %1369 = vmatprep.subr.bf16.mxu0 %v775
        %1370 = vmatpush1.bf16.msra.mxu0 %v772
        %1371 = vmatprep.subr.bf16.mxu0 %v612
        %1372 = vmatpush1.bf16.msra.mxu0 %v611
        %1373 = vmatprep.subr.bf16.mxu0 0
        %1374 = vmatpush2.bf16.msra.mxu0 0
        %1375 = vmatprep.subr.bf16.mxu0 0
        %1376 = vmatpush2.bf16.msra.mxu0 0
        %1377 = vmatprep.subr.bf16.mxu0 0
        %1378 = vmatpush2.bf16.msra.mxu0 0
        %1379 = vmatprep.subr.bf16.mxu0 0
        %1380 = vmatpush2.bf16.msra.mxu0 0
        %1381 = vmatprep.subr.bf16.mxu0 0
        %1382 = vmatpush2.bf16.msra.mxu0 0
        %1383 = vmatprep.subr.bf16.mxu0 0
        %1384 = vmatpush2.bf16.msra.mxu0 0
        %1385 = vmatprep.subr.bf16.mxu0 0
        %1386 = vmatpush2.bf16.msra.mxu0 0
        %1387 = vmatprep.subr.bf16.mxu0 0
        %1388 = vmatpush2.bf16.msra.mxu0 0
        %1389 = vmatprep.mubr.bf16.mxu0 0
        %1390 = vmatmul.mubr.bf16.gmra.mxu0 %v681
        %v1391 = vpop.f32.mrf.mxu0
        %v1392 = vadd.f32 %v389, %v1391
        %v1393 = vpop.f32.mrf.mxu0
        %v1394 = vadd.f32 %v389, %v1393
        %v1395 = vpop.f32.mrf.mxu0
        %v1396 = vpop.f32.mrf.mxu0
        %1397 = vdwg.mxu0
        %1398 = vmatprep.subr.bf16.mxu0 0
        %1399 = vmatpush1.bf16.msra.mxu0 0
        %1400 = vmatprep.subr.bf16.mxu0 0
        %1401 = vmatpush1.bf16.msra.mxu0 0
        %1402 = vmatprep.subr.bf16.mxu0 0
        %1403 = vmatpush1.bf16.msra.mxu0 0
        %1404 = vmatprep.subr.bf16.mxu0 0
        %1405 = vmatpush1.bf16.msra.mxu0 0
        %1406 = vmatprep.subr.bf16.mxu0 0
        %1407 = vmatpush1.bf16.msra.mxu0 0
        %1408 = vmatprep.subr.bf16.mxu0 0
        %1409 = vmatpush1.bf16.msra.mxu0 0
        %1410 = vmatprep.subr.bf16.mxu0 %v781
        %1411 = vmatpush1.bf16.msra.mxu0 %v778
        %1412 = vmatprep.subr.bf16.mxu0 %v614
        %1413 = vmatpush1.bf16.msra.mxu0 %v613
        %1414 = vmatprep.subr.bf16.mxu0 0
        %1415 = vmatpush2.bf16.msra.mxu0 0
        %1416 = vmatprep.subr.bf16.mxu0 0
        %1417 = vmatpush2.bf16.msra.mxu0 0
        %1418 = vmatprep.subr.bf16.mxu0 0
        %1419 = vmatpush2.bf16.msra.mxu0 0
        %1420 = vmatprep.subr.bf16.mxu0 0
        %1421 = vmatpush2.bf16.msra.mxu0 0
        %1422 = vmatprep.subr.bf16.mxu0 0
        %1423 = vmatpush2.bf16.msra.mxu0 0
        %1424 = vmatprep.subr.bf16.mxu0 0
        %1425 = vmatpush2.bf16.msra.mxu0 0
        %1426 = vmatprep.subr.bf16.mxu0 0
        %1427 = vmatpush2.bf16.msra.mxu0 0
        %1428 = vmatprep.subr.bf16.mxu0 0
        %1429 = vmatpush2.bf16.msra.mxu0 0
        %1430 = vmatprep.mubr.bf16.mxu0 0
        %1431 = vmatmul.mubr.bf16.gmra.mxu0 %v681
        %v1432 = vpop.f32.mrf.mxu0
        %v1433 = vadd.f32 %v389, %v1432
        %v1434 = vpop.f32.mrf.mxu0
        %v1435 = vadd.f32 %v389, %v1434
        %v1436 = vpop.f32.mrf.mxu0
        %v1437 = vpop.f32.mrf.mxu0
        %1438 = vdwg.mxu0
        %vm1439 = vcmp.ge.f32.partialorder %v818, 0.0
        %vm1440 = vcmp.ge.f32.partialorder %v820, 0.0
        %vm1441 = vcmp.ge.f32.partialorder %v859, 0.0
        %vm1442 = vcmp.ge.f32.partialorder %v861, 0.0
        %vm1443 = vcmp.ge.f32.partialorder %v900, 0.0
        %vm1444 = vcmp.ge.f32.partialorder %v902, 0.0
        %vm1445 = vcmp.ge.f32.partialorder %v941, 0.0
        %vm1446 = vcmp.ge.f32.partialorder %v943, 0.0
        %vm1447 = vcmp.ge.f32.partialorder %v982, 0.0
        %vm1448 = vcmp.ge.f32.partialorder %v984, 0.0
        %vm1449 = vcmp.ge.f32.partialorder %v1023, 0.0
        %vm1450 = vcmp.ge.f32.partialorder %v1025, 0.0
        %vm1451 = vcmp.ge.f32.partialorder %v1064, 0.0
        %vm1452 = vcmp.ge.f32.partialorder %v1066, 0.0
        %vm1453 = vcmp.ge.f32.partialorder %v1105, 0.0
        %vm1454 = vcmp.ge.f32.partialorder %v1107, 0.0
        %vm1455 = vcmp.ge.f32.partialorder %v1146, 0.0
        %vm1456 = vcmp.ge.f32.partialorder %v1148, 0.0
        %vm1457 = vcmp.ge.f32.partialorder %v1187, 0.0
        %vm1458 = vcmp.ge.f32.partialorder %v1189, 0.0
        %vm1459 = vcmp.ge.f32.partialorder %v1228, 0.0
        %vm1460 = vcmp.ge.f32.partialorder %v1230, 0.0
        %vm1461 = vcmp.ge.f32.partialorder %v1269, 0.0
        %vm1462 = vcmp.ge.f32.partialorder %v1271, 0.0
        %vm1463 = vcmp.ge.f32.partialorder %v1310, 0.0
        %vm1464 = vcmp.ge.f32.partialorder %v1312, 0.0
        %vm1465 = vcmp.ge.f32.partialorder %v1351, 0.0
        %vm1466 = vcmp.ge.f32.partialorder %v1353, 0.0
        %vm1467 = vcmp.ge.f32.partialorder %v1392, 0.0
        %vm1468 = vcmp.ge.f32.partialorder %v1394, 0.0
        %vm1469 = vcmp.ge.f32.partialorder %v1433, 0.0
        %vm1470 = vcmp.ge.f32.partialorder %v1435, 0.0
        %v1471 = vmul.f32 %v818, 0.01
        %v1472 = vmul.f32 %v820, 0.01
        %v1473 = vmul.f32 %v859, 0.01
        %v1474 = vmul.f32 %v861, 0.01
        %v1475 = vmul.f32 %v900, 0.01
        %v1476 = vmul.f32 %v902, 0.01
        %v1477 = vmul.f32 %v941, 0.01
        %v1478 = vmul.f32 %v943, 0.01
        %v1479 = vmul.f32 %v982, 0.01
        %v1480 = vmul.f32 %v984, 0.01
        %v1481 = vmul.f32 %v1023, 0.01
        %v1482 = vmul.f32 %v1025, 0.01
        %v1483 = vmul.f32 %v1064, 0.01
        %v1484 = vmul.f32 %v1066, 0.01
        %v1485 = vmul.f32 %v1105, 0.01
        %v1486 = vmul.f32 %v1107, 0.01
        %v1487 = vmul.f32 %v1146, 0.01
        %v1488 = vmul.f32 %v1148, 0.01
        %v1489 = vmul.f32 %v1187, 0.01
        %v1490 = vmul.f32 %v1189, 0.01
        %v1491 = vmul.f32 %v1228, 0.01
        %v1492 = vmul.f32 %v1230, 0.01
        %v1493 = vmul.f32 %v1269, 0.01
        %v1494 = vmul.f32 %v1271, 0.01
        %v1495 = vmul.f32 %v1310, 0.01
        %v1496 = vmul.f32 %v1312, 0.01
        %v1497 = vmul.f32 %v1351, 0.01
        %v1498 = vmul.f32 %v1353, 0.01
        %v1499 = vmul.f32 %v1392, 0.01
        %v1500 = vmul.f32 %v1394, 0.01
        %v1501 = vmul.f32 %v1433, 0.01
        %v1502 = vmul.f32 %v1435, 0.01
        %v1503 = vsel %vm1439, %v818, %v1471
        %v1504 = vsel %vm1440, %v820, %v1472
        %v1505 = vsel %vm1441, %v859, %v1473
        %v1506 = vsel %vm1442, %v861, %v1474
        %v1507 = vsel %vm1443, %v900, %v1475
        %v1508 = vsel %vm1444, %v902, %v1476
        %v1509 = vsel %vm1445, %v941, %v1477
        %v1510 = vsel %vm1446, %v943, %v1478
        %v1511 = vsel %vm1447, %v982, %v1479
        %v1512 = vsel %vm1448, %v984, %v1480
        %v1513 = vsel %vm1449, %v1023, %v1481
        %v1514 = vsel %vm1450, %v1025, %v1482
        %v1515 = vsel %vm1451, %v1064, %v1483
        %v1516 = vsel %vm1452, %v1066, %v1484
        %v1517 = vsel %vm1453, %v1105, %v1485
        %v1518 = vsel %vm1454, %v1107, %v1486
        %v1519 = vsel %vm1455, %v1146, %v1487
        %v1520 = vsel %vm1456, %v1148, %v1488
        %v1521 = vsel %vm1457, %v1187, %v1489
        %v1522 = vsel %vm1458, %v1189, %v1490
        %v1523 = vsel %vm1459, %v1228, %v1491
        %v1524 = vsel %vm1460, %v1230, %v1492
        %v1525 = vsel %vm1461, %v1269, %v1493
        %v1526 = vsel %vm1462, %v1271, %v1494
        %v1527 = vsel %vm1463, %v1310, %v1495
        %v1528 = vsel %vm1464, %v1312, %v1496
        %v1529 = vsel %vm1465, %v1351, %v1497
        %v1530 = vsel %vm1466, %v1353, %v1498
        %v1531 = vsel %vm1467, %v1392, %v1499
        %v1532 = vsel %vm1468, %v1394, %v1500
        %v1533 = vsel %vm1469, %v1433, %v1501
        %v1534 = vsel %vm1470, %v1435, %v1502
        %v1535 = vpack.c.bf16 %v1503, %v1503
        %v1536 = vpack.c.bf16 %v1504, %v1504
        %v1537 = vpack.c.bf16 %v1505, %v1505
        %v1538 = vpack.c.bf16 %v1506, %v1506
        %v1539 = vpack.c.bf16 %v1507, %v1507
        %v1540 = vpack.c.bf16 %v1508, %v1508
        %v1541 = vpack.c.bf16 %v1509, %v1509
        %v1542 = vpack.c.bf16 %v1510, %v1510
        %v1543 = vpack.c.bf16 %v1511, %v1511
        %v1544 = vpack.c.bf16 %v1512, %v1512
        %v1545 = vpack.c.bf16 %v1513, %v1513
        %v1546 = vpack.c.bf16 %v1514, %v1514
        %v1547 = vpack.c.bf16 %v1515, %v1515
        %v1548 = vpack.c.bf16 %v1516, %v1516
        %v1549 = vpack.c.bf16 %v1517, %v1517
        %v1550 = vpack.c.bf16 %v1518, %v1518
        %v1551 = vpack.c.bf16 %v1519, %v1519
        %v1552 = vpack.c.bf16 %v1520, %v1520
        %v1553 = vpack.c.bf16 %v1521, %v1521
        %v1554 = vpack.c.bf16 %v1522, %v1522
        %v1555 = vpack.c.bf16 %v1523, %v1523
        %v1556 = vpack.c.bf16 %v1524, %v1524
        %v1557 = vpack.c.bf16 %v1525, %v1525
        %v1558 = vpack.c.bf16 %v1526, %v1526
        %v1559 = vpack.c.bf16 %v1527, %v1527
        %v1560 = vpack.c.bf16 %v1528, %v1528
        %v1561 = vpack.c.bf16 %v1529, %v1529
        %v1562 = vpack.c.bf16 %v1530, %v1530
        %v1563 = vpack.c.bf16 %v1531, %v1531
        %v1564 = vpack.c.bf16 %v1532, %v1532
        %v1565 = vpack.c.bf16 %v1533, %v1533
        %v1566 = vpack.c.bf16 %v1534, %v1534
        %v1599 = vcombine.low %v1535, %v1536
        %v1600 = vcombine.low %v1537, %v1538
        %v1602 = vunpack.c.l.s4 1983009808
        %v1603 = vunpack.c.0.s8 %v1602
        %v1604 = vlaneseq
        %v1605 = vshrl.u32 %v1604, 7
        %v1606 = vsub.s32 %v1603, %v1605
        %v1607 = vrot.slane %v1599, %v1606
        %v1609 = vunpack.c.l.s4 1983009808
        %v1610 = vunpack.c.0.s8 %v1609
        %v1611 = vlaneseq
        %v1612 = vshrl.u32 %v1611, 7
        %v1613 = vsub.s32 %v1610, %v1612
        %v1614 = vrot.slane %v1600, %v1613
        %v1615 = vcombine.low %v1607, %v1614
        %v1616 = vcombine.low %v1539, %v1540
        %v1617 = vcombine.low %v1541, %v1542
        %v1619 = vunpack.c.l.s4 1983009808
        %v1620 = vunpack.c.0.s8 %v1619
        %v1621 = vlaneseq
        %v1622 = vshrl.u32 %v1621, 7
        %v1623 = vsub.s32 %v1620, %v1622
        %v1624 = vrot.slane %v1616, %v1623
        %v1626 = vunpack.c.l.s4 1983009808
        %v1627 = vunpack.c.0.s8 %v1626
        %v1628 = vlaneseq
        %v1629 = vshrl.u32 %v1628, 7
        %v1630 = vsub.s32 %v1627, %v1629
        %v1631 = vrot.slane %v1617, %v1630
        %v1632 = vcombine.low %v1624, %v1631
        %v1633 = vcombine.low %v1543, %v1544
        %v1634 = vcombine.low %v1545, %v1546
        %v1636 = vunpack.c.l.s4 1983009808
        %v1637 = vunpack.c.0.s8 %v1636
        %v1638 = vlaneseq
        %v1639 = vshrl.u32 %v1638, 7
        %v1640 = vsub.s32 %v1637, %v1639
        %v1641 = vrot.slane %v1633, %v1640
        %v1643 = vunpack.c.l.s4 1983009808
        %v1644 = vunpack.c.0.s8 %v1643
        %v1645 = vlaneseq
        %v1646 = vshrl.u32 %v1645, 7
        %v1647 = vsub.s32 %v1644, %v1646
        %v1648 = vrot.slane %v1634, %v1647
        %v1649 = vcombine.low %v1641, %v1648
        %v1650 = vcombine.low %v1547, %v1548
        %v1651 = vcombine.low %v1549, %v1550
        %v1653 = vunpack.c.l.s4 1983009808
        %v1654 = vunpack.c.0.s8 %v1653
        %v1655 = vlaneseq
        %v1656 = vshrl.u32 %v1655, 7
        %v1657 = vsub.s32 %v1654, %v1656
        %v1658 = vrot.slane %v1650, %v1657
        %v1660 = vunpack.c.l.s4 1983009808
        %v1661 = vunpack.c.0.s8 %v1660
        %v1662 = vlaneseq
        %v1663 = vshrl.u32 %v1662, 7
        %v1664 = vsub.s32 %v1661, %v1663
        %v1665 = vrot.slane %v1651, %v1664
        %v1666 = vcombine.low %v1658, %v1665
        %v1667 = vcombine.low %v1551, %v1552
        %v1668 = vcombine.low %v1553, %v1554
        %v1670 = vunpack.c.l.s4 1983009808
        %v1671 = vunpack.c.0.s8 %v1670
        %v1672 = vlaneseq
        %v1673 = vshrl.u32 %v1672, 7
        %v1674 = vsub.s32 %v1671, %v1673
        %v1675 = vrot.slane %v1667, %v1674
        %v1677 = vunpack.c.l.s4 1983009808
        %v1678 = vunpack.c.0.s8 %v1677
        %v1679 = vlaneseq
        %v1680 = vshrl.u32 %v1679, 7
        %v1681 = vsub.s32 %v1678, %v1680
        %v1682 = vrot.slane %v1668, %v1681
        %v1683 = vcombine.low %v1675, %v1682
        %v1684 = vcombine.low %v1555, %v1556
        %v1685 = vcombine.low %v1557, %v1558
        %v1687 = vunpack.c.l.s4 1983009808
        %v1688 = vunpack.c.0.s8 %v1687
        %v1689 = vlaneseq
        %v1690 = vshrl.u32 %v1689, 7
        %v1691 = vsub.s32 %v1688, %v1690
        %v1692 = vrot.slane %v1684, %v1691
        %v1694 = vunpack.c.l.s4 1983009808
        %v1695 = vunpack.c.0.s8 %v1694
        %v1696 = vlaneseq
        %v1697 = vshrl.u32 %v1696, 7
        %v1698 = vsub.s32 %v1695, %v1697
        %v1699 = vrot.slane %v1685, %v1698
        %v1700 = vcombine.low %v1692, %v1699
        %v1701 = vcombine.low %v1559, %v1560
        %v1702 = vcombine.low %v1561, %v1562
        %v1704 = vunpack.c.l.s4 1983009808
        %v1705 = vunpack.c.0.s8 %v1704
        %v1706 = vlaneseq
        %v1707 = vshrl.u32 %v1706, 7
        %v1708 = vsub.s32 %v1705, %v1707
        %v1709 = vrot.slane %v1701, %v1708
        %v1711 = vunpack.c.l.s4 1983009808
        %v1712 = vunpack.c.0.s8 %v1711
        %v1713 = vlaneseq
        %v1714 = vshrl.u32 %v1713, 7
        %v1715 = vsub.s32 %v1712, %v1714
        %v1716 = vrot.slane %v1702, %v1715
        %v1717 = vcombine.low %v1709, %v1716
        %v1718 = vcombine.low %v1563, %v1564
        %v1719 = vcombine.low %v1565, %v1566
        %v1721 = vunpack.c.l.s4 1983009808
        %v1722 = vunpack.c.0.s8 %v1721
        %v1723 = vlaneseq
        %v1724 = vshrl.u32 %v1723, 7
        %v1725 = vsub.s32 %v1722, %v1724
        %v1726 = vrot.slane %v1718, %v1725
        %v1728 = vunpack.c.l.s4 1983009808
        %v1729 = vunpack.c.0.s8 %v1728
        %v1730 = vlaneseq
        %v1731 = vshrl.u32 %v1730, 7
        %v1732 = vsub.s32 %v1729, %v1731
        %v1733 = vrot.slane %v1719, %v1732
        %v1734 = vcombine.low %v1726, %v1733
        %1743 = vst [vmem:[%s317] sm:$0xff] %v1615
        %1744 = vst [vmem:[%s317 + $0x8] sm:$0xff] %v1632
        %1745 = vst [vmem:[%s317 + $0x10] sm:$0xff] %v1649
        %1746 = vst [vmem:[%s317 + $0x18] sm:$0xff] %v1666
        %1747 = vst [vmem:[%s317 + $0x20] sm:$0xff] %v1683
        %1748 = vst [vmem:[%s317 + $0x28] sm:$0xff] %v1700
        %1749 = vst [vmem:[%s317 + $0x30] sm:$0xff] %v1717
        %1750 = vst [vmem:[%s317 + $0x38] sm:$0xff] %v1734
        %s1751 = smul.u32 32, %s14
        %p1752 = scmp.lt.s32.totalorder %s1751, 63
        %s1753 = scalar_select %p1752, %s1751, 63
        %s1754 = smul.addr %s1753, 2
        %s1755 = scalar_lea.vmem %s3, %s1754
        // Predicated region
        $region56: #{model_forward.9} parent=50 // pred_check
          %p1756 = pneg %p100
        $region57: #{model_forward.9} parent=50 // pred_check_branch
          %1758 = sbr.rel (%p1756) target = $region59
        $region58: #{model_forward.9} parent=50 // pred_region
          %s1759 = smul.u32 32, %s14
        $region59: #{model_forward.9} parent=50 // pred_fallthru
          _
      $region51: #{model_forward.9} parent=5 // pred_fallthru
        _
      %p1760 = scmp.le.s32.totalorder 2, %s9
      // Predicated region
      $region60: #{model_forward.9} parent=5 // pred_check
        %p1761 = pneg %p1760
      $region61: #{model_forward.9} parent=5 // pred_check_branch
        %1763 = sbr.rel (%p1761) target = $region63
      $region62: #{model_forward.9} parent=5 // pred_region
        %s1764 = ssub.s32 %s9, 2
        // Predicated region
        $region64: #{model_forward.9} parent=62 // pred_check
          %p1765 = pneg %p106
        $region65: #{model_forward.9} parent=62 // pred_check_branch
          %1767 = sbr.rel (%p1765) target = $region67
        $region66: #{model_forward.9} parent=62 // pred_region
          %s1768 = smul.u32 32, %s15
          %p1769 = scmp.lt.s32.totalorder %s1768, 63
          %s1770 = scalar_select %p1769, %s1768, 63
          %s1771 = smul.addr %s1770, 2
          %s1772 = scalar_lea.vmem %s3, %s1771
        $region67: #{model_forward.9} parent=62 // pred_fallthru
          _
      $region63: #{model_forward.9} parent=5 // pred_fallthru
        _
    $region6: #{model_forward.9} parent=1 // loop_footer
      %s13 = sadd.s32 1, %s9
    $region7: #{model_forward.9} parent=1 // loop_footer_branch
      %8 = sbr.rel target = $region3
    $region8: #{model_forward.9} parent=1 // loop_exit
      _

// kernel: model_forward.10
$region0: #{model_forward.10}
  #allocation0 [shape = 'u32[]', space=smem, size = 0x4, offset = 0x4, fixed_abs, tag = 'smem constant byte address 0x4 - core index']
  #allocation1 [shape = 'u32[144,128]{1,0:T(1,128)}', space=vmem, size = 0x12000, scoped, tag = 'internal scratch']
  %s0 = inlined_call_operand.vmem [shape: bf16[36,2048], index: 0, kind: input, shape index: {}]
  %s1 = inlined_call_operand.vmem [shape: bf16[8,36], index: 1, kind: input, shape index: {}]
  %s2 = inlined_call_operand.vmem [shape: f32[8,1], index: 2, kind: input, shape index: {}]
  %s3 = inlined_call_operand.vmem [shape: bf16[8,2048], index: 3, kind: output, shape index: {}]
  %s4 = sld [smem:[#allocation0]]
  $region68: #{model_forward.10} parent=0
    _
  %s6 = ssub.s32 1, %s4
  %s7 = scalar_select 0, %s6, %s4
  $region1: #{model_forward.10} parent=0
    #allocation2 [shape = 'u8[163840]{0}', space=vmem, size = 0x28000, scoped, tag = 'input window, operand 0']
    loop: start=0, step=1, limit=4
    $region2: #{model_forward.10} parent=1 // loop_pre_header
      _
    $region3: #{model_forward.10} parent=1 // loop_header
      %s9 = sphi 0, %s13
      %p10 = scmp.ge.s32.totalorder %s9, 4
      %s19 = sphi 0, %s21
      %s22 = sphi 0, %s19
      %s23 = sphi 0, %s22
      %s39 = sphi 0, %s23
      %s43 = sphi 0, %s43
      %s45 = sphi 0, %s43
      %s46 = sphi 0, %s45
      %s60 = sphi 0, %s46
      %s64 = sphi 0, %s64
      %s66 = sphi 0, %s64
      %s67 = sphi 0, %s66
      %s81 = sphi 0, %s67
      %s87 = sphi 0, %s89
      %s90 = sphi 0, %s87
      %s91 = sphi 0, %s90
      %s107 = sphi 0, %s91
    $region4: #{model_forward.10} parent=1 // loop_header_branch
      %12 = sbr.rel (%p10) target = $region8
    $region5: #{model_forward.10} parent=1 // loop_body
      %s14 = ssub.s32 %s9, 1
      %s15 = ssub.s32 %s9, 2
      %s16 = sadd.s32 %s9, 1
      %s17 = ssub.s32 %s9, %s16
      %p18 = scmp.eq.s32.totalorder %s17, 0
      %s20 = sadd.s32 %s19, 1
      %s21 = scalar_select %p18, %s19, %s20
      %p24 = pneg %p18
      %p25 = scmp.eq.s32.totalorder %s9, 1
      %p26 = por %p24, %p25
      %p27 = scmp.ne.s32.totalorder %s19, %s22
      %p28 = scmp.eq.s32.totalorder %s9, 0
      %p29 = por %p27, %p28
      %p30 = scmp.ne.s32.totalorder %s19, %s22
      %p31 = scmp.eq.s32.totalorder %s14, 1
      %p32 = por %p30, %p31
      %p33 = scmp.ne.s32.totalorder %s22, %s23
      %p34 = scmp.eq.s32.totalorder %s14, 0
      %p35 = por %p33, %p34
      %p36 = scmp.ne.s32.totalorder %s22, %s23
      %p37 = scmp.eq.s32.totalorder %s15, 1
      %p38 = por %p36, %p37
      %p40 = scmp.ne.s32.totalorder %s23, %s39
      %p41 = scmp.eq.s32.totalorder %s15, 0
      %p42 = por %p40, %p41
      %s44 = sadd.s32 %s43, 1
      %p47 = scmp.eq.s32.totalorder %s9, 1
      %p48 = scmp.ne.s32.totalorder %s43, %s45
      %p49 = scmp.eq.s32.totalorder %s9, 0
      %p50 = por %p48, %p49
      %p51 = scmp.ne.s32.totalorder %s43, %s45
      %p52 = scmp.eq.s32.totalorder %s14, 1
      %p53 = por %p51, %p52
      %p54 = scmp.ne.s32.totalorder %s45, %s46
      %p55 = scmp.eq.s32.totalorder %s14, 0
      %p56 = por %p54, %p55
      %p57 = scmp.ne.s32.totalorder %s45, %s46
      %p58 = scmp.eq.s32.totalorder %s15, 1
      %p59 = por %p57, %p58
      %p61 = scmp.ne.s32.totalorder %s46, %s60
      %p62 = scmp.eq.s32.totalorder %s15, 0
      %p63 = por %p61, %p62
      %s65 = sadd.s32 %s64, 1
      %p68 = scmp.eq.s32.totalorder %s9, 1
      %p69 = scmp.ne.s32.totalorder %s64, %s66
      %p70 = scmp.eq.s32.totalorder %s9, 0
      %p71 = por %p69, %p70
      %p72 = scmp.ne.s32.totalorder %s64, %s66
      %p73 = scmp.eq.s32.totalorder %s14, 1
      %p74 = por %p72, %p73
      %p75 = scmp.ne.s32.totalorder %s66, %s67
      %p76 = scmp.eq.s32.totalorder %s14, 0
      %p77 = por %p75, %p76
      %p78 = scmp.ne.s32.totalorder %s66, %s67
      %p79 = scmp.eq.s32.totalorder %s15, 1
      %p80 = por %p78, %p79
      %p82 = scmp.ne.s32.totalorder %s67, %s81
      %p83 = scmp.eq.s32.totalorder %s15, 0
      %p84 = por %p82, %p83
      %s85 = ssub.s32 %s9, %s16
      %p86 = scmp.eq.s32.totalorder %s85, 0
      %s88 = sadd.s32 %s87, 1
      %s89 = scalar_select %p86, %s87, %s88
      %p92 = pneg %p86
      %p93 = scmp.eq.s32.totalorder %s9, 1
      %p94 = por %p92, %p93
      %p95 = scmp.ne.s32.totalorder %s87, %s90
      %p96 = scmp.eq.s32.totalorder %s9, 0
      %p97 = por %p95, %p96
      %p98 = scmp.ne.s32.totalorder %s87, %s90
      %p99 = scmp.eq.s32.totalorder %s14, 1
      %p100 = por %p98, %p99
      %p101 = scmp.ne.s32.totalorder %s90, %s91
      %p102 = scmp.eq.s32.totalorder %s14, 0
      %p103 = por %p101, %p102
      %p104 = scmp.ne.s32.totalorder %s90, %s91
      %p105 = scmp.eq.s32.totalorder %s15, 1
      %p106 = por %p104, %p105
      %p108 = scmp.ne.s32.totalorder %s91, %s107
      %p109 = scmp.eq.s32.totalorder %s15, 0
      %p110 = por %p108, %p109
      %p111 = scmp.le.s32.totalorder 1, %s9
      %p112 = scmp.lt.s32.totalorder %s9, 3
      %p113 = pnand %p111, %p112
      %p114 = pneg %p113
      // Predicated region
      $region9: #{model_forward.10} parent=5 // pred_check
        _
      $region10: #{model_forward.10} parent=5 // pred_check_branch
        %116 = sbr.rel (%p113) target = $region12
      $region11: #{model_forward.10} parent=5 // pred_region
        %s117 = ssub.s32 %s9, 1
        // Predicated region
        $region13: #{model_forward.10} parent=11 // pred_check
          %p118 = pneg %p56
        $region14: #{model_forward.10} parent=11 // pred_check_branch
          %120 = sbr.rel (%p118) target = $region16
        $region15: #{model_forward.10} parent=11 // pred_region
          _
        $region16: #{model_forward.10} parent=11 // pred_fallthru
          _
        // Predicated region
        $region17: #{model_forward.10} parent=11 // pred_check
          %p121 = pneg %p77
        $region18: #{model_forward.10} parent=11 // pred_check_branch
          %123 = sbr.rel (%p121) target = $region20
        $region19: #{model_forward.10} parent=11 // pred_region
          _
        $region20: #{model_forward.10} parent=11 // pred_fallthru
          _
      $region12: #{model_forward.10} parent=5 // pred_fallthru
        _
      %p124 = scmp.lt.s32.totalorder %s9, 2
      // Predicated region
      $region21: #{model_forward.10} parent=5 // pred_check
        %p125 = pneg %p124
      $region22: #{model_forward.10} parent=5 // pred_check_branch
        %127 = sbr.rel (%p125) target = $region24
      $region23: #{model_forward.10} parent=5 // pred_region
        // Predicated region
        $region25: #{model_forward.10} parent=23 // pred_check
          %p128 = pneg %p29
        $region26: #{model_forward.10} parent=23 // pred_check_branch
          %130 = sbr.rel (%p128) target = $region28
        $region27: #{model_forward.10} parent=23 // pred_region
          %s131 = sand.u32 %s19, 1
          %s132 = sand.u32 %s19, 1
          %s133 = smul.addr %s132, 160
          %s134 = scalar_lea.vmem [#allocation2], %s133
          %s135 = smul.u32 8, %s9
          %s136 = smul.addr %s135, 4
          %s137 = scalar_lea.vmem %s0, %s136
          // Predicated region
          $region29: #{model_forward.10} parent=27 // pred_check
            _
          $region30: #{model_forward.10} parent=27 // pred_check_branch
            %139 = sbr.rel (0) target = $region32
          $region31: #{model_forward.10} parent=27 // pred_region
            // Predicated region
            $region33: #{model_forward.10} parent=31 // pred_check
              _
            $region34: #{model_forward.10} parent=31 // pred_check_branch
              %141 = sbr.rel (0) target = $region36
            $region35: #{model_forward.10} parent=31 // pred_region
              loop: start=0, step=1, limit=1
              $region37: #{model_forward.10} parent=35 // loop_pre_header
                _
              $region38: #{model_forward.10} parent=35 // loop_header
                %s143 = sphi 0, %s147
                %p144 = scmp.ge.s32.totalorder %s143, 1
                %s148 = sphi %s137, %s137
                %s149 = sphi %s134, %s134
              $region39: #{model_forward.10} parent=35 // loop_header_branch
                %146 = sbr.rel (%p144) target = $region43
              $region40: #{model_forward.10} parent=35 // loop_body
                %v150 = vld [vmem:[%s148] sm:$0xff]
                %151 = vst [vmem:[%s149] sm:$0xff] %v150
                %v152 = vld [vmem:[%s148 + $0x8] sm:$0xff]
                %153 = vst [vmem:[%s149 + $0x8] sm:$0xff] %v152
                %v154 = vld [vmem:[%s148 + $0x10] sm:$0xff]
                %155 = vst [vmem:[%s149 + $0x10] sm:$0xff] %v154
                %v156 = vld [vmem:[%s148 + $0x18] sm:$0xff]
                %157 = vst [vmem:[%s149 + $0x18] sm:$0xff] %v156
                %v158 = vld [vmem:[%s148 + $0x40] sm:$0xff]
                %159 = vst [vmem:[%s149 + $0x20] sm:$0xff] %v158
                %v160 = vld [vmem:[%s148 + $0x48] sm:$0xff]
                %161 = vst [vmem:[%s149 + $0x28] sm:$0xff] %v160
                %v162 = vld [vmem:[%s148 + $0x50] sm:$0xff]
                %163 = vst [vmem:[%s149 + $0x30] sm:$0xff] %v162
                %v164 = vld [vmem:[%s148 + $0x58] sm:$0xff]
                %165 = vst [vmem:[%s149 + $0x38] sm:$0xff] %v164
                %v166 = vld [vmem:[%s148 + $0x80] sm:$0xff]
                %167 = vst [vmem:[%s149 + $0x40] sm:$0xff] %v166
                %v168 = vld [vmem:[%s148 + $0x88] sm:$0xff]
                %169 = vst [vmem:[%s149 + $0x48] sm:$0xff] %v168
                %v170 = vld [vmem:[%s148 + $0x90] sm:$0xff]
                %171 = vst [vmem:[%s149 + $0x50] sm:$0xff] %v170
                %v172 = vld [vmem:[%s148 + $0x98] sm:$0xff]
                %173 = vst [vmem:[%s149 + $0x58] sm:$0xff] %v172
                %v174 = vld [vmem:[%s148 + $0xc0] sm:$0xff]
                %175 = vst [vmem:[%s149 + $0x60] sm:$0xff] %v174
                %v176 = vld [vmem:[%s148 + $0xc8] sm:$0xff]
                %177 = vst [vmem:[%s149 + $0x68] sm:$0xff] %v176
                %v178 = vld [vmem:[%s148 + $0xd0] sm:$0xff]
                %179 = vst [vmem:[%s149 + $0x70] sm:$0xff] %v178
                %v180 = vld [vmem:[%s148 + $0xd8] sm:$0xff]
                %181 = vst [vmem:[%s149 + $0x78] sm:$0xff] %v180
                %v182 = vld [vmem:[%s148 + $0x100] sm:$0xff]
                %183 = vst [vmem:[%s149 + $0x80] sm:$0xff] %v182
                %v184 = vld [vmem:[%s148 + $0x108] sm:$0xff]
                %185 = vst [vmem:[%s149 + $0x88] sm:$0xff] %v184
                %v186 = vld [vmem:[%s148 + $0x110] sm:$0xff]
                %187 = vst [vmem:[%s149 + $0x90] sm:$0xff] %v186
                %v188 = vld [vmem:[%s148 + $0x118] sm:$0xff]
                %189 = vst [vmem:[%s149 + $0x98] sm:$0xff] %v188
              $region41: #{model_forward.10} parent=35 // loop_footer
                %s147 = sadd.s32 1, %s143
              $region42: #{model_forward.10} parent=35 // loop_footer_branch
                %142 = sbr.rel target = $region38
              $region43: #{model_forward.10} parent=35 // loop_exit
                _
            $region36: #{model_forward.10} parent=31 // pred_fallthru
              _
            // Predicated region
            $region44: #{model_forward.10} parent=31 // pred_check
              _
            $region45: #{model_forward.10} parent=31 // pred_check_branch
              %191 = sbr.rel target = $region47
            $region46: #{model_forward.10} parent=31 // pred_region
              _
            $region47: #{model_forward.10} parent=31 // pred_fallthru
              _
          $region32: #{model_forward.10} parent=27 // pred_fallthru
            _
          %192 = vnop
        $region28: #{model_forward.10} parent=23 // pred_fallthru
          _
      $region24: #{model_forward.10} parent=5 // pred_fallthru
        _
      %p193 = scmp.le.s32.totalorder 1, %s9
      %p194 = scmp.lt.s32.totalorder %s9, 3
      %p195 = pnand %p193, %p194
      %p196 = pneg %p195
      // Predicated region
      $region48: #{model_forward.10} parent=5 // pred_check
        _
      $region49: #{model_forward.10} parent=5 // pred_check_branch
        %198 = sbr.rel (%p195) target = $region51
      $region50: #{model_forward.10} parent=5 // pred_region
        %s199 = ssub.s32 %s9, 1
        %s200 = sand.u32 %s22, 1
        %s201 = sand.u32 %s22, 1
        %s202 = smul.addr %s201, 160
        %s203 = scalar_lea.vmem [#allocation2], %s202
        // Predicated region
        $region52: #{model_forward.10} parent=50 // pred_check
          %p204 = pneg %p35
        $region53: #{model_forward.10} parent=50 // pred_check_branch
          %206 = sbr.rel (%p204) target = $region55
        $region54: #{model_forward.10} parent=50 // pred_region
          _
        $region55: #{model_forward.10} parent=50 // pred_fallthru
          _
        %s207 = sand.u32 %s22, 1
        %s208 = sand.u32 %s22, 1
        %s209 = smul.addr %s208, 160
        %s210 = scalar_lea.vmem [#allocation2], %s209
        %p211 = pneg %p35
        %p212 = pneg %p32
        %p213 = pneg %p56
        %p214 = pneg %p53
        %p215 = pneg %p77
        %p216 = pneg %p74
        %p217 = pneg %p103
        %p218 = pneg %p100
        %s219 = smul.u32 8, %s14
        %p220 = scmp.lt.s32.totalorder %s219, 15
        %s221 = scalar_select %p220, %s219, 15
        %s222 = smul.addr %s221, 4
        %s223 = scalar_lea.vmem %s3, %s222
        %s224 = smul.u32 8, %s14
        %s225 = smul.u32 8, %s14
        %p226 = scmp.lt.s32.totalorder %s225, 15
        %s227 = scalar_select %p226, %s225, 15
        %s228 = smul.addr %s227, 4
        %s229 = scalar_lea.vmem %s3, %s228
        %s230 = smul.u32 8, %s14
        %v232 = vld [vmem:[%s1] sm:$0xf]
        %v233 = vld [vmem:[%s203] sm:$0xff]
        %v234 = vld [vmem:[%s203 + $0x8] sm:$0xff]
        %v235 = vld [vmem:[%s203 + $0x10] sm:$0xff]
        %v236 = vld [vmem:[%s203 + $0x18] sm:$0xff]
        %v237 = vld [vmem:[%s203 + $0x20] sm:$0xff]
        %v238 = vld [vmem:[%s203 + $0x28] sm:$0xff]
        %v239 = vld [vmem:[%s203 + $0x30] sm:$0xff]
        %v240 = vld [vmem:[%s203 + $0x38] sm:$0xff]
        %v241 = vld [vmem:[%s203 + $0x40] sm:$0xff]
        %v242 = vld [vmem:[%s203 + $0x48] sm:$0xff]
        %v243 = vld [vmem:[%s203 + $0x50] sm:$0xff]
        %v244 = vld [vmem:[%s203 + $0x58] sm:$0xff]
        %v245 = vld [vmem:[%s203 + $0x60] sm:$0xff]
        %v246 = vld [vmem:[%s203 + $0x68] sm:$0xff]
        %v247 = vld [vmem:[%s203 + $0x70] sm:$0xff]
        %v248 = vld [vmem:[%s203 + $0x78] sm:$0xff]
        %v249 = vld [vmem:[%s203 + $0x80] sm:$0x33]
        %v250 = vld [vmem:[%s203 + $0x88] sm:$0x33]
        %v251 = vld [vmem:[%s203 + $0x90] sm:$0x33]
        %v252 = vld [vmem:[%s203 + $0x98] sm:$0x33]
        %v253 = vld [vmem:[%s2] sm:$0xff]
        %255 = vset.pattern.permute.xlu0 0
        %256 = vperm.xlu0 %255, %v253
        %v257 = vpop.permute.xlu0 %256
        %v279 = vunpack.c.l.b16 %v233
        %v280 = vunpack.c.h.b16 %v233
        %v281 = vunpack.c.l.b16 %v234
        %v282 = vunpack.c.h.b16 %v234
        %v283 = vunpack.c.l.b16 %v235
        %v284 = vunpack.c.h.b16 %v235
        %v285 = vunpack.c.l.b16 %v236
        %v286 = vunpack.c.h.b16 %v236
        %v287 = vunpack.c.l.b16 %v237
        %v288 = vunpack.c.h.b16 %v237
        %v289 = vunpack.c.l.b16 %v238
        %v290 = vunpack.c.h.b16 %v238
        %v291 = vunpack.c.l.b16 %v239
        %v292 = vunpack.c.h.b16 %v239
        %v293 = vunpack.c.l.b16 %v240
        %v294 = vunpack.c.h.b16 %v240
        %v295 = vunpack.c.l.b16 %v241
        %v296 = vunpack.c.h.b16 %v241
        %v297 = vunpack.c.l.b16 %v242
        %v298 = vunpack.c.h.b16 %v242
        %v299 = vunpack.c.l.b16 %v243
        %v300 = vunpack.c.h.b16 %v243
        %v301 = vunpack.c.l.b16 %v244
        %v302 = vunpack.c.h.b16 %v244
        %v303 = vunpack.c.l.b16 %v245
        %v304 = vunpack.c.h.b16 %v245
        %v305 = vunpack.c.l.b16 %v246
        %v306 = vunpack.c.h.b16 %v246
        %v307 = vunpack.c.l.b16 %v247
        %v308 = vunpack.c.h.b16 %v247
        %v309 = vunpack.c.l.b16 %v248
        %v310 = vunpack.c.h.b16 %v248
        %v311 = vunpack.c.l.b16 %v249
        %v312 = vunpack.c.h.b16 %v249
        %v313 = vunpack.c.l.b16 %v250
        %v314 = vunpack.c.h.b16 %v250
        %v315 = vunpack.c.l.b16 %v251
        %v316 = vunpack.c.h.b16 %v251
        %v317 = vunpack.c.l.b16 %v252
        %v318 = vunpack.c.h.b16 %v252
        %v319 = vpack.c.b16 %v287, %v279
        %v320 = vpack.c.b16 %v288, %v280
        %v321 = vpack.c.b16 %v289, %v281
        %v322 = vpack.c.b16 %v290, %v282
        %v323 = vpack.c.b16 %v291, %v283
        %v324 = vpack.c.b16 %v292, %v284
        %v325 = vpack.c.b16 %v293, %v285
        %v326 = vpack.c.b16 %v294, %v286
        %v327 = vpack.c.b16 %v303, %v295
        %v328 = vpack.c.b16 %v304, %v296
        %v329 = vpack.c.b16 %v305, %v297
        %v330 = vpack.c.b16 %v306, %v298
        %v331 = vpack.c.b16 %v307, %v299
        %v332 = vpack.c.b16 %v308, %v300
        %v333 = vpack.c.b16 %v309, %v301
        %v334 = vpack.c.b16 %v310, %v302
        %v335 = vpack.c.b16 %v311, %v311
        %v336 = vpack.c.b16 %v312, %v312
        %v337 = vpack.c.b16 %v313, %v313
        %v338 = vpack.c.b16 %v314, %v314
        %v339 = vpack.c.b16 %v315, %v315
        %v340 = vpack.c.b16 %v316, %v316
        %v341 = vpack.c.b16 %v317, %v317
        %v342 = vpack.c.b16 %v318, %v318
        %vm359 = vcmask 293888
        %v361 = vsel %vm359, %v232, 0
        %vm363 = vcmask 1041408
        %v365 = vsel %vm363, %v335, 0
        %v368 = vsel %vm363, %v336, 0
        %v371 = vsel %vm363, %v337, 0
        %v374 = vsel %vm363, %v338, 0
        %v377 = vsel %vm363, %v339, 0
        %v380 = vsel %vm363, %v340, 0
        %v383 = vsel %vm363, %v341, 0
        %v386 = vsel %vm363, %v342, 0
        %388 = vmatprep.subr.bf16.mxu0 0
        %389 = vmatpush1.bf16.msra.mxu0 0
        %390 = vmatprep.subr.bf16.mxu0 0
        %391 = vmatpush1.bf16.msra.mxu0 0
        %392 = vmatprep.subr.bf16.mxu0 0
        %393 = vmatpush1.bf16.msra.mxu0 0
        %394 = vmatprep.subr.bf16.mxu0 0
        %395 = vmatpush1.bf16.msra.mxu0 0
        %396 = vmatprep.subr.bf16.mxu0 0
        %397 = vmatpush1.bf16.msra.mxu0 0
        %398 = vmatprep.subr.bf16.mxu0 %v368
        %399 = vmatpush1.bf16.msra.mxu0 %v365
        %400 = vmatprep.subr.bf16.mxu0 %v328
        %401 = vmatpush1.bf16.msra.mxu0 %v327
        %402 = vmatprep.subr.bf16.mxu0 %v320
        %403 = vmatpush1.bf16.msra.mxu0 %v319
        %404 = vmatprep.subr.bf16.mxu0 0
        %405 = vmatpush2.bf16.msra.mxu0 0
        %406 = vmatprep.subr.bf16.mxu0 0
        %407 = vmatpush2.bf16.msra.mxu0 0
        %408 = vmatprep.subr.bf16.mxu0 0
        %409 = vmatpush2.bf16.msra.mxu0 0
        %410 = vmatprep.subr.bf16.mxu0 0
        %411 = vmatpush2.bf16.msra.mxu0 0
        %412 = vmatprep.subr.bf16.mxu0 0
        %413 = vmatpush2.bf16.msra.mxu0 0
        %414 = vmatprep.subr.bf16.mxu0 0
        %415 = vmatpush2.bf16.msra.mxu0 0
        %416 = vmatprep.subr.bf16.mxu0 0
        %417 = vmatpush2.bf16.msra.mxu0 0
        %418 = vmatprep.subr.bf16.mxu0 0
        %419 = vmatpush2.bf16.msra.mxu0 0
        %420 = vmatprep.mubr.bf16.mxu0 0
        %421 = vmatmul.mubr.bf16.gmra.mxu0 %v361
        %v422 = vpop.f32.mrf.mxu0
        %v423 = vadd.f32 %v257, %v422
        %v424 = vpop.f32.mrf.mxu0
        %v425 = vadd.f32 %v257, %v424
        %v426 = vpop.f32.mrf.mxu0
        %v427 = vpop.f32.mrf.mxu0
        %428 = vdwg.mxu0
        %429 = vmatprep.subr.bf16.mxu0 0
        %430 = vmatpush1.bf16.msra.mxu0 0
        %431 = vmatprep.subr.bf16.mxu0 0
        %432 = vmatpush1.bf16.msra.mxu0 0
        %433 = vmatprep.subr.bf16.mxu0 0
        %434 = vmatpush1.bf16.msra.mxu0 0
        %435 = vmatprep.subr.bf16.mxu0 0
        %436 = vmatpush1.bf16.msra.mxu0 0
        %437 = vmatprep.subr.bf16.mxu0 0
        %438 = vmatpush1.bf16.msra.mxu0 0
        %439 = vmatprep.subr.bf16.mxu0 %v374
        %440 = vmatpush1.bf16.msra.mxu0 %v371
        %441 = vmatprep.subr.bf16.mxu0 %v330
        %442 = vmatpush1.bf16.msra.mxu0 %v329
        %443 = vmatprep.subr.bf16.mxu0 %v322
        %444 = vmatpush1.bf16.msra.mxu0 %v321
        %445 = vmatprep.subr.bf16.mxu0 0
        %446 = vmatpush2.bf16.msra.mxu0 0
        %447 = vmatprep.subr.bf16.mxu0 0
        %448 = vmatpush2.bf16.msra.mxu0 0
        %449 = vmatprep.subr.bf16.mxu0 0
        %450 = vmatpush2.bf16.msra.mxu0 0
        %451 = vmatprep.subr.bf16.mxu0 0
        %452 = vmatpush2.bf16.msra.mxu0 0
        %453 = vmatprep.subr.bf16.mxu0 0
        %454 = vmatpush2.bf16.msra.mxu0 0
        %455 = vmatprep.subr.bf16.mxu0 0
        %456 = vmatpush2.bf16.msra.mxu0 0
        %457 = vmatprep.subr.bf16.mxu0 0
        %458 = vmatpush2.bf16.msra.mxu0 0
        %459 = vmatprep.subr.bf16.mxu0 0
        %460 = vmatpush2.bf16.msra.mxu0 0
        %461 = vmatprep.mubr.bf16.mxu0 0
        %462 = vmatmul.mubr.bf16.gmra.mxu0 %v361
        %v463 = vpop.f32.mrf.mxu0
        %v464 = vadd.f32 %v257, %v463
        %v465 = vpop.f32.mrf.mxu0
        %v466 = vadd.f32 %v257, %v465
        %v467 = vpop.f32.mrf.mxu0
        %v468 = vpop.f32.mrf.mxu0
        %469 = vdwg.mxu0
        %470 = vmatprep.subr.bf16.mxu0 0
        %471 = vmatpush1.bf16.msra.mxu0 0
        %472 = vmatprep.subr.bf16.mxu0 0
        %473 = vmatpush1.bf16.msra.mxu0 0
        %474 = vmatprep.subr.bf16.mxu0 0
        %475 = vmatpush1.bf16.msra.mxu0 0
        %476 = vmatprep.subr.bf16.mxu0 0
        %477 = vmatpush1.bf16.msra.mxu0 0
        %478 = vmatprep.subr.bf16.mxu0 0
        %479 = vmatpush1.bf16.msra.mxu0 0
        %480 = vmatprep.subr.bf16.mxu0 %v380
        %481 = vmatpush1.bf16.msra.mxu0 %v377
        %482 = vmatprep.subr.bf16.mxu0 %v332
        %483 = vmatpush1.bf16.msra.mxu0 %v331
        %484 = vmatprep.subr.bf16.mxu0 %v324
        %485 = vmatpush1.bf16.msra.mxu0 %v323
        %486 = vmatprep.subr.bf16.mxu0 0
        %487 = vmatpush2.bf16.msra.mxu0 0
        %488 = vmatprep.subr.bf16.mxu0 0
        %489 = vmatpush2.bf16.msra.mxu0 0
        %490 = vmatprep.subr.bf16.mxu0 0
        %491 = vmatpush2.bf16.msra.mxu0 0
        %492 = vmatprep.subr.bf16.mxu0 0
        %493 = vmatpush2.bf16.msra.mxu0 0
        %494 = vmatprep.subr.bf16.mxu0 0
        %495 = vmatpush2.bf16.msra.mxu0 0
        %496 = vmatprep.subr.bf16.mxu0 0
        %497 = vmatpush2.bf16.msra.mxu0 0
        %498 = vmatprep.subr.bf16.mxu0 0
        %499 = vmatpush2.bf16.msra.mxu0 0
        %500 = vmatprep.subr.bf16.mxu0 0
        %501 = vmatpush2.bf16.msra.mxu0 0
        %502 = vmatprep.mubr.bf16.mxu0 0
        %503 = vmatmul.mubr.bf16.gmra.mxu0 %v361
        %v504 = vpop.f32.mrf.mxu0
        %v505 = vadd.f32 %v257, %v504
        %v506 = vpop.f32.mrf.mxu0
        %v507 = vadd.f32 %v257, %v506
        %v508 = vpop.f32.mrf.mxu0
        %v509 = vpop.f32.mrf.mxu0
        %510 = vdwg.mxu0
        %511 = vmatprep.subr.bf16.mxu0 0
        %512 = vmatpush1.bf16.msra.mxu0 0
        %513 = vmatprep.subr.bf16.mxu0 0
        %514 = vmatpush1.bf16.msra.mxu0 0
        %515 = vmatprep.subr.bf16.mxu0 0
        %516 = vmatpush1.bf16.msra.mxu0 0
        %517 = vmatprep.subr.bf16.mxu0 0
        %518 = vmatpush1.bf16.msra.mxu0 0
        %519 = vmatprep.subr.bf16.mxu0 0
        %520 = vmatpush1.bf16.msra.mxu0 0
        %521 = vmatprep.subr.bf16.mxu0 %v386
        %522 = vmatpush1.bf16.msra.mxu0 %v383
        %523 = vmatprep.subr.bf16.mxu0 %v334
        %524 = vmatpush1.bf16.msra.mxu0 %v333
        %525 = vmatprep.subr.bf16.mxu0 %v326
        %526 = vmatpush1.bf16.msra.mxu0 %v325
        %527 = vmatprep.subr.bf16.mxu0 0
        %528 = vmatpush2.bf16.msra.mxu0 0
        %529 = vmatprep.subr.bf16.mxu0 0
        %530 = vmatpush2.bf16.msra.mxu0 0
        %531 = vmatprep.subr.bf16.mxu0 0
        %532 = vmatpush2.bf16.msra.mxu0 0
        %533 = vmatprep.subr.bf16.mxu0 0
        %534 = vmatpush2.bf16.msra.mxu0 0
        %535 = vmatprep.subr.bf16.mxu0 0
        %536 = vmatpush2.bf16.msra.mxu0 0
        %537 = vmatprep.subr.bf16.mxu0 0
        %538 = vmatpush2.bf16.msra.mxu0 0
        %539 = vmatprep.subr.bf16.mxu0 0
        %540 = vmatpush2.bf16.msra.mxu0 0
        %541 = vmatprep.subr.bf16.mxu0 0
        %542 = vmatpush2.bf16.msra.mxu0 0
        %543 = vmatprep.mubr.bf16.mxu0 0
        %544 = vmatmul.mubr.bf16.gmra.mxu0 %v361
        %v545 = vpop.f32.mrf.mxu0
        %v546 = vadd.f32 %v257, %v545
        %v547 = vpop.f32.mrf.mxu0
        %v548 = vadd.f32 %v257, %v547
        %v549 = vpop.f32.mrf.mxu0
        %v550 = vpop.f32.mrf.mxu0
        %551 = vdwg.mxu0
        %vm552 = vcmp.ge.f32.partialorder %v423, 0.0
        %vm553 = vcmp.ge.f32.partialorder %v425, 0.0
        %vm554 = vcmp.ge.f32.partialorder %v464, 0.0
        %vm555 = vcmp.ge.f32.partialorder %v466, 0.0
        %vm556 = vcmp.ge.f32.partialorder %v505, 0.0
        %vm557 = vcmp.ge.f32.partialorder %v507, 0.0
        %vm558 = vcmp.ge.f32.partialorder %v546, 0.0
        %vm559 = vcmp.ge.f32.partialorder %v548, 0.0
        %v560 = vmul.f32 %v423, 0.01
        %v561 = vmul.f32 %v425, 0.01
        %v562 = vmul.f32 %v464, 0.01
        %v563 = vmul.f32 %v466, 0.01
        %v564 = vmul.f32 %v505, 0.01
        %v565 = vmul.f32 %v507, 0.01
        %v566 = vmul.f32 %v546, 0.01
        %v567 = vmul.f32 %v548, 0.01
        %v568 = vsel %vm552, %v423, %v560
        %v569 = vsel %vm553, %v425, %v561
        %v570 = vsel %vm554, %v464, %v562
        %v571 = vsel %vm555, %v466, %v563
        %v572 = vsel %vm556, %v505, %v564
        %v573 = vsel %vm557, %v507, %v565
        %v574 = vsel %vm558, %v546, %v566
        %v575 = vsel %vm559, %v548, %v567
        %v576 = vpack.c.bf16 %v568, %v568
        %v577 = vpack.c.bf16 %v569, %v569
        %v578 = vpack.c.bf16 %v570, %v570
        %v579 = vpack.c.bf16 %v571, %v571
        %v580 = vpack.c.bf16 %v572, %v572
        %v581 = vpack.c.bf16 %v573, %v573
        %v582 = vpack.c.bf16 %v574, %v574
        %v583 = vpack.c.bf16 %v575, %v575
        %v592 = vunpack.c.l.b16 %v576
        %v593 = vunpack.c.l.b16 %v577
        %v594 = vunpack.c.l.b16 %v578
        %v595 = vunpack.c.l.b16 %v579
        %v596 = vunpack.c.l.b16 %v580
        %v597 = vunpack.c.l.b16 %v581
        %v598 = vunpack.c.l.b16 %v582
        %v599 = vunpack.c.l.b16 %v583
        %v600 = vpack.c.b16 %v593, %v592
        %v601 = vpack.c.b16 %v595, %v594
        %v602 = vpack.c.b16 %v597, %v596
        %v603 = vpack.c.b16 %v599, %v598
        %608 = vst [vmem:[%s229] sm:$0xff] %v600
        %609 = vst [vmem:[%s229 + $0x8] sm:$0xff] %v601
        %610 = vst [vmem:[%s229 + $0x10] sm:$0xff] %v602
        %611 = vst [vmem:[%s229 + $0x18] sm:$0xff] %v603
        %s612 = smul.u32 8, %s14
        %p613 = scmp.lt.s32.totalorder %s612, 15
        %s614 = scalar_select %p613, %s612, 15
        %s615 = smul.addr %s614, 4
        %s616 = scalar_lea.vmem %s3, %s615
        // Predicated region
        $region56: #{model_forward.10} parent=50 // pred_check
          %p617 = pneg %p100
        $region57: #{model_forward.10} parent=50 // pred_check_branch
          %619 = sbr.rel (%p617) target = $region59
        $region58: #{model_forward.10} parent=50 // pred_region
          %s620 = smul.u32 8, %s14
        $region59: #{model_forward.10} parent=50 // pred_fallthru
          _
      $region51: #{model_forward.10} parent=5 // pred_fallthru
        _
      %p621 = scmp.le.s32.totalorder 2, %s9
      // Predicated region
      $region60: #{model_forward.10} parent=5 // pred_check
        %p622 = pneg %p621
      $region61: #{model_forward.10} parent=5 // pred_check_branch
        %624 = sbr.rel (%p622) target = $region63
      $region62: #{model_forward.10} parent=5 // pred_region
        %s625 = ssub.s32 %s9, 2
        // Predicated region
        $region64: #{model_forward.10} parent=62 // pred_check
          %p626 = pneg %p106
        $region65: #{model_forward.10} parent=62 // pred_check_branch
          %628 = sbr.rel (%p626) target = $region67
        $region66: #{model_forward.10} parent=62 // pred_region
          %s629 = smul.u32 8, %s15
          %p630 = scmp.lt.s32.totalorder %s629, 15
          %s631 = scalar_select %p630, %s629, 15
          %s632 = smul.addr %s631, 4
          %s633 = scalar_lea.vmem %s3, %s632
        $region67: #{model_forward.10} parent=62 // pred_fallthru
          _
      $region63: #{model_forward.10} parent=5 // pred_fallthru
        _
    $region6: #{model_forward.10} parent=1 // loop_footer
      %s13 = sadd.s32 1, %s9
    $region7: #{model_forward.10} parent=1 // loop_footer_branch
      %8 = sbr.rel target = $region3
    $region8: #{model_forward.10} parent=1 // loop_exit
      _

// kernel: model_forward.11
$region0: #{model_forward.11}
  #allocation0 [shape = 'u32[]', space=smem, size = 0x4, offset = 0x4, fixed_abs, tag = 'smem constant byte address 0x4 - core index']
  #allocation1 [shape = 'u32[144,128]{1,0:T(1,128)}', space=vmem, size = 0x12000, scoped, tag = 'internal scratch']
  %s0 = inlined_call_operand.vmem [shape: bf16[72,512], index: 0, kind: input, shape index: {}]
  %s1 = inlined_call_operand.vmem [shape: bf16[16,72], index: 1, kind: input, shape index: {}]
  %s2 = inlined_call_operand.vmem [shape: f32[16,1], index: 2, kind: input, shape index: {}]
  %s3 = inlined_call_operand.vmem [shape: bf16[16,512], index: 3, kind: output, shape index: {}]
  %s4 = sld [smem:[#allocation0]]
  $region117: #{model_forward.11} parent=0
    _
  %s6 = ssub.s32 1, %s4
  %s7 = scalar_select 0, %s6, %s4
  $region1: #{model_forward.11} parent=0
    #allocation2 [shape = 'u8[73728]{0}', space=vmem, size = 0x12000, scoped, tag = 'input window, operand 0']
    #allocation3 [shape = 'u8[16384]{0}', space=vmem, size = 0x4000, scoped, tag = 'output window, operand 0']
    loop: start=0, step=1, limit=4
    $region2: #{model_forward.11} parent=1 // loop_pre_header
      _
    $region3: #{model_forward.11} parent=1 // loop_header
      %s9 = sphi 0, %s13
      %p10 = scmp.ge.s32.totalorder %s9, 4
      %s19 = sphi 0, %s21
      %s22 = sphi 0, %s19
      %s23 = sphi 0, %s22
      %s39 = sphi 0, %s23
      %s43 = sphi 0, %s43
      %s45 = sphi 0, %s43
      %s46 = sphi 0, %s45
      %s60 = sphi 0, %s46
      %s64 = sphi 0, %s64
      %s66 = sphi 0, %s64
      %s67 = sphi 0, %s66
      %s81 = sphi 0, %s67
      %s87 = sphi 0, %s89
      %s90 = sphi 0, %s87
      %s91 = sphi 0, %s90
      %s107 = sphi 0, %s91
    $region4: #{model_forward.11} parent=1 // loop_header_branch
      %12 = sbr.rel (%p10) target = $region8
    $region5: #{model_forward.11} parent=1 // loop_body
      %s14 = ssub.s32 %s9, 1
      %s15 = ssub.s32 %s9, 2
      %s16 = sadd.s32 %s9, 1
      %s17 = ssub.s32 %s9, %s16
      %p18 = scmp.eq.s32.totalorder %s17, 0
      %s20 = sadd.s32 %s19, 1
      %s21 = scalar_select %p18, %s19, %s20
      %p24 = pneg %p18
      %p25 = scmp.eq.s32.totalorder %s9, 1
      %p26 = por %p24, %p25
      %p27 = scmp.ne.s32.totalorder %s19, %s22
      %p28 = scmp.eq.s32.totalorder %s9, 0
      %p29 = por %p27, %p28
      %p30 = scmp.ne.s32.totalorder %s19, %s22
      %p31 = scmp.eq.s32.totalorder %s14, 1
      %p32 = por %p30, %p31
      %p33 = scmp.ne.s32.totalorder %s22, %s23
      %p34 = scmp.eq.s32.totalorder %s14, 0
      %p35 = por %p33, %p34
      %p36 = scmp.ne.s32.totalorder %s22, %s23
      %p37 = scmp.eq.s32.totalorder %s15, 1
      %p38 = por %p36, %p37
      %p40 = scmp.ne.s32.totalorder %s23, %s39
      %p41 = scmp.eq.s32.totalorder %s15, 0
      %p42 = por %p40, %p41
      %s44 = sadd.s32 %s43, 1
      %p47 = scmp.eq.s32.totalorder %s9, 1
      %p48 = scmp.ne.s32.totalorder %s43, %s45
      %p49 = scmp.eq.s32.totalorder %s9, 0
      %p50 = por %p48, %p49
      %p51 = scmp.ne.s32.totalorder %s43, %s45
      %p52 = scmp.eq.s32.totalorder %s14, 1
      %p53 = por %p51, %p52
      %p54 = scmp.ne.s32.totalorder %s45, %s46
      %p55 = scmp.eq.s32.totalorder %s14, 0
      %p56 = por %p54, %p55
      %p57 = scmp.ne.s32.totalorder %s45, %s46
      %p58 = scmp.eq.s32.totalorder %s15, 1
      %p59 = por %p57, %p58
      %p61 = scmp.ne.s32.totalorder %s46, %s60
      %p62 = scmp.eq.s32.totalorder %s15, 0
      %p63 = por %p61, %p62
      %s65 = sadd.s32 %s64, 1
      %p68 = scmp.eq.s32.totalorder %s9, 1
      %p69 = scmp.ne.s32.totalorder %s64, %s66
      %p70 = scmp.eq.s32.totalorder %s9, 0
      %p71 = por %p69, %p70
      %p72 = scmp.ne.s32.totalorder %s64, %s66
      %p73 = scmp.eq.s32.totalorder %s14, 1
      %p74 = por %p72, %p73
      %p75 = scmp.ne.s32.totalorder %s66, %s67
      %p76 = scmp.eq.s32.totalorder %s14, 0
      %p77 = por %p75, %p76
      %p78 = scmp.ne.s32.totalorder %s66, %s67
      %p79 = scmp.eq.s32.totalorder %s15, 1
      %p80 = por %p78, %p79
      %p82 = scmp.ne.s32.totalorder %s67, %s81
      %p83 = scmp.eq.s32.totalorder %s15, 0
      %p84 = por %p82, %p83
      %s85 = ssub.s32 %s9, %s16
      %p86 = scmp.eq.s32.totalorder %s85, 0
      %s88 = sadd.s32 %s87, 1
      %s89 = scalar_select %p86, %s87, %s88
      %p92 = pneg %p86
      %p93 = scmp.eq.s32.totalorder %s9, 1
      %p94 = por %p92, %p93
      %p95 = scmp.ne.s32.totalorder %s87, %s90
      %p96 = scmp.eq.s32.totalorder %s9, 0
      %p97 = por %p95, %p96
      %p98 = scmp.ne.s32.totalorder %s87, %s90
      %p99 = scmp.eq.s32.totalorder %s14, 1
      %p100 = por %p98, %p99
      %p101 = scmp.ne.s32.totalorder %s90, %s91
      %p102 = scmp.eq.s32.totalorder %s14, 0
      %p103 = por %p101, %p102
      %p104 = scmp.ne.s32.totalorder %s90, %s91
      %p105 = scmp.eq.s32.totalorder %s15, 1
      %p106 = por %p104, %p105
      %p108 = scmp.ne.s32.totalorder %s91, %s107
      %p109 = scmp.eq.s32.totalorder %s15, 0
      %p110 = por %p108, %p109
      %p111 = scmp.le.s32.totalorder 1, %s9
      %p112 = scmp.lt.s32.totalorder %s9, 3
      %p113 = pnand %p111, %p112
      %p114 = pneg %p113
      // Predicated region
      $region9: #{model_forward.11} parent=5 // pred_check
        _
      $region10: #{model_forward.11} parent=5 // pred_check_branch
        %116 = sbr.rel (%p113) target = $region12
      $region11: #{model_forward.11} parent=5 // pred_region
        %s117 = ssub.s32 %s9, 1
        // Predicated region
        $region13: #{model_forward.11} parent=11 // pred_check
          %p118 = pneg %p56
        $region14: #{model_forward.11} parent=11 // pred_check_branch
          %120 = sbr.rel (%p118) target = $region16
        $region15: #{model_forward.11} parent=11 // pred_region
          _
        $region16: #{model_forward.11} parent=11 // pred_fallthru
          _
        // Predicated region
        $region17: #{model_forward.11} parent=11 // pred_check
          %p121 = pneg %p77
        $region18: #{model_forward.11} parent=11 // pred_check_branch
          %123 = sbr.rel (%p121) target = $region20
        $region19: #{model_forward.11} parent=11 // pred_region
          _
        $region20: #{model_forward.11} parent=11 // pred_fallthru
          _
      $region12: #{model_forward.11} parent=5 // pred_fallthru
        _
      %p124 = scmp.lt.s32.totalorder %s9, 2
      // Predicated region
      $region21: #{model_forward.11} parent=5 // pred_check
        %p125 = pneg %p124
      $region22: #{model_forward.11} parent=5 // pred_check_branch
        %127 = sbr.rel (%p125) target = $region24
      $region23: #{model_forward.11} parent=5 // pred_region
        // Predicated region
        $region25: #{model_forward.11} parent=23 // pred_check
          %p128 = pneg %p29
        $region26: #{model_forward.11} parent=23 // pred_check_branch
          %130 = sbr.rel (%p128) target = $region28
        $region27: #{model_forward.11} parent=23 // pred_region
          %s131 = sand.u32 %s19, 1
          %s132 = sand.u32 %s19, 1
          %s133 = smul.addr %s132, 72
          %s134 = scalar_lea.vmem [#allocation2], %s133
          %s135 = smul.u32 2, %s9
          %s136 = smul.addr %s135, 4
          %s137 = scalar_lea.vmem %s0, %s136
          // Predicated region
          $region29: #{model_forward.11} parent=27 // pred_check
            _
          $region30: #{model_forward.11} parent=27 // pred_check_branch
            %139 = sbr.rel (0) target = $region32
          $region31: #{model_forward.11} parent=27 // pred_region
            // Predicated region
            $region33: #{model_forward.11} parent=31 // pred_check
              _
            $region34: #{model_forward.11} parent=31 // pred_check_branch
              %141 = sbr.rel (0) target = $region36
            $region35: #{model_forward.11} parent=31 // pred_region
              // Predicated region
              $region48: #{model_forward.11} parent=35 // pred_check
                _
              $region49: #{model_forward.11} parent=35 // pred_check_branch
                %173 = sbr.rel (0) target = $region51
              $region50: #{model_forward.11} parent=35 // pred_region
                loop: start=0, step=1, limit=1
                $region52: #{model_forward.11} parent=50 // loop_pre_header
                  _
                $region53: #{model_forward.11} parent=50 // loop_header
                  %s175 = sphi 0, %s179
                  %p176 = scmp.ge.s32.totalorder %s175, 1
                  %s180 = sphi %s137, %s137
                  %s181 = sphi %s134, %s134
                $region54: #{model_forward.11} parent=50 // loop_header_branch
                  %178 = sbr.rel (%p176) target = $region58
                $region55: #{model_forward.11} parent=50 // loop_body
                  %v182 = vld [vmem:[%s180] sm:$0xff]
                  %183 = vst [vmem:[%s181] sm:$0xff] %v182
                  %v184 = vld [vmem:[%s180 + $0x10] sm:$0xff]
                  %185 = vst [vmem:[%s181 + $0x8] sm:$0xff] %v184
                  %v186 = vld [vmem:[%s180 + $0x20] sm:$0xff]
                  %187 = vst [vmem:[%s181 + $0x10] sm:$0xff] %v186
                  %v188 = vld [vmem:[%s180 + $0x30] sm:$0xff]
                  %189 = vst [vmem:[%s181 + $0x18] sm:$0xff] %v188
                  %v190 = vld [vmem:[%s180 + $0x40] sm:$0xff]
                  %191 = vst [vmem:[%s181 + $0x20] sm:$0xff] %v190
                  %v192 = vld [vmem:[%s180 + $0x50] sm:$0xff]
                  %193 = vst [vmem:[%s181 + $0x28] sm:$0xff] %v192
                  %v194 = vld [vmem:[%s180 + $0x60] sm:$0xff]
                  %195 = vst [vmem:[%s181 + $0x30] sm:$0xff] %v194
                  %v196 = vld [vmem:[%s180 + $0x70] sm:$0xff]
                  %197 = vst [vmem:[%s181 + $0x38] sm:$0xff] %v196
                  %v198 = vld [vmem:[%s180 + $0x80] sm:$0xff]
                  %199 = vst [vmem:[%s181 + $0x40] sm:$0xff] %v198
                $region56: #{model_forward.11} parent=50 // loop_footer
                  %s179 = sadd.s32 1, %s175
                $region57: #{model_forward.11} parent=50 // loop_footer_branch
                  %174 = sbr.rel target = $region53
                $region58: #{model_forward.11} parent=50 // loop_exit
                  _
              $region51: #{model_forward.11} parent=35 // pred_fallthru
                _
              // Predicated region
              $region59: #{model_forward.11} parent=35 // pred_check
                _
              $region60: #{model_forward.11} parent=35 // pred_check_branch
                %201 = sbr.rel target = $region62
              $region61: #{model_forward.11} parent=35 // pred_region
                _
              $region62: #{model_forward.11} parent=35 // pred_fallthru
                _
            $region36: #{model_forward.11} parent=31 // pred_fallthru
              _
            // Predicated region
            $region37: #{model_forward.11} parent=31 // pred_check
              _
            $region38: #{model_forward.11} parent=31 // pred_check_branch
              %143 = sbr.rel target = $region40
            $region39: #{model_forward.11} parent=31 // pred_region
              %s145 = ssub.s32 256, 1
              loop: start=0, step=1, limit=1
              $region41: #{model_forward.11} parent=39 // loop_pre_header
                _
              $region42: #{model_forward.11} parent=39 // loop_header
                %s147 = sphi 0, %s151
                %p148 = scmp.ge.s32.totalorder %s147, 1
                %s152 = sphi %s137, %s137
                %s153 = sphi %s134, %s134
              $region43: #{model_forward.11} parent=39 // loop_header_branch
                %150 = sbr.rel (%p148) target = $region47
              $region44: #{model_forward.11} parent=39 // loop_body
                %v154 = vld [vmem:[%s152] sm:%s145]
                %155 = vst [vmem:[%s153] sm:%s145] %v154
                %v156 = vld [vmem:[%s152 + $0x10] sm:%s145]
                %157 = vst [vmem:[%s153 + $0x8] sm:%s145] %v156
                %v158 = vld [vmem:[%s152 + $0x20] sm:%s145]
                %159 = vst [vmem:[%s153 + $0x10] sm:%s145] %v158
                %v160 = vld [vmem:[%s152 + $0x30] sm:%s145]
                %161 = vst [vmem:[%s153 + $0x18] sm:%s145] %v160
                %v162 = vld [vmem:[%s152 + $0x40] sm:%s145]
                %163 = vst [vmem:[%s153 + $0x20] sm:%s145] %v162
                %v164 = vld [vmem:[%s152 + $0x50] sm:%s145]
                %165 = vst [vmem:[%s153 + $0x28] sm:%s145] %v164
                %v166 = vld [vmem:[%s152 + $0x60] sm:%s145]
                %167 = vst [vmem:[%s153 + $0x30] sm:%s145] %v166
                %v168 = vld [vmem:[%s152 + $0x70] sm:%s145]
                %169 = vst [vmem:[%s153 + $0x38] sm:%s145] %v168
                %v170 = vld [vmem:[%s152 + $0x80] sm:%s145]
                %171 = vst [vmem:[%s153 + $0x40] sm:%s145] %v170
              $region45: #{model_forward.11} parent=39 // loop_footer
                %s151 = sadd.s32 1, %s147
              $region46: #{model_forward.11} parent=39 // loop_footer_branch
                %146 = sbr.rel target = $region42
              $region47: #{model_forward.11} parent=39 // loop_exit
                _
            $region40: #{model_forward.11} parent=31 // pred_fallthru
              _
          $region32: #{model_forward.11} parent=27 // pred_fallthru
            _
          %202 = vnop
        $region28: #{model_forward.11} parent=23 // pred_fallthru
          _
      $region24: #{model_forward.11} parent=5 // pred_fallthru
        _
      %p203 = scmp.le.s32.totalorder 1, %s9
      %p204 = scmp.lt.s32.totalorder %s9, 3
      %p205 = pnand %p203, %p204
      %p206 = pneg %p205
      // Predicated region
      $region63: #{model_forward.11} parent=5 // pred_check
        _
      $region64: #{model_forward.11} parent=5 // pred_check_branch
        %208 = sbr.rel (%p205) target = $region66
      $region65: #{model_forward.11} parent=5 // pred_region
        %s209 = ssub.s32 %s9, 1
        %s210 = sand.u32 %s22, 1
        %s211 = sand.u32 %s22, 1
        %s212 = smul.addr %s211, 72
        %s213 = scalar_lea.vmem [#allocation2], %s212
        // Predicated region
        $region67: #{model_forward.11} parent=65 // pred_check
          %p214 = pneg %p35
        $region68: #{model_forward.11} parent=65 // pred_check_branch
          %216 = sbr.rel (%p214) target = $region70
        $region69: #{model_forward.11} parent=65 // pred_region
          _
        $region70: #{model_forward.11} parent=65 // pred_fallthru
          _
        %s217 = sand.u32 %s22, 1
        %s218 = sand.u32 %s22, 1
        %s219 = smul.addr %s218, 72
        %s220 = scalar_lea.vmem [#allocation2], %s219
        %p221 = pneg %p35
        %p222 = pneg %p32
        %p223 = pneg %p56
        %p224 = pneg %p53
        %p225 = pneg %p77
        %p226 = pneg %p74
        %p227 = pneg %p103
        %p228 = pneg %p100
        %s229 = sand.u32 %s90, 1
        %s230 = sand.u32 %s90, 1
        %s231 = smul.addr %s230, 16
        %s232 = scalar_lea.vmem [#allocation3], %s231
        %s233 = smul.u32 2, %s14
        %s234 = smul.u32 2, %s14
        %v236 = vld [vmem:[%s1] sm:$0xf]
        %v237 = vld [vmem:[%s1 + $0x4] sm:$0xf]
        %v238 = vld [vmem:[%s213] sm:$0xff]
        %v239 = vld [vmem:[%s213 + $0x8] sm:$0xff]
        %v240 = vld [vmem:[%s213 + $0x10] sm:$0xff]
        %v241 = vld [vmem:[%s213 + $0x18] sm:$0xff]
        %v242 = vld [vmem:[%s213 + $0x20] sm:$0xff]
        %v243 = vld [vmem:[%s213 + $0x28] sm:$0xff]
        %v244 = vld [vmem:[%s213 + $0x30] sm:$0xff]
        %v245 = vld [vmem:[%s213 + $0x38] sm:$0xff]
        %v246 = vld [vmem:[%s213 + $0x40] sm:$0xff]
        %v247 = vld [vmem:[%s2] sm:$0xff]
        %v248 = vld [vmem:[%s2 + $0x8] sm:$0xff]
        %250 = vset.pattern.permute.xlu0 0
        %251 = vperm.xlu0 %250, %v247
        %v252 = vpop.permute.xlu0 %251
        %255 = vset.pattern.permute.xlu0 0
        %256 = vperm.xlu0 %255, %v248
        %v257 = vpop.permute.xlu0 %256
        %v261 = vunpack.c.l.b16 %v236
        %v262 = vunpack.c.l.b16 %v237
        %v263 = vpack.c.b16 %v262, %v261
        %v273 = vunpack.c.l.b16 %v238
        %v274 = vunpack.c.h.b16 %v238
        %v275 = vunpack.c.l.b16 %v239
        %v276 = vunpack.c.h.b16 %v239
        %v277 = vunpack.c.l.b16 %v240
        %v278 = vunpack.c.h.b16 %v240
        %v279 = vunpack.c.l.b16 %v241
        %v280 = vunpack.c.h.b16 %v241
        %v281 = vunpack.c.l.b16 %v242
        %v282 = vunpack.c.h.b16 %v242
        %v283 = vunpack.c.l.b16 %v243
        %v284 = vunpack.c.h.b16 %v243
        %v285 = vunpack.c.l.b16 %v244
        %v286 = vunpack.c.h.b16 %v244
        %v287 = vunpack.c.l.b16 %v245
        %v288 = vunpack.c.h.b16 %v245
        %v289 = vunpack.c.l.b16 %v246
        %v290 = vunpack.c.h.b16 %v246
        %v291 = vpack.c.b16 %v275, %v273
        %v292 = vpack.c.b16 %v276, %v274
        %v293 = vpack.c.b16 %v279, %v277
        %v294 = vpack.c.b16 %v280, %v278
        %v295 = vpack.c.b16 %v283, %v281
        %v296 = vpack.c.b16 %v284, %v282
        %v297 = vpack.c.b16 %v287, %v285
        %v298 = vpack.c.b16 %v288, %v286
        %v299 = vpack.c.b16 %v289, %v289
        %v300 = vpack.c.b16 %v290, %v290
        %vm309 = vcmask 588800
        %v311 = vsel %vm309, %v263, 0
        %vm313 = vcmask 1043456
        %v315 = vsel %vm313, %v299, 0
        %v318 = vsel %vm313, %v300, 0
        %320 = vmatprep.subr.bf16.mxu0 0
        %321 = vmatpush1.bf16.msra.mxu0 0
        %322 = vmatprep.subr.bf16.mxu0 0
        %323 = vmatpush1.bf16.msra.mxu0 0
        %324 = vmatprep.subr.bf16.mxu0 0
        %325 = vmatpush1.bf16.msra.mxu0 0
        %326 = vmatprep.subr.bf16.mxu0 %v318
        %327 = vmatpush1.bf16.msra.mxu0 %v315
        %328 = vmatprep.subr.bf16.mxu0 %v298
        %329 = vmatpush1.bf16.msra.mxu0 %v297
        %330 = vmatprep.subr.bf16.mxu0 %v296
        %331 = vmatpush1.bf16.msra.mxu0 %v295
        %332 = vmatprep.subr.bf16.mxu0 %v294
        %333 = vmatpush1.bf16.msra.mxu0 %v293
        %334 = vmatprep.subr.bf16.mxu0 %v292
        %335 = vmatpush1.bf16.msra.mxu0 %v291
        %336 = vmatprep.subr.bf16.mxu0 0
        %337 = vmatpush2.bf16.msra.mxu0 0
        %338 = vmatprep.subr.bf16.mxu0 0
        %339 = vmatpush2.bf16.msra.mxu0 0
        %340 = vmatprep.subr.bf16.mxu0 0
        %341 = vmatpush2.bf16.msra.mxu0 0
        %342 = vmatprep.subr.bf16.mxu0 0
        %343 = vmatpush2.bf16.msra.mxu0 0
        %344 = vmatprep.subr.bf16.mxu0 0
        %345 = vmatpush2.bf16.msra.mxu0 0
        %346 = vmatprep.subr.bf16.mxu0 0
        %347 = vmatpush2.bf16.msra.mxu0 0
        %348 = vmatprep.subr.bf16.mxu0 0
        %349 = vmatpush2.bf16.msra.mxu0 0
        %350 = vmatprep.subr.bf16.mxu0 0
        %351 = vmatpush2.bf16.msra.mxu0 0
        %352 = vmatprep.mubr.bf16.mxu0 0
        %353 = vmatmul.mubr.bf16.gmra.mxu0 %v311
        %v354 = vpop.f32.mrf.mxu0
        %v355 = vadd.f32 %v252, %v354
        %v356 = vpop.f32.mrf.mxu0
        %v357 = vadd.f32 %v252, %v356
        %v358 = vpop.f32.mrf.mxu0
        %v359 = vadd.f32 %v257, %v358
        %v360 = vpop.f32.mrf.mxu0
        %v361 = vadd.f32 %v257, %v360
        %362 = vdwg.mxu0
        %vm363 = vcmp.ge.f32.partialorder %v355, 0.0
        %vm364 = vcmp.ge.f32.partialorder %v357, 0.0
        %vm365 = vcmp.ge.f32.partialorder %v359, 0.0
        %vm366 = vcmp.ge.f32.partialorder %v361, 0.0
        %v367 = vmul.f32 %v355, 0.01
        %v368 = vmul.f32 %v357, 0.01
        %v369 = vmul.f32 %v359, 0.01
        %v370 = vmul.f32 %v361, 0.01
        %v371 = vsel %vm363, %v355, %v367
        %v372 = vsel %vm364, %v357, %v368
        %v373 = vsel %vm365, %v359, %v369
        %v374 = vsel %vm366, %v361, %v370
        %v375 = vpack.c.bf16 %v373, %v371
        %v376 = vpack.c.bf16 %v374, %v372
        %v379 = vunpack.c.l.b16 %v375
        %v380 = vunpack.c.l.b16 %v376
        %v381 = vunpack.c.h.b16 %v375
        %v382 = vunpack.c.h.b16 %v376
        %v383 = vpack.c.b16 %v380, %v379
        %v384 = vpack.c.b16 %v382, %v381
        %387 = vst [vmem:[%s232] sm:$0xff] %v383
        %388 = vst [vmem:[%s232 + $0x8] sm:$0xff] %v384
        %s389 = sand.u32 %s90, 1
        %s390 = sand.u32 %s90, 1
        %s391 = smul.addr %s390, 16
        %s392 = scalar_lea.vmem [#allocation3], %s391
        // Predicated region
        $region71: #{model_forward.11} parent=65 // pred_check
          %p393 = pneg %p100
        $region72: #{model_forward.11} parent=65 // pred_check_branch
          %395 = sbr.rel (%p393) target = $region74
        $region73: #{model_forward.11} parent=65 // pred_region
          %s396 = smul.u32 2, %s14
          %s397 = smul.addr %s396, 4
          %s398 = scalar_lea.vmem %s3, %s397
          // Predicated region
          $region75: #{model_forward.11} parent=73 // pred_check
            _
          $region76: #{model_forward.11} parent=73 // pred_check_branch
            %400 = sbr.rel (0) target = $region78
          $region77: #{model_forward.11} parent=73 // pred_region
            // Predicated region
            $region79: #{model_forward.11} parent=77 // pred_check
              _
            $region80: #{model_forward.11} parent=77 // pred_check_branch
              %402 = sbr.rel (0) target = $region82
            $region81: #{model_forward.11} parent=77 // pred_region
              // Predicated region
              $region94: #{model_forward.11} parent=81 // pred_check
                _
              $region95: #{model_forward.11} parent=81 // pred_check_branch
                %420 = sbr.rel (0) target = $region97
              $region96: #{model_forward.11} parent=81 // pred_region
                loop: start=0, step=1, limit=1
                $region98: #{model_forward.11} parent=96 // loop_pre_header
                  _
                $region99: #{model_forward.11} parent=96 // loop_header
                  %s422 = sphi 0, %s426
                  %p423 = scmp.ge.s32.totalorder %s422, 1
                  %s427 = sphi %s392, %s392
                  %s428 = sphi %s398, %s398
                $region100: #{model_forward.11} parent=96 // loop_header_branch
                  %425 = sbr.rel (%p423) target = $region104
                $region101: #{model_forward.11} parent=96 // loop_body
                  %v429 = vld [vmem:[%s427] sm:$0xff]
                  %430 = vst [vmem:[%s428] sm:$0xff] %v429
                  %v431 = vld [vmem:[%s427 + $0x8] sm:$0xff]
                  %432 = vst [vmem:[%s428 + $0x10] sm:$0xff] %v431
                $region102: #{model_forward.11} parent=96 // loop_footer
                  %s426 = sadd.s32 1, %s422
                $region103: #{model_forward.11} parent=96 // loop_footer_branch
                  %421 = sbr.rel target = $region99
                $region104: #{model_forward.11} parent=96 // loop_exit
                  _
              $region97: #{model_forward.11} parent=81 // pred_fallthru
                _
              // Predicated region
              $region105: #{model_forward.11} parent=81 // pred_check
                _
              $region106: #{model_forward.11} parent=81 // pred_check_branch
                %434 = sbr.rel target = $region108
              $region107: #{model_forward.11} parent=81 // pred_region
                _
              $region108: #{model_forward.11} parent=81 // pred_fallthru
                _
            $region82: #{model_forward.11} parent=77 // pred_fallthru
              _
            // Predicated region
            $region83: #{model_forward.11} parent=77 // pred_check
              _
            $region84: #{model_forward.11} parent=77 // pred_check_branch
              %404 = sbr.rel target = $region86
            $region85: #{model_forward.11} parent=77 // pred_region
              %s406 = ssub.s32 256, 1
              loop: start=0, step=1, limit=1
              $region87: #{model_forward.11} parent=85 // loop_pre_header
                _
              $region88: #{model_forward.11} parent=85 // loop_header
                %s408 = sphi 0, %s412
                %p409 = scmp.ge.s32.totalorder %s408, 1
                %s413 = sphi %s392, %s392
                %s414 = sphi %s398, %s398
              $region89: #{model_forward.11} parent=85 // loop_header_branch
                %411 = sbr.rel (%p409) target = $region93
              $region90: #{model_forward.11} parent=85 // loop_body
                %v415 = vld [vmem:[%s413] sm:%s406]
                %416 = vst [vmem:[%s414] sm:%s406] %v415
                %v417 = vld [vmem:[%s413 + $0x8] sm:%s406]
                %418 = vst [vmem:[%s414 + $0x10] sm:%s406] %v417
              $region91: #{model_forward.11} parent=85 // loop_footer
                %s412 = sadd.s32 1, %s408
              $region92: #{model_forward.11} parent=85 // loop_footer_branch
                %407 = sbr.rel target = $region88
              $region93: #{model_forward.11} parent=85 // loop_exit
                _
            $region86: #{model_forward.11} parent=77 // pred_fallthru
              _
          $region78: #{model_forward.11} parent=73 // pred_fallthru
            _
          %435 = vnop
        $region74: #{model_forward.11} parent=65 // pred_fallthru
          _
      $region66: #{model_forward.11} parent=5 // pred_fallthru
        _
      %p436 = scmp.le.s32.totalorder 2, %s9
      // Predicated region
      $region109: #{model_forward.11} parent=5 // pred_check
        %p437 = pneg %p436
      $region110: #{model_forward.11} parent=5 // pred_check_branch
        %439 = sbr.rel (%p437) target = $region112
      $region111: #{model_forward.11} parent=5 // pred_region
        %s440 = ssub.s32 %s9, 2
        // Predicated region
        $region113: #{model_forward.11} parent=111 // pred_check
          %p441 = pneg %p106
        $region114: #{model_forward.11} parent=111 // pred_check_branch
          %443 = sbr.rel (%p441) target = $region116
        $region115: #{model_forward.11} parent=111 // pred_region
          %s444 = sand.u32 %s91, 1
          %s445 = sand.u32 %s91, 1
          %s446 = smul.addr %s445, 16
          %s447 = scalar_lea.vmem [#allocation3], %s446
        $region116: #{model_forward.11} parent=111 // pred_fallthru
          _
      $region112: #{model_forward.11} parent=5 // pred_fallthru
        _
    $region6: #{model_forward.11} parent=1 // loop_footer
      %s13 = sadd.s32 1, %s9
    $region7: #{model_forward.11} parent=1 // loop_footer_branch
      %8 = sbr.rel target = $region3
    $region8: #{model_forward.11} parent=1 // loop_exit
      _

// kernel: model_forward.12
$region0: #{model_forward.12}
  #allocation0 [shape = 'u32[]', space=smem, size = 0x4, offset = 0x4, fixed_abs, tag = 'smem constant byte address 0x4 - core index']
  #allocation1 [shape = 'u32[144,128]{1,0:T(1,128)}', space=vmem, size = 0x12000, scoped, tag = 'internal scratch']
  %s0 = inlined_call_operand.vmem [shape: bf16[144,128], index: 0, kind: input, shape index: {}]
  %s1 = inlined_call_operand.vmem [shape: bf16[32,144], index: 1, kind: input, shape index: {}]
  %s2 = inlined_call_operand.vmem [shape: f32[32,1], index: 2, kind: input, shape index: {}]
  %s3 = inlined_call_operand.vmem [shape: bf16[32,128], index: 3, kind: output, shape index: {}]
  %s4 = sld [smem:[#allocation0]]
  $region22: #{model_forward.12} parent=0
    _
  %s6 = ssub.s32 1, %s4
  %s7 = scalar_select 0, %s6, %s4
  // Predicated region
  $region2: #{model_forward.12} parent=0 // pred_check
    _
  $region3: #{model_forward.12} parent=0 // pred_check_branch
    %9 = sbr.rel (0) target = $region5
  $region4: #{model_forward.12} parent=0 // pred_region
    _
  $region5: #{model_forward.12} parent=0 // pred_fallthru
    _
  // Predicated region
  $region6: #{model_forward.12} parent=0 // pred_check
    _
  $region7: #{model_forward.12} parent=0 // pred_check_branch
    %11 = sbr.rel (0) target = $region9
  $region8: #{model_forward.12} parent=0 // pred_region
    _
  $region9: #{model_forward.12} parent=0 // pred_fallthru
    _
  // Predicated region
  $region10: #{model_forward.12} parent=0 // pred_check
    _
  $region11: #{model_forward.12} parent=0 // pred_check_branch
    %13 = sbr.rel (0) target = $region13
  $region12: #{model_forward.12} parent=0 // pred_region
    _
  $region13: #{model_forward.12} parent=0 // pred_fallthru
    _
  %v15 = vld [vmem:[%s1] sm:$0xff]
  %v16 = vld [vmem:[%s1 + $0x8] sm:$0xff]
  %v17 = vld [vmem:[%s1 + $0x10] sm:$0xff]
  %v18 = vld [vmem:[%s1 + $0x18] sm:$0xff]
  %v19 = vld [vmem:[%s0] sm:$0xf]
  %v20 = vld [vmem:[%s0 + $0x4] sm:$0xf]
  %v21 = vld [vmem:[%s0 + $0x8] sm:$0xf]
  %v22 = vld [vmem:[%s0 + $0xc] sm:$0xf]
  %v23 = vld [vmem:[%s0 + $0x10] sm:$0xf]
  %v24 = vld [vmem:[%s0 + $0x14] sm:$0xf]
  %v25 = vld [vmem:[%s0 + $0x18] sm:$0xf]
  %v26 = vld [vmem:[%s0 + $0x1c] sm:$0xf]
  %v27 = vld [vmem:[%s0 + $0x20] sm:$0xf]
  %v28 = vld [vmem:[%s0 + $0x24] sm:$0xf]
  %v29 = vld [vmem:[%s0 + $0x28] sm:$0xf]
  %v30 = vld [vmem:[%s0 + $0x2c] sm:$0xf]
  %v31 = vld [vmem:[%s0 + $0x30] sm:$0xf]
  %v32 = vld [vmem:[%s0 + $0x34] sm:$0xf]
  %v33 = vld [vmem:[%s0 + $0x38] sm:$0xf]
  %v34 = vld [vmem:[%s0 + $0x3c] sm:$0xf]
  %v35 = vld [vmem:[%s0 + $0x40] sm:$0xf]
  %v36 = vld [vmem:[%s0 + $0x44] sm:$0xf]
  %v37 = vld [vmem:[%s2] sm:$0xff]
  %v38 = vld [vmem:[%s2 + $0x8] sm:$0xff]
  %v39 = vld [vmem:[%s2 + $0x10] sm:$0xff]
  %v40 = vld [vmem:[%s2 + $0x18] sm:$0xff]
  %42 = vset.pattern.permute.xlu0 0
  %43 = vperm.xlu0 %42, %v37
  %v44 = vpop.permute.xlu0 %43
  %47 = vset.pattern.permute.xlu0 0
  %48 = vperm.xlu0 %47, %v38
  %v49 = vpop.permute.xlu0 %48
  %52 = vset.pattern.permute.xlu0 0
  %53 = vperm.xlu0 %52, %v39
  %v54 = vpop.permute.xlu0 %53
  %57 = vset.pattern.permute.xlu0 0
  %58 = vperm.xlu0 %57, %v40
  %v59 = vpop.permute.xlu0 %58
  %v65 = vunpack.c.l.b16 %v15
  %v66 = vunpack.c.h.b16 %v15
  %v67 = vunpack.c.l.b16 %v16
  %v68 = vunpack.c.h.b16 %v16
  %v69 = vunpack.c.l.b16 %v17
  %v70 = vunpack.c.h.b16 %v17
  %v71 = vunpack.c.l.b16 %v18
  %v72 = vunpack.c.h.b16 %v18
  %v73 = vpack.c.b16 %v67, %v65
  %v74 = vpack.c.b16 %v68, %v66
  %v75 = vpack.c.b16 %v71, %v69
  %v76 = vpack.c.b16 %v72, %v70
  %v97 = vunpack.c.l.b16 %v19
  %v98 = vunpack.c.l.b16 %v20
  %v99 = vunpack.c.l.b16 %v21
  %v100 = vunpack.c.l.b16 %v22
  %v101 = vunpack.c.l.b16 %v23
  %v102 = vunpack.c.l.b16 %v24
  %v103 = vunpack.c.l.b16 %v25
  %v104 = vunpack.c.l.b16 %v26
  %v105 = vunpack.c.l.b16 %v27
  %v106 = vunpack.c.l.b16 %v28
  %v107 = vunpack.c.l.b16 %v29
  %v108 = vunpack.c.l.b16 %v30
  %v109 = vunpack.c.l.b16 %v31
  %v110 = vunpack.c.l.b16 %v32
  %v111 = vunpack.c.l.b16 %v33
  %v112 = vunpack.c.l.b16 %v34
  %v113 = vunpack.c.l.b16 %v35
  %v114 = vunpack.c.l.b16 %v36
  %v115 = vpack.c.b16 %v98, %v97
  %v116 = vpack.c.b16 %v100, %v99
  %v117 = vpack.c.b16 %v102, %v101
  %v118 = vpack.c.b16 %v104, %v103
  %v119 = vpack.c.b16 %v106, %v105
  %v120 = vpack.c.b16 %v108, %v107
  %v121 = vpack.c.b16 %v110, %v109
  %v122 = vpack.c.b16 %v112, %v111
  %v123 = vpack.c.b16 %v114, %v113
  %vm133 = vcmask 130048
  %v135 = vsel %vm133, %v74, 0
  %v138 = vsel %vm133, %v76, 0
  %140 = vmatprep.subr.bf16.mxu0 0
  %141 = vmatpush1.bf16.msra.mxu0 %v122
  %142 = vmatprep.subr.bf16.mxu0 0
  %143 = vmatpush1.bf16.msra.mxu0 %v121
  %144 = vmatprep.subr.bf16.mxu0 0
  %145 = vmatpush1.bf16.msra.mxu0 %v120
  %146 = vmatprep.subr.bf16.mxu0 0
  %147 = vmatpush1.bf16.msra.mxu0 %v119
  %148 = vmatprep.subr.bf16.mxu0 0
  %149 = vmatpush1.bf16.msra.mxu0 %v118
  %150 = vmatprep.subr.bf16.mxu0 0
  %151 = vmatpush1.bf16.msra.mxu0 %v117
  %152 = vmatprep.subr.bf16.mxu0 0
  %153 = vmatpush1.bf16.msra.mxu0 %v116
  %154 = vmatprep.subr.bf16.mxu0 0
  %155 = vmatpush1.bf16.msra.mxu0 %v115
  %156 = vmatprep.subr.bf16.mxu0 0
  %157 = vmatpush2.bf16.msra.mxu0 0
  %158 = vmatprep.subr.bf16.mxu0 0
  %159 = vmatpush2.bf16.msra.mxu0 0
  %160 = vmatprep.subr.bf16.mxu0 0
  %161 = vmatpush2.bf16.msra.mxu0 0
  %162 = vmatprep.subr.bf16.mxu0 0
  %163 = vmatpush2.bf16.msra.mxu0 0
  %164 = vmatprep.subr.bf16.mxu0 0
  %165 = vmatpush2.bf16.msra.mxu0 0
  %166 = vmatprep.subr.bf16.mxu0 0
  %167 = vmatpush2.bf16.msra.mxu0 0
  %168 = vmatprep.subr.bf16.mxu0 0
  %169 = vmatpush2.bf16.msra.mxu0 0
  %170 = vmatprep.subr.bf16.mxu0 0
  %171 = vmatpush2.bf16.msra.mxu0 %v123
  %172 = vmatprep.mubr.bf16.mxu0 %v135
  %173 = vmatmul.mubr.bf16.gmra.mxu0 %v73
  %v174 = vpop.f32.mrf.mxu0
  %v175 = vadd.f32 %v44, %v174
  %v176 = vpop.f32.mrf.mxu0
  %v177 = vpop.f32.mrf.mxu0
  %v178 = vadd.f32 %v49, %v177
  %v179 = vpop.f32.mrf.mxu0
  %180 = vmatprep.mubr.bf16.mxu0 %v138
  %181 = vmatmul.mubr.bf16.gmra.mxu0 %v75
  %v182 = vpop.f32.mrf.mxu0
  %v183 = vadd.f32 %v54, %v182
  %v184 = vpop.f32.mrf.mxu0
  %v185 = vpop.f32.mrf.mxu0
  %v186 = vadd.f32 %v59, %v185
  %v187 = vpop.f32.mrf.mxu0
  %188 = vdwg.mxu0
  %vm189 = vcmp.ge.f32.partialorder %v175, 0.0
  %vm190 = vcmp.ge.f32.partialorder %v178, 0.0
  %vm191 = vcmp.ge.f32.partialorder %v183, 0.0
  %vm192 = vcmp.ge.f32.partialorder %v186, 0.0
  %v193 = vmul.f32 %v175, 0.01
  %v194 = vmul.f32 %v178, 0.01
  %v195 = vmul.f32 %v183, 0.01
  %v196 = vmul.f32 %v186, 0.01
  %v197 = vsel %vm189, %v175, %v193
  %v198 = vsel %vm190, %v178, %v194
  %v199 = vsel %vm191, %v183, %v195
  %v200 = vsel %vm192, %v186, %v196
  %v201 = vpack.c.bf16 %v198, %v197
  %v202 = vpack.c.bf16 %v200, %v199
  %v205 = vunpack.c.l.b16 %v201
  %v206 = vunpack.c.h.b16 %v201
  %v207 = vunpack.c.l.b16 %v202
  %v208 = vunpack.c.h.b16 %v202
  %v209 = vpack.c.b16 %v205, %v205
  %v210 = vpack.c.b16 %v206, %v206
  %v211 = vpack.c.b16 %v207, %v207
  %v212 = vpack.c.b16 %v208, %v208
  %217 = vst [vmem:[%s3] sm:$0xf] %v209
  %218 = vst [vmem:[%s3 + $0x4] sm:$0xf] %v210
  %219 = vst [vmem:[%s3 + $0x8] sm:$0xf] %v211
  %220 = vst [vmem:[%s3 + $0xc] sm:$0xf] %v212
  // Predicated region
  $region14: #{model_forward.12} parent=0 // pred_check
    _
  $region15: #{model_forward.12} parent=0 // pred_check_branch
    %222 = sbr.rel (0) target = $region17
  $region16: #{model_forward.12} parent=0 // pred_region
    _
  $region17: #{model_forward.12} parent=0 // pred_fallthru
    _
  // Predicated region
  $region18: #{model_forward.12} parent=0 // pred_check
    _
  $region19: #{model_forward.12} parent=0 // pred_check_branch
    %224 = sbr.rel (0) target = $region21
  $region20: #{model_forward.12} parent=0 // pred_region
    _
  $region21: #{model_forward.12} parent=0 // pred_fallthru
    _

// kernel: model_forward.13
$region0: #{model_forward.13}
  #allocation0 [shape = 'u32[]', space=smem, size = 0x4, offset = 0x4, fixed_abs, tag = 'smem constant byte address 0x4 - core index']
  #allocation1 [shape = 'u32[144,128]{1,0:T(1,128)}', space=vmem, size = 0x12000, scoped, tag = 'internal scratch']
  %s0 = inlined_call_operand.vmem [shape: bf16[2,2048], index: 0, kind: input, shape index: {}]
  %s1 = inlined_call_operand.vmem [shape: f32[2048,16], index: 1, kind: input, shape index: {}]
  %s2 = inlined_call_operand.vmem [shape: f32[1,16], index: 2, kind: input, shape index: {}]
  %s3 = inlined_call_operand.vmem [shape: f32[2048,16], index: 3, kind: input, shape index: {}]
  %s4 = inlined_call_operand.vmem [shape: f32[1,16], index: 4, kind: input, shape index: {}]
  %s5 = inlined_call_operand.vmem [shape: f32[2,16], index: 5, kind: input, shape index: {}]
  %s6 = inlined_call_operand.vmem [shape: f32[16,2048], index: 6, kind: input, shape index: {}]
  %s7 = inlined_call_operand.vmem [shape: f32[1,2048], index: 7, kind: input, shape index: {}]
  %s8 = inlined_call_operand.hbm [shape: f32[2,16], index: 8, kind: output, shape index: {0}]
  %s9 = inlined_call_operand.hbm [shape: f32[2,16], index: 9, kind: output, shape index: {1}]
  %s10 = inlined_call_operand.vmem [shape: bf16[2,2048], index: 10, kind: output, shape index: {2}]
  %11 = xla_tuple %s8, %s9, %s10
  %s12 = sld [smem:[#allocation0]]
  $region58: #{model_forward.13} parent=0
    _
  %s14 = ssub.s32 1, %s12
  %s15 = scalar_select 0, %s14, %s12
  $region1: #{model_forward.13} parent=0
    #allocation2 [shape = 'u8[1024]{0}', space=vmem, size = 0x400, scoped, tag = 'output window, operand 0, single buffered']
    #allocation3 [shape = 's32[1]{0}', space=sflag, size = 0x4, scoped, tag = 'scoped memory for model_forward.13']
    #allocation4 [shape = 'u8[1024]{0}', space=vmem, size = 0x400, scoped, tag = 'output window, operand 1, single buffered']
    #allocation5 [shape = 's32[1]{0}', space=sflag, size = 0x4, scoped, tag = 'scoped memory for model_forward.13']
    %16 = vsyncpa [#allocation3], 0
    %17 = vsyncpa [#allocation5], 0
    // Predicated region
    $region2: #{model_forward.13} parent=1 // pred_check
      _
    $region3: #{model_forward.13} parent=1 // pred_check_branch
      %19 = sbr.rel (0) target = $region5
    $region4: #{model_forward.13} parent=1 // pred_region
      _
    $region5: #{model_forward.13} parent=1 // pred_fallthru
      _
    // Predicated region
    $region6: #{model_forward.13} parent=1 // pred_check
      _
    $region7: #{model_forward.13} parent=1 // pred_check_branch
      %21 = sbr.rel (0) target = $region9
    $region8: #{model_forward.13} parent=1 // pred_region
      _
    $region9: #{model_forward.13} parent=1 // pred_fallthru
      _
    // Predicated region
    $region10: #{model_forward.13} parent=1 // pred_check
      _
    $region11: #{model_forward.13} parent=1 // pred_check_branch
      %23 = sbr.rel (0) target = $region13
    $region12: #{model_forward.13} parent=1 // pred_region
      _
    $region13: #{model_forward.13} parent=1 // pred_fallthru
      _
    // Predicated region
    $region14: #{model_forward.13} parent=1 // pred_check
      _
    $region15: #{model_forward.13} parent=1 // pred_check_branch
      %25 = sbr.rel (0) target = $region17
    $region16: #{model_forward.13} parent=1 // pred_region
      _
    $region17: #{model_forward.13} parent=1 // pred_fallthru
      _
    // Predicated region
    $region18: #{model_forward.13} parent=1 // pred_check
      _
    $region19: #{model_forward.13} parent=1 // pred_check_branch
      %27 = sbr.rel (0) target = $region21
    $region20: #{model_forward.13} parent=1 // pred_region
      _
    $region21: #{model_forward.13} parent=1 // pred_fallthru
      _
    // Predicated region
    $region22: #{model_forward.13} parent=1 // pred_check
      _
    $region23: #{model_forward.13} parent=1 // pred_check_branch
      %29 = sbr.rel (0) target = $region25
    $region24: #{model_forward.13} parent=1 // pred_region
      _
    $region25: #{model_forward.13} parent=1 // pred_fallthru
      _
    // Predicated region
    $region26: #{model_forward.13} parent=1 // pred_check
      _
    $region27: #{model_forward.13} parent=1 // pred_check_branch
      %31 = sbr.rel (0) target = $region29
    $region28: #{model_forward.13} parent=1 // pred_region
      _
    $region29: #{model_forward.13} parent=1 // pred_fallthru
      _
    // Predicated region
    $region30: #{model_forward.13} parent=1 // pred_check
      _
    $region31: #{model_forward.13} parent=1 // pred_check_branch
      %33 = sbr.rel (0) target = $region33
    $region32: #{model_forward.13} parent=1 // pred_region
      _
    $region33: #{model_forward.13} parent=1 // pred_fallthru
      _
    %v34 = vld [vmem:[%s0] sm:$0xff]
    %v35 = vld [vmem:[%s0 + $0x8] sm:$0xff]
    %v36 = vunpack.c.l.bf16 %v34
    %v37 = vunpack.c.h.bf16 %v34
    %v38 = vunpack.c.l.bf16 %v35
    %v39 = vunpack.c.h.bf16 %v35
    %v40 = vld [vmem:[%s1] sm:$0xff]
    %v41 = vld [vmem:[%s1 + $0x8] sm:$0xff]
    %v42 = vld [vmem:[%s1 + $0x10] sm:$0xff]
    %v43 = vld [vmem:[%s1 + $0x18] sm:$0xff]
    %v44 = vld [vmem:[%s1 + $0x20] sm:$0xff]
    %v45 = vld [vmem:[%s1 + $0x28] sm:$0xff]
    %v46 = vld [vmem:[%s1 + $0x30] sm:$0xff]
    %v47 = vld [vmem:[%s1 + $0x38] sm:$0xff]
    %v48 = vld [vmem:[%s1 + $0x40] sm:$0xff]
    %v49 = vld [vmem:[%s1 + $0x48] sm:$0xff]
    %v50 = vld [vmem:[%s1 + $0x50] sm:$0xff]
    %v51 = vld [vmem:[%s1 + $0x58] sm:$0xff]
    %v52 = vld [vmem:[%s1 + $0x60] sm:$0xff]
    %v53 = vld [vmem:[%s1 + $0x68] sm:$0xff]
    %v54 = vld [vmem:[%s1 + $0x70] sm:$0xff]
    %v55 = vld [vmem:[%s1 + $0x78] sm:$0xff]
    %v56 = vld [vmem:[%s1 + $0x80] sm:$0xff]
    %v57 = vld [vmem:[%s1 + $0x88] sm:$0xff]
    %v58 = vld [vmem:[%s1 + $0x90] sm:$0xff]
    %v59 = vld [vmem:[%s1 + $0x98] sm:$0xff]
    %v60 = vld [vmem:[%s1 + $0xa0] sm:$0xff]
    %v61 = vld [vmem:[%s1 + $0xa8] sm:$0xff]
    %v62 = vld [vmem:[%s1 + $0xb0] sm:$0xff]
    %v63 = vld [vmem:[%s1 + $0xb8] sm:$0xff]
    %v64 = vld [vmem:[%s1 + $0xc0] sm:$0xff]
    %v65 = vld [vmem:[%s1 + $0xc8] sm:$0xff]
    %v66 = vld [vmem:[%s1 + $0xd0] sm:$0xff]
    %v67 = vld [vmem:[%s1 + $0xd8] sm:$0xff]
    %v68 = vld [vmem:[%s1 + $0xe0] sm:$0xff]
    %v69 = vld [vmem:[%s1 + $0xe8] sm:$0xff]
    %v70 = vld [vmem:[%s1 + $0xf0] sm:$0xff]
    %v71 = vld [vmem:[%s1 + $0xf8] sm:$0xff]
    %v72 = vld [vmem:[%s1 + $0x100] sm:$0xff]
    %v73 = vld [vmem:[%s1 + $0x108] sm:$0xff]
    %v74 = vld [vmem:[%s1 + $0x110] sm:$0xff]
    %v75 = vld [vmem:[%s1 + $0x118] sm:$0xff]
    %v76 = vld [vmem:[%s1 + $0x120] sm:$0xff]
    %v77 = vld [vmem:[%s1 + $0x128] sm:$0xff]
    %v78 = vld [vmem:[%s1 + $0x130] sm:$0xff]
    %v79 = vld [vmem:[%s1 + $0x138] sm:$0xff]
    %v80 = vld [vmem:[%s1 + $0x140] sm:$0xff]
    %v81 = vld [vmem:[%s1 + $0x148] sm:$0xff]
    %v82 = vld [vmem:[%s1 + $0x150] sm:$0xff]
    %v83 = vld [vmem:[%s1 + $0x158] sm:$0xff]
    %v84 = vld [vmem:[%s1 + $0x160] sm:$0xff]
    %v85 = vld [vmem:[%s1 + $0x168] sm:$0xff]
    %v86 = vld [vmem:[%s1 + $0x170] sm:$0xff]
    %v87 = vld [vmem:[%s1 + $0x178] sm:$0xff]
    %v88 = vld [vmem:[%s1 + $0x180] sm:$0xff]
    %v89 = vld [vmem:[%s1 + $0x188] sm:$0xff]
    %v90 = vld [vmem:[%s1 + $0x190] sm:$0xff]
    %v91 = vld [vmem:[%s1 + $0x198] sm:$0xff]
    %v92 = vld [vmem:[%s1 + $0x1a0] sm:$0xff]
    %v93 = vld [vmem:[%s1 + $0x1a8] sm:$0xff]
    %v94 = vld [vmem:[%s1 + $0x1b0] sm:$0xff]
    %v95 = vld [vmem:[%s1 + $0x1b8] sm:$0xff]
    %v96 = vld [vmem:[%s1 + $0x1c0] sm:$0xff]
    %v97 = vld [vmem:[%s1 + $0x1c8] sm:$0xff]
    %v98 = vld [vmem:[%s1 + $0x1d0] sm:$0xff]
    %v99 = vld [vmem:[%s1 + $0x1d8] sm:$0xff]
    %v100 = vld [vmem:[%s1 + $0x1e0] sm:$0xff]
    %v101 = vld [vmem:[%s1 + $0x1e8] sm:$0xff]
    %v102 = vld [vmem:[%s1 + $0x1f0] sm:$0xff]
    %v103 = vld [vmem:[%s1 + $0x1f8] sm:$0xff]
    %v104 = vld [vmem:[%s1 + $0x200] sm:$0xff]
    %v105 = vld [vmem:[%s1 + $0x208] sm:$0xff]
    %v106 = vld [vmem:[%s1 + $0x210] sm:$0xff]
    %v107 = vld [vmem:[%s1 + $0x218] sm:$0xff]
    %v108 = vld [vmem:[%s1 + $0x220] sm:$0xff]
    %v109 = vld [vmem:[%s1 + $0x228] sm:$0xff]
    %v110 = vld [vmem:[%s1 + $0x230] sm:$0xff]
    %v111 = vld [vmem:[%s1 + $0x238] sm:$0xff]
    %v112 = vld [vmem:[%s1 + $0x240] sm:$0xff]
    %v113 = vld [vmem:[%s1 + $0x248] sm:$0xff]
    %v114 = vld [vmem:[%s1 + $0x250] sm:$0xff]
    %v115 = vld [vmem:[%s1 + $0x258] sm:$0xff]
    %v116 = vld [vmem:[%s1 + $0x260] sm:$0xff]
    %v117 = vld [vmem:[%s1 + $0x268] sm:$0xff]
    %v118 = vld [vmem:[%s1 + $0x270] sm:$0xff]
    %v119 = vld [vmem:[%s1 + $0x278] sm:$0xff]
    %v120 = vld [vmem:[%s1 + $0x280] sm:$0xff]
    %v121 = vld [vmem:[%s1 + $0x288] sm:$0xff]
    %v122 = vld [vmem:[%s1 + $0x290] sm:$0xff]
    %v123 = vld [vmem:[%s1 + $0x298] sm:$0xff]
    %v124 = vld [vmem:[%s1 + $0x2a0] sm:$0xff]
    %v125 = vld [vmem:[%s1 + $0x2a8] sm:$0xff]
    %v126 = vld [vmem:[%s1 + $0x2b0] sm:$0xff]
    %v127 = vld [vmem:[%s1 + $0x2b8] sm:$0xff]
    %v128 = vld [vmem:[%s1 + $0x2c0] sm:$0xff]
    %v129 = vld [vmem:[%s1 + $0x2c8] sm:$0xff]
    %v130 = vld [vmem:[%s1 + $0x2d0] sm:$0xff]
    %v131 = vld [vmem:[%s1 + $0x2d8] sm:$0xff]
    %v132 = vld [vmem:[%s1 + $0x2e0] sm:$0xff]
    %v133 = vld [vmem:[%s1 + $0x2e8] sm:$0xff]
    %v134 = vld [vmem:[%s1 + $0x2f0] sm:$0xff]
    %v135 = vld [vmem:[%s1 + $0x2f8] sm:$0xff]
    %v136 = vld [vmem:[%s1 + $0x300] sm:$0xff]
    %v137 = vld [vmem:[%s1 + $0x308] sm:$0xff]
    %v138 = vld [vmem:[%s1 + $0x310] sm:$0xff]
    %v139 = vld [vmem:[%s1 + $0x318] sm:$0xff]
    %v140 = vld [vmem:[%s1 + $0x320] sm:$0xff]
    %v141 = vld [vmem:[%s1 + $0x328] sm:$0xff]
    %v142 = vld [vmem:[%s1 + $0x330] sm:$0xff]
    %v143 = vld [vmem:[%s1 + $0x338] sm:$0xff]
    %v144 = vld [vmem:[%s1 + $0x340] sm:$0xff]
    %v145 = vld [vmem:[%s1 + $0x348] sm:$0xff]
    %v146 = vld [vmem:[%s1 + $0x350] sm:$0xff]
    %v147 = vld [vmem:[%s1 + $0x358] sm:$0xff]
    %v148 = vld [vmem:[%s1 + $0x360] sm:$0xff]
    %v149 = vld [vmem:[%s1 + $0x368] sm:$0xff]
    %v150 = vld [vmem:[%s1 + $0x370] sm:$0xff]
    %v151 = vld [vmem:[%s1 + $0x378] sm:$0xff]
    %v152 = vld [vmem:[%s1 + $0x380] sm:$0xff]
    %v153 = vld [vmem:[%s1 + $0x388] sm:$0xff]
    %v154 = vld [vmem:[%s1 + $0x390] sm:$0xff]
    %v155 = vld [vmem:[%s1 + $0x398] sm:$0xff]
    %v156 = vld [vmem:[%s1 + $0x3a0] sm:$0xff]
    %v157 = vld [vmem:[%s1 + $0x3a8] sm:$0xff]
    %v158 = vld [vmem:[%s1 + $0x3b0] sm:$0xff]
    %v159 = vld [vmem:[%s1 + $0x3b8] sm:$0xff]
    %v160 = vld [vmem:[%s1 + $0x3c0] sm:$0xff]
    %v161 = vld [vmem:[%s1 + $0x3c8] sm:$0xff]
    %v162 = vld [vmem:[%s1 + $0x3d0] sm:$0xff]
    %v163 = vld [vmem:[%s1 + $0x3d8] sm:$0xff]
    %v164 = vld [vmem:[%s1 + $0x3e0] sm:$0xff]
    %v165 = vld [vmem:[%s1 + $0x3e8] sm:$0xff]
    %v166 = vld [vmem:[%s1 + $0x3f0] sm:$0xff]
    %v167 = vld [vmem:[%s1 + $0x3f8] sm:$0xff]
    %v168 = vld [vmem:[%s1 + $0x400] sm:$0xff]
    %v169 = vld [vmem:[%s1 + $0x408] sm:$0xff]
    %v170 = vld [vmem:[%s1 + $0x410] sm:$0xff]
    %v171 = vld [vmem:[%s1 + $0x418] sm:$0xff]
    %v172 = vld [vmem:[%s1 + $0x420] sm:$0xff]
    %v173 = vld [vmem:[%s1 + $0x428] sm:$0xff]
    %v174 = vld [vmem:[%s1 + $0x430] sm:$0xff]
    %v175 = vld [vmem:[%s1 + $0x438] sm:$0xff]
    %v176 = vld [vmem:[%s1 + $0x440] sm:$0xff]
    %v177 = vld [vmem:[%s1 + $0x448] sm:$0xff]
    %v178 = vld [vmem:[%s1 + $0x450] sm:$0xff]
    %v179 = vld [vmem:[%s1 + $0x458] sm:$0xff]
    %v180 = vld [vmem:[%s1 + $0x460] sm:$0xff]
    %v181 = vld [vmem:[%s1 + $0x468] sm:$0xff]
    %v182 = vld [vmem:[%s1 + $0x470] sm:$0xff]
    %v183 = vld [vmem:[%s1 + $0x478] sm:$0xff]
    %v184 = vld [vmem:[%s1 + $0x480] sm:$0xff]
    %v185 = vld [vmem:[%s1 + $0x488] sm:$0xff]
    %v186 = vld [vmem:[%s1 + $0x490] sm:$0xff]
    %v187 = vld [vmem:[%s1 + $0x498] sm:$0xff]
    %v188 = vld [vmem:[%s1 + $0x4a0] sm:$0xff]
    %v189 = vld [vmem:[%s1 + $0x4a8] sm:$0xff]
    %v190 = vld [vmem:[%s1 + $0x4b0] sm:$0xff]
    %v191 = vld [vmem:[%s1 + $0x4b8] sm:$0xff]
    %v192 = vld [vmem:[%s1 + $0x4c0] sm:$0xff]
    %v193 = vld [vmem:[%s1 + $0x4c8] sm:$0xff]
    %v194 = vld [vmem:[%s1 + $0x4d0] sm:$0xff]
    %v195 = vld [vmem:[%s1 + $0x4d8] sm:$0xff]
    %v196 = vld [vmem:[%s1 + $0x4e0] sm:$0xff]
    %v197 = vld [vmem:[%s1 + $0x4e8] sm:$0xff]
    %v198 = vld [vmem:[%s1 + $0x4f0] sm:$0xff]
    %v199 = vld [vmem:[%s1 + $0x4f8] sm:$0xff]
    %v200 = vld [vmem:[%s1 + $0x500] sm:$0xff]
    %v201 = vld [vmem:[%s1 + $0x508] sm:$0xff]
    %v202 = vld [vmem:[%s1 + $0x510] sm:$0xff]
    %v203 = vld [vmem:[%s1 + $0x518] sm:$0xff]
    %v204 = vld [vmem:[%s1 + $0x520] sm:$0xff]
    %v205 = vld [vmem:[%s1 + $0x528] sm:$0xff]
    %v206 = vld [vmem:[%s1 + $0x530] sm:$0xff]
    %v207 = vld [vmem:[%s1 + $0x538] sm:$0xff]
    %v208 = vld [vmem:[%s1 + $0x540] sm:$0xff]
    %v209 = vld [vmem:[%s1 + $0x548] sm:$0xff]
    %v210 = vld [vmem:[%s1 + $0x550] sm:$0xff]
    %v211 = vld [vmem:[%s1 + $0x558] sm:$0xff]
    %v212 = vld [vmem:[%s1 + $0x560] sm:$0xff]
    %v213 = vld [vmem:[%s1 + $0x568] sm:$0xff]
    %v214 = vld [vmem:[%s1 + $0x570] sm:$0xff]
    %v215 = vld [vmem:[%s1 + $0x578] sm:$0xff]
    %v216 = vld [vmem:[%s1 + $0x580] sm:$0xff]
    %v217 = vld [vmem:[%s1 + $0x588] sm:$0xff]
    %v218 = vld [vmem:[%s1 + $0x590] sm:$0xff]
    %v219 = vld [vmem:[%s1 + $0x598] sm:$0xff]
    %v220 = vld [vmem:[%s1 + $0x5a0] sm:$0xff]
    %v221 = vld [vmem:[%s1 + $0x5a8] sm:$0xff]
    %v222 = vld [vmem:[%s1 + $0x5b0] sm:$0xff]
    %v223 = vld [vmem:[%s1 + $0x5b8] sm:$0xff]
    %v224 = vld [vmem:[%s1 + $0x5c0] sm:$0xff]
    %v225 = vld [vmem:[%s1 + $0x5c8] sm:$0xff]
    %v226 = vld [vmem:[%s1 + $0x5d0] sm:$0xff]
    %v227 = vld [vmem:[%s1 + $0x5d8] sm:$0xff]
    %v228 = vld [vmem:[%s1 + $0x5e0] sm:$0xff]
    %v229 = vld [vmem:[%s1 + $0x5e8] sm:$0xff]
    %v230 = vld [vmem:[%s1 + $0x5f0] sm:$0xff]
    %v231 = vld [vmem:[%s1 + $0x5f8] sm:$0xff]
    %v232 = vld [vmem:[%s1 + $0x600] sm:$0xff]
    %v233 = vld [vmem:[%s1 + $0x608] sm:$0xff]
    %v234 = vld [vmem:[%s1 + $0x610] sm:$0xff]
    %v235 = vld [vmem:[%s1 + $0x618] sm:$0xff]
    %v236 = vld [vmem:[%s1 + $0x620] sm:$0xff]
    %v237 = vld [vmem:[%s1 + $0x628] sm:$0xff]
    %v238 = vld [vmem:[%s1 + $0x630] sm:$0xff]
    %v239 = vld [vmem:[%s1 + $0x638] sm:$0xff]
    %v240 = vld [vmem:[%s1 + $0x640] sm:$0xff]
    %v241 = vld [vmem:[%s1 + $0x648] sm:$0xff]
    %v242 = vld [vmem:[%s1 + $0x650] sm:$0xff]
    %v243 = vld [vmem:[%s1 + $0x658] sm:$0xff]
    %v244 = vld [vmem:[%s1 + $0x660] sm:$0xff]
    %v245 = vld [vmem:[%s1 + $0x668] sm:$0xff]
    %v246 = vld [vmem:[%s1 + $0x670] sm:$0xff]
    %v247 = vld [vmem:[%s1 + $0x678] sm:$0xff]
    %v248 = vld [vmem:[%s1 + $0x680] sm:$0xff]
    %v249 = vld [vmem:[%s1 + $0x688] sm:$0xff]
    %v250 = vld [vmem:[%s1 + $0x690] sm:$0xff]
    %v251 = vld [vmem:[%s1 + $0x698] sm:$0xff]
    %v252 = vld [vmem:[%s1 + $0x6a0] sm:$0xff]
    %v253 = vld [vmem:[%s1 + $0x6a8] sm:$0xff]
    %v254 = vld [vmem:[%s1 + $0x6b0] sm:$0xff]
    %v255 = vld [vmem:[%s1 + $0x6b8] sm:$0xff]
    %v256 = vld [vmem:[%s1 + $0x6c0] sm:$0xff]
    %v257 = vld [vmem:[%s1 + $0x6c8] sm:$0xff]
    %v258 = vld [vmem:[%s1 + $0x6d0] sm:$0xff]
    %v259 = vld [vmem:[%s1 + $0x6d8] sm:$0xff]
    %v260 = vld [vmem:[%s1 + $0x6e0] sm:$0xff]
    %v261 = vld [vmem:[%s1 + $0x6e8] sm:$0xff]
    %v262 = vld [vmem:[%s1 + $0x6f0] sm:$0xff]
    %v263 = vld [vmem:[%s1 + $0x6f8] sm:$0xff]
    %v264 = vld [vmem:[%s1 + $0x700] sm:$0xff]
    %v265 = vld [vmem:[%s1 + $0x708] sm:$0xff]
    %v266 = vld [vmem:[%s1 + $0x710] sm:$0xff]
    %v267 = vld [vmem:[%s1 + $0x718] sm:$0xff]
    %v268 = vld [vmem:[%s1 + $0x720] sm:$0xff]
    %v269 = vld [vmem:[%s1 + $0x728] sm:$0xff]
    %v270 = vld [vmem:[%s1 + $0x730] sm:$0xff]
    %v271 = vld [vmem:[%s1 + $0x738] sm:$0xff]
    %v272 = vld [vmem:[%s1 + $0x740] sm:$0xff]
    %v273 = vld [vmem:[%s1 + $0x748] sm:$0xff]
    %v274 = vld [vmem:[%s1 + $0x750] sm:$0xff]
    %v275 = vld [vmem:[%s1 + $0x758] sm:$0xff]
    %v276 = vld [vmem:[%s1 + $0x760] sm:$0xff]
    %v277 = vld [vmem:[%s1 + $0x768] sm:$0xff]
    %v278 = vld [vmem:[%s1 + $0x770] sm:$0xff]
    %v279 = vld [vmem:[%s1 + $0x778] sm:$0xff]
    %v280 = vld [vmem:[%s1 + $0x780] sm:$0xff]
    %v281 = vld [vmem:[%s1 + $0x788] sm:$0xff]
    %v282 = vld [vmem:[%s1 + $0x790] sm:$0xff]
    %v283 = vld [vmem:[%s1 + $0x798] sm:$0xff]
    %v284 = vld [vmem:[%s1 + $0x7a0] sm:$0xff]
    %v285 = vld [vmem:[%s1 + $0x7a8] sm:$0xff]
    %v286 = vld [vmem:[%s1 + $0x7b0] sm:$0xff]
    %v287 = vld [vmem:[%s1 + $0x7b8] sm:$0xff]
    %v288 = vld [vmem:[%s1 + $0x7c0] sm:$0xff]
    %v289 = vld [vmem:[%s1 + $0x7c8] sm:$0xff]
    %v290 = vld [vmem:[%s1 + $0x7d0] sm:$0xff]
    %v291 = vld [vmem:[%s1 + $0x7d8] sm:$0xff]
    %v292 = vld [vmem:[%s1 + $0x7e0] sm:$0xff]
    %v293 = vld [vmem:[%s1 + $0x7e8] sm:$0xff]
    %v294 = vld [vmem:[%s1 + $0x7f0] sm:$0xff]
    %v295 = vld [vmem:[%s1 + $0x7f8] sm:$0xff]
    %v296 = vld [vmem:[%s2] sm:$0x1]
    %v298 = vlaneseq
    %v299 = vshrl.u32 %v298, 7
    %v300 = vsub.s32 0, %v299
    %v301 = vrot.slane %v296, %v300
    %v307 = vcombine.high %v36, %v36
    %v309 = vunpack.c.l.s4 1983009808
    %v310 = vunpack.c.0.s8 %v309
    %v311 = vlaneseq
    %v312 = vshrl.u32 %v311, 7
    %v313 = vsub.s32 %v310, %v312
    %v314 = vrot.slane %v36, %v313
    %v316 = vunpack.c.l.s4 1983009808
    %v317 = vunpack.c.0.s8 %v316
    %v318 = vlaneseq
    %v319 = vshrl.u32 %v318, 7
    %v320 = vsub.s32 %v317, %v319
    %v321 = vrot.slane %v307, %v320
    %v322 = vcombine.high %v314, %v314
    %v323 = vcombine.high %v321, %v321
    %v324 = vcombine.high %v37, %v37
    %v326 = vunpack.c.l.s4 1983009808
    %v327 = vunpack.c.0.s8 %v326
    %v328 = vlaneseq
    %v329 = vshrl.u32 %v328, 7
    %v330 = vsub.s32 %v327, %v329
    %v331 = vrot.slane %v37, %v330
    %v333 = vunpack.c.l.s4 1983009808
    %v334 = vunpack.c.0.s8 %v333
    %v335 = vlaneseq
    %v336 = vshrl.u32 %v335, 7
    %v337 = vsub.s32 %v334, %v336
    %v338 = vrot.slane %v324, %v337
    %v339 = vcombine.high %v331, %v331
    %v340 = vcombine.high %v338, %v338
    %v341 = vcombine.high %v38, %v38
    %v343 = vunpack.c.l.s4 1983009808
    %v344 = vunpack.c.0.s8 %v343
    %v345 = vlaneseq
    %v346 = vshrl.u32 %v345, 7
    %v347 = vsub.s32 %v344, %v346
    %v348 = vrot.slane %v38, %v347
    %v350 = vunpack.c.l.s4 1983009808
    %v351 = vunpack.c.0.s8 %v350
    %v352 = vlaneseq
    %v353 = vshrl.u32 %v352, 7
    %v354 = vsub.s32 %v351, %v353
    %v355 = vrot.slane %v341, %v354
    %v356 = vcombine.high %v348, %v348
    %v357 = vcombine.high %v355, %v355
    %v358 = vcombine.high %v39, %v39
    %v360 = vunpack.c.l.s4 1983009808
    %v361 = vunpack.c.0.s8 %v360
    %v362 = vlaneseq
    %v363 = vshrl.u32 %v362, 7
    %v364 = vsub.s32 %v361, %v363
    %v365 = vrot.slane %v39, %v364
    %v367 = vunpack.c.l.s4 1983009808
    %v368 = vunpack.c.0.s8 %v367
    %v369 = vlaneseq
    %v370 = vshrl.u32 %v369, 7
    %v371 = vsub.s32 %v368, %v370
    %v372 = vrot.slane %v358, %v371
    %v373 = vcombine.high %v365, %v365
    %v374 = vcombine.high %v372, %v372
    %391 = vmatprep.subr.mxu0 0.0
    %392 = vmatpush1.msra.mxu0 %v55
    %393 = vmatprep.subr.mxu0 0.0
    %394 = vmatpush1.msra.mxu0 %v54
    %395 = vmatprep.subr.mxu0 0.0
    %396 = vmatpush1.msra.mxu0 %v53
    %397 = vmatprep.subr.mxu0 0.0
    %398 = vmatpush1.msra.mxu0 %v52
    %399 = vmatprep.subr.mxu0 0.0
    %400 = vmatpush1.msra.mxu0 %v51
    %401 = vmatprep.subr.mxu0 0.0
    %402 = vmatpush1.msra.mxu0 %v50
    %403 = vmatprep.subr.mxu0 0.0
    %404 = vmatpush1.msra.mxu0 %v49
    %405 = vmatprep.subr.mxu0 0.0
    %406 = vmatpush1.msra.mxu0 %v48
    %407 = vmatprep.subr.mxu0 0.0
    %408 = vmatpush1.msra.mxu0 %v47
    %409 = vmatprep.subr.mxu0 0.0
    %410 = vmatpush1.msra.mxu0 %v46
    %411 = vmatprep.subr.mxu0 0.0
    %412 = vmatpush1.msra.mxu0 %v45
    %413 = vmatprep.subr.mxu0 0.0
    %414 = vmatpush1.msra.mxu0 %v44
    %415 = vmatprep.subr.mxu0 0.0
    %416 = vmatpush1.msra.mxu0 %v43
    %417 = vmatprep.subr.mxu0 0.0
    %418 = vmatpush1.msra.mxu0 %v42
    %419 = vmatprep.subr.mxu0 0.0
    %420 = vmatpush1.msra.mxu0 %v41
    %421 = vmatprep.subr.mxu0 0.0
    %422 = vmatpush1.msra.mxu0 %v40
    %423 = vmatprep.subr.mxu0 0.0
    %424 = vmatpush2.msra.mxu0 %v71
    %425 = vmatprep.subr.mxu0 0.0
    %426 = vmatpush2.msra.mxu0 %v70
    %427 = vmatprep.subr.mxu0 0.0
    %428 = vmatpush2.msra.mxu0 %v69
    %429 = vmatprep.subr.mxu0 0.0
    %430 = vmatpush2.msra.mxu0 %v68
    %431 = vmatprep.subr.mxu0 0.0
    %432 = vmatpush2.msra.mxu0 %v67
    %433 = vmatprep.subr.mxu0 0.0
    %434 = vmatpush2.msra.mxu0 %v66
    %435 = vmatprep.subr.mxu0 0.0
    %436 = vmatpush2.msra.mxu0 %v65
    %437 = vmatprep.subr.mxu0 0.0
    %438 = vmatpush2.msra.mxu0 %v64
    %439 = vmatprep.subr.mxu0 0.0
    %440 = vmatpush2.msra.mxu0 %v63
    %441 = vmatprep.subr.mxu0 0.0
    %442 = vmatpush2.msra.mxu0 %v62
    %443 = vmatprep.subr.mxu0 0.0
    %444 = vmatpush2.msra.mxu0 %v61
    %445 = vmatprep.subr.mxu0 0.0
    %446 = vmatpush2.msra.mxu0 %v60
    %447 = vmatprep.subr.mxu0 0.0
    %448 = vmatpush2.msra.mxu0 %v59
    %449 = vmatprep.subr.mxu0 0.0
    %450 = vmatpush2.msra.mxu0 %v58
    %451 = vmatprep.subr.mxu0 0.0
    %452 = vmatpush2.msra.mxu0 %v57
    %453 = vmatprep.subr.mxu0 0.0
    %454 = vmatpush2.msra.mxu0 %v56
    %455 = vmatprep.mubr.f32.mxu0 %v322
    %456 = vmatmul.mubr.f32.gmra.mxu0 %v314
    %v457 = vpop.f32.mrf.mxu0
    %v458 = vadd.f32 %v301, %v457
    %v459 = vpop.f32.mrf.mxu0
    %460 = vdwg.mxu0
    %461 = vmatprep.subr.mxu0 0.0
    %462 = vmatpush1.msra.mxu0 %v87
    %463 = vmatprep.subr.mxu0 0.0
    %464 = vmatpush1.msra.mxu0 %v86
    %465 = vmatprep.subr.mxu0 0.0
    %466 = vmatpush1.msra.mxu0 %v85
    %467 = vmatprep.subr.mxu0 0.0
    %468 = vmatpush1.msra.mxu0 %v84
    %469 = vmatprep.subr.mxu0 0.0
    %470 = vmatpush1.msra.mxu0 %v83
    %471 = vmatprep.subr.mxu0 0.0
    %472 = vmatpush1.msra.mxu0 %v82
    %473 = vmatprep.subr.mxu0 0.0
    %474 = vmatpush1.msra.mxu0 %v81
    %475 = vmatprep.subr.mxu0 0.0
    %476 = vmatpush1.msra.mxu0 %v80
    %477 = vmatprep.subr.mxu0 0.0
    %478 = vmatpush1.msra.mxu0 %v79
    %479 = vmatprep.subr.mxu0 0.0
    %480 = vmatpush1.msra.mxu0 %v78
    %481 = vmatprep.subr.mxu0 0.0
    %482 = vmatpush1.msra.mxu0 %v77
    %483 = vmatprep.subr.mxu0 0.0
    %484 = vmatpush1.msra.mxu0 %v76
    %485 = vmatprep.subr.mxu0 0.0
    %486 = vmatpush1.msra.mxu0 %v75
    %487 = vmatprep.subr.mxu0 0.0
    %488 = vmatpush1.msra.mxu0 %v74
    %489 = vmatprep.subr.mxu0 0.0
    %490 = vmatpush1.msra.mxu0 %v73
    %491 = vmatprep.subr.mxu0 0.0
    %492 = vmatpush1.msra.mxu0 %v72
    %493 = vmatprep.subr.mxu0 0.0
    %494 = vmatpush2.msra.mxu0 %v103
    %495 = vmatprep.subr.mxu0 0.0
    %496 = vmatpush2.msra.mxu0 %v102
    %497 = vmatprep.subr.mxu0 0.0
    %498 = vmatpush2.msra.mxu0 %v101
    %499 = vmatprep.subr.mxu0 0.0
    %500 = vmatpush2.msra.mxu0 %v100
    %501 = vmatprep.subr.mxu0 0.0
    %502 = vmatpush2.msra.mxu0 %v99
    %503 = vmatprep.subr.mxu0 0.0
    %504 = vmatpush2.msra.mxu0 %v98
    %505 = vmatprep.subr.mxu0 0.0
    %506 = vmatpush2.msra.mxu0 %v97
    %507 = vmatprep.subr.mxu0 0.0
    %508 = vmatpush2.msra.mxu0 %v96
    %509 = vmatprep.subr.mxu0 0.0
    %510 = vmatpush2.msra.mxu0 %v95
    %511 = vmatprep.subr.mxu0 0.0
    %512 = vmatpush2.msra.mxu0 %v94
    %513 = vmatprep.subr.mxu0 0.0
    %514 = vmatpush2.msra.mxu0 %v93
    %515 = vmatprep.subr.mxu0 0.0
    %516 = vmatpush2.msra.mxu0 %v92
    %517 = vmatprep.subr.mxu0 0.0
    %518 = vmatpush2.msra.mxu0 %v91
    %519 = vmatprep.subr.mxu0 0.0
    %520 = vmatpush2.msra.mxu0 %v90
    %521 = vmatprep.subr.mxu0 0.0
    %522 = vmatpush2.msra.mxu0 %v89
    %523 = vmatprep.subr.mxu0 0.0
    %524 = vmatpush2.msra.mxu0 %v88
    %525 = vmatprep.mubr.f32.mxu0 %v323
    %526 = vmatmul.mubr.f32.gmra.mxu0 %v321
    %v527 = vpop.f32.mrf.mxu0
    %v528 = vadd.f32 %v458, %v527
    %v529 = vpop.f32.mrf.mxu0
    %530 = vdwg.mxu0
    %531 = vmatprep.subr.mxu0 0.0
    %532 = vmatpush1.msra.mxu0 %v119
    %533 = vmatprep.subr.mxu0 0.0
    %534 = vmatpush1.msra.mxu0 %v118
    %535 = vmatprep.subr.mxu0 0.0
    %536 = vmatpush1.msra.mxu0 %v117
    %537 = vmatprep.subr.mxu0 0.0
    %538 = vmatpush1.msra.mxu0 %v116
    %539 = vmatprep.subr.mxu0 0.0
    %540 = vmatpush1.msra.mxu0 %v115
    %541 = vmatprep.subr.mxu0 0.0
    %542 = vmatpush1.msra.mxu0 %v114
    %543 = vmatprep.subr.mxu0 0.0
    %544 = vmatpush1.msra.mxu0 %v113
    %545 = vmatprep.subr.mxu0 0.0
    %546 = vmatpush1.msra.mxu0 %v112
    %547 = vmatprep.subr.mxu0 0.0
    %548 = vmatpush1.msra.mxu0 %v111
    %549 = vmatprep.subr.mxu0 0.0
    %550 = vmatpush1.msra.mxu0 %v110
    %551 = vmatprep.subr.mxu0 0.0
    %552 = vmatpush1.msra.mxu0 %v109
    %553 = vmatprep.subr.mxu0 0.0
    %554 = vmatpush1.msra.mxu0 %v108
    %555 = vmatprep.subr.mxu0 0.0
    %556 = vmatpush1.msra.mxu0 %v107
    %557 = vmatprep.subr.mxu0 0.0
    %558 = vmatpush1.msra.mxu0 %v106
    %559 = vmatprep.subr.mxu0 0.0
    %560 = vmatpush1.msra.mxu0 %v105
    %561 = vmatprep.subr.mxu0 0.0
    %562 = vmatpush1.msra.mxu0 %v104
    %563 = vmatprep.subr.mxu0 0.0
    %564 = vmatpush2.msra.mxu0 %v135
    %565 = vmatprep.subr.mxu0 0.0
    %566 = vmatpush2.msra.mxu0 %v134
    %567 = vmatprep.subr.mxu0 0.0
    %568 = vmatpush2.msra.mxu0 %v133
    %569 = vmatprep.subr.mxu0 0.0
    %570 = vmatpush2.msra.mxu0 %v132
    %571 = vmatprep.subr.mxu0 0.0
    %572 = vmatpush2.msra.mxu0 %v131
    %573 = vmatprep.subr.mxu0 0.0
    %574 = vmatpush2.msra.mxu0 %v130
    %575 = vmatprep.subr.mxu0 0.0
    %576 = vmatpush2.msra.mxu0 %v129
    %577 = vmatprep.subr.mxu0 0.0
    %578 = vmatpush2.msra.mxu0 %v128
    %579 = vmatprep.subr.mxu0 0.0
    %580 = vmatpush2.msra.mxu0 %v127
    %581 = vmatprep.subr.mxu0 0.0
    %582 = vmatpush2.msra.mxu0 %v126
    %583 = vmatprep.subr.mxu0 0.0
    %584 = vmatpush2.msra.mxu0 %v125
    %585 = vmatprep.subr.mxu0 0.0
    %586 = vmatpush2.msra.mxu0 %v124
    %587 = vmatprep.subr.mxu0 0.0
    %588 = vmatpush2.msra.mxu0 %v123
    %589 = vmatprep.subr.mxu0 0.0
    %590 = vmatpush2.msra.mxu0 %v122
    %591 = vmatprep.subr.mxu0 0.0
    %592 = vmatpush2.msra.mxu0 %v121
    %593 = vmatprep.subr.mxu0 0.0
    %594 = vmatpush2.msra.mxu0 %v120
    %595 = vmatprep.mubr.f32.mxu0 %v339
    %596 = vmatmul.mubr.f32.gmra.mxu0 %v331
    %v597 = vpop.f32.mrf.mxu0
    %v598 = vadd.f32 %v528, %v597
    %v599 = vpop.f32.mrf.mxu0
    %600 = vdwg.mxu0
    %601 = vmatprep.subr.mxu0 0.0
    %602 = vmatpush1.msra.mxu0 %v151
    %603 = vmatprep.subr.mxu0 0.0
    %604 = vmatpush1.msra.mxu0 %v150
    %605 = vmatprep.subr.mxu0 0.0
    %606 = vmatpush1.msra.mxu0 %v149
    %607 = vmatprep.subr.mxu0 0.0
    %608 = vmatpush1.msra.mxu0 %v148
    %609 = vmatprep.subr.mxu0 0.0
    %610 = vmatpush1.msra.mxu0 %v147
    %611 = vmatprep.subr.mxu0 0.0
    %612 = vmatpush1.msra.mxu0 %v146
    %613 = vmatprep.subr.mxu0 0.0
    %614 = vmatpush1.msra.mxu0 %v145
    %615 = vmatprep.subr.mxu0 0.0
    %616 = vmatpush1.msra.mxu0 %v144
    %617 = vmatprep.subr.mxu0 0.0
    %618 = vmatpush1.msra.mxu0 %v143
    %619 = vmatprep.subr.mxu0 0.0
    %620 = vmatpush1.msra.mxu0 %v142
    %621 = vmatprep.subr.mxu0 0.0
    %622 = vmatpush1.msra.mxu0 %v141
    %623 = vmatprep.subr.mxu0 0.0
    %624 = vmatpush1.msra.mxu0 %v140
    %625 = vmatprep.subr.mxu0 0.0
    %626 = vmatpush1.msra.mxu0 %v139
    %627 = vmatprep.subr.mxu0 0.0
    %628 = vmatpush1.msra.mxu0 %v138
    %629 = vmatprep.subr.mxu0 0.0
    %630 = vmatpush1.msra.mxu0 %v137
    %631 = vmatprep.subr.mxu0 0.0
    %632 = vmatpush1.msra.mxu0 %v136
    %633 = vmatprep.subr.mxu0 0.0
    %634 = vmatpush2.msra.mxu0 %v167
    %635 = vmatprep.subr.mxu0 0.0
    %636 = vmatpush2.msra.mxu0 %v166
    %637 = vmatprep.subr.mxu0 0.0
    %638 = vmatpush2.msra.mxu0 %v165
    %639 = vmatprep.subr.mxu0 0.0
    %640 = vmatpush2.msra.mxu0 %v164
    %641 = vmatprep.subr.mxu0 0.0
    %642 = vmatpush2.msra.mxu0 %v163
    %643 = vmatprep.subr.mxu0 0.0
    %644 = vmatpush2.msra.mxu0 %v162
    %645 = vmatprep.subr.mxu0 0.0
    %646 = vmatpush2.msra.mxu0 %v161
    %647 = vmatprep.subr.mxu0 0.0
    %648 = vmatpush2.msra.mxu0 %v160
    %649 = vmatprep.subr.mxu0 0.0
    %650 = vmatpush2.msra.mxu0 %v159
    %651 = vmatprep.subr.mxu0 0.0
    %652 = vmatpush2.msra.mxu0 %v158
    %653 = vmatprep.subr.mxu0 0.0
    %654 = vmatpush2.msra.mxu0 %v157
    %655 = vmatprep.subr.mxu0 0.0
    %656 = vmatpush2.msra.mxu0 %v156
    %657 = vmatprep.subr.mxu0 0.0
    %658 = vmatpush2.msra.mxu0 %v155
    %659 = vmatprep.subr.mxu0 0.0
    %660 = vmatpush2.msra.mxu0 %v154
    %661 = vmatprep.subr.mxu0 0.0
    %662 = vmatpush2.msra.mxu0 %v153
    %663 = vmatprep.subr.mxu0 0.0
    %664 = vmatpush2.msra.mxu0 %v152
    %665 = vmatprep.mubr.f32.mxu0 %v340
    %666 = vmatmul.mubr.f32.gmra.mxu0 %v338
    %v667 = vpop.f32.mrf.mxu0
    %v668 = vadd.f32 %v598, %v667
    %v669 = vpop.f32.mrf.mxu0
    %670 = vdwg.mxu0
    %671 = vmatprep.subr.mxu0 0.0
    %672 = vmatpush1.msra.mxu0 %v183
    %673 = vmatprep.subr.mxu0 0.0
    %674 = vmatpush1.msra.mxu0 %v182
    %675 = vmatprep.subr.mxu0 0.0
    %676 = vmatpush1.msra.mxu0 %v181
    %677 = vmatprep.subr.mxu0 0.0
    %678 = vmatpush1.msra.mxu0 %v180
    %679 = vmatprep.subr.mxu0 0.0
    %680 = vmatpush1.msra.mxu0 %v179
    %681 = vmatprep.subr.mxu0 0.0
    %682 = vmatpush1.msra.mxu0 %v178
    %683 = vmatprep.subr.mxu0 0.0
    %684 = vmatpush1.msra.mxu0 %v177
    %685 = vmatprep.subr.mxu0 0.0
    %686 = vmatpush1.msra.mxu0 %v176
    %687 = vmatprep.subr.mxu0 0.0
    %688 = vmatpush1.msra.mxu0 %v175
    %689 = vmatprep.subr.mxu0 0.0
    %690 = vmatpush1.msra.mxu0 %v174
    %691 = vmatprep.subr.mxu0 0.0
    %692 = vmatpush1.msra.mxu0 %v173
    %693 = vmatprep.subr.mxu0 0.0
    %694 = vmatpush1.msra.mxu0 %v172
    %695 = vmatprep.subr.mxu0 0.0
    %696 = vmatpush1.msra.mxu0 %v171
    %697 = vmatprep.subr.mxu0 0.0
    %698 = vmatpush1.msra.mxu0 %v170
    %699 = vmatprep.subr.mxu0 0.0
    %700 = vmatpush1.msra.mxu0 %v169
    %701 = vmatprep.subr.mxu0 0.0
    %702 = vmatpush1.msra.mxu0 %v168
    %703 = vmatprep.subr.mxu0 0.0
    %704 = vmatpush2.msra.mxu0 %v199
    %705 = vmatprep.subr.mxu0 0.0
    %706 = vmatpush2.msra.mxu0 %v198
    %707 = vmatprep.subr.mxu0 0.0
    %708 = vmatpush2.msra.mxu0 %v197
    %709 = vmatprep.subr.mxu0 0.0
    %710 = vmatpush2.msra.mxu0 %v196
    %711 = vmatprep.subr.mxu0 0.0
    %712 = vmatpush2.msra.mxu0 %v195
    %713 = vmatprep.subr.mxu0 0.0
    %714 = vmatpush2.msra.mxu0 %v194
    %715 = vmatprep.subr.mxu0 0.0
    %716 = vmatpush2.msra.mxu0 %v193
    %717 = vmatprep.subr.mxu0 0.0
    %718 = vmatpush2.msra.mxu0 %v192
    %719 = vmatprep.subr.mxu0 0.0
    %720 = vmatpush2.msra.mxu0 %v191
    %721 = vmatprep.subr.mxu0 0.0
    %722 = vmatpush2.msra.mxu0 %v190
    %723 = vmatprep.subr.mxu0 0.0
    %724 = vmatpush2.msra.mxu0 %v189
    %725 = vmatprep.subr.mxu0 0.0
    %726 = vmatpush2.msra.mxu0 %v188
    %727 = vmatprep.subr.mxu0 0.0
    %728 = vmatpush2.msra.mxu0 %v187
    %729 = vmatprep.subr.mxu0 0.0
    %730 = vmatpush2.msra.mxu0 %v186
    %731 = vmatprep.subr.mxu0 0.0
    %732 = vmatpush2.msra.mxu0 %v185
    %733 = vmatprep.subr.mxu0 0.0
    %734 = vmatpush2.msra.mxu0 %v184
    %735 = vmatprep.mubr.f32.mxu0 %v356
    %736 = vmatmul.mubr.f32.gmra.mxu0 %v348
    %v737 = vpop.f32.mrf.mxu0
    %v738 = vadd.f32 %v668, %v737
    %v739 = vpop.f32.mrf.mxu0
    %740 = vdwg.mxu0
    %741 = vmatprep.subr.mxu0 0.0
    %742 = vmatpush1.msra.mxu0 %v215
    %743 = vmatprep.subr.mxu0 0.0
    %744 = vmatpush1.msra.mxu0 %v214
    %745 = vmatprep.subr.mxu0 0.0
    %746 = vmatpush1.msra.mxu0 %v213
    %747 = vmatprep.subr.mxu0 0.0
    %748 = vmatpush1.msra.mxu0 %v212
    %749 = vmatprep.subr.mxu0 0.0
    %750 = vmatpush1.msra.mxu0 %v211
    %751 = vmatprep.subr.mxu0 0.0
    %752 = vmatpush1.msra.mxu0 %v210
    %753 = vmatprep.subr.mxu0 0.0
    %754 = vmatpush1.msra.mxu0 %v209
    %755 = vmatprep.subr.mxu0 0.0
    %756 = vmatpush1.msra.mxu0 %v208
    %757 = vmatprep.subr.mxu0 0.0
    %758 = vmatpush1.msra.mxu0 %v207
    %759 = vmatprep.subr.mxu0 0.0
    %760 = vmatpush1.msra.mxu0 %v206
    %761 = vmatprep.subr.mxu0 0.0
    %762 = vmatpush1.msra.mxu0 %v205
    %763 = vmatprep.subr.mxu0 0.0
    %764 = vmatpush1.msra.mxu0 %v204
    %765 = vmatprep.subr.mxu0 0.0
    %766 = vmatpush1.msra.mxu0 %v203
    %767 = vmatprep.subr.mxu0 0.0
    %768 = vmatpush1.msra.mxu0 %v202
    %769 = vmatprep.subr.mxu0 0.0
    %770 = vmatpush1.msra.mxu0 %v201
    %771 = vmatprep.subr.mxu0 0.0
    %772 = vmatpush1.msra.mxu0 %v200
    %773 = vmatprep.subr.mxu0 0.0
    %774 = vmatpush2.msra.mxu0 %v231
    %775 = vmatprep.subr.mxu0 0.0
    %776 = vmatpush2.msra.mxu0 %v230
    %777 = vmatprep.subr.mxu0 0.0
    %778 = vmatpush2.msra.mxu0 %v229
    %779 = vmatprep.subr.mxu0 0.0
    %780 = vmatpush2.msra.mxu0 %v228
    %781 = vmatprep.subr.mxu0 0.0
    %782 = vmatpush2.msra.mxu0 %v227
    %783 = vmatprep.subr.mxu0 0.0
    %784 = vmatpush2.msra.mxu0 %v226
    %785 = vmatprep.subr.mxu0 0.0
    %786 = vmatpush2.msra.mxu0 %v225
    %787 = vmatprep.subr.mxu0 0.0
    %788 = vmatpush2.msra.mxu0 %v224
    %789 = vmatprep.subr.mxu0 0.0
    %790 = vmatpush2.msra.mxu0 %v223
    %791 = vmatprep.subr.mxu0 0.0
    %792 = vmatpush2.msra.mxu0 %v222
    %793 = vmatprep.subr.mxu0 0.0
    %794 = vmatpush2.msra.mxu0 %v221
    %795 = vmatprep.subr.mxu0 0.0
    %796 = vmatpush2.msra.mxu0 %v220
    %797 = vmatprep.subr.mxu0 0.0
    %798 = vmatpush2.msra.mxu0 %v219
    %799 = vmatprep.subr.mxu0 0.0
    %800 = vmatpush2.msra.mxu0 %v218
    %801 = vmatprep.subr.mxu0 0.0
    %802 = vmatpush2.msra.mxu0 %v217
    %803 = vmatprep.subr.mxu0 0.0
    %804 = vmatpush2.msra.mxu0 %v216
    %805 = vmatprep.mubr.f32.mxu0 %v357
    %806 = vmatmul.mubr.f32.gmra.mxu0 %v355
    %v807 = vpop.f32.mrf.mxu0
    %v808 = vadd.f32 %v738, %v807
    %v809 = vpop.f32.mrf.mxu0
    %810 = vdwg.mxu0
    %811 = vmatprep.subr.mxu0 0.0
    %812 = vmatpush1.msra.mxu0 %v247
    %813 = vmatprep.subr.mxu0 0.0
    %814 = vmatpush1.msra.mxu0 %v246
    %815 = vmatprep.subr.mxu0 0.0
    %816 = vmatpush1.msra.mxu0 %v245
    %817 = vmatprep.subr.mxu0 0.0
    %818 = vmatpush1.msra.mxu0 %v244
    %819 = vmatprep.subr.mxu0 0.0
    %820 = vmatpush1.msra.mxu0 %v243
    %821 = vmatprep.subr.mxu0 0.0
    %822 = vmatpush1.msra.mxu0 %v242
    %823 = vmatprep.subr.mxu0 0.0
    %824 = vmatpush1.msra.mxu0 %v241
    %825 = vmatprep.subr.mxu0 0.0
    %826 = vmatpush1.msra.mxu0 %v240
    %827 = vmatprep.subr.mxu0 0.0
    %828 = vmatpush1.msra.mxu0 %v239
    %829 = vmatprep.subr.mxu0 0.0
    %830 = vmatpush1.msra.mxu0 %v238
    %831 = vmatprep.subr.mxu0 0.0
    %832 = vmatpush1.msra.mxu0 %v237
    %833 = vmatprep.subr.mxu0 0.0
    %834 = vmatpush1.msra.mxu0 %v236
    %835 = vmatprep.subr.mxu0 0.0
    %836 = vmatpush1.msra.mxu0 %v235
    %837 = vmatprep.subr.mxu0 0.0
    %838 = vmatpush1.msra.mxu0 %v234
    %839 = vmatprep.subr.mxu0 0.0
    %840 = vmatpush1.msra.mxu0 %v233
    %841 = vmatprep.subr.mxu0 0.0
    %842 = vmatpush1.msra.mxu0 %v232
    %843 = vmatprep.subr.mxu0 0.0
    %844 = vmatpush2.msra.mxu0 %v263
    %845 = vmatprep.subr.mxu0 0.0
    %846 = vmatpush2.msra.mxu0 %v262
    %847 = vmatprep.subr.mxu0 0.0
    %848 = vmatpush2.msra.mxu0 %v261
    %849 = vmatprep.subr.mxu0 0.0
    %850 = vmatpush2.msra.mxu0 %v260
    %851 = vmatprep.subr.mxu0 0.0
    %852 = vmatpush2.msra.mxu0 %v259
    %853 = vmatprep.subr.mxu0 0.0
    %854 = vmatpush2.msra.mxu0 %v258
    %855 = vmatprep.subr.mxu0 0.0
    %856 = vmatpush2.msra.mxu0 %v257
    %857 = vmatprep.subr.mxu0 0.0
    %858 = vmatpush2.msra.mxu0 %v256
    %859 = vmatprep.subr.mxu0 0.0
    %860 = vmatpush2.msra.mxu0 %v255
    %861 = vmatprep.subr.mxu0 0.0
    %862 = vmatpush2.msra.mxu0 %v254
    %863 = vmatprep.subr.mxu0 0.0
    %864 = vmatpush2.msra.mxu0 %v253
    %865 = vmatprep.subr.mxu0 0.0
    %866 = vmatpush2.msra.mxu0 %v252
    %867 = vmatprep.subr.mxu0 0.0
    %868 = vmatpush2.msra.mxu0 %v251
    %869 = vmatprep.subr.mxu0 0.0
    %870 = vmatpush2.msra.mxu0 %v250
    %871 = vmatprep.subr.mxu0 0.0
    %872 = vmatpush2.msra.mxu0 %v249
    %873 = vmatprep.subr.mxu0 0.0
    %874 = vmatpush2.msra.mxu0 %v248
    %875 = vmatprep.mubr.f32.mxu0 %v373
    %876 = vmatmul.mubr.f32.gmra.mxu0 %v365
    %v877 = vpop.f32.mrf.mxu0
    %v878 = vadd.f32 %v808, %v877
    %v879 = vpop.f32.mrf.mxu0
    %880 = vdwg.mxu0
    %881 = vmatprep.subr.mxu0 0.0
    %882 = vmatpush1.msra.mxu0 %v279
    %883 = vmatprep.subr.mxu0 0.0
    %884 = vmatpush1.msra.mxu0 %v278
    %885 = vmatprep.subr.mxu0 0.0
    %886 = vmatpush1.msra.mxu0 %v277
    %887 = vmatprep.subr.mxu0 0.0
    %888 = vmatpush1.msra.mxu0 %v276
    %889 = vmatprep.subr.mxu0 0.0
    %890 = vmatpush1.msra.mxu0 %v275
    %891 = vmatprep.subr.mxu0 0.0
    %892 = vmatpush1.msra.mxu0 %v274
    %893 = vmatprep.subr.mxu0 0.0
    %894 = vmatpush1.msra.mxu0 %v273
    %895 = vmatprep.subr.mxu0 0.0
    %896 = vmatpush1.msra.mxu0 %v272
    %897 = vmatprep.subr.mxu0 0.0
    %898 = vmatpush1.msra.mxu0 %v271
    %899 = vmatprep.subr.mxu0 0.0
    %900 = vmatpush1.msra.mxu0 %v270
    %901 = vmatprep.subr.mxu0 0.0
    %902 = vmatpush1.msra.mxu0 %v269
    %903 = vmatprep.subr.mxu0 0.0
    %904 = vmatpush1.msra.mxu0 %v268
    %905 = vmatprep.subr.mxu0 0.0
    %906 = vmatpush1.msra.mxu0 %v267
    %907 = vmatprep.subr.mxu0 0.0
    %908 = vmatpush1.msra.mxu0 %v266
    %909 = vmatprep.subr.mxu0 0.0
    %910 = vmatpush1.msra.mxu0 %v265
    %911 = vmatprep.subr.mxu0 0.0
    %912 = vmatpush1.msra.mxu0 %v264
    %913 = vmatprep.subr.mxu0 0.0
    %914 = vmatpush2.msra.mxu0 %v295
    %915 = vmatprep.subr.mxu0 0.0
    %916 = vmatpush2.msra.mxu0 %v294
    %917 = vmatprep.subr.mxu0 0.0
    %918 = vmatpush2.msra.mxu0 %v293
    %919 = vmatprep.subr.mxu0 0.0
    %920 = vmatpush2.msra.mxu0 %v292
    %921 = vmatprep.subr.mxu0 0.0
    %922 = vmatpush2.msra.mxu0 %v291
    %923 = vmatprep.subr.mxu0 0.0
    %924 = vmatpush2.msra.mxu0 %v290
    %925 = vmatprep.subr.mxu0 0.0
    %926 = vmatpush2.msra.mxu0 %v289
    %927 = vmatprep.subr.mxu0 0.0
    %928 = vmatpush2.msra.mxu0 %v288
    %929 = vmatprep.subr.mxu0 0.0
    %930 = vmatpush2.msra.mxu0 %v287
    %931 = vmatprep.subr.mxu0 0.0
    %932 = vmatpush2.msra.mxu0 %v286
    %933 = vmatprep.subr.mxu0 0.0
    %934 = vmatpush2.msra.mxu0 %v285
    %935 = vmatprep.subr.mxu0 0.0
    %936 = vmatpush2.msra.mxu0 %v284
    %937 = vmatprep.subr.mxu0 0.0
    %938 = vmatpush2.msra.mxu0 %v283
    %939 = vmatprep.subr.mxu0 0.0
    %940 = vmatpush2.msra.mxu0 %v282
    %941 = vmatprep.subr.mxu0 0.0
    %942 = vmatpush2.msra.mxu0 %v281
    %943 = vmatprep.subr.mxu0 0.0
    %944 = vmatpush2.msra.mxu0 %v280
    %945 = vmatprep.mubr.f32.mxu0 %v374
    %946 = vmatmul.mubr.f32.gmra.mxu0 %v372
    %v947 = vpop.f32.mrf.mxu0
    %v948 = vadd.f32 %v878, %v947
    %v949 = vpop.f32.mrf.mxu0
    %950 = vdwg.mxu0
    %v951 = vld [vmem:[%s3] sm:$0xff]
    %v952 = vld [vmem:[%s3 + $0x8] sm:$0xff]
    %v953 = vld [vmem:[%s3 + $0x10] sm:$0xff]
    %v954 = vld [vmem:[%s3 + $0x18] sm:$0xff]
    %v955 = vld [vmem:[%s3 + $0x20] sm:$0xff]
    %v956 = vld [vmem:[%s3 + $0x28] sm:$0xff]
    %v957 = vld [vmem:[%s3 + $0x30] sm:$0xff]
    %v958 = vld [vmem:[%s3 + $0x38] sm:$0xff]
    %v959 = vld [vmem:[%s3 + $0x40] sm:$0xff]
    %v960 = vld [vmem:[%s3 + $0x48] sm:$0xff]
    %v961 = vld [vmem:[%s3 + $0x50] sm:$0xff]
    %v962 = vld [vmem:[%s3 + $0x58] sm:$0xff]
    %v963 = vld [vmem:[%s3 + $0x60] sm:$0xff]
    %v964 = vld [vmem:[%s3 + $0x68] sm:$0xff]
    %v965 = vld [vmem:[%s3 + $0x70] sm:$0xff]
    %v966 = vld [vmem:[%s3 + $0x78] sm:$0xff]
    %v967 = vld [vmem:[%s3 + $0x80] sm:$0xff]
    %v968 = vld [vmem:[%s3 + $0x88] sm:$0xff]
    %v969 = vld [vmem:[%s3 + $0x90] sm:$0xff]
    %v970 = vld [vmem:[%s3 + $0x98] sm:$0xff]
    %v971 = vld [vmem:[%s3 + $0xa0] sm:$0xff]
    %v972 = vld [vmem:[%s3 + $0xa8] sm:$0xff]
    %v973 = vld [vmem:[%s3 + $0xb0] sm:$0xff]
    %v974 = vld [vmem:[%s3 + $0xb8] sm:$0xff]
    %v975 = vld [vmem:[%s3 + $0xc0] sm:$0xff]
    %v976 = vld [vmem:[%s3 + $0xc8] sm:$0xff]
    %v977 = vld [vmem:[%s3 + $0xd0] sm:$0xff]
    %v978 = vld [vmem:[%s3 + $0xd8] sm:$0xff]
    %v979 = vld [vmem:[%s3 + $0xe0] sm:$0xff]
    %v980 = vld [vmem:[%s3 + $0xe8] sm:$0xff]
    %v981 = vld [vmem:[%s3 + $0xf0] sm:$0xff]
    %v982 = vld [vmem:[%s3 + $0xf8] sm:$0xff]
    %v983 = vld [vmem:[%s3 + $0x100] sm:$0xff]
    %v984 = vld [vmem:[%s3 + $0x108] sm:$0xff]
    %v985 = vld [vmem:[%s3 + $0x110] sm:$0xff]
    %v986 = vld [vmem:[%s3 + $0x118] sm:$0xff]
    %v987 = vld [vmem:[%s3 + $0x120] sm:$0xff]
    %v988 = vld [vmem:[%s3 + $0x128] sm:$0xff]
    %v989 = vld [vmem:[%s3 + $0x130] sm:$0xff]
    %v990 = vld [vmem:[%s3 + $0x138] sm:$0xff]
    %v991 = vld [vmem:[%s3 + $0x140] sm:$0xff]
    %v992 = vld [vmem:[%s3 + $0x148] sm:$0xff]
    %v993 = vld [vmem:[%s3 + $0x150] sm:$0xff]
    %v994 = vld [vmem:[%s3 + $0x158] sm:$0xff]
    %v995 = vld [vmem:[%s3 + $0x160] sm:$0xff]
    %v996 = vld [vmem:[%s3 + $0x168] sm:$0xff]
    %v997 = vld [vmem:[%s3 + $0x170] sm:$0xff]
    %v998 = vld [vmem:[%s3 + $0x178] sm:$0xff]
    %v999 = vld [vmem:[%s3 + $0x180] sm:$0xff]
    %v1000 = vld [vmem:[%s3 + $0x188] sm:$0xff]
    %v1001 = vld [vmem:[%s3 + $0x190] sm:$0xff]
    %v1002 = vld [vmem:[%s3 + $0x198] sm:$0xff]
    %v1003 = vld [vmem:[%s3 + $0x1a0] sm:$0xff]
    %v1004 = vld [vmem:[%s3 + $0x1a8] sm:$0xff]
    %v1005 = vld [vmem:[%s3 + $0x1b0] sm:$0xff]
    %v1006 = vld [vmem:[%s3 + $0x1b8] sm:$0xff]
    %v1007 = vld [vmem:[%s3 + $0x1c0] sm:$0xff]
    %v1008 = vld [vmem:[%s3 + $0x1c8] sm:$0xff]
    %v1009 = vld [vmem:[%s3 + $0x1d0] sm:$0xff]
    %v1010 = vld [vmem:[%s3 + $0x1d8] sm:$0xff]
    %v1011 = vld [vmem:[%s3 + $0x1e0] sm:$0xff]
    %v1012 = vld [vmem:[%s3 + $0x1e8] sm:$0xff]
    %v1013 = vld [vmem:[%s3 + $0x1f0] sm:$0xff]
    %v1014 = vld [vmem:[%s3 + $0x1f8] sm:$0xff]
    %v1015 = vld [vmem:[%s3 + $0x200] sm:$0xff]
    %v1016 = vld [vmem:[%s3 + $0x208] sm:$0xff]
    %v1017 = vld [vmem:[%s3 + $0x210] sm:$0xff]
    %v1018 = vld [vmem:[%s3 + $0x218] sm:$0xff]
    %v1019 = vld [vmem:[%s3 + $0x220] sm:$0xff]
    %v1020 = vld [vmem:[%s3 + $0x228] sm:$0xff]
    %v1021 = vld [vmem:[%s3 + $0x230] sm:$0xff]
    %v1022 = vld [vmem:[%s3 + $0x238] sm:$0xff]
    %v1023 = vld [vmem:[%s3 + $0x240] sm:$0xff]
    %v1024 = vld [vmem:[%s3 + $0x248] sm:$0xff]
    %v1025 = vld [vmem:[%s3 + $0x250] sm:$0xff]
    %v1026 = vld [vmem:[%s3 + $0x258] sm:$0xff]
    %v1027 = vld [vmem:[%s3 + $0x260] sm:$0xff]
    %v1028 = vld [vmem:[%s3 + $0x268] sm:$0xff]
    %v1029 = vld [vmem:[%s3 + $0x270] sm:$0xff]
    %v1030 = vld [vmem:[%s3 + $0x278] sm:$0xff]
    %v1031 = vld [vmem:[%s3 + $0x280] sm:$0xff]
    %v1032 = vld [vmem:[%s3 + $0x288] sm:$0xff]
    %v1033 = vld [vmem:[%s3 + $0x290] sm:$0xff]
    %v1034 = vld [vmem:[%s3 + $0x298] sm:$0xff]
    %v1035 = vld [vmem:[%s3 + $0x2a0] sm:$0xff]
    %v1036 = vld [vmem:[%s3 + $0x2a8] sm:$0xff]
    %v1037 = vld [vmem:[%s3 + $0x2b0] sm:$0xff]
    %v1038 = vld [vmem:[%s3 + $0x2b8] sm:$0xff]
    %v1039 = vld [vmem:[%s3 + $0x2c0] sm:$0xff]
    %v1040 = vld [vmem:[%s3 + $0x2c8] sm:$0xff]
    %v1041 = vld [vmem:[%s3 + $0x2d0] sm:$0xff]
    %v1042 = vld [vmem:[%s3 + $0x2d8] sm:$0xff]
    %v1043 = vld [vmem:[%s3 + $0x2e0] sm:$0xff]
    %v1044 = vld [vmem:[%s3 + $0x2e8] sm:$0xff]
    %v1045 = vld [vmem:[%s3 + $0x2f0] sm:$0xff]
    %v1046 = vld [vmem:[%s3 + $0x2f8] sm:$0xff]
    %v1047 = vld [vmem:[%s3 + $0x300] sm:$0xff]
    %v1048 = vld [vmem:[%s3 + $0x308] sm:$0xff]
    %v1049 = vld [vmem:[%s3 + $0x310] sm:$0xff]
    %v1050 = vld [vmem:[%s3 + $0x318] sm:$0xff]
    %v1051 = vld [vmem:[%s3 + $0x320] sm:$0xff]
    %v1052 = vld [vmem:[%s3 + $0x328] sm:$0xff]
    %v1053 = vld [vmem:[%s3 + $0x330] sm:$0xff]
    %v1054 = vld [vmem:[%s3 + $0x338] sm:$0xff]
    %v1055 = vld [vmem:[%s3 + $0x340] sm:$0xff]
    %v1056 = vld [vmem:[%s3 + $0x348] sm:$0xff]
    %v1057 = vld [vmem:[%s3 + $0x350] sm:$0xff]
    %v1058 = vld [vmem:[%s3 + $0x358] sm:$0xff]
    %v1059 = vld [vmem:[%s3 + $0x360] sm:$0xff]
    %v1060 = vld [vmem:[%s3 + $0x368] sm:$0xff]
    %v1061 = vld [vmem:[%s3 + $0x370] sm:$0xff]
    %v1062 = vld [vmem:[%s3 + $0x378] sm:$0xff]
    %v1063 = vld [vmem:[%s3 + $0x380] sm:$0xff]
    %v1064 = vld [vmem:[%s3 + $0x388] sm:$0xff]
    %v1065 = vld [vmem:[%s3 + $0x390] sm:$0xff]
    %v1066 = vld [vmem:[%s3 + $0x398] sm:$0xff]
    %v1067 = vld [vmem:[%s3 + $0x3a0] sm:$0xff]
    %v1068 = vld [vmem:[%s3 + $0x3a8] sm:$0xff]
    %v1069 = vld [vmem:[%s3 + $0x3b0] sm:$0xff]
    %v1070 = vld [vmem:[%s3 + $0x3b8] sm:$0xff]
    %v1071 = vld [vmem:[%s3 + $0x3c0] sm:$0xff]
    %v1072 = vld [vmem:[%s3 + $0x3c8] sm:$0xff]
    %v1073 = vld [vmem:[%s3 + $0x3d0] sm:$0xff]
    %v1074 = vld [vmem:[%s3 + $0x3d8] sm:$0xff]
    %v1075 = vld [vmem:[%s3 + $0x3e0] sm:$0xff]
    %v1076 = vld [vmem:[%s3 + $0x3e8] sm:$0xff]
    %v1077 = vld [vmem:[%s3 + $0x3f0] sm:$0xff]
    %v1078 = vld [vmem:[%s3 + $0x3f8] sm:$0xff]
    %v1079 = vld [vmem:[%s3 + $0x400] sm:$0xff]
    %v1080 = vld [vmem:[%s3 + $0x408] sm:$0xff]
    %v1081 = vld [vmem:[%s3 + $0x410] sm:$0xff]
    %v1082 = vld [vmem:[%s3 + $0x418] sm:$0xff]
    %v1083 = vld [vmem:[%s3 + $0x420] sm:$0xff]
    %v1084 = vld [vmem:[%s3 + $0x428] sm:$0xff]
    %v1085 = vld [vmem:[%s3 + $0x430] sm:$0xff]
    %v1086 = vld [vmem:[%s3 + $0x438] sm:$0xff]
    %v1087 = vld [vmem:[%s3 + $0x440] sm:$0xff]
    %v1088 = vld [vmem:[%s3 + $0x448] sm:$0xff]
    %v1089 = vld [vmem:[%s3 + $0x450] sm:$0xff]
    %v1090 = vld [vmem:[%s3 + $0x458] sm:$0xff]
    %v1091 = vld [vmem:[%s3 + $0x460] sm:$0xff]
    %v1092 = vld [vmem:[%s3 + $0x468] sm:$0xff]
    %v1093 = vld [vmem:[%s3 + $0x470] sm:$0xff]
    %v1094 = vld [vmem:[%s3 + $0x478] sm:$0xff]
    %v1095 = vld [vmem:[%s3 + $0x480] sm:$0xff]
    %v1096 = vld [vmem:[%s3 + $0x488] sm:$0xff]
    %v1097 = vld [vmem:[%s3 + $0x490] sm:$0xff]
    %v1098 = vld [vmem:[%s3 + $0x498] sm:$0xff]
    %v1099 = vld [vmem:[%s3 + $0x4a0] sm:$0xff]
    %v1100 = vld [vmem:[%s3 + $0x4a8] sm:$0xff]
    %v1101 = vld [vmem:[%s3 + $0x4b0] sm:$0xff]
    %v1102 = vld [vmem:[%s3 + $0x4b8] sm:$0xff]
    %v1103 = vld [vmem:[%s3 + $0x4c0] sm:$0xff]
    %v1104 = vld [vmem:[%s3 + $0x4c8] sm:$0xff]
    %v1105 = vld [vmem:[%s3 + $0x4d0] sm:$0xff]
    %v1106 = vld [vmem:[%s3 + $0x4d8] sm:$0xff]
    %v1107 = vld [vmem:[%s3 + $0x4e0] sm:$0xff]
    %v1108 = vld [vmem:[%s3 + $0x4e8] sm:$0xff]
    %v1109 = vld [vmem:[%s3 + $0x4f0] sm:$0xff]
    %v1110 = vld [vmem:[%s3 + $0x4f8] sm:$0xff]
    %v1111 = vld [vmem:[%s3 + $0x500] sm:$0xff]
    %v1112 = vld [vmem:[%s3 + $0x508] sm:$0xff]
    %v1113 = vld [vmem:[%s3 + $0x510] sm:$0xff]
    %v1114 = vld [vmem:[%s3 + $0x518] sm:$0xff]
    %v1115 = vld [vmem:[%s3 + $0x520] sm:$0xff]
    %v1116 = vld [vmem:[%s3 + $0x528] sm:$0xff]
    %v1117 = vld [vmem:[%s3 + $0x530] sm:$0xff]
    %v1118 = vld [vmem:[%s3 + $0x538] sm:$0xff]
    %v1119 = vld [vmem:[%s3 + $0x540] sm:$0xff]
    %v1120 = vld [vmem:[%s3 + $0x548] sm:$0xff]
    %v1121 = vld [vmem:[%s3 + $0x550] sm:$0xff]
    %v1122 = vld [vmem:[%s3 + $0x558] sm:$0xff]
    %v1123 = vld [vmem:[%s3 + $0x560] sm:$0xff]
    %v1124 = vld [vmem:[%s3 + $0x568] sm:$0xff]
    %v1125 = vld [vmem:[%s3 + $0x570] sm:$0xff]
    %v1126 = vld [vmem:[%s3 + $0x578] sm:$0xff]
    %v1127 = vld [vmem:[%s3 + $0x580] sm:$0xff]
    %v1128 = vld [vmem:[%s3 + $0x588] sm:$0xff]
    %v1129 = vld [vmem:[%s3 + $0x590] sm:$0xff]
    %v1130 = vld [vmem:[%s3 + $0x598] sm:$0xff]
    %v1131 = vld [vmem:[%s3 + $0x5a0] sm:$0xff]
    %v1132 = vld [vmem:[%s3 + $0x5a8] sm:$0xff]
    %v1133 = vld [vmem:[%s3 + $0x5b0] sm:$0xff]
    %v1134 = vld [vmem:[%s3 + $0x5b8] sm:$0xff]
    %v1135 = vld [vmem:[%s3 + $0x5c0] sm:$0xff]
    %v1136 = vld [vmem:[%s3 + $0x5c8] sm:$0xff]
    %v1137 = vld [vmem:[%s3 + $0x5d0] sm:$0xff]
    %v1138 = vld [vmem:[%s3 + $0x5d8] sm:$0xff]
    %v1139 = vld [vmem:[%s3 + $0x5e0] sm:$0xff]
    %v1140 = vld [vmem:[%s3 + $0x5e8] sm:$0xff]
    %v1141 = vld [vmem:[%s3 + $0x5f0] sm:$0xff]
    %v1142 = vld [vmem:[%s3 + $0x5f8] sm:$0xff]
    %v1143 = vld [vmem:[%s3 + $0x600] sm:$0xff]
    %v1144 = vld [vmem:[%s3 + $0x608] sm:$0xff]
    %v1145 = vld [vmem:[%s3 + $0x610] sm:$0xff]
    %v1146 = vld [vmem:[%s3 + $0x618] sm:$0xff]
    %v1147 = vld [vmem:[%s3 + $0x620] sm:$0xff]
    %v1148 = vld [vmem:[%s3 + $0x628] sm:$0xff]
    %v1149 = vld [vmem:[%s3 + $0x630] sm:$0xff]
    %v1150 = vld [vmem:[%s3 + $0x638] sm:$0xff]
    %v1151 = vld [vmem:[%s3 + $0x640] sm:$0xff]
    %v1152 = vld [vmem:[%s3 + $0x648] sm:$0xff]
    %v1153 = vld [vmem:[%s3 + $0x650] sm:$0xff]
    %v1154 = vld [vmem:[%s3 + $0x658] sm:$0xff]
    %v1155 = vld [vmem:[%s3 + $0x660] sm:$0xff]
    %v1156 = vld [vmem:[%s3 + $0x668] sm:$0xff]
    %v1157 = vld [vmem:[%s3 + $0x670] sm:$0xff]
    %v1158 = vld [vmem:[%s3 + $0x678] sm:$0xff]
    %v1159 = vld [vmem:[%s3 + $0x680] sm:$0xff]
    %v1160 = vld [vmem:[%s3 + $0x688] sm:$0xff]
    %v1161 = vld [vmem:[%s3 + $0x690] sm:$0xff]
    %v1162 = vld [vmem:[%s3 + $0x698] sm:$0xff]
    %v1163 = vld [vmem:[%s3 + $0x6a0] sm:$0xff]
    %v1164 = vld [vmem:[%s3 + $0x6a8] sm:$0xff]
    %v1165 = vld [vmem:[%s3 + $0x6b0] sm:$0xff]
    %v1166 = vld [vmem:[%s3 + $0x6b8] sm:$0xff]
    %v1167 = vld [vmem:[%s3 + $0x6c0] sm:$0xff]
    %v1168 = vld [vmem:[%s3 + $0x6c8] sm:$0xff]
    %v1169 = vld [vmem:[%s3 + $0x6d0] sm:$0xff]
    %v1170 = vld [vmem:[%s3 + $0x6d8] sm:$0xff]
    %v1171 = vld [vmem:[%s3 + $0x6e0] sm:$0xff]
    %v1172 = vld [vmem:[%s3 + $0x6e8] sm:$0xff]
    %v1173 = vld [vmem:[%s3 + $0x6f0] sm:$0xff]
    %v1174 = vld [vmem:[%s3 + $0x6f8] sm:$0xff]
    %v1175 = vld [vmem:[%s3 + $0x700] sm:$0xff]
    %v1176 = vld [vmem:[%s3 + $0x708] sm:$0xff]
    %v1177 = vld [vmem:[%s3 + $0x710] sm:$0xff]
    %v1178 = vld [vmem:[%s3 + $0x718] sm:$0xff]
    %v1179 = vld [vmem:[%s3 + $0x720] sm:$0xff]
    %v1180 = vld [vmem:[%s3 + $0x728] sm:$0xff]
    %v1181 = vld [vmem:[%s3 + $0x730] sm:$0xff]
    %v1182 = vld [vmem:[%s3 + $0x738] sm:$0xff]
    %v1183 = vld [vmem:[%s3 + $0x740] sm:$0xff]
    %v1184 = vld [vmem:[%s3 + $0x748] sm:$0xff]
    %v1185 = vld [vmem:[%s3 + $0x750] sm:$0xff]
    %v1186 = vld [vmem:[%s3 + $0x758] sm:$0xff]
    %v1187 = vld [vmem:[%s3 + $0x760] sm:$0xff]
    %v1188 = vld [vmem:[%s3 + $0x768] sm:$0xff]
    %v1189 = vld [vmem:[%s3 + $0x770] sm:$0xff]
    %v1190 = vld [vmem:[%s3 + $0x778] sm:$0xff]
    %v1191 = vld [vmem:[%s3 + $0x780] sm:$0xff]
    %v1192 = vld [vmem:[%s3 + $0x788] sm:$0xff]
    %v1193 = vld [vmem:[%s3 + $0x790] sm:$0xff]
    %v1194 = vld [vmem:[%s3 + $0x798] sm:$0xff]
    %v1195 = vld [vmem:[%s3 + $0x7a0] sm:$0xff]
    %v1196 = vld [vmem:[%s3 + $0x7a8] sm:$0xff]
    %v1197 = vld [vmem:[%s3 + $0x7b0] sm:$0xff]
    %v1198 = vld [vmem:[%s3 + $0x7b8] sm:$0xff]
    %v1199 = vld [vmem:[%s3 + $0x7c0] sm:$0xff]
    %v1200 = vld [vmem:[%s3 + $0x7c8] sm:$0xff]
    %v1201 = vld [vmem:[%s3 + $0x7d0] sm:$0xff]
    %v1202 = vld [vmem:[%s3 + $0x7d8] sm:$0xff]
    %v1203 = vld [vmem:[%s3 + $0x7e0] sm:$0xff]
    %v1204 = vld [vmem:[%s3 + $0x7e8] sm:$0xff]
    %v1205 = vld [vmem:[%s3 + $0x7f0] sm:$0xff]
    %v1206 = vld [vmem:[%s3 + $0x7f8] sm:$0xff]
    %v1207 = vld [vmem:[%s4] sm:$0x1]
    %v1209 = vlaneseq
    %v1210 = vshrl.u32 %v1209, 7
    %v1211 = vsub.s32 0, %v1210
    %v1212 = vrot.slane %v1207, %v1211
    %1214 = vmatprep.subr.mxu0 0.0
    %1215 = vmatpush1.msra.mxu0 %v966
    %1216 = vmatprep.subr.mxu0 0.0
    %1217 = vmatpush1.msra.mxu0 %v965
    %1218 = vmatprep.subr.mxu0 0.0
    %1219 = vmatpush1.msra.mxu0 %v964
    %1220 = vmatprep.subr.mxu0 0.0
    %1221 = vmatpush1.msra.mxu0 %v963
    %1222 = vmatprep.subr.mxu0 0.0
    %1223 = vmatpush1.msra.mxu0 %v962
    %1224 = vmatprep.subr.mxu0 0.0
    %1225 = vmatpush1.msra.mxu0 %v961
    %1226 = vmatprep.subr.mxu0 0.0
    %1227 = vmatpush1.msra.mxu0 %v960
    %1228 = vmatprep.subr.mxu0 0.0
    %1229 = vmatpush1.msra.mxu0 %v959
    %1230 = vmatprep.subr.mxu0 0.0
    %1231 = vmatpush1.msra.mxu0 %v958
    %1232 = vmatprep.subr.mxu0 0.0
    %1233 = vmatpush1.msra.mxu0 %v957
    %1234 = vmatprep.subr.mxu0 0.0
    %1235 = vmatpush1.msra.mxu0 %v956
    %1236 = vmatprep.subr.mxu0 0.0
    %1237 = vmatpush1.msra.mxu0 %v955
    %1238 = vmatprep.subr.mxu0 0.0
    %1239 = vmatpush1.msra.mxu0 %v954
    %1240 = vmatprep.subr.mxu0 0.0
    %1241 = vmatpush1.msra.mxu0 %v953
    %1242 = vmatprep.subr.mxu0 0.0
    %1243 = vmatpush1.msra.mxu0 %v952
    %1244 = vmatprep.subr.mxu0 0.0
    %1245 = vmatpush1.msra.mxu0 %v951
    %1246 = vmatprep.subr.mxu0 0.0
    %1247 = vmatpush2.msra.mxu0 %v982
    %1248 = vmatprep.subr.mxu0 0.0
    %1249 = vmatpush2.msra.mxu0 %v981
    %1250 = vmatprep.subr.mxu0 0.0
    %1251 = vmatpush2.msra.mxu0 %v980
    %1252 = vmatprep.subr.mxu0 0.0
    %1253 = vmatpush2.msra.mxu0 %v979
    %1254 = vmatprep.subr.mxu0 0.0
    %1255 = vmatpush2.msra.mxu0 %v978
    %1256 = vmatprep.subr.mxu0 0.0
    %1257 = vmatpush2.msra.mxu0 %v977
    %1258 = vmatprep.subr.mxu0 0.0
    %1259 = vmatpush2.msra.mxu0 %v976
    %1260 = vmatprep.subr.mxu0 0.0
    %1261 = vmatpush2.msra.mxu0 %v975
    %1262 = vmatprep.subr.mxu0 0.0
    %1263 = vmatpush2.msra.mxu0 %v974
    %1264 = vmatprep.subr.mxu0 0.0
    %1265 = vmatpush2.msra.mxu0 %v973
    %1266 = vmatprep.subr.mxu0 0.0
    %1267 = vmatpush2.msra.mxu0 %v972
    %1268 = vmatprep.subr.mxu0 0.0
    %1269 = vmatpush2.msra.mxu0 %v971
    %1270 = vmatprep.subr.mxu0 0.0
    %1271 = vmatpush2.msra.mxu0 %v970
    %1272 = vmatprep.subr.mxu0 0.0
    %1273 = vmatpush2.msra.mxu0 %v969
    %1274 = vmatprep.subr.mxu0 0.0
    %1275 = vmatpush2.msra.mxu0 %v968
    %1276 = vmatprep.subr.mxu0 0.0
    %1277 = vmatpush2.msra.mxu0 %v967
    %1278 = vmatprep.mubr.f32.mxu0 %v322
    %1279 = vmatmul.mubr.f32.gmra.mxu0 %v314
    %v1280 = vpop.f32.mrf.mxu0
    %v1281 = vadd.f32 %v1212, %v1280
    %v1282 = vpop.f32.mrf.mxu0
    %1283 = vdwg.mxu0
    %1284 = vmatprep.subr.mxu0 0.0
    %1285 = vmatpush1.msra.mxu0 %v998
    %1286 = vmatprep.subr.mxu0 0.0
    %1287 = vmatpush1.msra.mxu0 %v997
    %1288 = vmatprep.subr.mxu0 0.0
    %1289 = vmatpush1.msra.mxu0 %v996
    %1290 = vmatprep.subr.mxu0 0.0
    %1291 = vmatpush1.msra.mxu0 %v995
    %1292 = vmatprep.subr.mxu0 0.0
    %1293 = vmatpush1.msra.mxu0 %v994
    %1294 = vmatprep.subr.mxu0 0.0
    %1295 = vmatpush1.msra.mxu0 %v993
    %1296 = vmatprep.subr.mxu0 0.0
    %1297 = vmatpush1.msra.mxu0 %v992
    %1298 = vmatprep.subr.mxu0 0.0
    %1299 = vmatpush1.msra.mxu0 %v991
    %1300 = vmatprep.subr.mxu0 0.0
    %1301 = vmatpush1.msra.mxu0 %v990
    %1302 = vmatprep.subr.mxu0 0.0
    %1303 = vmatpush1.msra.mxu0 %v989
    %1304 = vmatprep.subr.mxu0 0.0
    %1305 = vmatpush1.msra.mxu0 %v988
    %1306 = vmatprep.subr.mxu0 0.0
    %1307 = vmatpush1.msra.mxu0 %v987
    %1308 = vmatprep.subr.mxu0 0.0
    %1309 = vmatpush1.msra.mxu0 %v986
    %1310 = vmatprep.subr.mxu0 0.0
    %1311 = vmatpush1.msra.mxu0 %v985
    %1312 = vmatprep.subr.mxu0 0.0
    %1313 = vmatpush1.msra.mxu0 %v984
    %1314 = vmatprep.subr.mxu0 0.0
    %1315 = vmatpush1.msra.mxu0 %v983
    %1316 = vmatprep.subr.mxu0 0.0
    %1317 = vmatpush2.msra.mxu0 %v1014
    %1318 = vmatprep.subr.mxu0 0.0
    %1319 = vmatpush2.msra.mxu0 %v1013
    %1320 = vmatprep.subr.mxu0 0.0
    %1321 = vmatpush2.msra.mxu0 %v1012
    %1322 = vmatprep.subr.mxu0 0.0
    %1323 = vmatpush2.msra.mxu0 %v1011
    %1324 = vmatprep.subr.mxu0 0.0
    %1325 = vmatpush2.msra.mxu0 %v1010
    %1326 = vmatprep.subr.mxu0 0.0
    %1327 = vmatpush2.msra.mxu0 %v1009
    %1328 = vmatprep.subr.mxu0 0.0
    %1329 = vmatpush2.msra.mxu0 %v1008
    %1330 = vmatprep.subr.mxu0 0.0
    %1331 = vmatpush2.msra.mxu0 %v1007
    %1332 = vmatprep.subr.mxu0 0.0
    %1333 = vmatpush2.msra.mxu0 %v1006
    %1334 = vmatprep.subr.mxu0 0.0
    %1335 = vmatpush2.msra.mxu0 %v1005
    %1336 = vmatprep.subr.mxu0 0.0
    %1337 = vmatpush2.msra.mxu0 %v1004
    %1338 = vmatprep.subr.mxu0 0.0
    %1339 = vmatpush2.msra.mxu0 %v1003
    %1340 = vmatprep.subr.mxu0 0.0
    %1341 = vmatpush2.msra.mxu0 %v1002
    %1342 = vmatprep.subr.mxu0 0.0
    %1343 = vmatpush2.msra.mxu0 %v1001
    %1344 = vmatprep.subr.mxu0 0.0
    %1345 = vmatpush2.msra.mxu0 %v1000
    %1346 = vmatprep.subr.mxu0 0.0
    %1347 = vmatpush2.msra.mxu0 %v999
    %1348 = vmatprep.mubr.f32.mxu0 %v323
    %1349 = vmatmul.mubr.f32.gmra.mxu0 %v321
    %v1350 = vpop.f32.mrf.mxu0
    %v1351 = vadd.f32 %v1281, %v1350
    %v1352 = vpop.f32.mrf.mxu0
    %1353 = vdwg.mxu0
    %1354 = vmatprep.subr.mxu0 0.0
    %1355 = vmatpush1.msra.mxu0 %v1030
    %1356 = vmatprep.subr.mxu0 0.0
    %1357 = vmatpush1.msra.mxu0 %v1029
    %1358 = vmatprep.subr.mxu0 0.0
    %1359 = vmatpush1.msra.mxu0 %v1028
    %1360 = vmatprep.subr.mxu0 0.0
    %1361 = vmatpush1.msra.mxu0 %v1027
    %1362 = vmatprep.subr.mxu0 0.0
    %1363 = vmatpush1.msra.mxu0 %v1026
    %1364 = vmatprep.subr.mxu0 0.0
    %1365 = vmatpush1.msra.mxu0 %v1025
    %1366 = vmatprep.subr.mxu0 0.0
    %1367 = vmatpush1.msra.mxu0 %v1024
    %1368 = vmatprep.subr.mxu0 0.0
    %1369 = vmatpush1.msra.mxu0 %v1023
    %1370 = vmatprep.subr.mxu0 0.0
    %1371 = vmatpush1.msra.mxu0 %v1022
    %1372 = vmatprep.subr.mxu0 0.0
    %1373 = vmatpush1.msra.mxu0 %v1021
    %1374 = vmatprep.subr.mxu0 0.0
    %1375 = vmatpush1.msra.mxu0 %v1020
    %1376 = vmatprep.subr.mxu0 0.0
    %1377 = vmatpush1.msra.mxu0 %v1019
    %1378 = vmatprep.subr.mxu0 0.0
    %1379 = vmatpush1.msra.mxu0 %v1018
    %1380 = vmatprep.subr.mxu0 0.0
    %1381 = vmatpush1.msra.mxu0 %v1017
    %1382 = vmatprep.subr.mxu0 0.0
    %1383 = vmatpush1.msra.mxu0 %v1016
    %1384 = vmatprep.subr.mxu0 0.0
    %1385 = vmatpush1.msra.mxu0 %v1015
    %1386 = vmatprep.subr.mxu0 0.0
    %1387 = vmatpush2.msra.mxu0 %v1046
    %1388 = vmatprep.subr.mxu0 0.0
    %1389 = vmatpush2.msra.mxu0 %v1045
    %1390 = vmatprep.subr.mxu0 0.0
    %1391 = vmatpush2.msra.mxu0 %v1044
    %1392 = vmatprep.subr.mxu0 0.0
    %1393 = vmatpush2.msra.mxu0 %v1043
    %1394 = vmatprep.subr.mxu0 0.0
    %1395 = vmatpush2.msra.mxu0 %v1042
    %1396 = vmatprep.subr.mxu0 0.0
    %1397 = vmatpush2.msra.mxu0 %v1041
    %1398 = vmatprep.subr.mxu0 0.0
    %1399 = vmatpush2.msra.mxu0 %v1040
    %1400 = vmatprep.subr.mxu0 0.0
    %1401 = vmatpush2.msra.mxu0 %v1039
    %1402 = vmatprep.subr.mxu0 0.0
    %1403 = vmatpush2.msra.mxu0 %v1038
    %1404 = vmatprep.subr.mxu0 0.0
    %1405 = vmatpush2.msra.mxu0 %v1037
    %1406 = vmatprep.subr.mxu0 0.0
    %1407 = vmatpush2.msra.mxu0 %v1036
    %1408 = vmatprep.subr.mxu0 0.0
    %1409 = vmatpush2.msra.mxu0 %v1035
    %1410 = vmatprep.subr.mxu0 0.0
    %1411 = vmatpush2.msra.mxu0 %v1034
    %1412 = vmatprep.subr.mxu0 0.0
    %1413 = vmatpush2.msra.mxu0 %v1033
    %1414 = vmatprep.subr.mxu0 0.0
    %1415 = vmatpush2.msra.mxu0 %v1032
    %1416 = vmatprep.subr.mxu0 0.0
    %1417 = vmatpush2.msra.mxu0 %v1031
    %1418 = vmatprep.mubr.f32.mxu0 %v339
    %1419 = vmatmul.mubr.f32.gmra.mxu0 %v331
    %v1420 = vpop.f32.mrf.mxu0
    %v1421 = vadd.f32 %v1351, %v1420
    %v1422 = vpop.f32.mrf.mxu0
    %1423 = vdwg.mxu0
    %1424 = vmatprep.subr.mxu0 0.0
    %1425 = vmatpush1.msra.mxu0 %v1062
    %1426 = vmatprep.subr.mxu0 0.0
    %1427 = vmatpush1.msra.mxu0 %v1061
    %1428 = vmatprep.subr.mxu0 0.0
    %1429 = vmatpush1.msra.mxu0 %v1060
    %1430 = vmatprep.subr.mxu0 0.0
    %1431 = vmatpush1.msra.mxu0 %v1059
    %1432 = vmatprep.subr.mxu0 0.0
    %1433 = vmatpush1.msra.mxu0 %v1058
    %1434 = vmatprep.subr.mxu0 0.0
    %1435 = vmatpush1.msra.mxu0 %v1057
    %1436 = vmatprep.subr.mxu0 0.0
    %1437 = vmatpush1.msra.mxu0 %v1056
    %1438 = vmatprep.subr.mxu0 0.0
    %1439 = vmatpush1.msra.mxu0 %v1055
    %1440 = vmatprep.subr.mxu0 0.0
    %1441 = vmatpush1.msra.mxu0 %v1054
    %1442 = vmatprep.subr.mxu0 0.0
    %1443 = vmatpush1.msra.mxu0 %v1053
    %1444 = vmatprep.subr.mxu0 0.0
    %1445 = vmatpush1.msra.mxu0 %v1052
    %1446 = vmatprep.subr.mxu0 0.0
    %1447 = vmatpush1.msra.mxu0 %v1051
    %1448 = vmatprep.subr.mxu0 0.0
    %1449 = vmatpush1.msra.mxu0 %v1050
    %1450 = vmatprep.subr.mxu0 0.0
    %1451 = vmatpush1.msra.mxu0 %v1049
    %1452 = vmatprep.subr.mxu0 0.0
    %1453 = vmatpush1.msra.mxu0 %v1048
    %1454 = vmatprep.subr.mxu0 0.0
    %1455 = vmatpush1.msra.mxu0 %v1047
    %1456 = vmatprep.subr.mxu0 0.0
    %1457 = vmatpush2.msra.mxu0 %v1078
    %1458 = vmatprep.subr.mxu0 0.0
    %1459 = vmatpush2.msra.mxu0 %v1077
    %1460 = vmatprep.subr.mxu0 0.0
    %1461 = vmatpush2.msra.mxu0 %v1076
    %1462 = vmatprep.subr.mxu0 0.0
    %1463 = vmatpush2.msra.mxu0 %v1075
    %1464 = vmatprep.subr.mxu0 0.0
    %1465 = vmatpush2.msra.mxu0 %v1074
    %1466 = vmatprep.subr.mxu0 0.0
    %1467 = vmatpush2.msra.mxu0 %v1073
    %1468 = vmatprep.subr.mxu0 0.0
    %1469 = vmatpush2.msra.mxu0 %v1072
    %1470 = vmatprep.subr.mxu0 0.0
    %1471 = vmatpush2.msra.mxu0 %v1071
    %1472 = vmatprep.subr.mxu0 0.0
    %1473 = vmatpush2.msra.mxu0 %v1070
    %1474 = vmatprep.subr.mxu0 0.0
    %1475 = vmatpush2.msra.mxu0 %v1069
    %1476 = vmatprep.subr.mxu0 0.0
    %1477 = vmatpush2.msra.mxu0 %v1068
    %1478 = vmatprep.subr.mxu0 0.0
    %1479 = vmatpush2.msra.mxu0 %v1067
    %1480 = vmatprep.subr.mxu0 0.0
    %1481 = vmatpush2.msra.mxu0 %v1066
    %1482 = vmatprep.subr.mxu0 0.0
    %1483 = vmatpush2.msra.mxu0 %v1065
    %1484 = vmatprep.subr.mxu0 0.0
    %1485 = vmatpush2.msra.mxu0 %v1064
    %1486 = vmatprep.subr.mxu0 0.0
    %1487 = vmatpush2.msra.mxu0 %v1063
    %1488 = vmatprep.mubr.f32.mxu0 %v340
    %1489 = vmatmul.mubr.f32.gmra.mxu0 %v338
    %v1490 = vpop.f32.mrf.mxu0
    %v1491 = vadd.f32 %v1421, %v1490
    %v1492 = vpop.f32.mrf.mxu0
    %1493 = vdwg.mxu0
    %1494 = vmatprep.subr.mxu0 0.0
    %1495 = vmatpush1.msra.mxu0 %v1094
    %1496 = vmatprep.subr.mxu0 0.0
    %1497 = vmatpush1.msra.mxu0 %v1093
    %1498 = vmatprep.subr.mxu0 0.0
    %1499 = vmatpush1.msra.mxu0 %v1092
    %1500 = vmatprep.subr.mxu0 0.0
    %1501 = vmatpush1.msra.mxu0 %v1091
    %1502 = vmatprep.subr.mxu0 0.0
    %1503 = vmatpush1.msra.mxu0 %v1090
    %1504 = vmatprep.subr.mxu0 0.0
    %1505 = vmatpush1.msra.mxu0 %v1089
    %1506 = vmatprep.subr.mxu0 0.0
    %1507 = vmatpush1.msra.mxu0 %v1088
    %1508 = vmatprep.subr.mxu0 0.0
    %1509 = vmatpush1.msra.mxu0 %v1087
    %1510 = vmatprep.subr.mxu0 0.0
    %1511 = vmatpush1.msra.mxu0 %v1086
    %1512 = vmatprep.subr.mxu0 0.0
    %1513 = vmatpush1.msra.mxu0 %v1085
    %1514 = vmatprep.subr.mxu0 0.0
    %1515 = vmatpush1.msra.mxu0 %v1084
    %1516 = vmatprep.subr.mxu0 0.0
    %1517 = vmatpush1.msra.mxu0 %v1083
    %1518 = vmatprep.subr.mxu0 0.0
    %1519 = vmatpush1.msra.mxu0 %v1082
    %1520 = vmatprep.subr.mxu0 0.0
    %1521 = vmatpush1.msra.mxu0 %v1081
    %1522 = vmatprep.subr.mxu0 0.0
    %1523 = vmatpush1.msra.mxu0 %v1080
    %1524 = vmatprep.subr.mxu0 0.0
    %1525 = vmatpush1.msra.mxu0 %v1079
    %1526 = vmatprep.subr.mxu0 0.0
    %1527 = vmatpush2.msra.mxu0 %v1110
    %1528 = vmatprep.subr.mxu0 0.0
    %1529 = vmatpush2.msra.mxu0 %v1109
    %1530 = vmatprep.subr.mxu0 0.0
    %1531 = vmatpush2.msra.mxu0 %v1108
    %1532 = vmatprep.subr.mxu0 0.0
    %1533 = vmatpush2.msra.mxu0 %v1107
    %1534 = vmatprep.subr.mxu0 0.0
    %1535 = vmatpush2.msra.mxu0 %v1106
    %1536 = vmatprep.subr.mxu0 0.0
    %1537 = vmatpush2.msra.mxu0 %v1105
    %1538 = vmatprep.subr.mxu0 0.0
    %1539 = vmatpush2.msra.mxu0 %v1104
    %1540 = vmatprep.subr.mxu0 0.0
    %1541 = vmatpush2.msra.mxu0 %v1103
    %1542 = vmatprep.subr.mxu0 0.0
    %1543 = vmatpush2.msra.mxu0 %v1102
    %1544 = vmatprep.subr.mxu0 0.0
    %1545 = vmatpush2.msra.mxu0 %v1101
    %1546 = vmatprep.subr.mxu0 0.0
    %1547 = vmatpush2.msra.mxu0 %v1100
    %1548 = vmatprep.subr.mxu0 0.0
    %1549 = vmatpush2.msra.mxu0 %v1099
    %1550 = vmatprep.subr.mxu0 0.0
    %1551 = vmatpush2.msra.mxu0 %v1098
    %1552 = vmatprep.subr.mxu0 0.0
    %1553 = vmatpush2.msra.mxu0 %v1097
    %1554 = vmatprep.subr.mxu0 0.0
    %1555 = vmatpush2.msra.mxu0 %v1096
    %1556 = vmatprep.subr.mxu0 0.0
    %1557 = vmatpush2.msra.mxu0 %v1095
    %1558 = vmatprep.mubr.f32.mxu0 %v356
    %1559 = vmatmul.mubr.f32.gmra.mxu0 %v348
    %v1560 = vpop.f32.mrf.mxu0
    %v1561 = vadd.f32 %v1491, %v1560
    %v1562 = vpop.f32.mrf.mxu0
    %1563 = vdwg.mxu0
    %1564 = vmatprep.subr.mxu0 0.0
    %1565 = vmatpush1.msra.mxu0 %v1126
    %1566 = vmatprep.subr.mxu0 0.0
    %1567 = vmatpush1.msra.mxu0 %v1125
    %1568 = vmatprep.subr.mxu0 0.0
    %1569 = vmatpush1.msra.mxu0 %v1124
    %1570 = vmatprep.subr.mxu0 0.0
    %1571 = vmatpush1.msra.mxu0 %v1123
    %1572 = vmatprep.subr.mxu0 0.0
    %1573 = vmatpush1.msra.mxu0 %v1122
    %1574 = vmatprep.subr.mxu0 0.0
    %1575 = vmatpush1.msra.mxu0 %v1121
    %1576 = vmatprep.subr.mxu0 0.0
    %1577 = vmatpush1.msra.mxu0 %v1120
    %1578 = vmatprep.subr.mxu0 0.0
    %1579 = vmatpush1.msra.mxu0 %v1119
    %1580 = vmatprep.subr.mxu0 0.0
    %1581 = vmatpush1.msra.mxu0 %v1118
    %1582 = vmatprep.subr.mxu0 0.0
    %1583 = vmatpush1.msra.mxu0 %v1117
    %1584 = vmatprep.subr.mxu0 0.0
    %1585 = vmatpush1.msra.mxu0 %v1116
    %1586 = vmatprep.subr.mxu0 0.0
    %1587 = vmatpush1.msra.mxu0 %v1115
    %1588 = vmatprep.subr.mxu0 0.0
    %1589 = vmatpush1.msra.mxu0 %v1114
    %1590 = vmatprep.subr.mxu0 0.0
    %1591 = vmatpush1.msra.mxu0 %v1113
    %1592 = vmatprep.subr.mxu0 0.0
    %1593 = vmatpush1.msra.mxu0 %v1112
    %1594 = vmatprep.subr.mxu0 0.0
    %1595 = vmatpush1.msra.mxu0 %v1111
    %1596 = vmatprep.subr.mxu0 0.0
    %1597 = vmatpush2.msra.mxu0 %v1142
    %1598 = vmatprep.subr.mxu0 0.0
    %1599 = vmatpush2.msra.mxu0 %v1141
    %1600 = vmatprep.subr.mxu0 0.0
    %1601 = vmatpush2.msra.mxu0 %v1140
    %1602 = vmatprep.subr.mxu0 0.0
    %1603 = vmatpush2.msra.mxu0 %v1139
    %1604 = vmatprep.subr.mxu0 0.0
    %1605 = vmatpush2.msra.mxu0 %v1138
    %1606 = vmatprep.subr.mxu0 0.0
    %1607 = vmatpush2.msra.mxu0 %v1137
    %1608 = vmatprep.subr.mxu0 0.0
    %1609 = vmatpush2.msra.mxu0 %v1136
    %1610 = vmatprep.subr.mxu0 0.0
    %1611 = vmatpush2.msra.mxu0 %v1135
    %1612 = vmatprep.subr.mxu0 0.0
    %1613 = vmatpush2.msra.mxu0 %v1134
    %1614 = vmatprep.subr.mxu0 0.0
    %1615 = vmatpush2.msra.mxu0 %v1133
    %1616 = vmatprep.subr.mxu0 0.0
    %1617 = vmatpush2.msra.mxu0 %v1132
    %1618 = vmatprep.subr.mxu0 0.0
    %1619 = vmatpush2.msra.mxu0 %v1131
    %1620 = vmatprep.subr.mxu0 0.0
    %1621 = vmatpush2.msra.mxu0 %v1130
    %1622 = vmatprep.subr.mxu0 0.0
    %1623 = vmatpush2.msra.mxu0 %v1129
    %1624 = vmatprep.subr.mxu0 0.0
    %1625 = vmatpush2.msra.mxu0 %v1128
    %1626 = vmatprep.subr.mxu0 0.0
    %1627 = vmatpush2.msra.mxu0 %v1127
    %1628 = vmatprep.mubr.f32.mxu0 %v357
    %1629 = vmatmul.mubr.f32.gmra.mxu0 %v355
    %v1630 = vpop.f32.mrf.mxu0
    %v1631 = vadd.f32 %v1561, %v1630
    %v1632 = vpop.f32.mrf.mxu0
    %1633 = vdwg.mxu0
    %1634 = vmatprep.subr.mxu0 0.0
    %1635 = vmatpush1.msra.mxu0 %v1158
    %1636 = vmatprep.subr.mxu0 0.0
    %1637 = vmatpush1.msra.mxu0 %v1157
    %1638 = vmatprep.subr.mxu0 0.0
    %1639 = vmatpush1.msra.mxu0 %v1156
    %1640 = vmatprep.subr.mxu0 0.0
    %1641 = vmatpush1.msra.mxu0 %v1155
    %1642 = vmatprep.subr.mxu0 0.0
    %1643 = vmatpush1.msra.mxu0 %v1154
    %1644 = vmatprep.subr.mxu0 0.0
    %1645 = vmatpush1.msra.mxu0 %v1153
    %1646 = vmatprep.subr.mxu0 0.0
    %1647 = vmatpush1.msra.mxu0 %v1152
    %1648 = vmatprep.subr.mxu0 0.0
    %1649 = vmatpush1.msra.mxu0 %v1151
    %1650 = vmatprep.subr.mxu0 0.0
    %1651 = vmatpush1.msra.mxu0 %v1150
    %1652 = vmatprep.subr.mxu0 0.0
    %1653 = vmatpush1.msra.mxu0 %v1149
    %1654 = vmatprep.subr.mxu0 0.0
    %1655 = vmatpush1.msra.mxu0 %v1148
    %1656 = vmatprep.subr.mxu0 0.0
    %1657 = vmatpush1.msra.mxu0 %v1147
    %1658 = vmatprep.subr.mxu0 0.0
    %1659 = vmatpush1.msra.mxu0 %v1146
    %1660 = vmatprep.subr.mxu0 0.0
    %1661 = vmatpush1.msra.mxu0 %v1145
    %1662 = vmatprep.subr.mxu0 0.0
    %1663 = vmatpush1.msra.mxu0 %v1144
    %1664 = vmatprep.subr.mxu0 0.0
    %1665 = vmatpush1.msra.mxu0 %v1143
    %1666 = vmatprep.subr.mxu0 0.0
    %1667 = vmatpush2.msra.mxu0 %v1174
    %1668 = vmatprep.subr.mxu0 0.0
    %1669 = vmatpush2.msra.mxu0 %v1173
    %1670 = vmatprep.subr.mxu0 0.0
    %1671 = vmatpush2.msra.mxu0 %v1172
    %1672 = vmatprep.subr.mxu0 0.0
    %1673 = vmatpush2.msra.mxu0 %v1171
    %1674 = vmatprep.subr.mxu0 0.0
    %1675 = vmatpush2.msra.mxu0 %v1170
    %1676 = vmatprep.subr.mxu0 0.0
    %1677 = vmatpush2.msra.mxu0 %v1169
    %1678 = vmatprep.subr.mxu0 0.0
    %1679 = vmatpush2.msra.mxu0 %v1168
    %1680 = vmatprep.subr.mxu0 0.0
    %1681 = vmatpush2.msra.mxu0 %v1167
    %1682 = vmatprep.subr.mxu0 0.0
    %1683 = vmatpush2.msra.mxu0 %v1166
    %1684 = vmatprep.subr.mxu0 0.0
    %1685 = vmatpush2.msra.mxu0 %v1165
    %1686 = vmatprep.subr.mxu0 0.0
    %1687 = vmatpush2.msra.mxu0 %v1164
    %1688 = vmatprep.subr.mxu0 0.0
    %1689 = vmatpush2.msra.mxu0 %v1163
    %1690 = vmatprep.subr.mxu0 0.0
    %1691 = vmatpush2.msra.mxu0 %v1162
    %1692 = vmatprep.subr.mxu0 0.0
    %1693 = vmatpush2.msra.mxu0 %v1161
    %1694 = vmatprep.subr.mxu0 0.0
    %1695 = vmatpush2.msra.mxu0 %v1160
    %1696 = vmatprep.subr.mxu0 0.0
    %1697 = vmatpush2.msra.mxu0 %v1159
    %1698 = vmatprep.mubr.f32.mxu0 %v373
    %1699 = vmatmul.mubr.f32.gmra.mxu0 %v365
    %v1700 = vpop.f32.mrf.mxu0
    %v1701 = vadd.f32 %v1631, %v1700
    %v1702 = vpop.f32.mrf.mxu0
    %1703 = vdwg.mxu0
    %1704 = vmatprep.subr.mxu0 0.0
    %1705 = vmatpush1.msra.mxu0 %v1190
    %1706 = vmatprep.subr.mxu0 0.0
    %1707 = vmatpush1.msra.mxu0 %v1189
    %1708 = vmatprep.subr.mxu0 0.0
    %1709 = vmatpush1.msra.mxu0 %v1188
    %1710 = vmatprep.subr.mxu0 0.0
    %1711 = vmatpush1.msra.mxu0 %v1187
    %1712 = vmatprep.subr.mxu0 0.0
    %1713 = vmatpush1.msra.mxu0 %v1186
    %1714 = vmatprep.subr.mxu0 0.0
    %1715 = vmatpush1.msra.mxu0 %v1185
    %1716 = vmatprep.subr.mxu0 0.0
    %1717 = vmatpush1.msra.mxu0 %v1184
    %1718 = vmatprep.subr.mxu0 0.0
    %1719 = vmatpush1.msra.mxu0 %v1183
    %1720 = vmatprep.subr.mxu0 0.0
    %1721 = vmatpush1.msra.mxu0 %v1182
    %1722 = vmatprep.subr.mxu0 0.0
    %1723 = vmatpush1.msra.mxu0 %v1181
    %1724 = vmatprep.subr.mxu0 0.0
    %1725 = vmatpush1.msra.mxu0 %v1180
    %1726 = vmatprep.subr.mxu0 0.0
    %1727 = vmatpush1.msra.mxu0 %v1179
    %1728 = vmatprep.subr.mxu0 0.0
    %1729 = vmatpush1.msra.mxu0 %v1178
    %1730 = vmatprep.subr.mxu0 0.0
    %1731 = vmatpush1.msra.mxu0 %v1177
    %1732 = vmatprep.subr.mxu0 0.0
    %1733 = vmatpush1.msra.mxu0 %v1176
    %1734 = vmatprep.subr.mxu0 0.0
    %1735 = vmatpush1.msra.mxu0 %v1175
    %1736 = vmatprep.subr.mxu0 0.0
    %1737 = vmatpush2.msra.mxu0 %v1206
    %1738 = vmatprep.subr.mxu0 0.0
    %1739 = vmatpush2.msra.mxu0 %v1205
    %1740 = vmatprep.subr.mxu0 0.0
    %1741 = vmatpush2.msra.mxu0 %v1204
    %1742 = vmatprep.subr.mxu0 0.0
    %1743 = vmatpush2.msra.mxu0 %v1203
    %1744 = vmatprep.subr.mxu0 0.0
    %1745 = vmatpush2.msra.mxu0 %v1202
    %1746 = vmatprep.subr.mxu0 0.0
    %1747 = vmatpush2.msra.mxu0 %v1201
    %1748 = vmatprep.subr.mxu0 0.0
    %1749 = vmatpush2.msra.mxu0 %v1200
    %1750 = vmatprep.subr.mxu0 0.0
    %1751 = vmatpush2.msra.mxu0 %v1199
    %1752 = vmatprep.subr.mxu0 0.0
    %1753 = vmatpush2.msra.mxu0 %v1198
    %1754 = vmatprep.subr.mxu0 0.0
    %1755 = vmatpush2.msra.mxu0 %v1197
    %1756 = vmatprep.subr.mxu0 0.0
    %1757 = vmatpush2.msra.mxu0 %v1196
    %1758 = vmatprep.subr.mxu0 0.0
    %1759 = vmatpush2.msra.mxu0 %v1195
    %1760 = vmatprep.subr.mxu0 0.0
    %1761 = vmatpush2.msra.mxu0 %v1194
    %1762 = vmatprep.subr.mxu0 0.0
    %1763 = vmatpush2.msra.mxu0 %v1193
    %1764 = vmatprep.subr.mxu0 0.0
    %1765 = vmatpush2.msra.mxu0 %v1192
    %1766 = vmatprep.subr.mxu0 0.0
    %1767 = vmatpush2.msra.mxu0 %v1191
    %1768 = vmatprep.mubr.f32.mxu0 %v374
    %1769 = vmatmul.mubr.f32.gmra.mxu0 %v372
    %v1770 = vpop.f32.mrf.mxu0
    %v1771 = vadd.f32 %v1701, %v1770
    %v1772 = vpop.f32.mrf.mxu0
    %1773 = vdwg.mxu0
    %v1774 = vld [vmem:[%s5] sm:$0x3]
    %v1775 = vmul.f32 %v1771, 0.5
    %v1776 = vmul.f32 %v1775, 1.442695
    %v1777 = vpow.pop %v1776
    %v1778 = vmul.f32 %v1774, %v1777
    %v1779 = vadd.f32 %v1778, %v948
    %v1780 = vld [vmem:[%s6] sm:$0xff]
    %v1781 = vld [vmem:[%s6 + $0x8] sm:$0xff]
    %v1782 = vld [vmem:[%s6 + $0x10] sm:$0xff]
    %v1783 = vld [vmem:[%s6 + $0x18] sm:$0xff]
    %v1784 = vld [vmem:[%s6 + $0x20] sm:$0xff]
    %v1785 = vld [vmem:[%s6 + $0x28] sm:$0xff]
    %v1786 = vld [vmem:[%s6 + $0x30] sm:$0xff]
    %v1787 = vld [vmem:[%s6 + $0x38] sm:$0xff]
    %v1788 = vld [vmem:[%s6 + $0x40] sm:$0xff]
    %v1789 = vld [vmem:[%s6 + $0x48] sm:$0xff]
    %v1790 = vld [vmem:[%s6 + $0x50] sm:$0xff]
    %v1791 = vld [vmem:[%s6 + $0x58] sm:$0xff]
    %v1792 = vld [vmem:[%s6 + $0x60] sm:$0xff]
    %v1793 = vld [vmem:[%s6 + $0x68] sm:$0xff]
    %v1794 = vld [vmem:[%s6 + $0x70] sm:$0xff]
    %v1795 = vld [vmem:[%s6 + $0x78] sm:$0xff]
    %v1796 = vld [vmem:[%s6 + $0x80] sm:$0xff]
    %v1797 = vld [vmem:[%s6 + $0x88] sm:$0xff]
    %v1798 = vld [vmem:[%s6 + $0x90] sm:$0xff]
    %v1799 = vld [vmem:[%s6 + $0x98] sm:$0xff]
    %v1800 = vld [vmem:[%s6 + $0xa0] sm:$0xff]
    %v1801 = vld [vmem:[%s6 + $0xa8] sm:$0xff]
    %v1802 = vld [vmem:[%s6 + $0xb0] sm:$0xff]
    %v1803 = vld [vmem:[%s6 + $0xb8] sm:$0xff]
    %v1804 = vld [vmem:[%s6 + $0xc0] sm:$0xff]
    %v1805 = vld [vmem:[%s6 + $0xc8] sm:$0xff]
    %v1806 = vld [vmem:[%s6 + $0xd0] sm:$0xff]
    %v1807 = vld [vmem:[%s6 + $0xd8] sm:$0xff]
    %v1808 = vld [vmem:[%s6 + $0xe0] sm:$0xff]
    %v1809 = vld [vmem:[%s6 + $0xe8] sm:$0xff]
    %v1810 = vld [vmem:[%s6 + $0xf0] sm:$0xff]
    %v1811 = vld [vmem:[%s6 + $0xf8] sm:$0xff]
    %v1812 = vld [vmem:[%s7] sm:$0xff]
    %v1813 = vld [vmem:[%s7 + $0x8] sm:$0xff]
    %v1816 = vlaneseq
    %v1817 = vshrl.u32 %v1816, 7
    %v1818 = vsub.s32 0, %v1817
    %v1819 = vrot.slane %v1812, %v1818
    %v1820 = vlaneseq
    %v1821 = vshrl.u32 %v1820, 7
    %v1822 = vsub.s32 1, %v1821
    %v1823 = vrot.slane %v1812, %v1822
    %v1824 = vlaneseq
    %v1825 = vshrl.u32 %v1824, 7
    %v1826 = vsub.s32 2, %v1825
    %v1827 = vrot.slane %v1812, %v1826
    %v1828 = vlaneseq
    %v1829 = vshrl.u32 %v1828, 7
    %v1830 = vsub.s32 3, %v1829
    %v1831 = vrot.slane %v1812, %v1830
    %v1832 = vlaneseq
    %v1833 = vshrl.u32 %v1832, 7
    %v1834 = vsub.s32 4, %v1833
    %v1835 = vrot.slane %v1812, %v1834
    %v1836 = vlaneseq
    %v1837 = vshrl.u32 %v1836, 7
    %v1838 = vsub.s32 5, %v1837
    %v1839 = vrot.slane %v1812, %v1838
    %v1840 = vlaneseq
    %v1841 = vshrl.u32 %v1840, 7
    %v1842 = vsub.s32 6, %v1841
    %v1843 = vrot.slane %v1812, %v1842
    %v1844 = vlaneseq
    %v1845 = vshrl.u32 %v1844, 7
    %v1846 = vsub.s32 7, %v1845
    %v1847 = vrot.slane %v1812, %v1846
    %v1848 = vlaneseq
    %v1849 = vshrl.u32 %v1848, 7
    %v1850 = vsub.s32 0, %v1849
    %v1851 = vrot.slane %v1813, %v1850
    %v1852 = vlaneseq
    %v1853 = vshrl.u32 %v1852, 7
    %v1854 = vsub.s32 1, %v1853
    %v1855 = vrot.slane %v1813, %v1854
    %v1856 = vlaneseq
    %v1857 = vshrl.u32 %v1856, 7
    %v1858 = vsub.s32 2, %v1857
    %v1859 = vrot.slane %v1813, %v1858
    %v1860 = vlaneseq
    %v1861 = vshrl.u32 %v1860, 7
    %v1862 = vsub.s32 3, %v1861
    %v1863 = vrot.slane %v1813, %v1862
    %v1864 = vlaneseq
    %v1865 = vshrl.u32 %v1864, 7
    %v1866 = vsub.s32 4, %v1865
    %v1867 = vrot.slane %v1813, %v1866
    %v1868 = vlaneseq
    %v1869 = vshrl.u32 %v1868, 7
    %v1870 = vsub.s32 5, %v1869
    %v1871 = vrot.slane %v1813, %v1870
    %v1872 = vlaneseq
    %v1873 = vshrl.u32 %v1872, 7
    %v1874 = vsub.s32 6, %v1873
    %v1875 = vrot.slane %v1813, %v1874
    %v1876 = vlaneseq
    %v1877 = vshrl.u32 %v1876, 7
    %v1878 = vsub.s32 7, %v1877
    %v1879 = vrot.slane %v1813, %v1878
    %vm1896 = vcmask 130048
    %v1898 = vsel %vm1896, %v1779, 0
    %1900 = vmatprep.subr.mxu0 0.0
    %1901 = vmatpush1.msra.mxu0 0.0
    %1902 = vmatprep.subr.mxu0 0.0
    %1903 = vmatpush1.msra.mxu0 0.0
    %1904 = vmatprep.subr.mxu0 0.0
    %1905 = vmatpush1.msra.mxu0 0.0
    %1906 = vmatprep.subr.mxu0 0.0
    %1907 = vmatpush1.msra.mxu0 0.0
    %1908 = vmatprep.subr.mxu0 0.0
    %1909 = vmatpush1.msra.mxu0 0.0
    %1910 = vmatprep.subr.mxu0 0.0
    %1911 = vmatpush1.msra.mxu0 0.0
    %1912 = vmatprep.subr.mxu0 0.0
    %1913 = vmatpush1.msra.mxu0 0.0
    %1914 = vmatprep.subr.mxu0 0.0
    %1915 = vmatpush1.msra.mxu0 0.0
    %1916 = vmatprep.subr.mxu0 0.0
    %1917 = vmatpush1.msra.mxu0 0.0
    %1918 = vmatprep.subr.mxu0 0.0
    %1919 = vmatpush1.msra.mxu0 0.0
    %1920 = vmatprep.subr.mxu0 0.0
    %1921 = vmatpush1.msra.mxu0 0.0
    %1922 = vmatprep.subr.mxu0 0.0
    %1923 = vmatpush1.msra.mxu0 0.0
    %1924 = vmatprep.subr.mxu0 0.0
    %1925 = vmatpush1.msra.mxu0 0.0
    %1926 = vmatprep.subr.mxu0 0.0
    %1927 = vmatpush1.msra.mxu0 0.0
    %1928 = vmatprep.subr.mxu0 %v1797
    %1929 = vmatpush1.msra.mxu0 %v1796
    %1930 = vmatprep.subr.mxu0 %v1781
    %1931 = vmatpush1.msra.mxu0 %v1780
    %1932 = vmatprep.subr.mxu0 0.0
    %1933 = vmatpush2.msra.mxu0 0.0
    %1934 = vmatprep.subr.mxu0 0.0
    %1935 = vmatpush2.msra.mxu0 0.0
    %1936 = vmatprep.subr.mxu0 0.0
    %1937 = vmatpush2.msra.mxu0 0.0
    %1938 = vmatprep.subr.mxu0 0.0
    %1939 = vmatpush2.msra.mxu0 0.0
    %1940 = vmatprep.subr.mxu0 0.0
    %1941 = vmatpush2.msra.mxu0 0.0
    %1942 = vmatprep.subr.mxu0 0.0
    %1943 = vmatpush2.msra.mxu0 0.0
    %1944 = vmatprep.subr.mxu0 0.0
    %1945 = vmatpush2.msra.mxu0 0.0
    %1946 = vmatprep.subr.mxu0 0.0
    %1947 = vmatpush2.msra.mxu0 0.0
    %1948 = vmatprep.subr.mxu0 0.0
    %1949 = vmatpush2.msra.mxu0 0.0
    %1950 = vmatprep.subr.mxu0 0.0
    %1951 = vmatpush2.msra.mxu0 0.0
    %1952 = vmatprep.subr.mxu0 0.0
    %1953 = vmatpush2.msra.mxu0 0.0
    %1954 = vmatprep.subr.mxu0 0.0
    %1955 = vmatpush2.msra.mxu0 0.0
    %1956 = vmatprep.subr.mxu0 0.0
    %1957 = vmatpush2.msra.mxu0 0.0
    %1958 = vmatprep.subr.mxu0 0.0
    %1959 = vmatpush2.msra.mxu0 0.0
    %1960 = vmatprep.subr.mxu0 0.0
    %1961 = vmatpush2.msra.mxu0 0.0
    %1962 = vmatprep.subr.mxu0 0.0
    %1963 = vmatpush2.msra.mxu0 0.0
    %1964 = vmatprep.mubr.f32.mxu0 0.0
    %1965 = vmatmul.mubr.f32.gmra.mxu0 %v1898
    %v1966 = vpop.f32.mrf.mxu0
    %v1967 = vadd.f32 %v1819, %v1966
    %v1968 = vpop.f32.mrf.mxu0
    %v1969 = vadd.f32 %v1823, %v1968
    %1970 = vdwg.mxu0
    %1971 = vmatprep.subr.mxu0 0.0
    %1972 = vmatpush1.msra.mxu0 0.0
    %1973 = vmatprep.subr.mxu0 0.0
    %1974 = vmatpush1.msra.mxu0 0.0
    %1975 = vmatprep.subr.mxu0 0.0
    %1976 = vmatpush1.msra.mxu0 0.0
    %1977 = vmatprep.subr.mxu0 0.0
    %1978 = vmatpush1.msra.mxu0 0.0
    %1979 = vmatprep.subr.mxu0 0.0
    %1980 = vmatpush1.msra.mxu0 0.0
    %1981 = vmatprep.subr.mxu0 0.0
    %1982 = vmatpush1.msra.mxu0 0.0
    %1983 = vmatprep.subr.mxu0 0.0
    %1984 = vmatpush1.msra.mxu0 0.0
    %1985 = vmatprep.subr.mxu0 0.0
    %1986 = vmatpush1.msra.mxu0 0.0
    %1987 = vmatprep.subr.mxu0 0.0
    %1988 = vmatpush1.msra.mxu0 0.0
    %1989 = vmatprep.subr.mxu0 0.0
    %1990 = vmatpush1.msra.mxu0 0.0
    %1991 = vmatprep.subr.mxu0 0.0
    %1992 = vmatpush1.msra.mxu0 0.0
    %1993 = vmatprep.subr.mxu0 0.0
    %1994 = vmatpush1.msra.mxu0 0.0
    %1995 = vmatprep.subr.mxu0 0.0
    %1996 = vmatpush1.msra.mxu0 0.0
    %1997 = vmatprep.subr.mxu0 0.0
    %1998 = vmatpush1.msra.mxu0 0.0
    %1999 = vmatprep.subr.mxu0 %v1799
    %2000 = vmatpush1.msra.mxu0 %v1798
    %2001 = vmatprep.subr.mxu0 %v1783
    %2002 = vmatpush1.msra.mxu0 %v1782
    %2003 = vmatprep.subr.mxu0 0.0
    %2004 = vmatpush2.msra.mxu0 0.0
    %2005 = vmatprep.subr.mxu0 0.0
    %2006 = vmatpush2.msra.mxu0 0.0
    %2007 = vmatprep.subr.mxu0 0.0
    %2008 = vmatpush2.msra.mxu0 0.0
    %2009 = vmatprep.subr.mxu0 0.0
    %2010 = vmatpush2.msra.mxu0 0.0
    %2011 = vmatprep.subr.mxu0 0.0
    %2012 = vmatpush2.msra.mxu0 0.0
    %2013 = vmatprep.subr.mxu0 0.0
    %2014 = vmatpush2.msra.mxu0 0.0
    %2015 = vmatprep.subr.mxu0 0.0
    %2016 = vmatpush2.msra.mxu0 0.0
    %2017 = vmatprep.subr.mxu0 0.0
    %2018 = vmatpush2.msra.mxu0 0.0
    %2019 = vmatprep.subr.mxu0 0.0
    %2020 = vmatpush2.msra.mxu0 0.0
    %2021 = vmatprep.subr.mxu0 0.0
    %2022 = vmatpush2.msra.mxu0 0.0
    %2023 = vmatprep.subr.mxu0 0.0
    %2024 = vmatpush2.msra.mxu0 0.0
    %2025 = vmatprep.subr.mxu0 0.0
    %2026 = vmatpush2.msra.mxu0 0.0
    %2027 = vmatprep.subr.mxu0 0.0
    %2028 = vmatpush2.msra.mxu0 0.0
    %2029 = vmatprep.subr.mxu0 0.0
    %2030 = vmatpush2.msra.mxu0 0.0
    %2031 = vmatprep.subr.mxu0 0.0
    %2032 = vmatpush2.msra.mxu0 0.0
    %2033 = vmatprep.subr.mxu0 0.0
    %2034 = vmatpush2.msra.mxu0 0.0
    %2035 = vmatprep.mubr.f32.mxu0 0.0
    %2036 = vmatmul.mubr.f32.gmra.mxu0 %v1898
    %v2037 = vpop.f32.mrf.mxu0
    %v2038 = vadd.f32 %v1827, %v2037
    %v2039 = vpop.f32.mrf.mxu0
    %v2040 = vadd.f32 %v1831, %v2039
    %2041 = vdwg.mxu0
    %2042 = vmatprep.subr.mxu0 0.0
    %2043 = vmatpush1.msra.mxu0 0.0
    %2044 = vmatprep.subr.mxu0 0.0
    %2045 = vmatpush1.msra.mxu0 0.0
    %2046 = vmatprep.subr.mxu0 0.0
    %2047 = vmatpush1.msra.mxu0 0.0
    %2048 = vmatprep.subr.mxu0 0.0
    %2049 = vmatpush1.msra.mxu0 0.0
    %2050 = vmatprep.subr.mxu0 0.0
    %2051 = vmatpush1.msra.mxu0 0.0
    %2052 = vmatprep.subr.mxu0 0.0
    %2053 = vmatpush1.msra.mxu0 0.0
    %2054 = vmatprep.subr.mxu0 0.0
    %2055 = vmatpush1.msra.mxu0 0.0
    %2056 = vmatprep.subr.mxu0 0.0
    %2057 = vmatpush1.msra.mxu0 0.0
    %2058 = vmatprep.subr.mxu0 0.0
    %2059 = vmatpush1.msra.mxu0 0.0
    %2060 = vmatprep.subr.mxu0 0.0
    %2061 = vmatpush1.msra.mxu0 0.0
    %2062 = vmatprep.subr.mxu0 0.0
    %2063 = vmatpush1.msra.mxu0 0.0
    %2064 = vmatprep.subr.mxu0 0.0
    %2065 = vmatpush1.msra.mxu0 0.0
    %2066 = vmatprep.subr.mxu0 0.0
    %2067 = vmatpush1.msra.mxu0 0.0
    %2068 = vmatprep.subr.mxu0 0.0
    %2069 = vmatpush1.msra.mxu0 0.0
    %2070 = vmatprep.subr.mxu0 %v1801
    %2071 = vmatpush1.msra.mxu0 %v1800
    %2072 = vmatprep.subr.mxu0 %v1785
    %2073 = vmatpush1.msra.mxu0 %v1784
    %2074 = vmatprep.subr.mxu0 0.0
    %2075 = vmatpush2.msra.mxu0 0.0
    %2076 = vmatprep.subr.mxu0 0.0
    %2077 = vmatpush2.msra.mxu0 0.0
    %2078 = vmatprep.subr.mxu0 0.0
    %2079 = vmatpush2.msra.mxu0 0.0
    %2080 = vmatprep.subr.mxu0 0.0
    %2081 = vmatpush2.msra.mxu0 0.0
    %2082 = vmatprep.subr.mxu0 0.0
    %2083 = vmatpush2.msra.mxu0 0.0
    %2084 = vmatprep.subr.mxu0 0.0
    %2085 = vmatpush2.msra.mxu0 0.0
    %2086 = vmatprep.subr.mxu0 0.0
    %2087 = vmatpush2.msra.mxu0 0.0
    %2088 = vmatprep.subr.mxu0 0.0
    %2089 = vmatpush2.msra.mxu0 0.0
    %2090 = vmatprep.subr.mxu0 0.0
    %2091 = vmatpush2.msra.mxu0 0.0
    %2092 = vmatprep.subr.mxu0 0.0
    %2093 = vmatpush2.msra.mxu0 0.0
    %2094 = vmatprep.subr.mxu0 0.0
    %2095 = vmatpush2.msra.mxu0 0.0
    %2096 = vmatprep.subr.mxu0 0.0
    %2097 = vmatpush2.msra.mxu0 0.0
    %2098 = vmatprep.subr.mxu0 0.0
    %2099 = vmatpush2.msra.mxu0 0.0
    %2100 = vmatprep.subr.mxu0 0.0
    %2101 = vmatpush2.msra.mxu0 0.0
    %2102 = vmatprep.subr.mxu0 0.0
    %2103 = vmatpush2.msra.mxu0 0.0
    %2104 = vmatprep.subr.mxu0 0.0
    %2105 = vmatpush2.msra.mxu0 0.0
    %2106 = vmatprep.mubr.f32.mxu0 0.0
    %2107 = vmatmul.mubr.f32.gmra.mxu0 %v1898
    %v2108 = vpop.f32.mrf.mxu0
    %v2109 = vadd.f32 %v1835, %v2108
    %v2110 = vpop.f32.mrf.mxu0
    %v2111 = vadd.f32 %v1839, %v2110
    %2112 = vdwg.mxu0
    %2113 = vmatprep.subr.mxu0 0.0
    %2114 = vmatpush1.msra.mxu0 0.0
    %2115 = vmatprep.subr.mxu0 0.0
    %2116 = vmatpush1.msra.mxu0 0.0
    %2117 = vmatprep.subr.mxu0 0.0
    %2118 = vmatpush1.msra.mxu0 0.0
    %2119 = vmatprep.subr.mxu0 0.0
    %2120 = vmatpush1.msra.mxu0 0.0
    %2121 = vmatprep.subr.mxu0 0.0
    %2122 = vmatpush1.msra.mxu0 0.0
    %2123 = vmatprep.subr.mxu0 0.0
    %2124 = vmatpush1.msra.mxu0 0.0
    %2125 = vmatprep.subr.mxu0 0.0
    %2126 = vmatpush1.msra.mxu0 0.0
    %2127 = vmatprep.subr.mxu0 0.0
    %2128 = vmatpush1.msra.mxu0 0.0
    %2129 = vmatprep.subr.mxu0 0.0
    %2130 = vmatpush1.msra.mxu0 0.0
    %2131 = vmatprep.subr.mxu0 0.0
    %2132 = vmatpush1.msra.mxu0 0.0
    %2133 = vmatprep.subr.mxu0 0.0
    %2134 = vmatpush1.msra.mxu0 0.0
    %2135 = vmatprep.subr.mxu0 0.0
    %2136 = vmatpush1.msra.mxu0 0.0
    %2137 = vmatprep.subr.mxu0 0.0
    %2138 = vmatpush1.msra.mxu0 0.0
    %2139 = vmatprep.subr.mxu0 0.0
    %2140 = vmatpush1.msra.mxu0 0.0
    %2141 = vmatprep.subr.mxu0 %v1803
    %2142 = vmatpush1.msra.mxu0 %v1802
    %2143 = vmatprep.subr.mxu0 %v1787
    %2144 = vmatpush1.msra.mxu0 %v1786
    %2145 = vmatprep.subr.mxu0 0.0
    %2146 = vmatpush2.msra.mxu0 0.0
    %2147 = vmatprep.subr.mxu0 0.0
    %2148 = vmatpush2.msra.mxu0 0.0
    %2149 = vmatprep.subr.mxu0 0.0
    %2150 = vmatpush2.msra.mxu0 0.0
    %2151 = vmatprep.subr.mxu0 0.0
    %2152 = vmatpush2.msra.mxu0 0.0
    %2153 = vmatprep.subr.mxu0 0.0
    %2154 = vmatpush2.msra.mxu0 0.0
    %2155 = vmatprep.subr.mxu0 0.0
    %2156 = vmatpush2.msra.mxu0 0.0
    %2157 = vmatprep.subr.mxu0 0.0
    %2158 = vmatpush2.msra.mxu0 0.0
    %2159 = vmatprep.subr.mxu0 0.0
    %2160 = vmatpush2.msra.mxu0 0.0
    %2161 = vmatprep.subr.mxu0 0.0
    %2162 = vmatpush2.msra.mxu0 0.0
    %2163 = vmatprep.subr.mxu0 0.0
    %2164 = vmatpush2.msra.mxu0 0.0
    %2165 = vmatprep.subr.mxu0 0.0
    %2166 = vmatpush2.msra.mxu0 0.0
    %2167 = vmatprep.subr.mxu0 0.0
    %2168 = vmatpush2.msra.mxu0 0.0
    %2169 = vmatprep.subr.mxu0 0.0
    %2170 = vmatpush2.msra.mxu0 0.0
    %2171 = vmatprep.subr.mxu0 0.0
    %2172 = vmatpush2.msra.mxu0 0.0
    %2173 = vmatprep.subr.mxu0 0.0
    %2174 = vmatpush2.msra.mxu0 0.0
    %2175 = vmatprep.subr.mxu0 0.0
    %2176 = vmatpush2.msra.mxu0 0.0
    %2177 = vmatprep.mubr.f32.mxu0 0.0
    %2178 = vmatmul.mubr.f32.gmra.mxu0 %v1898
    %v2179 = vpop.f32.mrf.mxu0
    %v2180 = vadd.f32 %v1843, %v2179
    %v2181 = vpop.f32.mrf.mxu0
    %v2182 = vadd.f32 %v1847, %v2181
    %2183 = vdwg.mxu0
    %2184 = vmatprep.subr.mxu0 0.0
    %2185 = vmatpush1.msra.mxu0 0.0
    %2186 = vmatprep.subr.mxu0 0.0
    %2187 = vmatpush1.msra.mxu0 0.0
    %2188 = vmatprep.subr.mxu0 0.0
    %2189 = vmatpush1.msra.mxu0 0.0
    %2190 = vmatprep.subr.mxu0 0.0
    %2191 = vmatpush1.msra.mxu0 0.0
    %2192 = vmatprep.subr.mxu0 0.0
    %2193 = vmatpush1.msra.mxu0 0.0
    %2194 = vmatprep.subr.mxu0 0.0
    %2195 = vmatpush1.msra.mxu0 0.0
    %2196 = vmatprep.subr.mxu0 0.0
    %2197 = vmatpush1.msra.mxu0 0.0
    %2198 = vmatprep.subr.mxu0 0.0
    %2199 = vmatpush1.msra.mxu0 0.0
    %2200 = vmatprep.subr.mxu0 0.0
    %2201 = vmatpush1.msra.mxu0 0.0
    %2202 = vmatprep.subr.mxu0 0.0
    %2203 = vmatpush1.msra.mxu0 0.0
    %2204 = vmatprep.subr.mxu0 0.0
    %2205 = vmatpush1.msra.mxu0 0.0
    %2206 = vmatprep.subr.mxu0 0.0
    %2207 = vmatpush1.msra.mxu0 0.0
    %2208 = vmatprep.subr.mxu0 0.0
    %2209 = vmatpush1.msra.mxu0 0.0
    %2210 = vmatprep.subr.mxu0 0.0
    %2211 = vmatpush1.msra.mxu0 0.0
    %2212 = vmatprep.subr.mxu0 %v1805
    %2213 = vmatpush1.msra.mxu0 %v1804
    %2214 = vmatprep.subr.mxu0 %v1789
    %2215 = vmatpush1.msra.mxu0 %v1788
    %2216 = vmatprep.subr.mxu0 0.0
    %2217 = vmatpush2.msra.mxu0 0.0
    %2218 = vmatprep.subr.mxu0 0.0
    %2219 = vmatpush2.msra.mxu0 0.0
    %2220 = vmatprep.subr.mxu0 0.0
    %2221 = vmatpush2.msra.mxu0 0.0
    %2222 = vmatprep.subr.mxu0 0.0
    %2223 = vmatpush2.msra.mxu0 0.0
    %2224 = vmatprep.subr.mxu0 0.0
    %2225 = vmatpush2.msra.mxu0 0.0
    %2226 = vmatprep.subr.mxu0 0.0
    %2227 = vmatpush2.msra.mxu0 0.0
    %2228 = vmatprep.subr.mxu0 0.0
    %2229 = vmatpush2.msra.mxu0 0.0
    %2230 = vmatprep.subr.mxu0 0.0
    %2231 = vmatpush2.msra.mxu0 0.0
    %2232 = vmatprep.subr.mxu0 0.0
    %2233 = vmatpush2.msra.mxu0 0.0
    %2234 = vmatprep.subr.mxu0 0.0
    %2235 = vmatpush2.msra.mxu0 0.0
    %2236 = vmatprep.subr.mxu0 0.0
    %2237 = vmatpush2.msra.mxu0 0.0
    %2238 = vmatprep.subr.mxu0 0.0
    %2239 = vmatpush2.msra.mxu0 0.0
    %2240 = vmatprep.subr.mxu0 0.0
    %2241 = vmatpush2.msra.mxu0 0.0
    %2242 = vmatprep.subr.mxu0 0.0
    %2243 = vmatpush2.msra.mxu0 0.0
    %2244 = vmatprep.subr.mxu0 0.0
    %2245 = vmatpush2.msra.mxu0 0.0
    %2246 = vmatprep.subr.mxu0 0.0
    %2247 = vmatpush2.msra.mxu0 0.0
    %2248 = vmatprep.mubr.f32.mxu0 0.0
    %2249 = vmatmul.mubr.f32.gmra.mxu0 %v1898
    %v2250 = vpop.f32.mrf.mxu0
    %v2251 = vadd.f32 %v1851, %v2250
    %v2252 = vpop.f32.mrf.mxu0
    %v2253 = vadd.f32 %v1855, %v2252
    %2254 = vdwg.mxu0
    %2255 = vmatprep.subr.mxu0 0.0
    %2256 = vmatpush1.msra.mxu0 0.0
    %2257 = vmatprep.subr.mxu0 0.0
    %2258 = vmatpush1.msra.mxu0 0.0
    %2259 = vmatprep.subr.mxu0 0.0
    %2260 = vmatpush1.msra.mxu0 0.0
    %2261 = vmatprep.subr.mxu0 0.0
    %2262 = vmatpush1.msra.mxu0 0.0
    %2263 = vmatprep.subr.mxu0 0.0
    %2264 = vmatpush1.msra.mxu0 0.0
    %2265 = vmatprep.subr.mxu0 0.0
    %2266 = vmatpush1.msra.mxu0 0.0
    %2267 = vmatprep.subr.mxu0 0.0
    %2268 = vmatpush1.msra.mxu0 0.0
    %2269 = vmatprep.subr.mxu0 0.0
    %2270 = vmatpush1.msra.mxu0 0.0
    %2271 = vmatprep.subr.mxu0 0.0
    %2272 = vmatpush1.msra.mxu0 0.0
    %2273 = vmatprep.subr.mxu0 0.0
    %2274 = vmatpush1.msra.mxu0 0.0
    %2275 = vmatprep.subr.mxu0 0.0
    %2276 = vmatpush1.msra.mxu0 0.0
    %2277 = vmatprep.subr.mxu0 0.0
    %2278 = vmatpush1.msra.mxu0 0.0
    %2279 = vmatprep.subr.mxu0 0.0
    %2280 = vmatpush1.msra.mxu0 0.0
    %2281 = vmatprep.subr.mxu0 0.0
    %2282 = vmatpush1.msra.mxu0 0.0
    %2283 = vmatprep.subr.mxu0 %v1807
    %2284 = vmatpush1.msra.mxu0 %v1806
    %2285 = vmatprep.subr.mxu0 %v1791
    %2286 = vmatpush1.msra.mxu0 %v1790
    %2287 = vmatprep.subr.mxu0 0.0
    %2288 = vmatpush2.msra.mxu0 0.0
    %2289 = vmatprep.subr.mxu0 0.0
    %2290 = vmatpush2.msra.mxu0 0.0
    %2291 = vmatprep.subr.mxu0 0.0
    %2292 = vmatpush2.msra.mxu0 0.0
    %2293 = vmatprep.subr.mxu0 0.0
    %2294 = vmatpush2.msra.mxu0 0.0
    %2295 = vmatprep.subr.mxu0 0.0
    %2296 = vmatpush2.msra.mxu0 0.0
    %2297 = vmatprep.subr.mxu0 0.0
    %2298 = vmatpush2.msra.mxu0 0.0
    %2299 = vmatprep.subr.mxu0 0.0
    %2300 = vmatpush2.msra.mxu0 0.0
    %2301 = vmatprep.subr.mxu0 0.0
    %2302 = vmatpush2.msra.mxu0 0.0
    %2303 = vmatprep.subr.mxu0 0.0
    %2304 = vmatpush2.msra.mxu0 0.0
    %2305 = vmatprep.subr.mxu0 0.0
    %2306 = vmatpush2.msra.mxu0 0.0
    %2307 = vmatprep.subr.mxu0 0.0
    %2308 = vmatpush2.msra.mxu0 0.0
    %2309 = vmatprep.subr.mxu0 0.0
    %2310 = vmatpush2.msra.mxu0 0.0
    %2311 = vmatprep.subr.mxu0 0.0
    %2312 = vmatpush2.msra.mxu0 0.0
    %2313 = vmatprep.subr.mxu0 0.0
    %2314 = vmatpush2.msra.mxu0 0.0
    %2315 = vmatprep.subr.mxu0 0.0
    %2316 = vmatpush2.msra.mxu0 0.0
    %2317 = vmatprep.subr.mxu0 0.0
    %2318 = vmatpush2.msra.mxu0 0.0
    %2319 = vmatprep.mubr.f32.mxu0 0.0
    %2320 = vmatmul.mubr.f32.gmra.mxu0 %v1898
    %v2321 = vpop.f32.mrf.mxu0
    %v2322 = vadd.f32 %v1859, %v2321
    %v2323 = vpop.f32.mrf.mxu0
    %v2324 = vadd.f32 %v1863, %v2323
    %2325 = vdwg.mxu0
    %2326 = vmatprep.subr.mxu0 0.0
    %2327 = vmatpush1.msra.mxu0 0.0
    %2328 = vmatprep.subr.mxu0 0.0
    %2329 = vmatpush1.msra.mxu0 0.0
    %2330 = vmatprep.subr.mxu0 0.0
    %2331 = vmatpush1.msra.mxu0 0.0
    %2332 = vmatprep.subr.mxu0 0.0
    %2333 = vmatpush1.msra.mxu0 0.0
    %2334 = vmatprep.subr.mxu0 0.0
    %2335 = vmatpush1.msra.mxu0 0.0
    %2336 = vmatprep.subr.mxu0 0.0
    %2337 = vmatpush1.msra.mxu0 0.0
    %2338 = vmatprep.subr.mxu0 0.0
    %2339 = vmatpush1.msra.mxu0 0.0
    %2340 = vmatprep.subr.mxu0 0.0
    %2341 = vmatpush1.msra.mxu0 0.0
    %2342 = vmatprep.subr.mxu0 0.0
    %2343 = vmatpush1.msra.mxu0 0.0
    %2344 = vmatprep.subr.mxu0 0.0
    %2345 = vmatpush1.msra.mxu0 0.0
    %2346 = vmatprep.subr.mxu0 0.0
    %2347 = vmatpush1.msra.mxu0 0.0
    %2348 = vmatprep.subr.mxu0 0.0
    %2349 = vmatpush1.msra.mxu0 0.0
    %2350 = vmatprep.subr.mxu0 0.0
    %2351 = vmatpush1.msra.mxu0 0.0
    %2352 = vmatprep.subr.mxu0 0.0
    %2353 = vmatpush1.msra.mxu0 0.0
    %2354 = vmatprep.subr.mxu0 %v1809
    %2355 = vmatpush1.msra.mxu0 %v1808
    %2356 = vmatprep.subr.mxu0 %v1793
    %2357 = vmatpush1.msra.mxu0 %v1792
    %2358 = vmatprep.subr.mxu0 0.0
    %2359 = vmatpush2.msra.mxu0 0.0
    %2360 = vmatprep.subr.mxu0 0.0
    %2361 = vmatpush2.msra.mxu0 0.0
    %2362 = vmatprep.subr.mxu0 0.0
    %2363 = vmatpush2.msra.mxu0 0.0
    %2364 = vmatprep.subr.mxu0 0.0
    %2365 = vmatpush2.msra.mxu0 0.0
    %2366 = vmatprep.subr.mxu0 0.0
    %2367 = vmatpush2.msra.mxu0 0.0
    %2368 = vmatprep.subr.mxu0 0.0
    %2369 = vmatpush2.msra.mxu0 0.0
    %2370 = vmatprep.subr.mxu0 0.0
    %2371 = vmatpush2.msra.mxu0 0.0
    %2372 = vmatprep.subr.mxu0 0.0
    %2373 = vmatpush2.msra.mxu0 0.0
    %2374 = vmatprep.subr.mxu0 0.0
    %2375 = vmatpush2.msra.mxu0 0.0
    %2376 = vmatprep.subr.mxu0 0.0
    %2377 = vmatpush2.msra.mxu0 0.0
    %2378 = vmatprep.subr.mxu0 0.0
    %2379 = vmatpush2.msra.mxu0 0.0
    %2380 = vmatprep.subr.mxu0 0.0
    %2381 = vmatpush2.msra.mxu0 0.0
    %2382 = vmatprep.subr.mxu0 0.0
    %2383 = vmatpush2.msra.mxu0 0.0
    %2384 = vmatprep.subr.mxu0 0.0
    %2385 = vmatpush2.msra.mxu0 0.0
    %2386 = vmatprep.subr.mxu0 0.0
    %2387 = vmatpush2.msra.mxu0 0.0
    %2388 = vmatprep.subr.mxu0 0.0
    %2389 = vmatpush2.msra.mxu0 0.0
    %2390 = vmatprep.mubr.f32.mxu0 0.0
    %2391 = vmatmul.mubr.f32.gmra.mxu0 %v1898
    %v2392 = vpop.f32.mrf.mxu0
    %v2393 = vadd.f32 %v1867, %v2392
    %v2394 = vpop.f32.mrf.mxu0
    %v2395 = vadd.f32 %v1871, %v2394
    %2396 = vdwg.mxu0
    %2397 = vmatprep.subr.mxu0 0.0
    %2398 = vmatpush1.msra.mxu0 0.0
    %2399 = vmatprep.subr.mxu0 0.0
    %2400 = vmatpush1.msra.mxu0 0.0
    %2401 = vmatprep.subr.mxu0 0.0
    %2402 = vmatpush1.msra.mxu0 0.0
    %2403 = vmatprep.subr.mxu0 0.0
    %2404 = vmatpush1.msra.mxu0 0.0
    %2405 = vmatprep.subr.mxu0 0.0
    %2406 = vmatpush1.msra.mxu0 0.0
    %2407 = vmatprep.subr.mxu0 0.0
    %2408 = vmatpush1.msra.mxu0 0.0
    %2409 = vmatprep.subr.mxu0 0.0
    %2410 = vmatpush1.msra.mxu0 0.0
    %2411 = vmatprep.subr.mxu0 0.0
    %2412 = vmatpush1.msra.mxu0 0.0
    %2413 = vmatprep.subr.mxu0 0.0
    %2414 = vmatpush1.msra.mxu0 0.0
    %2415 = vmatprep.subr.mxu0 0.0
    %2416 = vmatpush1.msra.mxu0 0.0
    %2417 = vmatprep.subr.mxu0 0.0
    %2418 = vmatpush1.msra.mxu0 0.0
    %2419 = vmatprep.subr.mxu0 0.0
    %2420 = vmatpush1.msra.mxu0 0.0
    %2421 = vmatprep.subr.mxu0 0.0
    %2422 = vmatpush1.msra.mxu0 0.0
    %2423 = vmatprep.subr.mxu0 0.0
    %2424 = vmatpush1.msra.mxu0 0.0
    %2425 = vmatprep.subr.mxu0 %v1811
    %2426 = vmatpush1.msra.mxu0 %v1810
    %2427 = vmatprep.subr.mxu0 %v1795
    %2428 = vmatpush1.msra.mxu0 %v1794
    %2429 = vmatprep.subr.mxu0 0.0
    %2430 = vmatpush2.msra.mxu0 0.0
    %2431 = vmatprep.subr.mxu0 0.0
    %2432 = vmatpush2.msra.mxu0 0.0
    %2433 = vmatprep.subr.mxu0 0.0
    %2434 = vmatpush2.msra.mxu0 0.0
    %2435 = vmatprep.subr.mxu0 0.0
    %2436 = vmatpush2.msra.mxu0 0.0
    %2437 = vmatprep.subr.mxu0 0.0
    %2438 = vmatpush2.msra.mxu0 0.0
    %2439 = vmatprep.subr.mxu0 0.0
    %2440 = vmatpush2.msra.mxu0 0.0
    %2441 = vmatprep.subr.mxu0 0.0
    %2442 = vmatpush2.msra.mxu0 0.0
    %2443 = vmatprep.subr.mxu0 0.0
    %2444 = vmatpush2.msra.mxu0 0.0
    %2445 = vmatprep.subr.mxu0 0.0
    %2446 = vmatpush2.msra.mxu0 0.0
    %2447 = vmatprep.subr.mxu0 0.0
    %2448 = vmatpush2.msra.mxu0 0.0
    %2449 = vmatprep.subr.mxu0 0.0
    %2450 = vmatpush2.msra.mxu0 0.0
    %2451 = vmatprep.subr.mxu0 0.0
    %2452 = vmatpush2.msra.mxu0 0.0
    %2453 = vmatprep.subr.mxu0 0.0
    %2454 = vmatpush2.msra.mxu0 0.0
    %2455 = vmatprep.subr.mxu0 0.0
    %2456 = vmatpush2.msra.mxu0 0.0
    %2457 = vmatprep.subr.mxu0 0.0
    %2458 = vmatpush2.msra.mxu0 0.0
    %2459 = vmatprep.subr.mxu0 0.0
    %2460 = vmatpush2.msra.mxu0 0.0
    %2461 = vmatprep.mubr.f32.mxu0 0.0
    %2462 = vmatmul.mubr.f32.gmra.mxu0 %v1898
    %v2463 = vpop.f32.mrf.mxu0
    %v2464 = vadd.f32 %v1875, %v2463
    %v2465 = vpop.f32.mrf.mxu0
    %v2466 = vadd.f32 %v1879, %v2465
    %2467 = vdwg.mxu0
    %vm2468 = vcmp.ge.f32.partialorder %v1967, 0.0
    %vm2469 = vcmp.ge.f32.partialorder %v1969, 0.0
    %vm2470 = vcmp.ge.f32.partialorder %v2038, 0.0
    %vm2471 = vcmp.ge.f32.partialorder %v2040, 0.0
    %vm2472 = vcmp.ge.f32.partialorder %v2109, 0.0
    %vm2473 = vcmp.ge.f32.partialorder %v2111, 0.0
    %vm2474 = vcmp.ge.f32.partialorder %v2180, 0.0
    %vm2475 = vcmp.ge.f32.partialorder %v2182, 0.0
    %vm2476 = vcmp.ge.f32.partialorder %v2251, 0.0
    %vm2477 = vcmp.ge.f32.partialorder %v2253, 0.0
    %vm2478 = vcmp.ge.f32.partialorder %v2322, 0.0
    %vm2479 = vcmp.ge.f32.partialorder %v2324, 0.0
    %vm2480 = vcmp.ge.f32.partialorder %v2393, 0.0
    %vm2481 = vcmp.ge.f32.partialorder %v2395, 0.0
    %vm2482 = vcmp.ge.f32.partialorder %v2464, 0.0
    %vm2483 = vcmp.ge.f32.partialorder %v2466, 0.0
    %v2484 = vmul.f32 %v1967, 0.01
    %v2485 = vmul.f32 %v1969, 0.01
    %v2486 = vmul.f32 %v2038, 0.01
    %v2487 = vmul.f32 %v2040, 0.01
    %v2488 = vmul.f32 %v2109, 0.01
    %v2489 = vmul.f32 %v2111, 0.01
    %v2490 = vmul.f32 %v2180, 0.01
    %v2491 = vmul.f32 %v2182, 0.01
    %v2492 = vmul.f32 %v2251, 0.01
    %v2493 = vmul.f32 %v2253, 0.01
    %v2494 = vmul.f32 %v2322, 0.01
    %v2495 = vmul.f32 %v2324, 0.01
    %v2496 = vmul.f32 %v2393, 0.01
    %v2497 = vmul.f32 %v2395, 0.01
    %v2498 = vmul.f32 %v2464, 0.01
    %v2499 = vmul.f32 %v2466, 0.01
    %v2500 = vsel %vm2468, %v1967, %v2484
    %v2501 = vsel %vm2469, %v1969, %v2485
    %v2502 = vsel %vm2470, %v2038, %v2486
    %v2503 = vsel %vm2471, %v2040, %v2487
    %v2504 = vsel %vm2472, %v2109, %v2488
    %v2505 = vsel %vm2473, %v2111, %v2489
    %v2506 = vsel %vm2474, %v2180, %v2490
    %v2507 = vsel %vm2475, %v2182, %v2491
    %v2508 = vsel %vm2476, %v2251, %v2492
    %v2509 = vsel %vm2477, %v2253, %v2493
    %v2510 = vsel %vm2478, %v2322, %v2494
    %v2511 = vsel %vm2479, %v2324, %v2495
    %v2512 = vsel %vm2480, %v2393, %v2496
    %v2513 = vsel %vm2481, %v2395, %v2497
    %v2514 = vsel %vm2482, %v2464, %v2498
    %v2515 = vsel %vm2483, %v2466, %v2499
    %vm2516 = vcmask 123904
    %2517 = vst.msk [vmem:[#allocation2] sm:$0x3] %vm2516, %v948
    %2518 = vst.msk [vmem:[#allocation4] sm:$0x3] %vm2516, %v1771
    %v2519 = vpack.c.bf16 %v2500, %v2500
    %v2520 = vpack.c.bf16 %v2501, %v2501
    %v2521 = vpack.c.bf16 %v2502, %v2502
    %v2522 = vpack.c.bf16 %v2503, %v2503
    %v2523 = vpack.c.bf16 %v2504, %v2504
    %v2524 = vpack.c.bf16 %v2505, %v2505
    %v2525 = vpack.c.bf16 %v2506, %v2506
    %v2526 = vpack.c.bf16 %v2507, %v2507
    %v2527 = vpack.c.bf16 %v2508, %v2508
    %v2528 = vpack.c.bf16 %v2509, %v2509
    %v2529 = vpack.c.bf16 %v2510, %v2510
    %v2530 = vpack.c.bf16 %v2511, %v2511
    %v2531 = vpack.c.bf16 %v2512, %v2512
    %v2532 = vpack.c.bf16 %v2513, %v2513
    %v2533 = vpack.c.bf16 %v2514, %v2514
    %v2534 = vpack.c.bf16 %v2515, %v2515
    %v2551 = vcombine.low %v2519, %v2520
    %v2552 = vcombine.low %v2521, %v2522
    %v2553 = vcombine.low %v2523, %v2524
    %v2554 = vcombine.low %v2525, %v2526
    %v2556 = vunpack.c.l.s4 1966171168
    %v2557 = vunpack.c.0.s8 %v2556
    %v2558 = vlaneseq
    %v2559 = vshrl.u32 %v2558, 7
    %v2560 = vsub.s32 %v2557, %v2559
    %v2561 = vrot.slane %v2551, %v2560
    %v2563 = vunpack.c.l.s4 1966171168
    %v2564 = vunpack.c.0.s8 %v2563
    %v2565 = vlaneseq
    %v2566 = vshrl.u32 %v2565, 7
    %v2567 = vsub.s32 %v2564, %v2566
    %v2568 = vrot.slane %v2552, %v2567
    %v2570 = vunpack.c.l.s4 1966171168
    %v2571 = vunpack.c.0.s8 %v2570
    %v2572 = vlaneseq
    %v2573 = vshrl.u32 %v2572, 7
    %v2574 = vsub.s32 %v2571, %v2573
    %v2575 = vrot.slane %v2553, %v2574
    %v2577 = vunpack.c.l.s4 1966171168
    %v2578 = vunpack.c.0.s8 %v2577
    %v2579 = vlaneseq
    %v2580 = vshrl.u32 %v2579, 7
    %v2581 = vsub.s32 %v2578, %v2580
    %v2582 = vrot.slane %v2554, %v2581
    %v2583 = vcombine.low %v2561, %v2568
    %v2584 = vcombine.low %v2575, %v2582
    %v2586 = vunpack.c.l.s4 1966171168
    %v2587 = vunpack.c.0.s8 %v2586
    %v2588 = vlaneseq
    %v2589 = vshrl.u32 %v2588, 7
    %v2590 = vsub.s32 %v2587, %v2589
    %v2591 = vrot.slane %v2583, %v2590
    %v2593 = vunpack.c.l.s4 1966171168
    %v2594 = vunpack.c.0.s8 %v2593
    %v2595 = vlaneseq
    %v2596 = vshrl.u32 %v2595, 7
    %v2597 = vsub.s32 %v2594, %v2596
    %v2598 = vrot.slane %v2584, %v2597
    %v2599 = vcombine.low %v2591, %v2598
    %v2600 = vcombine.low %v2527, %v2528
    %v2601 = vcombine.low %v2529, %v2530
    %v2602 = vcombine.low %v2531, %v2532
    %v2603 = vcombine.low %v2533, %v2534
    %v2605 = vunpack.c.l.s4 1966171168
    %v2606 = vunpack.c.0.s8 %v2605
    %v2607 = vlaneseq
    %v2608 = vshrl.u32 %v2607, 7
    %v2609 = vsub.s32 %v2606, %v2608
    %v2610 = vrot.slane %v2600, %v2609
    %v2612 = vunpack.c.l.s4 1966171168
    %v2613 = vunpack.c.0.s8 %v2612
    %v2614 = vlaneseq
    %v2615 = vshrl.u32 %v2614, 7
    %v2616 = vsub.s32 %v2613, %v2615
    %v2617 = vrot.slane %v2601, %v2616
    %v2619 = vunpack.c.l.s4 1966171168
    %v2620 = vunpack.c.0.s8 %v2619
    %v2621 = vlaneseq
    %v2622 = vshrl.u32 %v2621, 7
    %v2623 = vsub.s32 %v2620, %v2622
    %v2624 = vrot.slane %v2602, %v2623
    %v2626 = vunpack.c.l.s4 1966171168
    %v2627 = vunpack.c.0.s8 %v2626
    %v2628 = vlaneseq
    %v2629 = vshrl.u32 %v2628, 7
    %v2630 = vsub.s32 %v2627, %v2629
    %v2631 = vrot.slane %v2603, %v2630
    %v2632 = vcombine.low %v2610, %v2617
    %v2633 = vcombine.low %v2624, %v2631
    %v2635 = vunpack.c.l.s4 1966171168
    %v2636 = vunpack.c.0.s8 %v2635
    %v2637 = vlaneseq
    %v2638 = vshrl.u32 %v2637, 7
    %v2639 = vsub.s32 %v2636, %v2638
    %v2640 = vrot.slane %v2632, %v2639
    %v2642 = vunpack.c.l.s4 1966171168
    %v2643 = vunpack.c.0.s8 %v2642
    %v2644 = vlaneseq
    %v2645 = vshrl.u32 %v2644, 7
    %v2646 = vsub.s32 %v2643, %v2645
    %v2647 = vrot.slane %v2633, %v2646
    %v2648 = vcombine.low %v2640, %v2647
    %2651 = vst [vmem:[%s10] sm:$0xff] %v2599
    %2652 = vst [vmem:[%s10 + $0x8] sm:$0xff] %v2648
    // Predicated region
    $region34: #{model_forward.13} parent=1 // pred_check
      _
    $region35: #{model_forward.13} parent=1 // pred_check_branch
      %2654 = sbr.rel (0) target = $region37
    $region36: #{model_forward.13} parent=1 // pred_region
      %s2656 = ssub.s32 32, 32
      %2657 = vsyncadd [#allocation3], %s2656
      %s2659 = sshll.u32 [#allocation2], 4
      %s2660 = int_to_ptr.vmem [resolvable:$true] %s2659
      %2662 = dma.vmem_to_hbm [thread:$0]  %s2660, 32, %s8, [#allocation3]
    $region37: #{model_forward.13} parent=1 // pred_fallthru
      _
    // Predicated region
    $region38: #{model_forward.13} parent=1 // pred_check
      _
    $region39: #{model_forward.13} parent=1 // pred_check_branch
      %2664 = sbr.rel (0) target = $region41
    $region40: #{model_forward.13} parent=1 // pred_region
      %s2666 = ssub.s32 32, 32
      %2667 = vsyncadd [#allocation5], %s2666
      %s2669 = sshll.u32 [#allocation4], 4
      %s2670 = int_to_ptr.vmem [resolvable:$true] %s2669
      %2672 = dma.vmem_to_hbm [thread:$0]  %s2670, 32, %s9, [#allocation5]
    $region41: #{model_forward.13} parent=1 // pred_fallthru
      _
    // Predicated region
    $region42: #{model_forward.13} parent=1 // pred_check
      _
    $region43: #{model_forward.13} parent=1 // pred_check_branch
      %2674 = sbr.rel (0) target = $region45
    $region44: #{model_forward.13} parent=1 // pred_region
      _
    $region45: #{model_forward.13} parent=1 // pred_fallthru
      _
    // Predicated region
    $region46: #{model_forward.13} parent=1 // pred_check
      _
    $region47: #{model_forward.13} parent=1 // pred_check_branch
      %2676 = sbr.rel (0) target = $region49
    $region48: #{model_forward.13} parent=1 // pred_region
      %2677 = dma.done [#allocation3], 32
    $region49: #{model_forward.13} parent=1 // pred_fallthru
      _
    // Predicated region
    $region50: #{model_forward.13} parent=1 // pred_check
      _
    $region51: #{model_forward.13} parent=1 // pred_check_branch
      %2679 = sbr.rel (0) target = $region53
    $region52: #{model_forward.13} parent=1 // pred_region
      %2680 = dma.done [#allocation5], 32
    $region53: #{model_forward.13} parent=1 // pred_fallthru
      _
    // Predicated region
    $region54: #{model_forward.13} parent=1 // pred_check
      _
    $region55: #{model_forward.13} parent=1 // pred_check_branch
      %2682 = sbr.rel (0) target = $region57
    $region56: #{model_forward.13} parent=1 // pred_region
      _
    $region57: #{model_forward.13} parent=1 // pred_fallthru
      _
    %2683 = vsyncpa [#allocation3], 1
    %2684 = vsyncpa [#allocation5], 1

// kernel: model_forward.14
$region0: #{model_forward.14}
  #allocation0 [shape = 'u32[]', space=smem, size = 0x4, offset = 0x4, fixed_abs, tag = 'smem constant byte address 0x4 - core index']
  #allocation1 [shape = 'u32[144,128]{1,0:T(1,128)}', space=vmem, size = 0x12000, scoped, tag = 'internal scratch']
  %s0 = inlined_call_operand.vmem [shape: bf16[288,128], index: 0, kind: input, shape index: {}]
  %s1 = inlined_call_operand.vmem [shape: bf16[64,288], index: 1, kind: input, shape index: {}]
  %s2 = inlined_call_operand.vmem [shape: f32[64,1], index: 2, kind: input, shape index: {}]
  %s3 = inlined_call_operand.vmem [shape: bf16[64,128], index: 3, kind: output, shape index: {}]
  %s4 = sld [smem:[#allocation0]]
  $region22: #{model_forward.14} parent=0
    _
  %s6 = ssub.s32 1, %s4
  %s7 = scalar_select 0, %s6, %s4
  // Predicated region
  $region2: #{model_forward.14} parent=0 // pred_check
    _
  $region3: #{model_forward.14} parent=0 // pred_check_branch
    %9 = sbr.rel (0) target = $region5
  $region4: #{model_forward.14} parent=0 // pred_region
    _
  $region5: #{model_forward.14} parent=0 // pred_fallthru
    _
  // Predicated region
  $region6: #{model_forward.14} parent=0 // pred_check
    _
  $region7: #{model_forward.14} parent=0 // pred_check_branch
    %11 = sbr.rel (0) target = $region9
  $region8: #{model_forward.14} parent=0 // pred_region
    _
  $region9: #{model_forward.14} parent=0 // pred_fallthru
    _
  // Predicated region
  $region10: #{model_forward.14} parent=0 // pred_check
    _
  $region11: #{model_forward.14} parent=0 // pred_check_branch
    %13 = sbr.rel (0) target = $region13
  $region12: #{model_forward.14} parent=0 // pred_region
    _
  $region13: #{model_forward.14} parent=0 // pred_fallthru
    _
  %v15 = vld [vmem:[%s1] sm:$0xff]
  %v16 = vld [vmem:[%s1 + $0x8] sm:$0xf]
  %v17 = vld [vmem:[%s1 + $0xc] sm:$0xff]
  %v18 = vld [vmem:[%s1 + $0x14] sm:$0xf]
  %v19 = vld [vmem:[%s1 + $0x18] sm:$0xff]
  %v20 = vld [vmem:[%s1 + $0x20] sm:$0xf]
  %v21 = vld [vmem:[%s1 + $0x24] sm:$0xff]
  %v22 = vld [vmem:[%s1 + $0x2c] sm:$0xf]
  %v23 = vld [vmem:[%s1 + $0x30] sm:$0xff]
  %v24 = vld [vmem:[%s1 + $0x38] sm:$0xf]
  %v25 = vld [vmem:[%s1 + $0x3c] sm:$0xff]
  %v26 = vld [vmem:[%s1 + $0x44] sm:$0xf]
  %v27 = vld [vmem:[%s1 + $0x48] sm:$0xff]
  %v28 = vld [vmem:[%s1 + $0x50] sm:$0xf]
  %v29 = vld [vmem:[%s1 + $0x54] sm:$0xff]
  %v30 = vld [vmem:[%s1 + $0x5c] sm:$0xf]
  %v31 = vld [vmem:[%s0] sm:$0xf]
  %v32 = vld [vmem:[%s0 + $0x4] sm:$0xf]
  %v33 = vld [vmem:[%s0 + $0x8] sm:$0xf]
  %v34 = vld [vmem:[%s0 + $0xc] sm:$0xf]
  %v35 = vld [vmem:[%s0 + $0x10] sm:$0xf]
  %v36 = vld [vmem:[%s0 + $0x14] sm:$0xf]
  %v37 = vld [vmem:[%s0 + $0x18] sm:$0xf]
  %v38 = vld [vmem:[%s0 + $0x1c] sm:$0xf]
  %v39 = vld [vmem:[%s0 + $0x20] sm:$0xf]
  %v40 = vld [vmem:[%s0 + $0x24] sm:$0xf]
  %v41 = vld [vmem:[%s0 + $0x28] sm:$0xf]
  %v42 = vld [vmem:[%s0 + $0x2c] sm:$0xf]
  %v43 = vld [vmem:[%s0 + $0x30] sm:$0xf]
  %v44 = vld [vmem:[%s0 + $0x34] sm:$0xf]
  %v45 = vld [vmem:[%s0 + $0x38] sm:$0xf]
  %v46 = vld [vmem:[%s0 + $0x3c] sm:$0xf]
  %v47 = vld [vmem:[%s0 + $0x40] sm:$0xf]
  %v48 = vld [vmem:[%s0 + $0x44] sm:$0xf]
  %v49 = vld [vmem:[%s0 + $0x48] sm:$0xf]
  %v50 = vld [vmem:[%s0 + $0x4c] sm:$0xf]
  %v51 = vld [vmem:[%s0 + $0x50] sm:$0xf]
  %v52 = vld [vmem:[%s0 + $0x54] sm:$0xf]
  %v53 = vld [vmem:[%s0 + $0x58] sm:$0xf]
  %v54 = vld [vmem:[%s0 + $0x5c] sm:$0xf]
  %v55 = vld [vmem:[%s0 + $0x60] sm:$0xf]
  %v56 = vld [vmem:[%s0 + $0x64] sm:$0xf]
  %v57 = vld [vmem:[%s0 + $0x68] sm:$0xf]
  %v58 = vld [vmem:[%s0 + $0x6c] sm:$0xf]
  %v59 = vld [vmem:[%s0 + $0x70] sm:$0xf]
  %v60 = vld [vmem:[%s0 + $0x74] sm:$0xf]
  %v61 = vld [vmem:[%s0 + $0x78] sm:$0xf]
  %v62 = vld [vmem:[%s0 + $0x7c] sm:$0xf]
  %v63 = vld [vmem:[%s0 + $0x80] sm:$0xf]
  %v64 = vld [vmem:[%s0 + $0x84] sm:$0xf]
  %v65 = vld [vmem:[%s0 + $0x88] sm:$0xf]
  %v66 = vld [vmem:[%s0 + $0x8c] sm:$0xf]
  %v67 = vld [vmem:[%s2] sm:$0xff]
  %v68 = vld [vmem:[%s2 + $0x8] sm:$0xff]
  %v69 = vld [vmem:[%s2 + $0x10] sm:$0xff]
  %v70 = vld [vmem:[%s2 + $0x18] sm:$0xff]
  %v71 = vld [vmem:[%s2 + $0x20] sm:$0xff]
  %v72 = vld [vmem:[%s2 + $0x28] sm:$0xff]
  %v73 = vld [vmem:[%s2 + $0x30] sm:$0xff]
  %v74 = vld [vmem:[%s2 + $0x38] sm:$0xff]
  %76 = vset.pattern.permute.xlu0 0
  %77 = vperm.xlu0 %76, %v67
  %v78 = vpop.permute.xlu0 %77
  %81 = vset.pattern.permute.xlu0 0
  %82 = vperm.xlu0 %81, %v68
  %v83 = vpop.permute.xlu0 %82
  %86 = vset.pattern.permute.xlu0 0
  %87 = vperm.xlu0 %86, %v69
  %v88 = vpop.permute.xlu0 %87
  %91 = vset.pattern.permute.xlu0 0
  %92 = vperm.xlu0 %91, %v70
  %v93 = vpop.permute.xlu0 %92
  %96 = vset.pattern.permute.xlu0 0
  %97 = vperm.xlu0 %96, %v71
  %v98 = vpop.permute.xlu0 %97
  %101 = vset.pattern.permute.xlu0 0
  %102 = vperm.xlu0 %101, %v72
  %v103 = vpop.permute.xlu0 %102
  %106 = vset.pattern.permute.xlu0 0
  %107 = vperm.xlu0 %106, %v73
  %v108 = vpop.permute.xlu0 %107
  %111 = vset.pattern.permute.xlu0 0
  %112 = vperm.xlu0 %111, %v74
  %v113 = vpop.permute.xlu0 %112
  %v131 = vunpack.c.l.b16 %v15
  %v132 = vunpack.c.h.b16 %v15
  %v133 = vunpack.c.l.b16 %v16
  %v134 = vunpack.c.l.b16 %v17
  %v135 = vunpack.c.h.b16 %v17
  %v136 = vunpack.c.l.b16 %v18
  %v137 = vunpack.c.l.b16 %v19
  %v138 = vunpack.c.h.b16 %v19
  %v139 = vunpack.c.l.b16 %v20
  %v140 = vunpack.c.l.b16 %v21
  %v141 = vunpack.c.h.b16 %v21
  %v142 = vunpack.c.l.b16 %v22
  %v143 = vunpack.c.l.b16 %v23
  %v144 = vunpack.c.h.b16 %v23
  %v145 = vunpack.c.l.b16 %v24
  %v146 = vunpack.c.l.b16 %v25
  %v147 = vunpack.c.h.b16 %v25
  %v148 = vunpack.c.l.b16 %v26
  %v149 = vunpack.c.l.b16 %v27
  %v150 = vunpack.c.h.b16 %v27
  %v151 = vunpack.c.l.b16 %v28
  %v152 = vunpack.c.l.b16 %v29
  %v153 = vunpack.c.h.b16 %v29
  %v154 = vunpack.c.l.b16 %v30
  %v155 = vpack.c.b16 %v134, %v131
  %v156 = vpack.c.b16 %v135, %v132
  %v157 = vpack.c.b16 %v136, %v133
  %v158 = vpack.c.b16 %v140, %v137
  %v159 = vpack.c.b16 %v141, %v138
  %v160 = vpack.c.b16 %v142, %v139
  %v161 = vpack.c.b16 %v146, %v143
  %v162 = vpack.c.b16 %v147, %v144
  %v163 = vpack.c.b16 %v148, %v145
  %v164 = vpack.c.b16 %v152, %v149
  %v165 = vpack.c.b16 %v153, %v150
  %v166 = vpack.c.b16 %v154, %v151
  %v211 = vunpack.c.l.b16 %v31
  %v212 = vunpack.c.l.b16 %v32
  %v213 = vunpack.c.l.b16 %v33
  %v214 = vunpack.c.l.b16 %v34
  %v215 = vunpack.c.l.b16 %v35
  %v216 = vunpack.c.l.b16 %v36
  %v217 = vunpack.c.l.b16 %v37
  %v218 = vunpack.c.l.b16 %v38
  %v219 = vunpack.c.l.b16 %v39
  %v220 = vunpack.c.l.b16 %v40
  %v221 = vunpack.c.l.b16 %v41
  %v222 = vunpack.c.l.b16 %v42
  %v223 = vunpack.c.l.b16 %v43
  %v224 = vunpack.c.l.b16 %v44
  %v225 = vunpack.c.l.b16 %v45
  %v226 = vunpack.c.l.b16 %v46
  %v227 = vunpack.c.l.b16 %v47
  %v228 = vunpack.c.l.b16 %v48
  %v229 = vunpack.c.l.b16 %v49
  %v230 = vunpack.c.l.b16 %v50
  %v231 = vunpack.c.l.b16 %v51
  %v232 = vunpack.c.l.b16 %v52
  %v233 = vunpack.c.l.b16 %v53
  %v234 = vunpack.c.l.b16 %v54
  %v235 = vunpack.c.l.b16 %v55
  %v236 = vunpack.c.l.b16 %v56
  %v237 = vunpack.c.l.b16 %v57
  %v238 = vunpack.c.l.b16 %v58
  %v239 = vunpack.c.l.b16 %v59
  %v240 = vunpack.c.l.b16 %v60
  %v241 = vunpack.c.l.b16 %v61
  %v242 = vunpack.c.l.b16 %v62
  %v243 = vunpack.c.l.b16 %v63
  %v244 = vunpack.c.l.b16 %v64
  %v245 = vunpack.c.l.b16 %v65
  %v246 = vunpack.c.l.b16 %v66
  %v247 = vpack.c.b16 %v212, %v211
  %v248 = vpack.c.b16 %v214, %v213
  %v249 = vpack.c.b16 %v216, %v215
  %v250 = vpack.c.b16 %v218, %v217
  %v251 = vpack.c.b16 %v220, %v219
  %v252 = vpack.c.b16 %v222, %v221
  %v253 = vpack.c.b16 %v224, %v223
  %v254 = vpack.c.b16 %v226, %v225
  %v255 = vpack.c.b16 %v228, %v227
  %v256 = vpack.c.b16 %v230, %v229
  %v257 = vpack.c.b16 %v232, %v231
  %v258 = vpack.c.b16 %v234, %v233
  %v259 = vpack.c.b16 %v236, %v235
  %v260 = vpack.c.b16 %v238, %v237
  %v261 = vpack.c.b16 %v240, %v239
  %v262 = vpack.c.b16 %v242, %v241
  %v263 = vpack.c.b16 %v244, %v243
  %v264 = vpack.c.b16 %v246, %v245
  %vm283 = vcmask 261120
  %v285 = vsel %vm283, %v157, 0
  %v288 = vsel %vm283, %v160, 0
  %v291 = vsel %vm283, %v163, 0
  %v294 = vsel %vm283, %v166, 0
  %296 = vmatprep.subr.bf16.mxu0 0
  %297 = vmatpush1.bf16.msra.mxu0 %v254
  %298 = vmatprep.subr.bf16.mxu0 0
  %299 = vmatpush1.bf16.msra.mxu0 %v253
  %300 = vmatprep.subr.bf16.mxu0 0
  %301 = vmatpush1.bf16.msra.mxu0 %v252
  %302 = vmatprep.subr.bf16.mxu0 0
  %303 = vmatpush1.bf16.msra.mxu0 %v251
  %304 = vmatprep.subr.bf16.mxu0 0
  %305 = vmatpush1.bf16.msra.mxu0 %v250
  %306 = vmatprep.subr.bf16.mxu0 0
  %307 = vmatpush1.bf16.msra.mxu0 %v249
  %308 = vmatprep.subr.bf16.mxu0 0
  %309 = vmatpush1.bf16.msra.mxu0 %v248
  %310 = vmatprep.subr.bf16.mxu0 0
  %311 = vmatpush1.bf16.msra.mxu0 %v247
  %312 = vmatprep.subr.bf16.mxu0 0
  %313 = vmatpush2.bf16.msra.mxu0 %v262
  %314 = vmatprep.subr.bf16.mxu0 0
  %315 = vmatpush2.bf16.msra.mxu0 %v261
  %316 = vmatprep.subr.bf16.mxu0 0
  %317 = vmatpush2.bf16.msra.mxu0 %v260
  %318 = vmatprep.subr.bf16.mxu0 0
  %319 = vmatpush2.bf16.msra.mxu0 %v259
  %320 = vmatprep.subr.bf16.mxu0 0
  %321 = vmatpush2.bf16.msra.mxu0 %v258
  %322 = vmatprep.subr.bf16.mxu0 0
  %323 = vmatpush2.bf16.msra.mxu0 %v257
  %324 = vmatprep.subr.bf16.mxu0 0
  %325 = vmatpush2.bf16.msra.mxu0 %v256
  %326 = vmatprep.subr.bf16.mxu0 0
  %327 = vmatpush2.bf16.msra.mxu0 %v255
  %328 = vmatprep.mubr.bf16.mxu0 %v156
  %329 = vmatmul.mubr.bf16.gmra.mxu0 %v155
  %v330 = vpop.f32.mrf.mxu0
  %v331 = vadd.f32 %v78, %v330
  %v332 = vpop.f32.mrf.mxu0
  %v333 = vpop.f32.mrf.mxu0
  %v334 = vadd.f32 %v83, %v333
  %v335 = vpop.f32.mrf.mxu0
  %336 = vmatprep.mubr.bf16.mxu0 %v159
  %337 = vmatmul.mubr.bf16.gmra.mxu0 %v158
  %v338 = vpop.f32.mrf.mxu0
  %v339 = vadd.f32 %v88, %v338
  %v340 = vpop.f32.mrf.mxu0
  %v341 = vpop.f32.mrf.mxu0
  %v342 = vadd.f32 %v93, %v341
  %v343 = vpop.f32.mrf.mxu0
  %344 = vmatprep.mubr.bf16.mxu0 %v162
  %345 = vmatmul.mubr.bf16.gmra.mxu0 %v161
  %v346 = vpop.f32.mrf.mxu0
  %v347 = vadd.f32 %v98, %v346
  %v348 = vpop.f32.mrf.mxu0
  %v349 = vpop.f32.mrf.mxu0
  %v350 = vadd.f32 %v103, %v349
  %v351 = vpop.f32.mrf.mxu0
  %352 = vmatprep.mubr.bf16.mxu0 %v165
  %353 = vmatmul.mubr.bf16.gmra.mxu0 %v164
  %v354 = vpop.f32.mrf.mxu0
  %v355 = vadd.f32 %v108, %v354
  %v356 = vpop.f32.mrf.mxu0
  %v357 = vpop.f32.mrf.mxu0
  %v358 = vadd.f32 %v113, %v357
  %v359 = vpop.f32.mrf.mxu0
  %360 = vdwg.mxu0
  %361 = vmatprep.subr.bf16.mxu0 0
  %362 = vmatpush1.bf16.msra.mxu0 0
  %363 = vmatprep.subr.bf16.mxu0 0
  %364 = vmatpush1.bf16.msra.mxu0 0
  %365 = vmatprep.subr.bf16.mxu0 0
  %366 = vmatpush1.bf16.msra.mxu0 0
  %367 = vmatprep.subr.bf16.mxu0 0
  %368 = vmatpush1.bf16.msra.mxu0 0
  %369 = vmatprep.subr.bf16.mxu0 0
  %370 = vmatpush1.bf16.msra.mxu0 0
  %371 = vmatprep.subr.bf16.mxu0 0
  %372 = vmatpush1.bf16.msra.mxu0 0
  %373 = vmatprep.subr.bf16.mxu0 0
  %374 = vmatpush1.bf16.msra.mxu0 %v264
  %375 = vmatprep.subr.bf16.mxu0 0
  %376 = vmatpush1.bf16.msra.mxu0 %v263
  %377 = vmatprep.subr.bf16.mxu0 0
  %378 = vmatpush2.bf16.msra.mxu0 0
  %379 = vmatprep.subr.bf16.mxu0 0
  %380 = vmatpush2.bf16.msra.mxu0 0
  %381 = vmatprep.subr.bf16.mxu0 0
  %382 = vmatpush2.bf16.msra.mxu0 0
  %383 = vmatprep.subr.bf16.mxu0 0
  %384 = vmatpush2.bf16.msra.mxu0 0
  %385 = vmatprep.subr.bf16.mxu0 0
  %386 = vmatpush2.bf16.msra.mxu0 0
  %387 = vmatprep.subr.bf16.mxu0 0
  %388 = vmatpush2.bf16.msra.mxu0 0
  %389 = vmatprep.subr.bf16.mxu0 0
  %390 = vmatpush2.bf16.msra.mxu0 0
  %391 = vmatprep.subr.bf16.mxu0 0
  %392 = vmatpush2.bf16.msra.mxu0 0
  %393 = vmatprep.mubr.bf16.mxu0 0
  %394 = vmatmul.mubr.bf16.gmra.mxu0 %v285
  %v395 = vpop.f32.mrf.mxu0
  %v396 = vadd.f32 %v331, %v395
  %v397 = vpop.f32.mrf.mxu0
  %v398 = vpop.f32.mrf.mxu0
  %v399 = vadd.f32 %v334, %v398
  %v400 = vpop.f32.mrf.mxu0
  %401 = vmatprep.mubr.bf16.mxu0 0
  %402 = vmatmul.mubr.bf16.gmra.mxu0 %v288
  %v403 = vpop.f32.mrf.mxu0
  %v404 = vadd.f32 %v339, %v403
  %v405 = vpop.f32.mrf.mxu0
  %v406 = vpop.f32.mrf.mxu0
  %v407 = vadd.f32 %v342, %v406
  %v408 = vpop.f32.mrf.mxu0
  %409 = vmatprep.mubr.bf16.mxu0 0
  %410 = vmatmul.mubr.bf16.gmra.mxu0 %v291
  %v411 = vpop.f32.mrf.mxu0
  %v412 = vadd.f32 %v347, %v411
  %v413 = vpop.f32.mrf.mxu0
  %v414 = vpop.f32.mrf.mxu0
  %v415 = vadd.f32 %v350, %v414
  %v416 = vpop.f32.mrf.mxu0
  %417 = vmatprep.mubr.bf16.mxu0 0
  %418 = vmatmul.mubr.bf16.gmra.mxu0 %v294
  %v419 = vpop.f32.mrf.mxu0
  %v420 = vadd.f32 %v355, %v419
  %v421 = vpop.f32.mrf.mxu0
  %v422 = vpop.f32.mrf.mxu0
  %v423 = vadd.f32 %v358, %v422
  %v424 = vpop.f32.mrf.mxu0
  %425 = vdwg.mxu0
  %vm426 = vcmp.ge.f32.partialorder %v396, 0.0
  %vm427 = vcmp.ge.f32.partialorder %v399, 0.0
  %vm428 = vcmp.ge.f32.partialorder %v404, 0.0
  %vm429 = vcmp.ge.f32.partialorder %v407, 0.0
  %vm430 = vcmp.ge.f32.partialorder %v412, 0.0
  %vm431 = vcmp.ge.f32.partialorder %v415, 0.0
  %vm432 = vcmp.ge.f32.partialorder %v420, 0.0
  %vm433 = vcmp.ge.f32.partialorder %v423, 0.0
  %v434 = vmul.f32 %v396, 0.01
  %v435 = vmul.f32 %v399, 0.01
  %v436 = vmul.f32 %v404, 0.01
  %v437 = vmul.f32 %v407, 0.01
  %v438 = vmul.f32 %v412, 0.01
  %v439 = vmul.f32 %v415, 0.01
  %v440 = vmul.f32 %v420, 0.01
  %v441 = vmul.f32 %v423, 0.01
  %v442 = vsel %vm426, %v396, %v434
  %v443 = vsel %vm427, %v399, %v435
  %v444 = vsel %vm428, %v404, %v436
  %v445 = vsel %vm429, %v407, %v437
  %v446 = vsel %vm430, %v412, %v438
  %v447 = vsel %vm431, %v415, %v439
  %v448 = vsel %vm432, %v420, %v440
  %v449 = vsel %vm433, %v423, %v441
  %v450 = vpack.c.bf16 %v443, %v442
  %v451 = vpack.c.bf16 %v445, %v444
  %v452 = vpack.c.bf16 %v447, %v446
  %v453 = vpack.c.bf16 %v449, %v448
  %v458 = vunpack.c.l.b16 %v450
  %v459 = vunpack.c.h.b16 %v450
  %v460 = vunpack.c.l.b16 %v451
  %v461 = vunpack.c.h.b16 %v451
  %v462 = vunpack.c.l.b16 %v452
  %v463 = vunpack.c.h.b16 %v452
  %v464 = vunpack.c.l.b16 %v453
  %v465 = vunpack.c.h.b16 %v453
  %v466 = vpack.c.b16 %v458, %v458
  %v467 = vpack.c.b16 %v459, %v459
  %v468 = vpack.c.b16 %v460, %v460
  %v469 = vpack.c.b16 %v461, %v461
  %v470 = vpack.c.b16 %v462, %v462
  %v471 = vpack.c.b16 %v463, %v463
  %v472 = vpack.c.b16 %v464, %v464
  %v473 = vpack.c.b16 %v465, %v465
  %482 = vst [vmem:[%s3] sm:$0xf] %v466
  %483 = vst [vmem:[%s3 + $0x4] sm:$0xf] %v467
  %484 = vst [vmem:[%s3 + $0x8] sm:$0xf] %v468
  %485 = vst [vmem:[%s3 + $0xc] sm:$0xf] %v469
  %486 = vst [vmem:[%s3 + $0x10] sm:$0xf] %v470
  %487 = vst [vmem:[%s3 + $0x14] sm:$0xf] %v471
  %488 = vst [vmem:[%s3 + $0x18] sm:$0xf] %v472
  %489 = vst [vmem:[%s3 + $0x1c] sm:$0xf] %v473
  // Predicated region
  $region14: #{model_forward.14} parent=0 // pred_check
    _
  $region15: #{model_forward.14} parent=0 // pred_check_branch
    %491 = sbr.rel (0) target = $region17
  $region16: #{model_forward.14} parent=0 // pred_region
    _
  $region17: #{model_forward.14} parent=0 // pred_fallthru
    _
  // Predicated region
  $region18: #{model_forward.14} parent=0 // pred_check
    _
  $region19: #{model_forward.14} parent=0 // pred_check_branch
    %493 = sbr.rel (0) target = $region21
  $region20: #{model_forward.14} parent=0 // pred_region
    _
  $region21: #{model_forward.14} parent=0 // pred_fallthru
    _

// kernel: model_forward.15
$region0: #{model_forward.15}
  #allocation0 [shape = 'u32[]', space=smem, size = 0x4, offset = 0x4, fixed_abs, tag = 'smem constant byte address 0x4 - core index']
  #allocation1 [shape = 'u32[144,128]{1,0:T(1,128)}', space=vmem, size = 0x12000, scoped, tag = 'internal scratch']
  %s0 = inlined_call_operand.vmem [shape: bf16[144,512], index: 0, kind: input, shape index: {}]
  %s1 = inlined_call_operand.vmem [shape: bf16[32,144], index: 1, kind: input, shape index: {}]
  %s2 = inlined_call_operand.vmem [shape: f32[32,1], index: 2, kind: input, shape index: {}]
  %s3 = inlined_call_operand.vmem [shape: bf16[32,512], index: 3, kind: output, shape index: {}]
  %s4 = sld [smem:[#allocation0]]
  $region117: #{model_forward.15} parent=0
    _
  %s6 = ssub.s32 1, %s4
  %s7 = scalar_select 0, %s6, %s4
  $region1: #{model_forward.15} parent=0
    #allocation2 [shape = 'u8[147456]{0}', space=vmem, size = 0x24000, scoped, tag = 'input window, operand 0']
    #allocation3 [shape = 'u8[32768]{0}', space=vmem, size = 0x8000, scoped, tag = 'output window, operand 0']
    loop: start=0, step=1, limit=4
    $region2: #{model_forward.15} parent=1 // loop_pre_header
      _
    $region3: #{model_forward.15} parent=1 // loop_header
      %s9 = sphi 0, %s13
      %p10 = scmp.ge.s32.totalorder %s9, 4
      %s19 = sphi 0, %s21
      %s22 = sphi 0, %s19
      %s23 = sphi 0, %s22
      %s39 = sphi 0, %s23
      %s43 = sphi 0, %s43
      %s45 = sphi 0, %s43
      %s46 = sphi 0, %s45
      %s60 = sphi 0, %s46
      %s64 = sphi 0, %s64
      %s66 = sphi 0, %s64
      %s67 = sphi 0, %s66
      %s81 = sphi 0, %s67
      %s87 = sphi 0, %s89
      %s90 = sphi 0, %s87
      %s91 = sphi 0, %s90
      %s107 = sphi 0, %s91
    $region4: #{model_forward.15} parent=1 // loop_header_branch
      %12 = sbr.rel (%p10) target = $region8
    $region5: #{model_forward.15} parent=1 // loop_body
      %s14 = ssub.s32 %s9, 1
      %s15 = ssub.s32 %s9, 2
      %s16 = sadd.s32 %s9, 1
      %s17 = ssub.s32 %s9, %s16
      %p18 = scmp.eq.s32.totalorder %s17, 0
      %s20 = sadd.s32 %s19, 1
      %s21 = scalar_select %p18, %s19, %s20
      %p24 = pneg %p18
      %p25 = scmp.eq.s32.totalorder %s9, 1
      %p26 = por %p24, %p25
      %p27 = scmp.ne.s32.totalorder %s19, %s22
      %p28 = scmp.eq.s32.totalorder %s9, 0
      %p29 = por %p27, %p28
      %p30 = scmp.ne.s32.totalorder %s19, %s22
      %p31 = scmp.eq.s32.totalorder %s14, 1
      %p32 = por %p30, %p31
      %p33 = scmp.ne.s32.totalorder %s22, %s23
      %p34 = scmp.eq.s32.totalorder %s14, 0
      %p35 = por %p33, %p34
      %p36 = scmp.ne.s32.totalorder %s22, %s23
      %p37 = scmp.eq.s32.totalorder %s15, 1
      %p38 = por %p36, %p37
      %p40 = scmp.ne.s32.totalorder %s23, %s39
      %p41 = scmp.eq.s32.totalorder %s15, 0
      %p42 = por %p40, %p41
      %s44 = sadd.s32 %s43, 1
      %p47 = scmp.eq.s32.totalorder %s9, 1
      %p48 = scmp.ne.s32.totalorder %s43, %s45
      %p49 = scmp.eq.s32.totalorder %s9, 0
      %p50 = por %p48, %p49
      %p51 = scmp.ne.s32.totalorder %s43, %s45
      %p52 = scmp.eq.s32.totalorder %s14, 1
      %p53 = por %p51, %p52
      %p54 = scmp.ne.s32.totalorder %s45, %s46
      %p55 = scmp.eq.s32.totalorder %s14, 0
      %p56 = por %p54, %p55
      %p57 = scmp.ne.s32.totalorder %s45, %s46
      %p58 = scmp.eq.s32.totalorder %s15, 1
      %p59 = por %p57, %p58
      %p61 = scmp.ne.s32.totalorder %s46, %s60
      %p62 = scmp.eq.s32.totalorder %s15, 0
      %p63 = por %p61, %p62
      %s65 = sadd.s32 %s64, 1
      %p68 = scmp.eq.s32.totalorder %s9, 1
      %p69 = scmp.ne.s32.totalorder %s64, %s66
      %p70 = scmp.eq.s32.totalorder %s9, 0
      %p71 = por %p69, %p70
      %p72 = scmp.ne.s32.totalorder %s64, %s66
      %p73 = scmp.eq.s32.totalorder %s14, 1
      %p74 = por %p72, %p73
      %p75 = scmp.ne.s32.totalorder %s66, %s67
      %p76 = scmp.eq.s32.totalorder %s14, 0
      %p77 = por %p75, %p76
      %p78 = scmp.ne.s32.totalorder %s66, %s67
      %p79 = scmp.eq.s32.totalorder %s15, 1
      %p80 = por %p78, %p79
      %p82 = scmp.ne.s32.totalorder %s67, %s81
      %p83 = scmp.eq.s32.totalorder %s15, 0
      %p84 = por %p82, %p83
      %s85 = ssub.s32 %s9, %s16
      %p86 = scmp.eq.s32.totalorder %s85, 0
      %s88 = sadd.s32 %s87, 1
      %s89 = scalar_select %p86, %s87, %s88
      %p92 = pneg %p86
      %p93 = scmp.eq.s32.totalorder %s9, 1
      %p94 = por %p92, %p93
      %p95 = scmp.ne.s32.totalorder %s87, %s90
      %p96 = scmp.eq.s32.totalorder %s9, 0
      %p97 = por %p95, %p96
      %p98 = scmp.ne.s32.totalorder %s87, %s90
      %p99 = scmp.eq.s32.totalorder %s14, 1
      %p100 = por %p98, %p99
      %p101 = scmp.ne.s32.totalorder %s90, %s91
      %p102 = scmp.eq.s32.totalorder %s14, 0
      %p103 = por %p101, %p102
      %p104 = scmp.ne.s32.totalorder %s90, %s91
      %p105 = scmp.eq.s32.totalorder %s15, 1
      %p106 = por %p104, %p105
      %p108 = scmp.ne.s32.totalorder %s91, %s107
      %p109 = scmp.eq.s32.totalorder %s15, 0
      %p110 = por %p108, %p109
      %p111 = scmp.le.s32.totalorder 1, %s9
      %p112 = scmp.lt.s32.totalorder %s9, 3
      %p113 = pnand %p111, %p112
      %p114 = pneg %p113
      // Predicated region
      $region9: #{model_forward.15} parent=5 // pred_check
        _
      $region10: #{model_forward.15} parent=5 // pred_check_branch
        %116 = sbr.rel (%p113) target = $region12
      $region11: #{model_forward.15} parent=5 // pred_region
        %s117 = ssub.s32 %s9, 1
        // Predicated region
        $region13: #{model_forward.15} parent=11 // pred_check
          %p118 = pneg %p56
        $region14: #{model_forward.15} parent=11 // pred_check_branch
          %120 = sbr.rel (%p118) target = $region16
        $region15: #{model_forward.15} parent=11 // pred_region
          _
        $region16: #{model_forward.15} parent=11 // pred_fallthru
          _
        // Predicated region
        $region17: #{model_forward.15} parent=11 // pred_check
          %p121 = pneg %p77
        $region18: #{model_forward.15} parent=11 // pred_check_branch
          %123 = sbr.rel (%p121) target = $region20
        $region19: #{model_forward.15} parent=11 // pred_region
          _
        $region20: #{model_forward.15} parent=11 // pred_fallthru
          _
      $region12: #{model_forward.15} parent=5 // pred_fallthru
        _
      %p124 = scmp.lt.s32.totalorder %s9, 2
      // Predicated region
      $region21: #{model_forward.15} parent=5 // pred_check
        %p125 = pneg %p124
      $region22: #{model_forward.15} parent=5 // pred_check_branch
        %127 = sbr.rel (%p125) target = $region24
      $region23: #{model_forward.15} parent=5 // pred_region
        // Predicated region
        $region25: #{model_forward.15} parent=23 // pred_check
          %p128 = pneg %p29
        $region26: #{model_forward.15} parent=23 // pred_check_branch
          %130 = sbr.rel (%p128) target = $region28
        $region27: #{model_forward.15} parent=23 // pred_region
          %s131 = sand.u32 %s19, 1
          %s132 = sand.u32 %s19, 1
          %s133 = smul.addr %s132, 144
          %s134 = scalar_lea.vmem [#allocation2], %s133
          %s135 = smul.u32 2, %s9
          %s136 = smul.addr %s135, 4
          %s137 = scalar_lea.vmem %s0, %s136
          // Predicated region
          $region29: #{model_forward.15} parent=27 // pred_check
            _
          $region30: #{model_forward.15} parent=27 // pred_check_branch
            %139 = sbr.rel (0) target = $region32
          $region31: #{model_forward.15} parent=27 // pred_region
            // Predicated region
            $region33: #{model_forward.15} parent=31 // pred_check
              _
            $region34: #{model_forward.15} parent=31 // pred_check_branch
              %141 = sbr.rel (0) target = $region36
            $region35: #{model_forward.15} parent=31 // pred_region
              // Predicated region
              $region48: #{model_forward.15} parent=35 // pred_check
                _
              $region49: #{model_forward.15} parent=35 // pred_check_branch
                %191 = sbr.rel (0) target = $region51
              $region50: #{model_forward.15} parent=35 // pred_region
                loop: start=0, step=1, limit=1
                $region52: #{model_forward.15} parent=50 // loop_pre_header
                  _
                $region53: #{model_forward.15} parent=50 // loop_header
                  %s193 = sphi 0, %s197
                  %p194 = scmp.ge.s32.totalorder %s193, 1
                  %s198 = sphi %s137, %s137
                  %s199 = sphi %s134, %s134
                $region54: #{model_forward.15} parent=50 // loop_header_branch
                  %196 = sbr.rel (%p194) target = $region58
                $region55: #{model_forward.15} parent=50 // loop_body
                  %v200 = vld [vmem:[%s198] sm:$0xff]
                  %201 = vst [vmem:[%s199] sm:$0xff] %v200
                  %v202 = vld [vmem:[%s198 + $0x10] sm:$0xff]
                  %203 = vst [vmem:[%s199 + $0x8] sm:$0xff] %v202
                  %v204 = vld [vmem:[%s198 + $0x20] sm:$0xff]
                  %205 = vst [vmem:[%s199 + $0x10] sm:$0xff] %v204
                  %v206 = vld [vmem:[%s198 + $0x30] sm:$0xff]
                  %207 = vst [vmem:[%s199 + $0x18] sm:$0xff] %v206
                  %v208 = vld [vmem:[%s198 + $0x40] sm:$0xff]
                  %209 = vst [vmem:[%s199 + $0x20] sm:$0xff] %v208
                  %v210 = vld [vmem:[%s198 + $0x50] sm:$0xff]
                  %211 = vst [vmem:[%s199 + $0x28] sm:$0xff] %v210
                  %v212 = vld [vmem:[%s198 + $0x60] sm:$0xff]
                  %213 = vst [vmem:[%s199 + $0x30] sm:$0xff] %v212
                  %v214 = vld [vmem:[%s198 + $0x70] sm:$0xff]
                  %215 = vst [vmem:[%s199 + $0x38] sm:$0xff] %v214
                  %v216 = vld [vmem:[%s198 + $0x80] sm:$0xff]
                  %217 = vst [vmem:[%s199 + $0x40] sm:$0xff] %v216
                  %v218 = vld [vmem:[%s198 + $0x90] sm:$0xff]
                  %219 = vst [vmem:[%s199 + $0x48] sm:$0xff] %v218
                  %v220 = vld [vmem:[%s198 + $0xa0] sm:$0xff]
                  %221 = vst [vmem:[%s199 + $0x50] sm:$0xff] %v220
                  %v222 = vld [vmem:[%s198 + $0xb0] sm:$0xff]
                  %223 = vst [vmem:[%s199 + $0x58] sm:$0xff] %v222
                  %v224 = vld [vmem:[%s198 + $0xc0] sm:$0xff]
                  %225 = vst [vmem:[%s199 + $0x60] sm:$0xff] %v224
                  %v226 = vld [vmem:[%s198 + $0xd0] sm:$0xff]
                  %227 = vst [vmem:[%s199 + $0x68] sm:$0xff] %v226
                  %v228 = vld [vmem:[%s198 + $0xe0] sm:$0xff]
                  %229 = vst [vmem:[%s199 + $0x70] sm:$0xff] %v228
                  %v230 = vld [vmem:[%s198 + $0xf0] sm:$0xff]
                  %231 = vst [vmem:[%s199 + $0x78] sm:$0xff] %v230
                  %v232 = vld [vmem:[%s198 + $0x100] sm:$0xff]
                  %233 = vst [vmem:[%s199 + $0x80] sm:$0xff] %v232
                  %v234 = vld [vmem:[%s198 + $0x110] sm:$0xff]
                  %235 = vst [vmem:[%s199 + $0x88] sm:$0xff] %v234
                $region56: #{model_forward.15} parent=50 // loop_footer
                  %s197 = sadd.s32 1, %s193
                $region57: #{model_forward.15} parent=50 // loop_footer_branch
                  %192 = sbr.rel target = $region53
                $region58: #{model_forward.15} parent=50 // loop_exit
                  _
              $region51: #{model_forward.15} parent=35 // pred_fallthru
                _
              // Predicated region
              $region59: #{model_forward.15} parent=35 // pred_check
                _
              $region60: #{model_forward.15} parent=35 // pred_check_branch
                %237 = sbr.rel target = $region62
              $region61: #{model_forward.15} parent=35 // pred_region
                _
              $region62: #{model_forward.15} parent=35 // pred_fallthru
                _
            $region36: #{model_forward.15} parent=31 // pred_fallthru
              _
            // Predicated region
            $region37: #{model_forward.15} parent=31 // pred_check
              _
            $region38: #{model_forward.15} parent=31 // pred_check_branch
              %143 = sbr.rel target = $region40
            $region39: #{model_forward.15} parent=31 // pred_region
              %s145 = ssub.s32 256, 1
              loop: start=0, step=1, limit=1
              $region41: #{model_forward.15} parent=39 // loop_pre_header
                _
              $region42: #{model_forward.15} parent=39 // loop_header
                %s147 = sphi 0, %s151
                %p148 = scmp.ge.s32.totalorder %s147, 1
                %s152 = sphi %s137, %s137
                %s153 = sphi %s134, %s134
              $region43: #{model_forward.15} parent=39 // loop_header_branch
                %150 = sbr.rel (%p148) target = $region47
              $region44: #{model_forward.15} parent=39 // loop_body
                %v154 = vld [vmem:[%s152] sm:%s145]
                %155 = vst [vmem:[%s153] sm:%s145] %v154
                %v156 = vld [vmem:[%s152 + $0x10] sm:%s145]
                %157 = vst [vmem:[%s153 + $0x8] sm:%s145] %v156
                %v158 = vld [vmem:[%s152 + $0x20] sm:%s145]
                %159 = vst [vmem:[%s153 + $0x10] sm:%s145] %v158
                %v160 = vld [vmem:[%s152 + $0x30] sm:%s145]
                %161 = vst [vmem:[%s153 + $0x18] sm:%s145] %v160
                %v162 = vld [vmem:[%s152 + $0x40] sm:%s145]
                %163 = vst [vmem:[%s153 + $0x20] sm:%s145] %v162
                %v164 = vld [vmem:[%s152 + $0x50] sm:%s145]
                %165 = vst [vmem:[%s153 + $0x28] sm:%s145] %v164
                %v166 = vld [vmem:[%s152 + $0x60] sm:%s145]
                %167 = vst [vmem:[%s153 + $0x30] sm:%s145] %v166
                %v168 = vld [vmem:[%s152 + $0x70] sm:%s145]
                %169 = vst [vmem:[%s153 + $0x38] sm:%s145] %v168
                %v170 = vld [vmem:[%s152 + $0x80] sm:%s145]
                %171 = vst [vmem:[%s153 + $0x40] sm:%s145] %v170
                %v172 = vld [vmem:[%s152 + $0x90] sm:%s145]
                %173 = vst [vmem:[%s153 + $0x48] sm:%s145] %v172
                %v174 = vld [vmem:[%s152 + $0xa0] sm:%s145]
                %175 = vst [vmem:[%s153 + $0x50] sm:%s145] %v174
                %v176 = vld [vmem:[%s152 + $0xb0] sm:%s145]
                %177 = vst [vmem:[%s153 + $0x58] sm:%s145] %v176
                %v178 = vld [vmem:[%s152 + $0xc0] sm:%s145]
                %179 = vst [vmem:[%s153 + $0x60] sm:%s145] %v178
                %v180 = vld [vmem:[%s152 + $0xd0] sm:%s145]
                %181 = vst [vmem:[%s153 + $0x68] sm:%s145] %v180
                %v182 = vld [vmem:[%s152 + $0xe0] sm:%s145]
                %183 = vst [vmem:[%s153 + $0x70] sm:%s145] %v182
                %v184 = vld [vmem:[%s152 + $0xf0] sm:%s145]
                %185 = vst [vmem:[%s153 + $0x78] sm:%s145] %v184
                %v186 = vld [vmem:[%s152 + $0x100] sm:%s145]
                %187 = vst [vmem:[%s153 + $0x80] sm:%s145] %v186
                %v188 = vld [vmem:[%s152 + $0x110] sm:%s145]
                %189 = vst [vmem:[%s153 + $0x88] sm:%s145] %v188
              $region45: #{model_forward.15} parent=39 // loop_footer
                %s151 = sadd.s32 1, %s147
              $region46: #{model_forward.15} parent=39 // loop_footer_branch
                %146 = sbr.rel target = $region42
              $region47: #{model_forward.15} parent=39 // loop_exit
                _
            $region40: #{model_forward.15} parent=31 // pred_fallthru
              _
          $region32: #{model_forward.15} parent=27 // pred_fallthru
            _
          %238 = vnop
        $region28: #{model_forward.15} parent=23 // pred_fallthru
          _
      $region24: #{model_forward.15} parent=5 // pred_fallthru
        _
      %p239 = scmp.le.s32.totalorder 1, %s9
      %p240 = scmp.lt.s32.totalorder %s9, 3
      %p241 = pnand %p239, %p240
      %p242 = pneg %p241
      // Predicated region
      $region63: #{model_forward.15} parent=5 // pred_check
        _
      $region64: #{model_forward.15} parent=5 // pred_check_branch
        %244 = sbr.rel (%p241) target = $region66
      $region65: #{model_forward.15} parent=5 // pred_region
        %s245 = ssub.s32 %s9, 1
        %s246 = sand.u32 %s22, 1
        %s247 = sand.u32 %s22, 1
        %s248 = smul.addr %s247, 144
        %s249 = scalar_lea.vmem [#allocation2], %s248
        // Predicated region
        $region67: #{model_forward.15} parent=65 // pred_check
          %p250 = pneg %p35
        $region68: #{model_forward.15} parent=65 // pred_check_branch
          %252 = sbr.rel (%p250) target = $region70
        $region69: #{model_forward.15} parent=65 // pred_region
          _
        $region70: #{model_forward.15} parent=65 // pred_fallthru
          _
        %s253 = sand.u32 %s22, 1
        %s254 = sand.u32 %s22, 1
        %s255 = smul.addr %s254, 144
        %s256 = scalar_lea.vmem [#allocation2], %s255
        %p257 = pneg %p35
        %p258 = pneg %p32
        %p259 = pneg %p56
        %p260 = pneg %p53
        %p261 = pneg %p77
        %p262 = pneg %p74
        %p263 = pneg %p103
        %p264 = pneg %p100
        %s265 = sand.u32 %s90, 1
        %s266 = sand.u32 %s90, 1
        %s267 = smul.addr %s266, 32
        %s268 = scalar_lea.vmem [#allocation3], %s267
        %s269 = smul.u32 2, %s14
        %s270 = smul.u32 2, %s14
        %v272 = vld [vmem:[%s1] sm:$0xff]
        %v273 = vld [vmem:[%s1 + $0x8] sm:$0xff]
        %v274 = vld [vmem:[%s1 + $0x10] sm:$0xff]
        %v275 = vld [vmem:[%s1 + $0x18] sm:$0xff]
        %v276 = vld [vmem:[%s249] sm:$0xff]
        %v277 = vld [vmem:[%s249 + $0x8] sm:$0xff]
        %v278 = vld [vmem:[%s249 + $0x10] sm:$0xff]
        %v279 = vld [vmem:[%s249 + $0x18] sm:$0xff]
        %v280 = vld [vmem:[%s249 + $0x20] sm:$0xff]
        %v281 = vld [vmem:[%s249 + $0x28] sm:$0xff]
        %v282 = vld [vmem:[%s249 + $0x30] sm:$0xff]
        %v283 = vld [vmem:[%s249 + $0x38] sm:$0xff]
        %v284 = vld [vmem:[%s249 + $0x40] sm:$0xff]
        %v285 = vld [vmem:[%s249 + $0x48] sm:$0xff]
        %v286 = vld [vmem:[%s249 + $0x50] sm:$0xff]
        %v287 = vld [vmem:[%s249 + $0x58] sm:$0xff]
        %v288 = vld [vmem:[%s249 + $0x60] sm:$0xff]
        %v289 = vld [vmem:[%s249 + $0x68] sm:$0xff]
        %v290 = vld [vmem:[%s249 + $0x70] sm:$0xff]
        %v291 = vld [vmem:[%s249 + $0x78] sm:$0xff]
        %v292 = vld [vmem:[%s249 + $0x80] sm:$0xff]
        %v293 = vld [vmem:[%s249 + $0x88] sm:$0xff]
        %v294 = vld [vmem:[%s2] sm:$0xff]
        %v295 = vld [vmem:[%s2 + $0x8] sm:$0xff]
        %v296 = vld [vmem:[%s2 + $0x10] sm:$0xff]
        %v297 = vld [vmem:[%s2 + $0x18] sm:$0xff]
        %299 = vset.pattern.permute.xlu0 0
        %300 = vperm.xlu0 %299, %v294
        %v301 = vpop.permute.xlu0 %300
        %304 = vset.pattern.permute.xlu0 0
        %305 = vperm.xlu0 %304, %v295
        %v306 = vpop.permute.xlu0 %305
        %309 = vset.pattern.permute.xlu0 0
        %310 = vperm.xlu0 %309, %v296
        %v311 = vpop.permute.xlu0 %310
        %314 = vset.pattern.permute.xlu0 0
        %315 = vperm.xlu0 %314, %v297
        %v316 = vpop.permute.xlu0 %315
        %v322 = vunpack.c.l.b16 %v272
        %v323 = vunpack.c.h.b16 %v272
        %v324 = vunpack.c.l.b16 %v273
        %v325 = vunpack.c.h.b16 %v273
        %v326 = vunpack.c.l.b16 %v274
        %v327 = vunpack.c.h.b16 %v274
        %v328 = vunpack.c.l.b16 %v275
        %v329 = vunpack.c.h.b16 %v275
        %v330 = vpack.c.b16 %v324, %v322
        %v331 = vpack.c.b16 %v325, %v323
        %v332 = vpack.c.b16 %v328, %v326
        %v333 = vpack.c.b16 %v329, %v327
        %v354 = vunpack.c.l.b16 %v276
        %v355 = vunpack.c.h.b16 %v276
        %v356 = vunpack.c.l.b16 %v277
        %v357 = vunpack.c.h.b16 %v277
        %v358 = vunpack.c.l.b16 %v278
        %v359 = vunpack.c.h.b16 %v278
        %v360 = vunpack.c.l.b16 %v279
        %v361 = vunpack.c.h.b16 %v279
        %v362 = vunpack.c.l.b16 %v280
        %v363 = vunpack.c.h.b16 %v280
        %v364 = vunpack.c.l.b16 %v281
        %v365 = vunpack.c.h.b16 %v281
        %v366 = vunpack.c.l.b16 %v282
        %v367 = vunpack.c.h.b16 %v282
        %v368 = vunpack.c.l.b16 %v283
        %v369 = vunpack.c.h.b16 %v283
        %v370 = vunpack.c.l.b16 %v284
        %v371 = vunpack.c.h.b16 %v284
        %v372 = vunpack.c.l.b16 %v285
        %v373 = vunpack.c.h.b16 %v285
        %v374 = vunpack.c.l.b16 %v286
        %v375 = vunpack.c.h.b16 %v286
        %v376 = vunpack.c.l.b16 %v287
        %v377 = vunpack.c.h.b16 %v287
        %v378 = vunpack.c.l.b16 %v288
        %v379 = vunpack.c.h.b16 %v288
        %v380 = vunpack.c.l.b16 %v289
        %v381 = vunpack.c.h.b16 %v289
        %v382 = vunpack.c.l.b16 %v290
        %v383 = vunpack.c.h.b16 %v290
        %v384 = vunpack.c.l.b16 %v291
        %v385 = vunpack.c.h.b16 %v291
        %v386 = vunpack.c.l.b16 %v292
        %v387 = vunpack.c.h.b16 %v292
        %v388 = vunpack.c.l.b16 %v293
        %v389 = vunpack.c.h.b16 %v293
        %v390 = vpack.c.b16 %v356, %v354
        %v391 = vpack.c.b16 %v357, %v355
        %v392 = vpack.c.b16 %v360, %v358
        %v393 = vpack.c.b16 %v361, %v359
        %v394 = vpack.c.b16 %v364, %v362
        %v395 = vpack.c.b16 %v365, %v363
        %v396 = vpack.c.b16 %v368, %v366
        %v397 = vpack.c.b16 %v369, %v367
        %v398 = vpack.c.b16 %v372, %v370
        %v399 = vpack.c.b16 %v373, %v371
        %v400 = vpack.c.b16 %v376, %v374
        %v401 = vpack.c.b16 %v377, %v375
        %v402 = vpack.c.b16 %v380, %v378
        %v403 = vpack.c.b16 %v381, %v379
        %v404 = vpack.c.b16 %v384, %v382
        %v405 = vpack.c.b16 %v385, %v383
        %v406 = vpack.c.b16 %v388, %v386
        %v407 = vpack.c.b16 %v389, %v387
        %vm426 = vcmask 130048
        %v428 = vsel %vm426, %v331, 0
        %v431 = vsel %vm426, %v333, 0
        %433 = vmatprep.subr.bf16.mxu0 %v405
        %434 = vmatpush1.bf16.msra.mxu0 %v404
        %435 = vmatprep.subr.bf16.mxu0 %v403
        %436 = vmatpush1.bf16.msra.mxu0 %v402
        %437 = vmatprep.subr.bf16.mxu0 %v401
        %438 = vmatpush1.bf16.msra.mxu0 %v400
        %439 = vmatprep.subr.bf16.mxu0 %v399
        %440 = vmatpush1.bf16.msra.mxu0 %v398
        %441 = vmatprep.subr.bf16.mxu0 %v397
        %442 = vmatpush1.bf16.msra.mxu0 %v396
        %443 = vmatprep.subr.bf16.mxu0 %v395
        %444 = vmatpush1.bf16.msra.mxu0 %v394
        %445 = vmatprep.subr.bf16.mxu0 %v393
        %446 = vmatpush1.bf16.msra.mxu0 %v392
        %447 = vmatprep.subr.bf16.mxu0 %v391
        %448 = vmatpush1.bf16.msra.mxu0 %v390
        %449 = vmatprep.subr.bf16.mxu0 0
        %450 = vmatpush2.bf16.msra.mxu0 0
        %451 = vmatprep.subr.bf16.mxu0 0
        %452 = vmatpush2.bf16.msra.mxu0 0
        %453 = vmatprep.subr.bf16.mxu0 0
        %454 = vmatpush2.bf16.msra.mxu0 0
        %455 = vmatprep.subr.bf16.mxu0 0
        %456 = vmatpush2.bf16.msra.mxu0 0
        %457 = vmatprep.subr.bf16.mxu0 0
        %458 = vmatpush2.bf16.msra.mxu0 0
        %459 = vmatprep.subr.bf16.mxu0 0
        %460 = vmatpush2.bf16.msra.mxu0 0
        %461 = vmatprep.subr.bf16.mxu0 0
        %462 = vmatpush2.bf16.msra.mxu0 0
        %463 = vmatprep.subr.bf16.mxu0 %v407
        %464 = vmatpush2.bf16.msra.mxu0 %v406
        %465 = vmatprep.mubr.bf16.mxu0 %v428
        %466 = vmatmul.mubr.bf16.gmra.mxu0 %v330
        %v467 = vpop.f32.mrf.mxu0
        %v468 = vadd.f32 %v301, %v467
        %v469 = vpop.f32.mrf.mxu0
        %v470 = vadd.f32 %v301, %v469
        %v471 = vpop.f32.mrf.mxu0
        %v472 = vadd.f32 %v306, %v471
        %v473 = vpop.f32.mrf.mxu0
        %v474 = vadd.f32 %v306, %v473
        %475 = vmatprep.mubr.bf16.mxu0 %v431
        %476 = vmatmul.mubr.bf16.gmra.mxu0 %v332
        %v477 = vpop.f32.mrf.mxu0
        %v478 = vadd.f32 %v311, %v477
        %v479 = vpop.f32.mrf.mxu0
        %v480 = vadd.f32 %v311, %v479
        %v481 = vpop.f32.mrf.mxu0
        %v482 = vadd.f32 %v316, %v481
        %v483 = vpop.f32.mrf.mxu0
        %v484 = vadd.f32 %v316, %v483
        %485 = vdwg.mxu0
        %vm486 = vcmp.ge.f32.partialorder %v468, 0.0
        %vm487 = vcmp.ge.f32.partialorder %v470, 0.0
        %vm488 = vcmp.ge.f32.partialorder %v472, 0.0
        %vm489 = vcmp.ge.f32.partialorder %v474, 0.0
        %vm490 = vcmp.ge.f32.partialorder %v478, 0.0
        %vm491 = vcmp.ge.f32.partialorder %v480, 0.0
        %vm492 = vcmp.ge.f32.partialorder %v482, 0.0
        %vm493 = vcmp.ge.f32.partialorder %v484, 0.0
        %v494 = vmul.f32 %v468, 0.01
        %v495 = vmul.f32 %v470, 0.01
        %v496 = vmul.f32 %v472, 0.01
        %v497 = vmul.f32 %v474, 0.01
        %v498 = vmul.f32 %v478, 0.01
        %v499 = vmul.f32 %v480, 0.01
        %v500 = vmul.f32 %v482, 0.01
        %v501 = vmul.f32 %v484, 0.01
        %v502 = vsel %vm486, %v468, %v494
        %v503 = vsel %vm487, %v470, %v495
        %v504 = vsel %vm488, %v472, %v496
        %v505 = vsel %vm489, %v474, %v497
        %v506 = vsel %vm490, %v478, %v498
        %v507 = vsel %vm491, %v480, %v499
        %v508 = vsel %vm492, %v482, %v500
        %v509 = vsel %vm493, %v484, %v501
        %v510 = vpack.c.bf16 %v504, %v502
        %v511 = vpack.c.bf16 %v505, %v503
        %v512 = vpack.c.bf16 %v508, %v506
        %v513 = vpack.c.bf16 %v509, %v507
        %v518 = vunpack.c.l.b16 %v510
        %v519 = vunpack.c.l.b16 %v511
        %v520 = vunpack.c.h.b16 %v510
        %v521 = vunpack.c.h.b16 %v511
        %v522 = vunpack.c.l.b16 %v512
        %v523 = vunpack.c.l.b16 %v513
        %v524 = vunpack.c.h.b16 %v512
        %v525 = vunpack.c.h.b16 %v513
        %v526 = vpack.c.b16 %v519, %v518
        %v527 = vpack.c.b16 %v521, %v520
        %v528 = vpack.c.b16 %v523, %v522
        %v529 = vpack.c.b16 %v525, %v524
        %534 = vst [vmem:[%s268] sm:$0xff] %v526
        %535 = vst [vmem:[%s268 + $0x8] sm:$0xff] %v527
        %536 = vst [vmem:[%s268 + $0x10] sm:$0xff] %v528
        %537 = vst [vmem:[%s268 + $0x18] sm:$0xff] %v529
        %s538 = sand.u32 %s90, 1
        %s539 = sand.u32 %s90, 1
        %s540 = smul.addr %s539, 32
        %s541 = scalar_lea.vmem [#allocation3], %s540
        // Predicated region
        $region71: #{model_forward.15} parent=65 // pred_check
          %p542 = pneg %p100
        $region72: #{model_forward.15} parent=65 // pred_check_branch
          %544 = sbr.rel (%p542) target = $region74
        $region73: #{model_forward.15} parent=65 // pred_region
          %s545 = smul.u32 2, %s14
          %s546 = smul.addr %s545, 4
          %s547 = scalar_lea.vmem %s3, %s546
          // Predicated region
          $region75: #{model_forward.15} parent=73 // pred_check
            _
          $region76: #{model_forward.15} parent=73 // pred_check_branch
            %549 = sbr.rel (0) target = $region78
          $region77: #{model_forward.15} parent=73 // pred_region
            // Predicated region
            $region79: #{model_forward.15} parent=77 // pred_check
              _
            $region80: #{model_forward.15} parent=77 // pred_check_branch
              %551 = sbr.rel (0) target = $region82
            $region81: #{model_forward.15} parent=77 // pred_region
              // Predicated region
              $region94: #{model_forward.15} parent=81 // pred_check
                _
              $region95: #{model_forward.15} parent=81 // pred_check_branch
                %573 = sbr.rel (0) target = $region97
              $region96: #{model_forward.15} parent=81 // pred_region
                loop: start=0, step=1, limit=1
                $region98: #{model_forward.15} parent=96 // loop_pre_header
                  _
                $region99: #{model_forward.15} parent=96 // loop_header
                  %s575 = sphi 0, %s579
                  %p576 = scmp.ge.s32.totalorder %s575, 1
                  %s580 = sphi %s541, %s541
                  %s581 = sphi %s547, %s547
                $region100: #{model_forward.15} parent=96 // loop_header_branch
                  %578 = sbr.rel (%p576) target = $region104
                $region101: #{model_forward.15} parent=96 // loop_body
                  %v582 = vld [vmem:[%s580] sm:$0xff]
                  %583 = vst [vmem:[%s581] sm:$0xff] %v582
                  %v584 = vld [vmem:[%s580 + $0x8] sm:$0xff]
                  %585 = vst [vmem:[%s581 + $0x10] sm:$0xff] %v584
                  %v586 = vld [vmem:[%s580 + $0x10] sm:$0xff]
                  %587 = vst [vmem:[%s581 + $0x20] sm:$0xff] %v586
                  %v588 = vld [vmem:[%s580 + $0x18] sm:$0xff]
                  %589 = vst [vmem:[%s581 + $0x30] sm:$0xff] %v588
                $region102: #{model_forward.15} parent=96 // loop_footer
                  %s579 = sadd.s32 1, %s575
                $region103: #{model_forward.15} parent=96 // loop_footer_branch
                  %574 = sbr.rel target = $region99
                $region104: #{model_forward.15} parent=96 // loop_exit
                  _
              $region97: #{model_forward.15} parent=81 // pred_fallthru
                _
              // Predicated region
              $region105: #{model_forward.15} parent=81 // pred_check
                _
              $region106: #{model_forward.15} parent=81 // pred_check_branch
                %591 = sbr.rel target = $region108
              $region107: #{model_forward.15} parent=81 // pred_region
                _
              $region108: #{model_forward.15} parent=81 // pred_fallthru
                _
            $region82: #{model_forward.15} parent=77 // pred_fallthru
              _
            // Predicated region
            $region83: #{model_forward.15} parent=77 // pred_check
              _
            $region84: #{model_forward.15} parent=77 // pred_check_branch
              %553 = sbr.rel target = $region86
            $region85: #{model_forward.15} parent=77 // pred_region
              %s555 = ssub.s32 256, 1
              loop: start=0, step=1, limit=1
              $region87: #{model_forward.15} parent=85 // loop_pre_header
                _
              $region88: #{model_forward.15} parent=85 // loop_header
                %s557 = sphi 0, %s561
                %p558 = scmp.ge.s32.totalorder %s557, 1
                %s562 = sphi %s541, %s541
                %s563 = sphi %s547, %s547
              $region89: #{model_forward.15} parent=85 // loop_header_branch
                %560 = sbr.rel (%p558) target = $region93
              $region90: #{model_forward.15} parent=85 // loop_body
                %v564 = vld [vmem:[%s562] sm:%s555]
                %565 = vst [vmem:[%s563] sm:%s555] %v564
                %v566 = vld [vmem:[%s562 + $0x8] sm:%s555]
                %567 = vst [vmem:[%s563 + $0x10] sm:%s555] %v566
                %v568 = vld [vmem:[%s562 + $0x10] sm:%s555]
                %569 = vst [vmem:[%s563 + $0x20] sm:%s555] %v568
                %v570 = vld [vmem:[%s562 + $0x18] sm:%s555]
                %571 = vst [vmem:[%s563 + $0x30] sm:%s555] %v570
              $region91: #{model_forward.15} parent=85 // loop_footer
                %s561 = sadd.s32 1, %s557
              $region92: #{model_forward.15} parent=85 // loop_footer_branch
                %556 = sbr.rel target = $region88
              $region93: #{model_forward.15} parent=85 // loop_exit
                _
            $region86: #{model_forward.15} parent=77 // pred_fallthru
              _
          $region78: #{model_forward.15} parent=73 // pred_fallthru
            _
          %592 = vnop
        $region74: #{model_forward.15} parent=65 // pred_fallthru
          _
      $region66: #{model_forward.15} parent=5 // pred_fallthru
        _
      %p593 = scmp.le.s32.totalorder 2, %s9
      // Predicated region
      $region109: #{model_forward.15} parent=5 // pred_check
        %p594 = pneg %p593
      $region110: #{model_forward.15} parent=5 // pred_check_branch
        %596 = sbr.rel (%p594) target = $region112
      $region111: #{model_forward.15} parent=5 // pred_region
        %s597 = ssub.s32 %s9, 2
        // Predicated region
        $region113: #{model_forward.15} parent=111 // pred_check
          %p598 = pneg %p106
        $region114: #{model_forward.15} parent=111 // pred_check_branch
          %600 = sbr.rel (%p598) target = $region116
        $region115: #{model_forward.15} parent=111 // pred_region
          %s601 = sand.u32 %s91, 1
          %s602 = sand.u32 %s91, 1
          %s603 = smul.addr %s602, 32
          %s604 = scalar_lea.vmem [#allocation3], %s603
        $region116: #{model_forward.15} parent=111 // pred_fallthru
          _
      $region112: #{model_forward.15} parent=5 // pred_fallthru
        _
    $region6: #{model_forward.15} parent=1 // loop_footer
      %s13 = sadd.s32 1, %s9
    $region7: #{model_forward.15} parent=1 // loop_footer_branch
      %8 = sbr.rel target = $region3
    $region8: #{model_forward.15} parent=1 // loop_exit
      _

// kernel: model_forward.16
$region0: #{model_forward.16}
  #allocation0 [shape = 'u32[]', space=smem, size = 0x4, offset = 0x4, fixed_abs, tag = 'smem constant byte address 0x4 - core index']
  #allocation1 [shape = 'u32[144,128]{1,0:T(1,128)}', space=vmem, size = 0x12000, scoped, tag = 'internal scratch']
  %s0 = inlined_call_operand.vmem [shape: bf16[72,2048], index: 0, kind: input, shape index: {}]
  %s1 = inlined_call_operand.vmem [shape: bf16[16,72], index: 1, kind: input, shape index: {}]
  %s2 = inlined_call_operand.vmem [shape: f32[16,1], index: 2, kind: input, shape index: {}]
  %s3 = inlined_call_operand.vmem [shape: bf16[16,2048], index: 3, kind: output, shape index: {}]
  %s4 = sld [smem:[#allocation0]]
  $region87: #{model_forward.16} parent=0
    _
  %s6 = ssub.s32 1, %s4
  %s7 = scalar_select 0, %s6, %s4
  $region1: #{model_forward.16} parent=0
    #allocation2 [shape = 'u8[294912]{0}', space=vmem, size = 0x48000, scoped, tag = 'input window, operand 0']
    #allocation3 [shape = 'u8[65536]{0}', space=vmem, size = 0x10000, scoped, tag = 'output window, operand 0']
    loop: start=0, step=1, limit=4
    $region2: #{model_forward.16} parent=1 // loop_pre_header
      _
    $region3: #{model_forward.16} parent=1 // loop_header
      %s9 = sphi 0, %s13
      %p10 = scmp.ge.s32.totalorder %s9, 4
      %s19 = sphi 0, %s21
      %s22 = sphi 0, %s19
      %s23 = sphi 0, %s22
      %s39 = sphi 0, %s23
      %s43 = sphi 0, %s43
      %s45 = sphi 0, %s43
      %s46 = sphi 0, %s45
      %s60 = sphi 0, %s46
      %s64 = sphi 0, %s64
      %s66 = sphi 0, %s64
      %s67 = sphi 0, %s66
      %s81 = sphi 0, %s67
      %s87 = sphi 0, %s89
      %s90 = sphi 0, %s87
      %s91 = sphi 0, %s90
      %s107 = sphi 0, %s91
    $region4: #{model_forward.16} parent=1 // loop_header_branch
      %12 = sbr.rel (%p10) target = $region8
    $region5: #{model_forward.16} parent=1 // loop_body
      %s14 = ssub.s32 %s9, 1
      %s15 = ssub.s32 %s9, 2
      %s16 = sadd.s32 %s9, 1
      %s17 = ssub.s32 %s9, %s16
      %p18 = scmp.eq.s32.totalorder %s17, 0
      %s20 = sadd.s32 %s19, 1
      %s21 = scalar_select %p18, %s19, %s20
      %p24 = pneg %p18
      %p25 = scmp.eq.s32.totalorder %s9, 1
      %p26 = por %p24, %p25
      %p27 = scmp.ne.s32.totalorder %s19, %s22
      %p28 = scmp.eq.s32.totalorder %s9, 0
      %p29 = por %p27, %p28
      %p30 = scmp.ne.s32.totalorder %s19, %s22
      %p31 = scmp.eq.s32.totalorder %s14, 1
      %p32 = por %p30, %p31
      %p33 = scmp.ne.s32.totalorder %s22, %s23
      %p34 = scmp.eq.s32.totalorder %s14, 0
      %p35 = por %p33, %p34
      %p36 = scmp.ne.s32.totalorder %s22, %s23
      %p37 = scmp.eq.s32.totalorder %s15, 1
      %p38 = por %p36, %p37
      %p40 = scmp.ne.s32.totalorder %s23, %s39
      %p41 = scmp.eq.s32.totalorder %s15, 0
      %p42 = por %p40, %p41
      %s44 = sadd.s32 %s43, 1
      %p47 = scmp.eq.s32.totalorder %s9, 1
      %p48 = scmp.ne.s32.totalorder %s43, %s45
      %p49 = scmp.eq.s32.totalorder %s9, 0
      %p50 = por %p48, %p49
      %p51 = scmp.ne.s32.totalorder %s43, %s45
      %p52 = scmp.eq.s32.totalorder %s14, 1
      %p53 = por %p51, %p52
      %p54 = scmp.ne.s32.totalorder %s45, %s46
      %p55 = scmp.eq.s32.totalorder %s14, 0
      %p56 = por %p54, %p55
      %p57 = scmp.ne.s32.totalorder %s45, %s46
      %p58 = scmp.eq.s32.totalorder %s15, 1
      %p59 = por %p57, %p58
      %p61 = scmp.ne.s32.totalorder %s46, %s60
      %p62 = scmp.eq.s32.totalorder %s15, 0
      %p63 = por %p61, %p62
      %s65 = sadd.s32 %s64, 1
      %p68 = scmp.eq.s32.totalorder %s9, 1
      %p69 = scmp.ne.s32.totalorder %s64, %s66
      %p70 = scmp.eq.s32.totalorder %s9, 0
      %p71 = por %p69, %p70
      %p72 = scmp.ne.s32.totalorder %s64, %s66
      %p73 = scmp.eq.s32.totalorder %s14, 1
      %p74 = por %p72, %p73
      %p75 = scmp.ne.s32.totalorder %s66, %s67
      %p76 = scmp.eq.s32.totalorder %s14, 0
      %p77 = por %p75, %p76
      %p78 = scmp.ne.s32.totalorder %s66, %s67
      %p79 = scmp.eq.s32.totalorder %s15, 1
      %p80 = por %p78, %p79
      %p82 = scmp.ne.s32.totalorder %s67, %s81
      %p83 = scmp.eq.s32.totalorder %s15, 0
      %p84 = por %p82, %p83
      %s85 = ssub.s32 %s9, %s16
      %p86 = scmp.eq.s32.totalorder %s85, 0
      %s88 = sadd.s32 %s87, 1
      %s89 = scalar_select %p86, %s87, %s88
      %p92 = pneg %p86
      %p93 = scmp.eq.s32.totalorder %s9, 1
      %p94 = por %p92, %p93
      %p95 = scmp.ne.s32.totalorder %s87, %s90
      %p96 = scmp.eq.s32.totalorder %s9, 0
      %p97 = por %p95, %p96
      %p98 = scmp.ne.s32.totalorder %s87, %s90
      %p99 = scmp.eq.s32.totalorder %s14, 1
      %p100 = por %p98, %p99
      %p101 = scmp.ne.s32.totalorder %s90, %s91
      %p102 = scmp.eq.s32.totalorder %s14, 0
      %p103 = por %p101, %p102
      %p104 = scmp.ne.s32.totalorder %s90, %s91
      %p105 = scmp.eq.s32.totalorder %s15, 1
      %p106 = por %p104, %p105
      %p108 = scmp.ne.s32.totalorder %s91, %s107
      %p109 = scmp.eq.s32.totalorder %s15, 0
      %p110 = por %p108, %p109
      %p111 = scmp.le.s32.totalorder 1, %s9
      %p112 = scmp.lt.s32.totalorder %s9, 3
      %p113 = pnand %p111, %p112
      %p114 = pneg %p113
      // Predicated region
      $region9: #{model_forward.16} parent=5 // pred_check
        _
      $region10: #{model_forward.16} parent=5 // pred_check_branch
        %116 = sbr.rel (%p113) target = $region12
      $region11: #{model_forward.16} parent=5 // pred_region
        %s117 = ssub.s32 %s9, 1
        // Predicated region
        $region13: #{model_forward.16} parent=11 // pred_check
          %p118 = pneg %p56
        $region14: #{model_forward.16} parent=11 // pred_check_branch
          %120 = sbr.rel (%p118) target = $region16
        $region15: #{model_forward.16} parent=11 // pred_region
          _
        $region16: #{model_forward.16} parent=11 // pred_fallthru
          _
        // Predicated region
        $region17: #{model_forward.16} parent=11 // pred_check
          %p121 = pneg %p77
        $region18: #{model_forward.16} parent=11 // pred_check_branch
          %123 = sbr.rel (%p121) target = $region20
        $region19: #{model_forward.16} parent=11 // pred_region
          _
        $region20: #{model_forward.16} parent=11 // pred_fallthru
          _
      $region12: #{model_forward.16} parent=5 // pred_fallthru
        _
      %p124 = scmp.lt.s32.totalorder %s9, 2
      // Predicated region
      $region21: #{model_forward.16} parent=5 // pred_check
        %p125 = pneg %p124
      $region22: #{model_forward.16} parent=5 // pred_check_branch
        %127 = sbr.rel (%p125) target = $region24
      $region23: #{model_forward.16} parent=5 // pred_region
        // Predicated region
        $region25: #{model_forward.16} parent=23 // pred_check
          %p128 = pneg %p29
        $region26: #{model_forward.16} parent=23 // pred_check_branch
          %130 = sbr.rel (%p128) target = $region28
        $region27: #{model_forward.16} parent=23 // pred_region
          %s131 = sand.u32 %s19, 1
          %s132 = sand.u32 %s19, 1
          %s133 = smul.addr %s132, 288
          %s134 = scalar_lea.vmem [#allocation2], %s133
          %s135 = smul.u32 8, %s9
          %s136 = smul.addr %s135, 4
          %s137 = scalar_lea.vmem %s0, %s136
          // Predicated region
          $region29: #{model_forward.16} parent=27 // pred_check
            _
          $region30: #{model_forward.16} parent=27 // pred_check_branch
            %139 = sbr.rel (0) target = $region32
          $region31: #{model_forward.16} parent=27 // pred_region
            // Predicated region
            $region33: #{model_forward.16} parent=31 // pred_check
              _
            $region34: #{model_forward.16} parent=31 // pred_check_branch
              %141 = sbr.rel (0) target = $region36
            $region35: #{model_forward.16} parent=31 // pred_region
              loop: start=0, step=1, limit=1
              $region37: #{model_forward.16} parent=35 // loop_pre_header
                _
              $region38: #{model_forward.16} parent=35 // loop_header
                %s143 = sphi 0, %s147
                %p144 = scmp.ge.s32.totalorder %s143, 1
                %s148 = sphi %s137, %s137
                %s149 = sphi %s134, %s134
              $region39: #{model_forward.16} parent=35 // loop_header_branch
                %146 = sbr.rel (%p144) target = $region43
              $region40: #{model_forward.16} parent=35 // loop_body
                %v150 = vld [vmem:[%s148] sm:$0xff]
                %151 = vst [vmem:[%s149] sm:$0xff] %v150
                %v152 = vld [vmem:[%s148 + $0x8] sm:$0xff]
                %153 = vst [vmem:[%s149 + $0x8] sm:$0xff] %v152
                %v154 = vld [vmem:[%s148 + $0x10] sm:$0xff]
                %155 = vst [vmem:[%s149 + $0x10] sm:$0xff] %v154
                %v156 = vld [vmem:[%s148 + $0x18] sm:$0xff]
                %157 = vst [vmem:[%s149 + $0x18] sm:$0xff] %v156
                %v158 = vld [vmem:[%s148 + $0x40] sm:$0xff]
                %159 = vst [vmem:[%s149 + $0x20] sm:$0xff] %v158
                %v160 = vld [vmem:[%s148 + $0x48] sm:$0xff]
                %161 = vst [vmem:[%s149 + $0x28] sm:$0xff] %v160
                %v162 = vld [vmem:[%s148 + $0x50] sm:$0xff]
                %163 = vst [vmem:[%s149 + $0x30] sm:$0xff] %v162
                %v164 = vld [vmem:[%s148 + $0x58] sm:$0xff]
                %165 = vst [vmem:[%s149 + $0x38] sm:$0xff] %v164
                %v166 = vld [vmem:[%s148 + $0x80] sm:$0xff]
                %167 = vst [vmem:[%s149 + $0x40] sm:$0xff] %v166
                %v168 = vld [vmem:[%s148 + $0x88] sm:$0xff]
                %169 = vst [vmem:[%s149 + $0x48] sm:$0xff] %v168
                %v170 = vld [vmem:[%s148 + $0x90] sm:$0xff]
                %171 = vst [vmem:[%s149 + $0x50] sm:$0xff] %v170
                %v172 = vld [vmem:[%s148 + $0x98] sm:$0xff]
                %173 = vst [vmem:[%s149 + $0x58] sm:$0xff] %v172
                %v174 = vld [vmem:[%s148 + $0xc0] sm:$0xff]
                %175 = vst [vmem:[%s149 + $0x60] sm:$0xff] %v174
                %v176 = vld [vmem:[%s148 + $0xc8] sm:$0xff]
                %177 = vst [vmem:[%s149 + $0x68] sm:$0xff] %v176
                %v178 = vld [vmem:[%s148 + $0xd0] sm:$0xff]
                %179 = vst [vmem:[%s149 + $0x70] sm:$0xff] %v178
                %v180 = vld [vmem:[%s148 + $0xd8] sm:$0xff]
                %181 = vst [vmem:[%s149 + $0x78] sm:$0xff] %v180
                %v182 = vld [vmem:[%s148 + $0x100] sm:$0xff]
                %183 = vst [vmem:[%s149 + $0x80] sm:$0xff] %v182
                %v184 = vld [vmem:[%s148 + $0x108] sm:$0xff]
                %185 = vst [vmem:[%s149 + $0x88] sm:$0xff] %v184
                %v186 = vld [vmem:[%s148 + $0x110] sm:$0xff]
                %187 = vst [vmem:[%s149 + $0x90] sm:$0xff] %v186
                %v188 = vld [vmem:[%s148 + $0x118] sm:$0xff]
                %189 = vst [vmem:[%s149 + $0x98] sm:$0xff] %v188
                %v190 = vld [vmem:[%s148 + $0x140] sm:$0xff]
                %191 = vst [vmem:[%s149 + $0xa0] sm:$0xff] %v190
                %v192 = vld [vmem:[%s148 + $0x148] sm:$0xff]
                %193 = vst [vmem:[%s149 + $0xa8] sm:$0xff] %v192
                %v194 = vld [vmem:[%s148 + $0x150] sm:$0xff]
                %195 = vst [vmem:[%s149 + $0xb0] sm:$0xff] %v194
                %v196 = vld [vmem:[%s148 + $0x158] sm:$0xff]
                %197 = vst [vmem:[%s149 + $0xb8] sm:$0xff] %v196
                %v198 = vld [vmem:[%s148 + $0x180] sm:$0xff]
                %199 = vst [vmem:[%s149 + $0xc0] sm:$0xff] %v198
                %v200 = vld [vmem:[%s148 + $0x188] sm:$0xff]
                %201 = vst [vmem:[%s149 + $0xc8] sm:$0xff] %v200
                %v202 = vld [vmem:[%s148 + $0x190] sm:$0xff]
                %203 = vst [vmem:[%s149 + $0xd0] sm:$0xff] %v202
                %v204 = vld [vmem:[%s148 + $0x198] sm:$0xff]
                %205 = vst [vmem:[%s149 + $0xd8] sm:$0xff] %v204
                %v206 = vld [vmem:[%s148 + $0x1c0] sm:$0xff]
                %207 = vst [vmem:[%s149 + $0xe0] sm:$0xff] %v206
                %v208 = vld [vmem:[%s148 + $0x1c8] sm:$0xff]
                %209 = vst [vmem:[%s149 + $0xe8] sm:$0xff] %v208
                %v210 = vld [vmem:[%s148 + $0x1d0] sm:$0xff]
                %211 = vst [vmem:[%s149 + $0xf0] sm:$0xff] %v210
                %v212 = vld [vmem:[%s148 + $0x1d8] sm:$0xff]
                %213 = vst [vmem:[%s149 + $0xf8] sm:$0xff] %v212
                %v214 = vld [vmem:[%s148 + $0x200] sm:$0xff]
                %215 = vst [vmem:[%s149 + $0x100] sm:$0xff] %v214
                %v216 = vld [vmem:[%s148 + $0x208] sm:$0xff]
                %217 = vst [vmem:[%s149 + $0x108] sm:$0xff] %v216
                %v218 = vld [vmem:[%s148 + $0x210] sm:$0xff]
                %219 = vst [vmem:[%s149 + $0x110] sm:$0xff] %v218
                %v220 = vld [vmem:[%s148 + $0x218] sm:$0xff]
                %221 = vst [vmem:[%s149 + $0x118] sm:$0xff] %v220
              $region41: #{model_forward.16} parent=35 // loop_footer
                %s147 = sadd.s32 1, %s143
              $region42: #{model_forward.16} parent=35 // loop_footer_branch
                %142 = sbr.rel target = $region38
              $region43: #{model_forward.16} parent=35 // loop_exit
                _
            $region36: #{model_forward.16} parent=31 // pred_fallthru
              _
            // Predicated region
            $region44: #{model_forward.16} parent=31 // pred_check
              _
            $region45: #{model_forward.16} parent=31 // pred_check_branch
              %223 = sbr.rel target = $region47
            $region46: #{model_forward.16} parent=31 // pred_region
              _
            $region47: #{model_forward.16} parent=31 // pred_fallthru
              _
          $region32: #{model_forward.16} parent=27 // pred_fallthru
            _
          %224 = vnop
        $region28: #{model_forward.16} parent=23 // pred_fallthru
          _
      $region24: #{model_forward.16} parent=5 // pred_fallthru
        _
      %p225 = scmp.le.s32.totalorder 1, %s9
      %p226 = scmp.lt.s32.totalorder %s9, 3
      %p227 = pnand %p225, %p226
      %p228 = pneg %p227
      // Predicated region
      $region48: #{model_forward.16} parent=5 // pred_check
        _
      $region49: #{model_forward.16} parent=5 // pred_check_branch
        %230 = sbr.rel (%p227) target = $region51
      $region50: #{model_forward.16} parent=5 // pred_region
        %s231 = ssub.s32 %s9, 1
        %s232 = sand.u32 %s22, 1
        %s233 = sand.u32 %s22, 1
        %s234 = smul.addr %s233, 288
        %s235 = scalar_lea.vmem [#allocation2], %s234
        // Predicated region
        $region52: #{model_forward.16} parent=50 // pred_check
          %p236 = pneg %p35
        $region53: #{model_forward.16} parent=50 // pred_check_branch
          %238 = sbr.rel (%p236) target = $region55
        $region54: #{model_forward.16} parent=50 // pred_region
          _
        $region55: #{model_forward.16} parent=50 // pred_fallthru
          _
        %s239 = sand.u32 %s22, 1
        %s240 = sand.u32 %s22, 1
        %s241 = smul.addr %s240, 288
        %s242 = scalar_lea.vmem [#allocation2], %s241
        %p243 = pneg %p35
        %p244 = pneg %p32
        %p245 = pneg %p56
        %p246 = pneg %p53
        %p247 = pneg %p77
        %p248 = pneg %p74
        %p249 = pneg %p103
        %p250 = pneg %p100
        %s251 = sand.u32 %s90, 1
        %s252 = sand.u32 %s90, 1
        %s253 = smul.addr %s252, 64
        %s254 = scalar_lea.vmem [#allocation3], %s253
        %s255 = smul.u32 8, %s14
        %s256 = smul.u32 8, %s14
        %v258 = vld [vmem:[%s1] sm:$0xf]
        %v259 = vld [vmem:[%s1 + $0x4] sm:$0xf]
        %v260 = vld [vmem:[%s235] sm:$0xff]
        %v261 = vld [vmem:[%s235 + $0x8] sm:$0xff]
        %v262 = vld [vmem:[%s235 + $0x10] sm:$0xff]
        %v263 = vld [vmem:[%s235 + $0x18] sm:$0xff]
        %v264 = vld [vmem:[%s235 + $0x20] sm:$0xff]
        %v265 = vld [vmem:[%s235 + $0x28] sm:$0xff]
        %v266 = vld [vmem:[%s235 + $0x30] sm:$0xff]
        %v267 = vld [vmem:[%s235 + $0x38] sm:$0xff]
        %v268 = vld [vmem:[%s235 + $0x40] sm:$0xff]
        %v269 = vld [vmem:[%s235 + $0x48] sm:$0xff]
        %v270 = vld [vmem:[%s235 + $0x50] sm:$0xff]
        %v271 = vld [vmem:[%s235 + $0x58] sm:$0xff]
        %v272 = vld [vmem:[%s235 + $0x60] sm:$0xff]
        %v273 = vld [vmem:[%s235 + $0x68] sm:$0xff]
        %v274 = vld [vmem:[%s235 + $0x70] sm:$0xff]
        %v275 = vld [vmem:[%s235 + $0x78] sm:$0xff]
        %v276 = vld [vmem:[%s235 + $0x80] sm:$0xff]
        %v277 = vld [vmem:[%s235 + $0x88] sm:$0xff]
        %v278 = vld [vmem:[%s235 + $0x90] sm:$0xff]
        %v279 = vld [vmem:[%s235 + $0x98] sm:$0xff]
        %v280 = vld [vmem:[%s235 + $0xa0] sm:$0xff]
        %v281 = vld [vmem:[%s235 + $0xa8] sm:$0xff]
        %v282 = vld [vmem:[%s235 + $0xb0] sm:$0xff]
        %v283 = vld [vmem:[%s235 + $0xb8] sm:$0xff]
        %v284 = vld [vmem:[%s235 + $0xc0] sm:$0xff]
        %v285 = vld [vmem:[%s235 + $0xc8] sm:$0xff]
        %v286 = vld [vmem:[%s235 + $0xd0] sm:$0xff]
        %v287 = vld [vmem:[%s235 + $0xd8] sm:$0xff]
        %v288 = vld [vmem:[%s235 + $0xe0] sm:$0xff]
        %v289 = vld [vmem:[%s235 + $0xe8] sm:$0xff]
        %v290 = vld [vmem:[%s235 + $0xf0] sm:$0xff]
        %v291 = vld [vmem:[%s235 + $0xf8] sm:$0xff]
        %v292 = vld [vmem:[%s235 + $0x100] sm:$0xff]
        %v293 = vld [vmem:[%s235 + $0x108] sm:$0xff]
        %v294 = vld [vmem:[%s235 + $0x110] sm:$0xff]
        %v295 = vld [vmem:[%s235 + $0x118] sm:$0xff]
        %v296 = vld [vmem:[%s2] sm:$0xff]
        %v297 = vld [vmem:[%s2 + $0x8] sm:$0xff]
        %299 = vset.pattern.permute.xlu0 0
        %300 = vperm.xlu0 %299, %v296
        %v301 = vpop.permute.xlu0 %300
        %304 = vset.pattern.permute.xlu0 0
        %305 = vperm.xlu0 %304, %v297
        %v306 = vpop.permute.xlu0 %305
        %v310 = vunpack.c.l.b16 %v258
        %v311 = vunpack.c.l.b16 %v259
        %v312 = vpack.c.b16 %v311, %v310
        %v349 = vunpack.c.l.b16 %v260
        %v350 = vunpack.c.h.b16 %v260
        %v351 = vunpack.c.l.b16 %v261
        %v352 = vunpack.c.h.b16 %v261
        %v353 = vunpack.c.l.b16 %v262
        %v354 = vunpack.c.h.b16 %v262
        %v355 = vunpack.c.l.b16 %v263
        %v356 = vunpack.c.h.b16 %v263
        %v357 = vunpack.c.l.b16 %v264
        %v358 = vunpack.c.h.b16 %v264
        %v359 = vunpack.c.l.b16 %v265
        %v360 = vunpack.c.h.b16 %v265
        %v361 = vunpack.c.l.b16 %v266
        %v362 = vunpack.c.h.b16 %v266
        %v363 = vunpack.c.l.b16 %v267
        %v364 = vunpack.c.h.b16 %v267
        %v365 = vunpack.c.l.b16 %v268
        %v366 = vunpack.c.h.b16 %v268
        %v367 = vunpack.c.l.b16 %v269
        %v368 = vunpack.c.h.b16 %v269
        %v369 = vunpack.c.l.b16 %v270
        %v370 = vunpack.c.h.b16 %v270
        %v371 = vunpack.c.l.b16 %v271
        %v372 = vunpack.c.h.b16 %v271
        %v373 = vunpack.c.l.b16 %v272
        %v374 = vunpack.c.h.b16 %v272
        %v375 = vunpack.c.l.b16 %v273
        %v376 = vunpack.c.h.b16 %v273
        %v377 = vunpack.c.l.b16 %v274
        %v378 = vunpack.c.h.b16 %v274
        %v379 = vunpack.c.l.b16 %v275
        %v380 = vunpack.c.h.b16 %v275
        %v381 = vunpack.c.l.b16 %v276
        %v382 = vunpack.c.h.b16 %v276
        %v383 = vunpack.c.l.b16 %v277
        %v384 = vunpack.c.h.b16 %v277
        %v385 = vunpack.c.l.b16 %v278
        %v386 = vunpack.c.h.b16 %v278
        %v387 = vunpack.c.l.b16 %v279
        %v388 = vunpack.c.h.b16 %v279
        %v389 = vunpack.c.l.b16 %v280
        %v390 = vunpack.c.h.b16 %v280
        %v391 = vunpack.c.l.b16 %v281
        %v392 = vunpack.c.h.b16 %v281
        %v393 = vunpack.c.l.b16 %v282
        %v394 = vunpack.c.h.b16 %v282
        %v395 = vunpack.c.l.b16 %v283
        %v396 = vunpack.c.h.b16 %v283
        %v397 = vunpack.c.l.b16 %v284
        %v398 = vunpack.c.h.b16 %v284
        %v399 = vunpack.c.l.b16 %v285
        %v400 = vunpack.c.h.b16 %v285
        %v401 = vunpack.c.l.b16 %v286
        %v402 = vunpack.c.h.b16 %v286
        %v403 = vunpack.c.l.b16 %v287
        %v404 = vunpack.c.h.b16 %v287
        %v405 = vunpack.c.l.b16 %v288
        %v406 = vunpack.c.h.b16 %v288
        %v407 = vunpack.c.l.b16 %v289
        %v408 = vunpack.c.h.b16 %v289
        %v409 = vunpack.c.l.b16 %v290
        %v410 = vunpack.c.h.b16 %v290
        %v411 = vunpack.c.l.b16 %v291
        %v412 = vunpack.c.h.b16 %v291
        %v413 = vunpack.c.l.b16 %v292
        %v414 = vunpack.c.h.b16 %v292
        %v415 = vunpack.c.l.b16 %v293
        %v416 = vunpack.c.h.b16 %v293
        %v417 = vunpack.c.l.b16 %v294
        %v418 = vunpack.c.h.b16 %v294
        %v419 = vunpack.c.l.b16 %v295
        %v420 = vunpack.c.h.b16 %v295
        %v421 = vpack.c.b16 %v357, %v349
        %v422 = vpack.c.b16 %v358, %v350
        %v423 = vpack.c.b16 %v359, %v351
        %v424 = vpack.c.b16 %v360, %v352
        %v425 = vpack.c.b16 %v361, %v353
        %v426 = vpack.c.b16 %v362, %v354
        %v427 = vpack.c.b16 %v363, %v355
        %v428 = vpack.c.b16 %v364, %v356
        %v429 = vpack.c.b16 %v373, %v365
        %v430 = vpack.c.b16 %v374, %v366
        %v431 = vpack.c.b16 %v375, %v367
        %v432 = vpack.c.b16 %v376, %v368
        %v433 = vpack.c.b16 %v377, %v369
        %v434 = vpack.c.b16 %v378, %v370
        %v435 = vpack.c.b16 %v379, %v371
        %v436 = vpack.c.b16 %v380, %v372
        %v437 = vpack.c.b16 %v389, %v381
        %v438 = vpack.c.b16 %v390, %v382
        %v439 = vpack.c.b16 %v391, %v383
        %v440 = vpack.c.b16 %v392, %v384
        %v441 = vpack.c.b16 %v393, %v385
        %v442 = vpack.c.b16 %v394, %v386
        %v443 = vpack.c.b16 %v395, %v387
        %v444 = vpack.c.b16 %v396, %v388
        %v445 = vpack.c.b16 %v405, %v397
        %v446 = vpack.c.b16 %v406, %v398
        %v447 = vpack.c.b16 %v407, %v399
        %v448 = vpack.c.b16 %v408, %v400
        %v449 = vpack.c.b16 %v409, %v401
        %v450 = vpack.c.b16 %v410, %v402
        %v451 = vpack.c.b16 %v411, %v403
        %v452 = vpack.c.b16 %v412, %v404
        %v453 = vpack.c.b16 %v413, %v413
        %v454 = vpack.c.b16 %v414, %v414
        %v455 = vpack.c.b16 %v415, %v415
        %v456 = vpack.c.b16 %v416, %v416
        %v457 = vpack.c.b16 %v417, %v417
        %v458 = vpack.c.b16 %v418, %v418
        %v459 = vpack.c.b16 %v419, %v419
        %v460 = vpack.c.b16 %v420, %v420
        %vm493 = vcmask 588800
        %v495 = vsel %vm493, %v312, 0
        %vm497 = vcmask 1043456
        %v499 = vsel %vm497, %v453, 0
        %v502 = vsel %vm497, %v454, 0
        %v505 = vsel %vm497, %v455, 0
        %v508 = vsel %vm497, %v456, 0
        %v511 = vsel %vm497, %v457, 0
        %v514 = vsel %vm497, %v458, 0
        %v517 = vsel %vm497, %v459, 0
        %v520 = vsel %vm497, %v460, 0
        %522 = vmatprep.subr.bf16.mxu0 0
        %523 = vmatpush1.bf16.msra.mxu0 0
        %524 = vmatprep.subr.bf16.mxu0 0
        %525 = vmatpush1.bf16.msra.mxu0 0
        %526 = vmatprep.subr.bf16.mxu0 0
        %527 = vmatpush1.bf16.msra.mxu0 0
        %528 = vmatprep.subr.bf16.mxu0 %v502
        %529 = vmatpush1.bf16.msra.mxu0 %v499
        %530 = vmatprep.subr.bf16.mxu0 %v446
        %531 = vmatpush1.bf16.msra.mxu0 %v445
        %532 = vmatprep.subr.bf16.mxu0 %v438
        %533 = vmatpush1.bf16.msra.mxu0 %v437
        %534 = vmatprep.subr.bf16.mxu0 %v430
        %535 = vmatpush1.bf16.msra.mxu0 %v429
        %536 = vmatprep.subr.bf16.mxu0 %v422
        %537 = vmatpush1.bf16.msra.mxu0 %v421
        %538 = vmatprep.subr.bf16.mxu0 0
        %539 = vmatpush2.bf16.msra.mxu0 0
        %540 = vmatprep.subr.bf16.mxu0 0
        %541 = vmatpush2.bf16.msra.mxu0 0
        %542 = vmatprep.subr.bf16.mxu0 0
        %543 = vmatpush2.bf16.msra.mxu0 0
        %544 = vmatprep.subr.bf16.mxu0 0
        %545 = vmatpush2.bf16.msra.mxu0 0
        %546 = vmatprep.subr.bf16.mxu0 0
        %547 = vmatpush2.bf16.msra.mxu0 0
        %548 = vmatprep.subr.bf16.mxu0 0
        %549 = vmatpush2.bf16.msra.mxu0 0
        %550 = vmatprep.subr.bf16.mxu0 0
        %551 = vmatpush2.bf16.msra.mxu0 0
        %552 = vmatprep.subr.bf16.mxu0 0
        %553 = vmatpush2.bf16.msra.mxu0 0
        %554 = vmatprep.mubr.bf16.mxu0 0
        %555 = vmatmul.mubr.bf16.gmra.mxu0 %v495
        %v556 = vpop.f32.mrf.mxu0
        %v557 = vadd.f32 %v301, %v556
        %v558 = vpop.f32.mrf.mxu0
        %v559 = vadd.f32 %v301, %v558
        %v560 = vpop.f32.mrf.mxu0
        %v561 = vadd.f32 %v306, %v560
        %v562 = vpop.f32.mrf.mxu0
        %v563 = vadd.f32 %v306, %v562
        %564 = vdwg.mxu0
        %565 = vmatprep.subr.bf16.mxu0 0
        %566 = vmatpush1.bf16.msra.mxu0 0
        %567 = vmatprep.subr.bf16.mxu0 0
        %568 = vmatpush1.bf16.msra.mxu0 0
        %569 = vmatprep.subr.bf16.mxu0 0
        %570 = vmatpush1.bf16.msra.mxu0 0
        %571 = vmatprep.subr.bf16.mxu0 %v508
        %572 = vmatpush1.bf16.msra.mxu0 %v505
        %573 = vmatprep.subr.bf16.mxu0 %v448
        %574 = vmatpush1.bf16.msra.mxu0 %v447
        %575 = vmatprep.subr.bf16.mxu0 %v440
        %576 = vmatpush1.bf16.msra.mxu0 %v439
        %577 = vmatprep.subr.bf16.mxu0 %v432
        %578 = vmatpush1.bf16.msra.mxu0 %v431
        %579 = vmatprep.subr.bf16.mxu0 %v424
        %580 = vmatpush1.bf16.msra.mxu0 %v423
        %581 = vmatprep.subr.bf16.mxu0 0
        %582 = vmatpush2.bf16.msra.mxu0 0
        %583 = vmatprep.subr.bf16.mxu0 0
        %584 = vmatpush2.bf16.msra.mxu0 0
        %585 = vmatprep.subr.bf16.mxu0 0
        %586 = vmatpush2.bf16.msra.mxu0 0
        %587 = vmatprep.subr.bf16.mxu0 0
        %588 = vmatpush2.bf16.msra.mxu0 0
        %589 = vmatprep.subr.bf16.mxu0 0
        %590 = vmatpush2.bf16.msra.mxu0 0
        %591 = vmatprep.subr.bf16.mxu0 0
        %592 = vmatpush2.bf16.msra.mxu0 0
        %593 = vmatprep.subr.bf16.mxu0 0
        %594 = vmatpush2.bf16.msra.mxu0 0
        %595 = vmatprep.subr.bf16.mxu0 0
        %596 = vmatpush2.bf16.msra.mxu0 0
        %597 = vmatprep.mubr.bf16.mxu0 0
        %598 = vmatmul.mubr.bf16.gmra.mxu0 %v495
        %v599 = vpop.f32.mrf.mxu0
        %v600 = vadd.f32 %v301, %v599
        %v601 = vpop.f32.mrf.mxu0
        %v602 = vadd.f32 %v301, %v601
        %v603 = vpop.f32.mrf.mxu0
        %v604 = vadd.f32 %v306, %v603
        %v605 = vpop.f32.mrf.mxu0
        %v606 = vadd.f32 %v306, %v605
        %607 = vdwg.mxu0
        %608 = vmatprep.subr.bf16.mxu0 0
        %609 = vmatpush1.bf16.msra.mxu0 0
        %610 = vmatprep.subr.bf16.mxu0 0
        %611 = vmatpush1.bf16.msra.mxu0 0
        %612 = vmatprep.subr.bf16.mxu0 0
        %613 = vmatpush1.bf16.msra.mxu0 0
        %614 = vmatprep.subr.bf16.mxu0 %v514
        %615 = vmatpush1.bf16.msra.mxu0 %v511
        %616 = vmatprep.subr.bf16.mxu0 %v450
        %617 = vmatpush1.bf16.msra.mxu0 %v449
        %618 = vmatprep.subr.bf16.mxu0 %v442
        %619 = vmatpush1.bf16.msra.mxu0 %v441
        %620 = vmatprep.subr.bf16.mxu0 %v434
        %621 = vmatpush1.bf16.msra.mxu0 %v433
        %622 = vmatprep.subr.bf16.mxu0 %v426
        %623 = vmatpush1.bf16.msra.mxu0 %v425
        %624 = vmatprep.subr.bf16.mxu0 0
        %625 = vmatpush2.bf16.msra.mxu0 0
        %626 = vmatprep.subr.bf16.mxu0 0
        %627 = vmatpush2.bf16.msra.mxu0 0
        %628 = vmatprep.subr.bf16.mxu0 0
        %629 = vmatpush2.bf16.msra.mxu0 0
        %630 = vmatprep.subr.bf16.mxu0 0
        %631 = vmatpush2.bf16.msra.mxu0 0
        %632 = vmatprep.subr.bf16.mxu0 0
        %633 = vmatpush2.bf16.msra.mxu0 0
        %634 = vmatprep.subr.bf16.mxu0 0
        %635 = vmatpush2.bf16.msra.mxu0 0
        %636 = vmatprep.subr.bf16.mxu0 0
        %637 = vmatpush2.bf16.msra.mxu0 0
        %638 = vmatprep.subr.bf16.mxu0 0
        %639 = vmatpush2.bf16.msra.mxu0 0
        %640 = vmatprep.mubr.bf16.mxu0 0
        %641 = vmatmul.mubr.bf16.gmra.mxu0 %v495
        %v642 = vpop.f32.mrf.mxu0
        %v643 = vadd.f32 %v301, %v642
        %v644 = vpop.f32.mrf.mxu0
        %v645 = vadd.f32 %v301, %v644
        %v646 = vpop.f32.mrf.mxu0
        %v647 = vadd.f32 %v306, %v646
        %v648 = vpop.f32.mrf.mxu0
        %v649 = vadd.f32 %v306, %v648
        %650 = vdwg.mxu0
        %651 = vmatprep.subr.bf16.mxu0 0
        %652 = vmatpush1.bf16.msra.mxu0 0
        %653 = vmatprep.subr.bf16.mxu0 0
        %654 = vmatpush1.bf16.msra.mxu0 0
        %655 = vmatprep.subr.bf16.mxu0 0
        %656 = vmatpush1.bf16.msra.mxu0 0
        %657 = vmatprep.subr.bf16.mxu0 %v520
        %658 = vmatpush1.bf16.msra.mxu0 %v517
        %659 = vmatprep.subr.bf16.mxu0 %v452
        %660 = vmatpush1.bf16.msra.mxu0 %v451
        %661 = vmatprep.subr.bf16.mxu0 %v444
        %662 = vmatpush1.bf16.msra.mxu0 %v443
        %663 = vmatprep.subr.bf16.mxu0 %v436
        %664 = vmatpush1.bf16.msra.mxu0 %v435
        %665 = vmatprep.subr.bf16.mxu0 %v428
        %666 = vmatpush1.bf16.msra.mxu0 %v427
        %667 = vmatprep.subr.bf16.mxu0 0
        %668 = vmatpush2.bf16.msra.mxu0 0
        %669 = vmatprep.subr.bf16.mxu0 0
        %670 = vmatpush2.bf16.msra.mxu0 0
        %671 = vmatprep.subr.bf16.mxu0 0
        %672 = vmatpush2.bf16.msra.mxu0 0
        %673 = vmatprep.subr.bf16.mxu0 0
        %674 = vmatpush2.bf16.msra.mxu0 0
        %675 = vmatprep.subr.bf16.mxu0 0
        %676 = vmatpush2.bf16.msra.mxu0 0
        %677 = vmatprep.subr.bf16.mxu0 0
        %678 = vmatpush2.bf16.msra.mxu0 0
        %679 = vmatprep.subr.bf16.mxu0 0
        %680 = vmatpush2.bf16.msra.mxu0 0
        %681 = vmatprep.subr.bf16.mxu0 0
        %682 = vmatpush2.bf16.msra.mxu0 0
        %683 = vmatprep.mubr.bf16.mxu0 0
        %684 = vmatmul.mubr.bf16.gmra.mxu0 %v495
        %v685 = vpop.f32.mrf.mxu0
        %v686 = vadd.f32 %v301, %v685
        %v687 = vpop.f32.mrf.mxu0
        %v688 = vadd.f32 %v301, %v687
        %v689 = vpop.f32.mrf.mxu0
        %v690 = vadd.f32 %v306, %v689
        %v691 = vpop.f32.mrf.mxu0
        %v692 = vadd.f32 %v306, %v691
        %693 = vdwg.mxu0
        %vm694 = vcmp.ge.f32.partialorder %v557, 0.0
        %vm695 = vcmp.ge.f32.partialorder %v559, 0.0
        %vm696 = vcmp.ge.f32.partialorder %v600, 0.0
        %vm697 = vcmp.ge.f32.partialorder %v602, 0.0
        %vm698 = vcmp.ge.f32.partialorder %v643, 0.0
        %vm699 = vcmp.ge.f32.partialorder %v645, 0.0
        %vm700 = vcmp.ge.f32.partialorder %v686, 0.0
        %vm701 = vcmp.ge.f32.partialorder %v688, 0.0
        %vm702 = vcmp.ge.f32.partialorder %v561, 0.0
        %vm703 = vcmp.ge.f32.partialorder %v563, 0.0
        %vm704 = vcmp.ge.f32.partialorder %v604, 0.0
        %vm705 = vcmp.ge.f32.partialorder %v606, 0.0
        %vm706 = vcmp.ge.f32.partialorder %v647, 0.0
        %vm707 = vcmp.ge.f32.partialorder %v649, 0.0
        %vm708 = vcmp.ge.f32.partialorder %v690, 0.0
        %vm709 = vcmp.ge.f32.partialorder %v692, 0.0
        %v710 = vmul.f32 %v557, 0.01
        %v711 = vmul.f32 %v559, 0.01
        %v712 = vmul.f32 %v600, 0.01
        %v713 = vmul.f32 %v602, 0.01
        %v714 = vmul.f32 %v643, 0.01
        %v715 = vmul.f32 %v645, 0.01
        %v716 = vmul.f32 %v686, 0.01
        %v717 = vmul.f32 %v688, 0.01
        %v718 = vmul.f32 %v561, 0.01
        %v719 = vmul.f32 %v563, 0.01
        %v720 = vmul.f32 %v604, 0.01
        %v721 = vmul.f32 %v606, 0.01
        %v722 = vmul.f32 %v647, 0.01
        %v723 = vmul.f32 %v649, 0.01
        %v724 = vmul.f32 %v690, 0.01
        %v725 = vmul.f32 %v692, 0.01
        %v726 = vsel %vm694, %v557, %v710
        %v727 = vsel %vm695, %v559, %v711
        %v728 = vsel %vm696, %v600, %v712
        %v729 = vsel %vm697, %v602, %v713
        %v730 = vsel %vm698, %v643, %v714
        %v731 = vsel %vm699, %v645, %v715
        %v732 = vsel %vm700, %v686, %v716
        %v733 = vsel %vm701, %v688, %v717
        %v734 = vsel %vm702, %v561, %v718
        %v735 = vsel %vm703, %v563, %v719
        %v736 = vsel %vm704, %v604, %v720
        %v737 = vsel %vm705, %v606, %v721
        %v738 = vsel %vm706, %v647, %v722
        %v739 = vsel %vm707, %v649, %v723
        %v740 = vsel %vm708, %v690, %v724
        %v741 = vsel %vm709, %v692, %v725
        %v742 = vpack.c.bf16 %v734, %v726
        %v743 = vpack.c.bf16 %v735, %v727
        %v744 = vpack.c.bf16 %v736, %v728
        %v745 = vpack.c.bf16 %v737, %v729
        %v746 = vpack.c.bf16 %v738, %v730
        %v747 = vpack.c.bf16 %v739, %v731
        %v748 = vpack.c.bf16 %v740, %v732
        %v749 = vpack.c.bf16 %v741, %v733
        %v758 = vunpack.c.l.b16 %v742
        %v759 = vunpack.c.l.b16 %v743
        %v760 = vunpack.c.l.b16 %v744
        %v761 = vunpack.c.l.b16 %v745
        %v762 = vunpack.c.l.b16 %v746
        %v763 = vunpack.c.l.b16 %v747
        %v764 = vunpack.c.l.b16 %v748
        %v765 = vunpack.c.l.b16 %v749
        %v766 = vunpack.c.h.b16 %v742
        %v767 = vunpack.c.h.b16 %v743
        %v768 = vunpack.c.h.b16 %v744
        %v769 = vunpack.c.h.b16 %v745
        %v770 = vunpack.c.h.b16 %v746
        %v771 = vunpack.c.h.b16 %v747
        %v772 = vunpack.c.h.b16 %v748
        %v773 = vunpack.c.h.b16 %v749
        %v774 = vpack.c.b16 %v759, %v758
        %v775 = vpack.c.b16 %v761, %v760
        %v776 = vpack.c.b16 %v763, %v762
        %v777 = vpack.c.b16 %v765, %v764
        %v778 = vpack.c.b16 %v767, %v766
        %v779 = vpack.c.b16 %v769, %v768
        %v780 = vpack.c.b16 %v771, %v770
        %v781 = vpack.c.b16 %v773, %v772
        %790 = vst [vmem:[%s254] sm:$0xff] %v774
        %791 = vst [vmem:[%s254 + $0x8] sm:$0xff] %v775
        %792 = vst [vmem:[%s254 + $0x10] sm:$0xff] %v776
        %793 = vst [vmem:[%s254 + $0x18] sm:$0xff] %v777
        %794 = vst [vmem:[%s254 + $0x20] sm:$0xff] %v778
        %795 = vst [vmem:[%s254 + $0x28] sm:$0xff] %v779
        %796 = vst [vmem:[%s254 + $0x30] sm:$0xff] %v780
        %797 = vst [vmem:[%s254 + $0x38] sm:$0xff] %v781
        %s798 = sand.u32 %s90, 1
        %s799 = sand.u32 %s90, 1
        %s800 = smul.addr %s799, 64
        %s801 = scalar_lea.vmem [#allocation3], %s800
        // Predicated region
        $region56: #{model_forward.16} parent=50 // pred_check
          %p802 = pneg %p100
        $region57: #{model_forward.16} parent=50 // pred_check_branch
          %804 = sbr.rel (%p802) target = $region59
        $region58: #{model_forward.16} parent=50 // pred_region
          %s805 = smul.u32 8, %s14
          %s806 = smul.addr %s805, 4
          %s807 = scalar_lea.vmem %s3, %s806
          // Predicated region
          $region60: #{model_forward.16} parent=58 // pred_check
            _
          $region61: #{model_forward.16} parent=58 // pred_check_branch
            %809 = sbr.rel (0) target = $region63
          $region62: #{model_forward.16} parent=58 // pred_region
            // Predicated region
            $region64: #{model_forward.16} parent=62 // pred_check
              _
            $region65: #{model_forward.16} parent=62 // pred_check_branch
              %811 = sbr.rel (0) target = $region67
            $region66: #{model_forward.16} parent=62 // pred_region
              loop: start=0, step=1, limit=1
              $region68: #{model_forward.16} parent=66 // loop_pre_header
                _
              $region69: #{model_forward.16} parent=66 // loop_header
                %s813 = sphi 0, %s817
                %p814 = scmp.ge.s32.totalorder %s813, 1
                %s818 = sphi %s801, %s801
                %s819 = sphi %s807, %s807
              $region70: #{model_forward.16} parent=66 // loop_header_branch
                %816 = sbr.rel (%p814) target = $region74
              $region71: #{model_forward.16} parent=66 // loop_body
                %v820 = vld [vmem:[%s818] sm:$0xff]
                %821 = vst [vmem:[%s819] sm:$0xff] %v820
                %v822 = vld [vmem:[%s818 + $0x8] sm:$0xff]
                %823 = vst [vmem:[%s819 + $0x8] sm:$0xff] %v822
                %v824 = vld [vmem:[%s818 + $0x10] sm:$0xff]
                %825 = vst [vmem:[%s819 + $0x10] sm:$0xff] %v824
                %v826 = vld [vmem:[%s818 + $0x18] sm:$0xff]
                %827 = vst [vmem:[%s819 + $0x18] sm:$0xff] %v826
                %v828 = vld [vmem:[%s818 + $0x20] sm:$0xff]
                %829 = vst [vmem:[%s819 + $0x40] sm:$0xff] %v828
                %v830 = vld [vmem:[%s818 + $0x28] sm:$0xff]
                %831 = vst [vmem:[%s819 + $0x48] sm:$0xff] %v830
                %v832 = vld [vmem:[%s818 + $0x30] sm:$0xff]
                %833 = vst [vmem:[%s819 + $0x50] sm:$0xff] %v832
                %v834 = vld [vmem:[%s818 + $0x38] sm:$0xff]
                %835 = vst [vmem:[%s819 + $0x58] sm:$0xff] %v834
              $region72: #{model_forward.16} parent=66 // loop_footer
                %s817 = sadd.s32 1, %s813
              $region73: #{model_forward.16} parent=66 // loop_footer_branch
                %812 = sbr.rel target = $region69
              $region74: #{model_forward.16} parent=66 // loop_exit
                _
            $region67: #{model_forward.16} parent=62 // pred_fallthru
              _
            // Predicated region
            $region75: #{model_forward.16} parent=62 // pred_check
              _
            $region76: #{model_forward.16} parent=62 // pred_check_branch
              %837 = sbr.rel target = $region78
            $region77: #{model_forward.16} parent=62 // pred_region
              _
            $region78: #{model_forward.16} parent=62 // pred_fallthru
              _
          $region63: #{model_forward.16} parent=58 // pred_fallthru
            _
          %838 = vnop
        $region59: #{model_forward.16} parent=50 // pred_fallthru
          _
      $region51: #{model_forward.16} parent=5 // pred_fallthru
        _
      %p839 = scmp.le.s32.totalorder 2, %s9
      // Predicated region
      $region79: #{model_forward.16} parent=5 // pred_check
        %p840 = pneg %p839
      $region80: #{model_forward.16} parent=5 // pred_check_branch
        %842 = sbr.rel (%p840) target = $region82
      $region81: #{model_forward.16} parent=5 // pred_region
        %s843 = ssub.s32 %s9, 2
        // Predicated region
        $region83: #{model_forward.16} parent=81 // pred_check
          %p844 = pneg %p106
        $region84: #{model_forward.16} parent=81 // pred_check_branch
          %846 = sbr.rel (%p844) target = $region86
        $region85: #{model_forward.16} parent=81 // pred_region
          %s847 = sand.u32 %s91, 1
          %s848 = sand.u32 %s91, 1
          %s849 = smul.addr %s848, 64
          %s850 = scalar_lea.vmem [#allocation3], %s849
        $region86: #{model_forward.16} parent=81 // pred_fallthru
          _
      $region82: #{model_forward.16} parent=5 // pred_fallthru
        _
    $region6: #{model_forward.16} parent=1 // loop_footer
      %s13 = sadd.s32 1, %s9
    $region7: #{model_forward.16} parent=1 // loop_footer_branch
      %8 = sbr.rel target = $region3
    $region8: #{model_forward.16} parent=1 // loop_exit
      _

// kernel: model_forward.17
$region0: #{model_forward.17}
  #allocation0 [shape = 'u32[]', space=smem, size = 0x4, offset = 0x4, fixed_abs, tag = 'smem constant byte address 0x4 - core index']
  #allocation1 [shape = 'u32[144,128]{1,0:T(1,128)}', space=vmem, size = 0x12000, scoped, tag = 'internal scratch']
  %s0 = inlined_call_operand.vmem [shape: bf16[36,8192], index: 0, kind: input, shape index: {}]
  %s1 = inlined_call_operand.vmem [shape: bf16[12,36], index: 1, kind: input, shape index: {}]
  %s2 = inlined_call_operand.vmem [shape: f32[12,1], index: 2, kind: input, shape index: {}]
  %s3 = inlined_call_operand.vmem [shape: f32[12,8192], index: 3, kind: output, shape index: {}]
  %s4 = sld [smem:[#allocation0]]
  $region87: #{model_forward.17} parent=0
    _
  %s6 = ssub.s32 1, %s4
  %s7 = scalar_select 0, %s6, %s4
  $region1: #{model_forward.17} parent=0
    #allocation2 [shape = 'u8[655360]{0}', space=vmem, size = 0xa0000, scoped, tag = 'input window, operand 0']
    #allocation3 [shape = 'u8[524288]{0}', space=vmem, size = 0x80000, scoped, tag = 'output window, operand 0']
    loop: start=0, step=1, limit=4
    $region2: #{model_forward.17} parent=1 // loop_pre_header
      _
    $region3: #{model_forward.17} parent=1 // loop_header
      %s9 = sphi 0, %s13
      %p10 = scmp.ge.s32.totalorder %s9, 4
      %s19 = sphi 0, %s21
      %s22 = sphi 0, %s19
      %s23 = sphi 0, %s22
      %s39 = sphi 0, %s23
      %s43 = sphi 0, %s43
      %s45 = sphi 0, %s43
      %s46 = sphi 0, %s45
      %s60 = sphi 0, %s46
      %s64 = sphi 0, %s64
      %s66 = sphi 0, %s64
      %s67 = sphi 0, %s66
      %s81 = sphi 0, %s67
      %s87 = sphi 0, %s89
      %s90 = sphi 0, %s87
      %s91 = sphi 0, %s90
      %s107 = sphi 0, %s91
    $region4: #{model_forward.17} parent=1 // loop_header_branch
      %12 = sbr.rel (%p10) target = $region8
    $region5: #{model_forward.17} parent=1 // loop_body
      %s14 = ssub.s32 %s9, 1
      %s15 = ssub.s32 %s9, 2
      %s16 = sadd.s32 %s9, 1
      %s17 = ssub.s32 %s9, %s16
      %p18 = scmp.eq.s32.totalorder %s17, 0
      %s20 = sadd.s32 %s19, 1
      %s21 = scalar_select %p18, %s19, %s20
      %p24 = pneg %p18
      %p25 = scmp.eq.s32.totalorder %s9, 1
      %p26 = por %p24, %p25
      %p27 = scmp.ne.s32.totalorder %s19, %s22
      %p28 = scmp.eq.s32.totalorder %s9, 0
      %p29 = por %p27, %p28
      %p30 = scmp.ne.s32.totalorder %s19, %s22
      %p31 = scmp.eq.s32.totalorder %s14, 1
      %p32 = por %p30, %p31
      %p33 = scmp.ne.s32.totalorder %s22, %s23
      %p34 = scmp.eq.s32.totalorder %s14, 0
      %p35 = por %p33, %p34
      %p36 = scmp.ne.s32.totalorder %s22, %s23
      %p37 = scmp.eq.s32.totalorder %s15, 1
      %p38 = por %p36, %p37
      %p40 = scmp.ne.s32.totalorder %s23, %s39
      %p41 = scmp.eq.s32.totalorder %s15, 0
      %p42 = por %p40, %p41
      %s44 = sadd.s32 %s43, 1
      %p47 = scmp.eq.s32.totalorder %s9, 1
      %p48 = scmp.ne.s32.totalorder %s43, %s45
      %p49 = scmp.eq.s32.totalorder %s9, 0
      %p50 = por %p48, %p49
      %p51 = scmp.ne.s32.totalorder %s43, %s45
      %p52 = scmp.eq.s32.totalorder %s14, 1
      %p53 = por %p51, %p52
      %p54 = scmp.ne.s32.totalorder %s45, %s46
      %p55 = scmp.eq.s32.totalorder %s14, 0
      %p56 = por %p54, %p55
      %p57 = scmp.ne.s32.totalorder %s45, %s46
      %p58 = scmp.eq.s32.totalorder %s15, 1
      %p59 = por %p57, %p58
      %p61 = scmp.ne.s32.totalorder %s46, %s60
      %p62 = scmp.eq.s32.totalorder %s15, 0
      %p63 = por %p61, %p62
      %s65 = sadd.s32 %s64, 1
      %p68 = scmp.eq.s32.totalorder %s9, 1
      %p69 = scmp.ne.s32.totalorder %s64, %s66
      %p70 = scmp.eq.s32.totalorder %s9, 0
      %p71 = por %p69, %p70
      %p72 = scmp.ne.s32.totalorder %s64, %s66
      %p73 = scmp.eq.s32.totalorder %s14, 1
      %p74 = por %p72, %p73
      %p75 = scmp.ne.s32.totalorder %s66, %s67
      %p76 = scmp.eq.s32.totalorder %s14, 0
      %p77 = por %p75, %p76
      %p78 = scmp.ne.s32.totalorder %s66, %s67
      %p79 = scmp.eq.s32.totalorder %s15, 1
      %p80 = por %p78, %p79
      %p82 = scmp.ne.s32.totalorder %s67, %s81
      %p83 = scmp.eq.s32.totalorder %s15, 0
      %p84 = por %p82, %p83
      %s85 = ssub.s32 %s9, %s16
      %p86 = scmp.eq.s32.totalorder %s85, 0
      %s88 = sadd.s32 %s87, 1
      %s89 = scalar_select %p86, %s87, %s88
      %p92 = pneg %p86
      %p93 = scmp.eq.s32.totalorder %s9, 1
      %p94 = por %p92, %p93
      %p95 = scmp.ne.s32.totalorder %s87, %s90
      %p96 = scmp.eq.s32.totalorder %s9, 0
      %p97 = por %p95, %p96
      %p98 = scmp.ne.s32.totalorder %s87, %s90
      %p99 = scmp.eq.s32.totalorder %s14, 1
      %p100 = por %p98, %p99
      %p101 = scmp.ne.s32.totalorder %s90, %s91
      %p102 = scmp.eq.s32.totalorder %s14, 0
      %p103 = por %p101, %p102
      %p104 = scmp.ne.s32.totalorder %s90, %s91
      %p105 = scmp.eq.s32.totalorder %s15, 1
      %p106 = por %p104, %p105
      %p108 = scmp.ne.s32.totalorder %s91, %s107
      %p109 = scmp.eq.s32.totalorder %s15, 0
      %p110 = por %p108, %p109
      %p111 = scmp.le.s32.totalorder 1, %s9
      %p112 = scmp.lt.s32.totalorder %s9, 3
      %p113 = pnand %p111, %p112
      %p114 = pneg %p113
      // Predicated region
      $region9: #{model_forward.17} parent=5 // pred_check
        _
      $region10: #{model_forward.17} parent=5 // pred_check_branch
        %116 = sbr.rel (%p113) target = $region12
      $region11: #{model_forward.17} parent=5 // pred_region
        %s117 = ssub.s32 %s9, 1
        // Predicated region
        $region13: #{model_forward.17} parent=11 // pred_check
          %p118 = pneg %p56
        $region14: #{model_forward.17} parent=11 // pred_check_branch
          %120 = sbr.rel (%p118) target = $region16
        $region15: #{model_forward.17} parent=11 // pred_region
          _
        $region16: #{model_forward.17} parent=11 // pred_fallthru
          _
        // Predicated region
        $region17: #{model_forward.17} parent=11 // pred_check
          %p121 = pneg %p77
        $region18: #{model_forward.17} parent=11 // pred_check_branch
          %123 = sbr.rel (%p121) target = $region20
        $region19: #{model_forward.17} parent=11 // pred_region
          _
        $region20: #{model_forward.17} parent=11 // pred_fallthru
          _
      $region12: #{model_forward.17} parent=5 // pred_fallthru
        _
      %p124 = scmp.lt.s32.totalorder %s9, 2
      // Predicated region
      $region21: #{model_forward.17} parent=5 // pred_check
        %p125 = pneg %p124
      $region22: #{model_forward.17} parent=5 // pred_check_branch
        %127 = sbr.rel (%p125) target = $region24
      $region23: #{model_forward.17} parent=5 // pred_region
        // Predicated region
        $region25: #{model_forward.17} parent=23 // pred_check
          %p128 = pneg %p29
        $region26: #{model_forward.17} parent=23 // pred_check_branch
          %130 = sbr.rel (%p128) target = $region28
        $region27: #{model_forward.17} parent=23 // pred_region
          %s131 = sand.u32 %s19, 1
          %s132 = sand.u32 %s19, 1
          %s133 = smul.addr %s132, 640
          %s134 = scalar_lea.vmem [#allocation2], %s133
          %s135 = smul.u32 32, %s9
          %s136 = smul.addr %s135, 4
          %s137 = scalar_lea.vmem %s0, %s136
          // Predicated region
          $region29: #{model_forward.17} parent=27 // pred_check
            _
          $region30: #{model_forward.17} parent=27 // pred_check_branch
            %139 = sbr.rel (0) target = $region32
          $region31: #{model_forward.17} parent=27 // pred_region
            // Predicated region
            $region33: #{model_forward.17} parent=31 // pred_check
              _
            $region34: #{model_forward.17} parent=31 // pred_check_branch
              %141 = sbr.rel (0) target = $region36
            $region35: #{model_forward.17} parent=31 // pred_region
              loop: start=0, step=1, limit=1
              $region37: #{model_forward.17} parent=35 // loop_pre_header
                _
              $region38: #{model_forward.17} parent=35 // loop_header
                %s143 = sphi 0, %s147
                %p144 = scmp.ge.s32.totalorder %s143, 1
                %s148 = sphi %s137, %s137
                %s149 = sphi %s134, %s134
              $region39: #{model_forward.17} parent=35 // loop_header_branch
                %146 = sbr.rel (%p144) target = $region43
              $region40: #{model_forward.17} parent=35 // loop_body
                %v150 = vld [vmem:[%s148] sm:$0xff]
                %151 = vst [vmem:[%s149] sm:$0xff] %v150
                %v152 = vld [vmem:[%s148 + $0x8] sm:$0xff]
                %153 = vst [vmem:[%s149 + $0x8] sm:$0xff] %v152
                %v154 = vld [vmem:[%s148 + $0x10] sm:$0xff]
                %155 = vst [vmem:[%s149 + $0x10] sm:$0xff] %v154
                %v156 = vld [vmem:[%s148 + $0x18] sm:$0xff]
                %157 = vst [vmem:[%s149 + $0x18] sm:$0xff] %v156
                %v158 = vld [vmem:[%s148 + $0x20] sm:$0xff]
                %159 = vst [vmem:[%s149 + $0x20] sm:$0xff] %v158
                %v160 = vld [vmem:[%s148 + $0x28] sm:$0xff]
                %161 = vst [vmem:[%s149 + $0x28] sm:$0xff] %v160
                %v162 = vld [vmem:[%s148 + $0x30] sm:$0xff]
                %163 = vst [vmem:[%s149 + $0x30] sm:$0xff] %v162
                %v164 = vld [vmem:[%s148 + $0x38] sm:$0xff]
                %165 = vst [vmem:[%s149 + $0x38] sm:$0xff] %v164
                %v166 = vld [vmem:[%s148 + $0x40] sm:$0xff]
                %167 = vst [vmem:[%s149 + $0x40] sm:$0xff] %v166
                %v168 = vld [vmem:[%s148 + $0x48] sm:$0xff]
                %169 = vst [vmem:[%s149 + $0x48] sm:$0xff] %v168
                %v170 = vld [vmem:[%s148 + $0x50] sm:$0xff]
                %171 = vst [vmem:[%s149 + $0x50] sm:$0xff] %v170
                %v172 = vld [vmem:[%s148 + $0x58] sm:$0xff]
                %173 = vst [vmem:[%s149 + $0x58] sm:$0xff] %v172
                %v174 = vld [vmem:[%s148 + $0x60] sm:$0xff]
                %175 = vst [vmem:[%s149 + $0x60] sm:$0xff] %v174
                %v176 = vld [vmem:[%s148 + $0x68] sm:$0xff]
                %177 = vst [vmem:[%s149 + $0x68] sm:$0xff] %v176
                %v178 = vld [vmem:[%s148 + $0x70] sm:$0xff]
                %179 = vst [vmem:[%s149 + $0x70] sm:$0xff] %v178
                %v180 = vld [vmem:[%s148 + $0x78] sm:$0xff]
                %181 = vst [vmem:[%s149 + $0x78] sm:$0xff] %v180
                %v182 = vld [vmem:[%s148 + $0x100] sm:$0xff]
                %183 = vst [vmem:[%s149 + $0x80] sm:$0xff] %v182
                %v184 = vld [vmem:[%s148 + $0x108] sm:$0xff]
                %185 = vst [vmem:[%s149 + $0x88] sm:$0xff] %v184
                %v186 = vld [vmem:[%s148 + $0x110] sm:$0xff]
                %187 = vst [vmem:[%s149 + $0x90] sm:$0xff] %v186
                %v188 = vld [vmem:[%s148 + $0x118] sm:$0xff]
                %189 = vst [vmem:[%s149 + $0x98] sm:$0xff] %v188
                %v190 = vld [vmem:[%s148 + $0x120] sm:$0xff]
                %191 = vst [vmem:[%s149 + $0xa0] sm:$0xff] %v190
                %v192 = vld [vmem:[%s148 + $0x128] sm:$0xff]
                %193 = vst [vmem:[%s149 + $0xa8] sm:$0xff] %v192
                %v194 = vld [vmem:[%s148 + $0x130] sm:$0xff]
                %195 = vst [vmem:[%s149 + $0xb0] sm:$0xff] %v194
                %v196 = vld [vmem:[%s148 + $0x138] sm:$0xff]
                %197 = vst [vmem:[%s149 + $0xb8] sm:$0xff] %v196
                %v198 = vld [vmem:[%s148 + $0x140] sm:$0xff]
                %199 = vst [vmem:[%s149 + $0xc0] sm:$0xff] %v198
                %v200 = vld [vmem:[%s148 + $0x148] sm:$0xff]
                %201 = vst [vmem:[%s149 + $0xc8] sm:$0xff] %v200
                %v202 = vld [vmem:[%s148 + $0x150] sm:$0xff]
                %203 = vst [vmem:[%s149 + $0xd0] sm:$0xff] %v202
                %v204 = vld [vmem:[%s148 + $0x158] sm:$0xff]
                %205 = vst [vmem:[%s149 + $0xd8] sm:$0xff] %v204
                %v206 = vld [vmem:[%s148 + $0x160] sm:$0xff]
                %207 = vst [vmem:[%s149 + $0xe0] sm:$0xff] %v206
                %v208 = vld [vmem:[%s148 + $0x168] sm:$0xff]
                %209 = vst [vmem:[%s149 + $0xe8] sm:$0xff] %v208
                %v210 = vld [vmem:[%s148 + $0x170] sm:$0xff]
                %211 = vst [vmem:[%s149 + $0xf0] sm:$0xff] %v210
                %v212 = vld [vmem:[%s148 + $0x178] sm:$0xff]
                %213 = vst [vmem:[%s149 + $0xf8] sm:$0xff] %v212
                %v214 = vld [vmem:[%s148 + $0x200] sm:$0xff]
                %215 = vst [vmem:[%s149 + $0x100] sm:$0xff] %v214
                %v216 = vld [vmem:[%s148 + $0x208] sm:$0xff]
                %217 = vst [vmem:[%s149 + $0x108] sm:$0xff] %v216
                %v218 = vld [vmem:[%s148 + $0x210] sm:$0xff]
                %219 = vst [vmem:[%s149 + $0x110] sm:$0xff] %v218
                %v220 = vld [vmem:[%s148 + $0x218] sm:$0xff]
                %221 = vst [vmem:[%s149 + $0x118] sm:$0xff] %v220
                %v222 = vld [vmem:[%s148 + $0x220] sm:$0xff]
                %223 = vst [vmem:[%s149 + $0x120] sm:$0xff] %v222
                %v224 = vld [vmem:[%s148 + $0x228] sm:$0xff]
                %225 = vst [vmem:[%s149 + $0x128] sm:$0xff] %v224
                %v226 = vld [vmem:[%s148 + $0x230] sm:$0xff]
                %227 = vst [vmem:[%s149 + $0x130] sm:$0xff] %v226
                %v228 = vld [vmem:[%s148 + $0x238] sm:$0xff]
                %229 = vst [vmem:[%s149 + $0x138] sm:$0xff] %v228
                %v230 = vld [vmem:[%s148 + $0x240] sm:$0xff]
                %231 = vst [vmem:[%s149 + $0x140] sm:$0xff] %v230
                %v232 = vld [vmem:[%s148 + $0x248] sm:$0xff]
                %233 = vst [vmem:[%s149 + $0x148] sm:$0xff] %v232
                %v234 = vld [vmem:[%s148 + $0x250] sm:$0xff]
                %235 = vst [vmem:[%s149 + $0x150] sm:$0xff] %v234
                %v236 = vld [vmem:[%s148 + $0x258] sm:$0xff]
                %237 = vst [vmem:[%s149 + $0x158] sm:$0xff] %v236
                %v238 = vld [vmem:[%s148 + $0x260] sm:$0xff]
                %239 = vst [vmem:[%s149 + $0x160] sm:$0xff] %v238
                %v240 = vld [vmem:[%s148 + $0x268] sm:$0xff]
                %241 = vst [vmem:[%s149 + $0x168] sm:$0xff] %v240
                %v242 = vld [vmem:[%s148 + $0x270] sm:$0xff]
                %243 = vst [vmem:[%s149 + $0x170] sm:$0xff] %v242
                %v244 = vld [vmem:[%s148 + $0x278] sm:$0xff]
                %245 = vst [vmem:[%s149 + $0x178] sm:$0xff] %v244
                %v246 = vld [vmem:[%s148 + $0x300] sm:$0xff]
                %247 = vst [vmem:[%s149 + $0x180] sm:$0xff] %v246
                %v248 = vld [vmem:[%s148 + $0x308] sm:$0xff]
                %249 = vst [vmem:[%s149 + $0x188] sm:$0xff] %v248
                %v250 = vld [vmem:[%s148 + $0x310] sm:$0xff]
                %251 = vst [vmem:[%s149 + $0x190] sm:$0xff] %v250
                %v252 = vld [vmem:[%s148 + $0x318] sm:$0xff]
                %253 = vst [vmem:[%s149 + $0x198] sm:$0xff] %v252
                %v254 = vld [vmem:[%s148 + $0x320] sm:$0xff]
                %255 = vst [vmem:[%s149 + $0x1a0] sm:$0xff] %v254
                %v256 = vld [vmem:[%s148 + $0x328] sm:$0xff]
                %257 = vst [vmem:[%s149 + $0x1a8] sm:$0xff] %v256
                %v258 = vld [vmem:[%s148 + $0x330] sm:$0xff]
                %259 = vst [vmem:[%s149 + $0x1b0] sm:$0xff] %v258
                %v260 = vld [vmem:[%s148 + $0x338] sm:$0xff]
                %261 = vst [vmem:[%s149 + $0x1b8] sm:$0xff] %v260
                %v262 = vld [vmem:[%s148 + $0x340] sm:$0xff]
                %263 = vst [vmem:[%s149 + $0x1c0] sm:$0xff] %v262
                %v264 = vld [vmem:[%s148 + $0x348] sm:$0xff]
                %265 = vst [vmem:[%s149 + $0x1c8] sm:$0xff] %v264
                %v266 = vld [vmem:[%s148 + $0x350] sm:$0xff]
                %267 = vst [vmem:[%s149 + $0x1d0] sm:$0xff] %v266
                %v268 = vld [vmem:[%s148 + $0x358] sm:$0xff]
                %269 = vst [vmem:[%s149 + $0x1d8] sm:$0xff] %v268
                %v270 = vld [vmem:[%s148 + $0x360] sm:$0xff]
                %271 = vst [vmem:[%s149 + $0x1e0] sm:$0xff] %v270
                %v272 = vld [vmem:[%s148 + $0x368] sm:$0xff]
                %273 = vst [vmem:[%s149 + $0x1e8] sm:$0xff] %v272
                %v274 = vld [vmem:[%s148 + $0x370] sm:$0xff]
                %275 = vst [vmem:[%s149 + $0x1f0] sm:$0xff] %v274
                %v276 = vld [vmem:[%s148 + $0x378] sm:$0xff]
                %277 = vst [vmem:[%s149 + $0x1f8] sm:$0xff] %v276
                %v278 = vld [vmem:[%s148 + $0x400] sm:$0xff]
                %279 = vst [vmem:[%s149 + $0x200] sm:$0xff] %v278
                %v280 = vld [vmem:[%s148 + $0x408] sm:$0xff]
                %281 = vst [vmem:[%s149 + $0x208] sm:$0xff] %v280
                %v282 = vld [vmem:[%s148 + $0x410] sm:$0xff]
                %283 = vst [vmem:[%s149 + $0x210] sm:$0xff] %v282
                %v284 = vld [vmem:[%s148 + $0x418] sm:$0xff]
                %285 = vst [vmem:[%s149 + $0x218] sm:$0xff] %v284
                %v286 = vld [vmem:[%s148 + $0x420] sm:$0xff]
                %287 = vst [vmem:[%s149 + $0x220] sm:$0xff] %v286
                %v288 = vld [vmem:[%s148 + $0x428] sm:$0xff]
                %289 = vst [vmem:[%s149 + $0x228] sm:$0xff] %v288
                %v290 = vld [vmem:[%s148 + $0x430] sm:$0xff]
                %291 = vst [vmem:[%s149 + $0x230] sm:$0xff] %v290
                %v292 = vld [vmem:[%s148 + $0x438] sm:$0xff]
                %293 = vst [vmem:[%s149 + $0x238] sm:$0xff] %v292
                %v294 = vld [vmem:[%s148 + $0x440] sm:$0xff]
                %295 = vst [vmem:[%s149 + $0x240] sm:$0xff] %v294
                %v296 = vld [vmem:[%s148 + $0x448] sm:$0xff]
                %297 = vst [vmem:[%s149 + $0x248] sm:$0xff] %v296
                %v298 = vld [vmem:[%s148 + $0x450] sm:$0xff]
                %299 = vst [vmem:[%s149 + $0x250] sm:$0xff] %v298
                %v300 = vld [vmem:[%s148 + $0x458] sm:$0xff]
                %301 = vst [vmem:[%s149 + $0x258] sm:$0xff] %v300
                %v302 = vld [vmem:[%s148 + $0x460] sm:$0xff]
                %303 = vst [vmem:[%s149 + $0x260] sm:$0xff] %v302
                %v304 = vld [vmem:[%s148 + $0x468] sm:$0xff]
                %305 = vst [vmem:[%s149 + $0x268] sm:$0xff] %v304
                %v306 = vld [vmem:[%s148 + $0x470] sm:$0xff]
                %307 = vst [vmem:[%s149 + $0x270] sm:$0xff] %v306
                %v308 = vld [vmem:[%s148 + $0x478] sm:$0xff]
                %309 = vst [vmem:[%s149 + $0x278] sm:$0xff] %v308
              $region41: #{model_forward.17} parent=35 // loop_footer
                %s147 = sadd.s32 1, %s143
              $region42: #{model_forward.17} parent=35 // loop_footer_branch
                %142 = sbr.rel target = $region38
              $region43: #{model_forward.17} parent=35 // loop_exit
                _
            $region36: #{model_forward.17} parent=31 // pred_fallthru
              _
            // Predicated region
            $region44: #{model_forward.17} parent=31 // pred_check
              _
            $region45: #{model_forward.17} parent=31 // pred_check_branch
              %311 = sbr.rel target = $region47
            $region46: #{model_forward.17} parent=31 // pred_region
              _
            $region47: #{model_forward.17} parent=31 // pred_fallthru
              _
          $region32: #{model_forward.17} parent=27 // pred_fallthru
            _
          %312 = vnop
        $region28: #{model_forward.17} parent=23 // pred_fallthru
          _
      $region24: #{model_forward.17} parent=5 // pred_fallthru
        _
      %p313 = scmp.le.s32.totalorder 1, %s9
      %p314 = scmp.lt.s32.totalorder %s9, 3
      %p315 = pnand %p313, %p314
      %p316 = pneg %p315
      // Predicated region
      $region48: #{model_forward.17} parent=5 // pred_check
        _
      $region49: #{model_forward.17} parent=5 // pred_check_branch
        %318 = sbr.rel (%p315) target = $region51
      $region50: #{model_forward.17} parent=5 // pred_region
        %s319 = ssub.s32 %s9, 1
        %s320 = sand.u32 %s22, 1
        %s321 = sand.u32 %s22, 1
        %s322 = smul.addr %s321, 640
        %s323 = scalar_lea.vmem [#allocation2], %s322
        // Predicated region
        $region52: #{model_forward.17} parent=50 // pred_check
          %p324 = pneg %p35
        $region53: #{model_forward.17} parent=50 // pred_check_branch
          %326 = sbr.rel (%p324) target = $region55
        $region54: #{model_forward.17} parent=50 // pred_region
          _
        $region55: #{model_forward.17} parent=50 // pred_fallthru
          _
        %s327 = sand.u32 %s22, 1
        %s328 = sand.u32 %s22, 1
        %s329 = smul.addr %s328, 640
        %s330 = scalar_lea.vmem [#allocation2], %s329
        %p331 = pneg %p35
        %p332 = pneg %p32
        %p333 = pneg %p56
        %p334 = pneg %p53
        %p335 = pneg %p77
        %p336 = pneg %p74
        %p337 = pneg %p103
        %p338 = pneg %p100
        %s339 = sand.u32 %s90, 1
        %s340 = sand.u32 %s90, 1
        %s341 = smul.addr %s340, 512
        %s342 = scalar_lea.vmem [#allocation3], %s341
        %s343 = smul.u32 32, %s14
        %s344 = smul.u32 32, %s14
        %v346 = vld [vmem:[%s1] sm:$0xf]
        %v347 = vld [vmem:[%s1 + $0x4] sm:$0x3]
        %v348 = vld [vmem:[%s323] sm:$0xff]
        %v349 = vld [vmem:[%s323 + $0x8] sm:$0xff]
        %v350 = vld [vmem:[%s323 + $0x10] sm:$0xff]
        %v351 = vld [vmem:[%s323 + $0x18] sm:$0xff]
        %v352 = vld [vmem:[%s323 + $0x20] sm:$0xff]
        %v353 = vld [vmem:[%s323 + $0x28] sm:$0xff]
        %v354 = vld [vmem:[%s323 + $0x30] sm:$0xff]
        %v355 = vld [vmem:[%s323 + $0x38] sm:$0xff]
        %v356 = vld [vmem:[%s323 + $0x40] sm:$0xff]
        %v357 = vld [vmem:[%s323 + $0x48] sm:$0xff]
        %v358 = vld [vmem:[%s323 + $0x50] sm:$0xff]
        %v359 = vld [vmem:[%s323 + $0x58] sm:$0xff]
        %v360 = vld [vmem:[%s323 + $0x60] sm:$0xff]
        %v361 = vld [vmem:[%s323 + $0x68] sm:$0xff]
        %v362 = vld [vmem:[%s323 + $0x70] sm:$0xff]
        %v363 = vld [vmem:[%s323 + $0x78] sm:$0xff]
        %v364 = vld [vmem:[%s323 + $0x80] sm:$0xff]
        %v365 = vld [vmem:[%s323 + $0x88] sm:$0xff]
        %v366 = vld [vmem:[%s323 + $0x90] sm:$0xff]
        %v367 = vld [vmem:[%s323 + $0x98] sm:$0xff]
        %v368 = vld [vmem:[%s323 + $0xa0] sm:$0xff]
        %v369 = vld [vmem:[%s323 + $0xa8] sm:$0xff]
        %v370 = vld [vmem:[%s323 + $0xb0] sm:$0xff]
        %v371 = vld [vmem:[%s323 + $0xb8] sm:$0xff]
        %v372 = vld [vmem:[%s323 + $0xc0] sm:$0xff]
        %v373 = vld [vmem:[%s323 + $0xc8] sm:$0xff]
        %v374 = vld [vmem:[%s323 + $0xd0] sm:$0xff]
        %v375 = vld [vmem:[%s323 + $0xd8] sm:$0xff]
        %v376 = vld [vmem:[%s323 + $0xe0] sm:$0xff]
        %v377 = vld [vmem:[%s323 + $0xe8] sm:$0xff]
        %v378 = vld [vmem:[%s323 + $0xf0] sm:$0xff]
        %v379 = vld [vmem:[%s323 + $0xf8] sm:$0xff]
        %v380 = vld [vmem:[%s323 + $0x100] sm:$0xff]
        %v381 = vld [vmem:[%s323 + $0x108] sm:$0xff]
        %v382 = vld [vmem:[%s323 + $0x110] sm:$0xff]
        %v383 = vld [vmem:[%s323 + $0x118] sm:$0xff]
        %v384 = vld [vmem:[%s323 + $0x120] sm:$0xff]
        %v385 = vld [vmem:[%s323 + $0x128] sm:$0xff]
        %v386 = vld [vmem:[%s323 + $0x130] sm:$0xff]
        %v387 = vld [vmem:[%s323 + $0x138] sm:$0xff]
        %v388 = vld [vmem:[%s323 + $0x140] sm:$0xff]
        %v389 = vld [vmem:[%s323 + $0x148] sm:$0xff]
        %v390 = vld [vmem:[%s323 + $0x150] sm:$0xff]
        %v391 = vld [vmem:[%s323 + $0x158] sm:$0xff]
        %v392 = vld [vmem:[%s323 + $0x160] sm:$0xff]
        %v393 = vld [vmem:[%s323 + $0x168] sm:$0xff]
        %v394 = vld [vmem:[%s323 + $0x170] sm:$0xff]
        %v395 = vld [vmem:[%s323 + $0x178] sm:$0xff]
        %v396 = vld [vmem:[%s323 + $0x180] sm:$0xff]
        %v397 = vld [vmem:[%s323 + $0x188] sm:$0xff]
        %v398 = vld [vmem:[%s323 + $0x190] sm:$0xff]
        %v399 = vld [vmem:[%s323 + $0x198] sm:$0xff]
        %v400 = vld [vmem:[%s323 + $0x1a0] sm:$0xff]
        %v401 = vld [vmem:[%s323 + $0x1a8] sm:$0xff]
        %v402 = vld [vmem:[%s323 + $0x1b0] sm:$0xff]
        %v403 = vld [vmem:[%s323 + $0x1b8] sm:$0xff]
        %v404 = vld [vmem:[%s323 + $0x1c0] sm:$0xff]
        %v405 = vld [vmem:[%s323 + $0x1c8] sm:$0xff]
        %v406 = vld [vmem:[%s323 + $0x1d0] sm:$0xff]
        %v407 = vld [vmem:[%s323 + $0x1d8] sm:$0xff]
        %v408 = vld [vmem:[%s323 + $0x1e0] sm:$0xff]
        %v409 = vld [vmem:[%s323 + $0x1e8] sm:$0xff]
        %v410 = vld [vmem:[%s323 + $0x1f0] sm:$0xff]
        %v411 = vld [vmem:[%s323 + $0x1f8] sm:$0xff]
        %v412 = vld [vmem:[%s323 + $0x200] sm:$0x33]
        %v413 = vld [vmem:[%s323 + $0x208] sm:$0x33]
        %v414 = vld [vmem:[%s323 + $0x210] sm:$0x33]
        %v415 = vld [vmem:[%s323 + $0x218] sm:$0x33]
        %v416 = vld [vmem:[%s323 + $0x220] sm:$0x33]
        %v417 = vld [vmem:[%s323 + $0x228] sm:$0x33]
        %v418 = vld [vmem:[%s323 + $0x230] sm:$0x33]
        %v419 = vld [vmem:[%s323 + $0x238] sm:$0x33]
        %v420 = vld [vmem:[%s323 + $0x240] sm:$0x33]
        %v421 = vld [vmem:[%s323 + $0x248] sm:$0x33]
        %v422 = vld [vmem:[%s323 + $0x250] sm:$0x33]
        %v423 = vld [vmem:[%s323 + $0x258] sm:$0x33]
        %v424 = vld [vmem:[%s323 + $0x260] sm:$0x33]
        %v425 = vld [vmem:[%s323 + $0x268] sm:$0x33]
        %v426 = vld [vmem:[%s323 + $0x270] sm:$0x33]
        %v427 = vld [vmem:[%s323 + $0x278] sm:$0x33]
        %v428 = vld [vmem:[%s2] sm:$0xff]
        %v429 = vld [vmem:[%s2 + $0x8] sm:$0xf]
        %431 = vset.pattern.permute.xlu0 0
        %432 = vperm.xlu0 %431, %v428
        %v433 = vpop.permute.xlu0 %432
        %436 = vset.pattern.permute.xlu0 0
        %437 = vperm.xlu0 %436, %v429
        %v438 = vpop.permute.xlu0 %437
        %v442 = vunpack.c.l.b16 %v346
        %v443 = vunpack.c.l.b16 %v347
        %v444 = vpack.c.b16 %v443, %v442
        %v525 = vunpack.c.l.b16 %v348
        %v526 = vunpack.c.h.b16 %v348
        %v527 = vunpack.c.l.b16 %v349
        %v528 = vunpack.c.h.b16 %v349
        %v529 = vunpack.c.l.b16 %v350
        %v530 = vunpack.c.h.b16 %v350
        %v531 = vunpack.c.l.b16 %v351
        %v532 = vunpack.c.h.b16 %v351
        %v533 = vunpack.c.l.b16 %v352
        %v534 = vunpack.c.h.b16 %v352
        %v535 = vunpack.c.l.b16 %v353
        %v536 = vunpack.c.h.b16 %v353
        %v537 = vunpack.c.l.b16 %v354
        %v538 = vunpack.c.h.b16 %v354
        %v539 = vunpack.c.l.b16 %v355
        %v540 = vunpack.c.h.b16 %v355
        %v541 = vunpack.c.l.b16 %v356
        %v542 = vunpack.c.h.b16 %v356
        %v543 = vunpack.c.l.b16 %v357
        %v544 = vunpack.c.h.b16 %v357
        %v545 = vunpack.c.l.b16 %v358
        %v546 = vunpack.c.h.b16 %v358
        %v547 = vunpack.c.l.b16 %v359
        %v548 = vunpack.c.h.b16 %v359
        %v549 = vunpack.c.l.b16 %v360
        %v550 = vunpack.c.h.b16 %v360
        %v551 = vunpack.c.l.b16 %v361
        %v552 = vunpack.c.h.b16 %v361
        %v553 = vunpack.c.l.b16 %v362
        %v554 = vunpack.c.h.b16 %v362
        %v555 = vunpack.c.l.b16 %v363
        %v556 = vunpack.c.h.b16 %v363
        %v557 = vunpack.c.l.b16 %v364
        %v558 = vunpack.c.h.b16 %v364
        %v559 = vunpack.c.l.b16 %v365
        %v560 = vunpack.c.h.b16 %v365
        %v561 = vunpack.c.l.b16 %v366
        %v562 = vunpack.c.h.b16 %v366
        %v563 = vunpack.c.l.b16 %v367
        %v564 = vunpack.c.h.b16 %v367
        %v565 = vunpack.c.l.b16 %v368
        %v566 = vunpack.c.h.b16 %v368
        %v567 = vunpack.c.l.b16 %v369
        %v568 = vunpack.c.h.b16 %v369
        %v569 = vunpack.c.l.b16 %v370
        %v570 = vunpack.c.h.b16 %v370
        %v571 = vunpack.c.l.b16 %v371
        %v572 = vunpack.c.h.b16 %v371
        %v573 = vunpack.c.l.b16 %v372
        %v574 = vunpack.c.h.b16 %v372
        %v575 = vunpack.c.l.b16 %v373
        %v576 = vunpack.c.h.b16 %v373
        %v577 = vunpack.c.l.b16 %v374
        %v578 = vunpack.c.h.b16 %v374
        %v579 = vunpack.c.l.b16 %v375
        %v580 = vunpack.c.h.b16 %v375
        %v581 = vunpack.c.l.b16 %v376
        %v582 = vunpack.c.h.b16 %v376
        %v583 = vunpack.c.l.b16 %v377
        %v584 = vunpack.c.h.b16 %v377
        %v585 = vunpack.c.l.b16 %v378
        %v586 = vunpack.c.h.b16 %v378
        %v587 = vunpack.c.l.b16 %v379
        %v588 = vunpack.c.h.b16 %v379
        %v589 = vunpack.c.l.b16 %v380
        %v590 = vunpack.c.h.b16 %v380
        %v591 = vunpack.c.l.b16 %v381
        %v592 = vunpack.c.h.b16 %v381
        %v593 = vunpack.c.l.b16 %v382
        %v594 = vunpack.c.h.b16 %v382
        %v595 = vunpack.c.l.b16 %v383
        %v596 = vunpack.c.h.b16 %v383
        %v597 = vunpack.c.l.b16 %v384
        %v598 = vunpack.c.h.b16 %v384
        %v599 = vunpack.c.l.b16 %v385
        %v600 = vunpack.c.h.b16 %v385
        %v601 = vunpack.c.l.b16 %v386
        %v602 = vunpack.c.h.b16 %v386
        %v603 = vunpack.c.l.b16 %v387
        %v604 = vunpack.c.h.b16 %v387
        %v605 = vunpack.c.l.b16 %v388
        %v606 = vunpack.c.h.b16 %v388
        %v607 = vunpack.c.l.b16 %v389
        %v608 = vunpack.c.h.b16 %v389
        %v609 = vunpack.c.l.b16 %v390
        %v610 = vunpack.c.h.b16 %v390
        %v611 = vunpack.c.l.b16 %v391
        %v612 = vunpack.c.h.b16 %v391
        %v613 = vunpack.c.l.b16 %v392
        %v614 = vunpack.c.h.b16 %v392
        %v615 = vunpack.c.l.b16 %v393
        %v616 = vunpack.c.h.b16 %v393
        %v617 = vunpack.c.l.b16 %v394
        %v618 = vunpack.c.h.b16 %v394
        %v619 = vunpack.c.l.b16 %v395
        %v620 = vunpack.c.h.b16 %v395
        %v621 = vunpack.c.l.b16 %v396
        %v622 = vunpack.c.h.b16 %v396
        %v623 = vunpack.c.l.b16 %v397
        %v624 = vunpack.c.h.b16 %v397
        %v625 = vunpack.c.l.b16 %v398
        %v626 = vunpack.c.h.b16 %v398
        %v627 = vunpack.c.l.b16 %v399
        %v628 = vunpack.c.h.b16 %v399
        %v629 = vunpack.c.l.b16 %v400
        %v630 = vunpack.c.h.b16 %v400
        %v631 = vunpack.c.l.b16 %v401
        %v632 = vunpack.c.h.b16 %v401
        %v633 = vunpack.c.l.b16 %v402
        %v634 = vunpack.c.h.b16 %v402
        %v635 = vunpack.c.l.b16 %v403
        %v636 = vunpack.c.h.b16 %v403
        %v637 = vunpack.c.l.b16 %v404
        %v638 = vunpack.c.h.b16 %v404
        %v639 = vunpack.c.l.b16 %v405
        %v640 = vunpack.c.h.b16 %v405
        %v641 = vunpack.c.l.b16 %v406
        %v642 = vunpack.c.h.b16 %v406
        %v643 = vunpack.c.l.b16 %v407
        %v644 = vunpack.c.h.b16 %v407
        %v645 = vunpack.c.l.b16 %v408
        %v646 = vunpack.c.h.b16 %v408
        %v647 = vunpack.c.l.b16 %v409
        %v648 = vunpack.c.h.b16 %v409
        %v649 = vunpack.c.l.b16 %v410
        %v650 = vunpack.c.h.b16 %v410
        %v651 = vunpack.c.l.b16 %v411
        %v652 = vunpack.c.h.b16 %v411
        %v653 = vunpack.c.l.b16 %v412
        %v654 = vunpack.c.h.b16 %v412
        %v655 = vunpack.c.l.b16 %v413
        %v656 = vunpack.c.h.b16 %v413
        %v657 = vunpack.c.l.b16 %v414
        %v658 = vunpack.c.h.b16 %v414
        %v659 = vunpack.c.l.b16 %v415
        %v660 = vunpack.c.h.b16 %v415
        %v661 = vunpack.c.l.b16 %v416
        %v662 = vunpack.c.h.b16 %v416
        %v663 = vunpack.c.l.b16 %v417
        %v664 = vunpack.c.h.b16 %v417
        %v665 = vunpack.c.l.b16 %v418
        %v666 = vunpack.c.h.b16 %v418
        %v667 = vunpack.c.l.b16 %v419
        %v668 = vunpack.c.h.b16 %v419
        %v669 = vunpack.c.l.b16 %v420
        %v670 = vunpack.c.h.b16 %v420
        %v671 = vunpack.c.l.b16 %v421
        %v672 = vunpack.c.h.b16 %v421
        %v673 = vunpack.c.l.b16 %v422
        %v674 = vunpack.c.h.b16 %v422
        %v675 = vunpack.c.l.b16 %v423
        %v676 = vunpack.c.h.b16 %v423
        %v677 = vunpack.c.l.b16 %v424
        %v678 = vunpack.c.h.b16 %v424
        %v679 = vunpack.c.l.b16 %v425
        %v680 = vunpack.c.h.b16 %v425
        %v681 = vunpack.c.l.b16 %v426
        %v682 = vunpack.c.h.b16 %v426
        %v683 = vunpack.c.l.b16 %v427
        %v684 = vunpack.c.h.b16 %v427
        %v685 = vpack.c.b16 %v557, %v525
        %v686 = vpack.c.b16 %v558, %v526
        %v687 = vpack.c.b16 %v559, %v527
        %v688 = vpack.c.b16 %v560, %v528
        %v689 = vpack.c.b16 %v561, %v529
        %v690 = vpack.c.b16 %v562, %v530
        %v691 = vpack.c.b16 %v563, %v531
        %v692 = vpack.c.b16 %v564, %v532
        %v693 = vpack.c.b16 %v565, %v533
        %v694 = vpack.c.b16 %v566, %v534
        %v695 = vpack.c.b16 %v567, %v535
        %v696 = vpack.c.b16 %v568, %v536
        %v697 = vpack.c.b16 %v569, %v537
        %v698 = vpack.c.b16 %v570, %v538
        %v699 = vpack.c.b16 %v571, %v539
        %v700 = vpack.c.b16 %v572, %v540
        %v701 = vpack.c.b16 %v573, %v541
        %v702 = vpack.c.b16 %v574, %v542
        %v703 = vpack.c.b16 %v575, %v543
        %v704 = vpack.c.b16 %v576, %v544
        %v705 = vpack.c.b16 %v577, %v545
        %v706 = vpack.c.b16 %v578, %v546
        %v707 = vpack.c.b16 %v579, %v547
        %v708 = vpack.c.b16 %v580, %v548
        %v709 = vpack.c.b16 %v581, %v549
        %v710 = vpack.c.b16 %v582, %v550
        %v711 = vpack.c.b16 %v583, %v551
        %v712 = vpack.c.b16 %v584, %v552
        %v713 = vpack.c.b16 %v585, %v553
        %v714 = vpack.c.b16 %v586, %v554
        %v715 = vpack.c.b16 %v587, %v555
        %v716 = vpack.c.b16 %v588, %v556
        %v717 = vpack.c.b16 %v621, %v589
        %v718 = vpack.c.b16 %v622, %v590
        %v719 = vpack.c.b16 %v623, %v591
        %v720 = vpack.c.b16 %v624, %v592
        %v721 = vpack.c.b16 %v625, %v593
        %v722 = vpack.c.b16 %v626, %v594
        %v723 = vpack.c.b16 %v627, %v595
        %v724 = vpack.c.b16 %v628, %v596
        %v725 = vpack.c.b16 %v629, %v597
        %v726 = vpack.c.b16 %v630, %v598
        %v727 = vpack.c.b16 %v631, %v599
        %v728 = vpack.c.b16 %v632, %v600
        %v729 = vpack.c.b16 %v633, %v601
        %v730 = vpack.c.b16 %v634, %v602
        %v731 = vpack.c.b16 %v635, %v603
        %v732 = vpack.c.b16 %v636, %v604
        %v733 = vpack.c.b16 %v637, %v605
        %v734 = vpack.c.b16 %v638, %v606
        %v735 = vpack.c.b16 %v639, %v607
        %v736 = vpack.c.b16 %v640, %v608
        %v737 = vpack.c.b16 %v641, %v609
        %v738 = vpack.c.b16 %v642, %v610
        %v739 = vpack.c.b16 %v643, %v611
        %v740 = vpack.c.b16 %v644, %v612
        %v741 = vpack.c.b16 %v645, %v613
        %v742 = vpack.c.b16 %v646, %v614
        %v743 = vpack.c.b16 %v647, %v615
        %v744 = vpack.c.b16 %v648, %v616
        %v745 = vpack.c.b16 %v649, %v617
        %v746 = vpack.c.b16 %v650, %v618
        %v747 = vpack.c.b16 %v651, %v619
        %v748 = vpack.c.b16 %v652, %v620
        %v749 = vpack.c.b16 %v653, %v653
        %v750 = vpack.c.b16 %v654, %v654
        %v751 = vpack.c.b16 %v655, %v655
        %v752 = vpack.c.b16 %v656, %v656
        %v753 = vpack.c.b16 %v657, %v657
        %v754 = vpack.c.b16 %v658, %v658
        %v755 = vpack.c.b16 %v659, %v659
        %v756 = vpack.c.b16 %v660, %v660
        %v757 = vpack.c.b16 %v661, %v661
        %v758 = vpack.c.b16 %v662, %v662
        %v759 = vpack.c.b16 %v663, %v663
        %v760 = vpack.c.b16 %v664, %v664
        %v761 = vpack.c.b16 %v665, %v665
        %v762 = vpack.c.b16 %v666, %v666
        %v763 = vpack.c.b16 %v667, %v667
        %v764 = vpack.c.b16 %v668, %v668
        %v765 = vpack.c.b16 %v669, %v669
        %v766 = vpack.c.b16 %v670, %v670
        %v767 = vpack.c.b16 %v671, %v671
        %v768 = vpack.c.b16 %v672, %v672
        %v769 = vpack.c.b16 %v673, %v673
        %v770 = vpack.c.b16 %v674, %v674
        %v771 = vpack.c.b16 %v675, %v675
        %v772 = vpack.c.b16 %v676, %v676
        %v773 = vpack.c.b16 %v677, %v677
        %v774 = vpack.c.b16 %v678, %v678
        %v775 = vpack.c.b16 %v679, %v679
        %v776 = vpack.c.b16 %v680, %v680
        %v777 = vpack.c.b16 %v681, %v681
        %v778 = vpack.c.b16 %v682, %v682
        %v779 = vpack.c.b16 %v683, %v683
        %v780 = vpack.c.b16 %v684, %v684
        %vm845 = vcmask 293888
        %v847 = vsel %vm845, %v444, 0
        %vm849 = vcmask 1041408
        %v851 = vsel %vm849, %v749, 0
        %v854 = vsel %vm849, %v750, 0
        %v857 = vsel %vm849, %v751, 0
        %v860 = vsel %vm849, %v752, 0
        %v863 = vsel %vm849, %v753, 0
        %v866 = vsel %vm849, %v754, 0
        %v869 = vsel %vm849, %v755, 0
        %v872 = vsel %vm849, %v756, 0
        %v875 = vsel %vm849, %v757, 0
        %v878 = vsel %vm849, %v758, 0
        %v881 = vsel %vm849, %v759, 0
        %v884 = vsel %vm849, %v760, 0
        %v887 = vsel %vm849, %v761, 0
        %v890 = vsel %vm849, %v762, 0
        %v893 = vsel %vm849, %v763, 0
        %v896 = vsel %vm849, %v764, 0
        %v899 = vsel %vm849, %v765, 0
        %v902 = vsel %vm849, %v766, 0
        %v905 = vsel %vm849, %v767, 0
        %v908 = vsel %vm849, %v768, 0
        %v911 = vsel %vm849, %v769, 0
        %v914 = vsel %vm849, %v770, 0
        %v917 = vsel %vm849, %v771, 0
        %v920 = vsel %vm849, %v772, 0
        %v923 = vsel %vm849, %v773, 0
        %v926 = vsel %vm849, %v774, 0
        %v929 = vsel %vm849, %v775, 0
        %v932 = vsel %vm849, %v776, 0
        %v935 = vsel %vm849, %v777, 0
        %v938 = vsel %vm849, %v778, 0
        %v941 = vsel %vm849, %v779, 0
        %v944 = vsel %vm849, %v780, 0
        %946 = vmatprep.subr.bf16.mxu0 0
        %947 = vmatpush1.bf16.msra.mxu0 0
        %948 = vmatprep.subr.bf16.mxu0 0
        %949 = vmatpush1.bf16.msra.mxu0 0
        %950 = vmatprep.subr.bf16.mxu0 0
        %951 = vmatpush1.bf16.msra.mxu0 0
        %952 = vmatprep.subr.bf16.mxu0 0
        %953 = vmatpush1.bf16.msra.mxu0 0
        %954 = vmatprep.subr.bf16.mxu0 0
        %955 = vmatpush1.bf16.msra.mxu0 0
        %956 = vmatprep.subr.bf16.mxu0 %v854
        %957 = vmatpush1.bf16.msra.mxu0 %v851
        %958 = vmatprep.subr.bf16.mxu0 %v718
        %959 = vmatpush1.bf16.msra.mxu0 %v717
        %960 = vmatprep.subr.bf16.mxu0 %v686
        %961 = vmatpush1.bf16.msra.mxu0 %v685
        %962 = vmatprep.subr.bf16.mxu0 0
        %963 = vmatpush2.bf16.msra.mxu0 0
        %964 = vmatprep.subr.bf16.mxu0 0
        %965 = vmatpush2.bf16.msra.mxu0 0
        %966 = vmatprep.subr.bf16.mxu0 0
        %967 = vmatpush2.bf16.msra.mxu0 0
        %968 = vmatprep.subr.bf16.mxu0 0
        %969 = vmatpush2.bf16.msra.mxu0 0
        %970 = vmatprep.subr.bf16.mxu0 0
        %971 = vmatpush2.bf16.msra.mxu0 0
        %972 = vmatprep.subr.bf16.mxu0 0
        %973 = vmatpush2.bf16.msra.mxu0 0
        %974 = vmatprep.subr.bf16.mxu0 0
        %975 = vmatpush2.bf16.msra.mxu0 0
        %976 = vmatprep.subr.bf16.mxu0 0
        %977 = vmatpush2.bf16.msra.mxu0 0
        %978 = vmatprep.mubr.bf16.mxu0 0
        %979 = vmatmul.mubr.bf16.gmra.mxu0 %v847
        %v980 = vpop.f32.mrf.mxu0
        %v981 = vadd.f32 %v433, %v980
        %v982 = vpop.f32.mrf.mxu0
        %v983 = vadd.f32 %v433, %v982
        %v984 = vpop.f32.mrf.mxu0
        %v985 = vadd.f32 %v438, %v984
        %v986 = vpop.f32.mrf.mxu0
        %v987 = vadd.f32 %v438, %v986
        %988 = vdwg.mxu0
        %989 = vmatprep.subr.bf16.mxu0 0
        %990 = vmatpush1.bf16.msra.mxu0 0
        %991 = vmatprep.subr.bf16.mxu0 0
        %992 = vmatpush1.bf16.msra.mxu0 0
        %993 = vmatprep.subr.bf16.mxu0 0
        %994 = vmatpush1.bf16.msra.mxu0 0
        %995 = vmatprep.subr.bf16.mxu0 0
        %996 = vmatpush1.bf16.msra.mxu0 0
        %997 = vmatprep.subr.bf16.mxu0 0
        %998 = vmatpush1.bf16.msra.mxu0 0
        %999 = vmatprep.subr.bf16.mxu0 %v860
        %1000 = vmatpush1.bf16.msra.mxu0 %v857
        %1001 = vmatprep.subr.bf16.mxu0 %v720
        %1002 = vmatpush1.bf16.msra.mxu0 %v719
        %1003 = vmatprep.subr.bf16.mxu0 %v688
        %1004 = vmatpush1.bf16.msra.mxu0 %v687
        %1005 = vmatprep.subr.bf16.mxu0 0
        %1006 = vmatpush2.bf16.msra.mxu0 0
        %1007 = vmatprep.subr.bf16.mxu0 0
        %1008 = vmatpush2.bf16.msra.mxu0 0
        %1009 = vmatprep.subr.bf16.mxu0 0
        %1010 = vmatpush2.bf16.msra.mxu0 0
        %1011 = vmatprep.subr.bf16.mxu0 0
        %1012 = vmatpush2.bf16.msra.mxu0 0
        %1013 = vmatprep.subr.bf16.mxu0 0
        %1014 = vmatpush2.bf16.msra.mxu0 0
        %1015 = vmatprep.subr.bf16.mxu0 0
        %1016 = vmatpush2.bf16.msra.mxu0 0
        %1017 = vmatprep.subr.bf16.mxu0 0
        %1018 = vmatpush2.bf16.msra.mxu0 0
        %1019 = vmatprep.subr.bf16.mxu0 0
        %1020 = vmatpush2.bf16.msra.mxu0 0
        %1021 = vmatprep.mubr.bf16.mxu0 0
        %1022 = vmatmul.mubr.bf16.gmra.mxu0 %v847
        %v1023 = vpop.f32.mrf.mxu0
        %v1024 = vadd.f32 %v433, %v1023
        %v1025 = vpop.f32.mrf.mxu0
        %v1026 = vadd.f32 %v433, %v1025
        %v1027 = vpop.f32.mrf.mxu0
        %v1028 = vadd.f32 %v438, %v1027
        %v1029 = vpop.f32.mrf.mxu0
        %v1030 = vadd.f32 %v438, %v1029
        %1031 = vdwg.mxu0
        %1032 = vmatprep.subr.bf16.mxu0 0
        %1033 = vmatpush1.bf16.msra.mxu0 0
        %1034 = vmatprep.subr.bf16.mxu0 0
        %1035 = vmatpush1.bf16.msra.mxu0 0
        %1036 = vmatprep.subr.bf16.mxu0 0
        %1037 = vmatpush1.bf16.msra.mxu0 0
        %1038 = vmatprep.subr.bf16.mxu0 0
        %1039 = vmatpush1.bf16.msra.mxu0 0
        %1040 = vmatprep.subr.bf16.mxu0 0
        %1041 = vmatpush1.bf16.msra.mxu0 0
        %1042 = vmatprep.subr.bf16.mxu0 %v866
        %1043 = vmatpush1.bf16.msra.mxu0 %v863
        %1044 = vmatprep.subr.bf16.mxu0 %v722
        %1045 = vmatpush1.bf16.msra.mxu0 %v721
        %1046 = vmatprep.subr.bf16.mxu0 %v690
        %1047 = vmatpush1.bf16.msra.mxu0 %v689
        %1048 = vmatprep.subr.bf16.mxu0 0
        %1049 = vmatpush2.bf16.msra.mxu0 0
        %1050 = vmatprep.subr.bf16.mxu0 0
        %1051 = vmatpush2.bf16.msra.mxu0 0
        %1052 = vmatprep.subr.bf16.mxu0 0
        %1053 = vmatpush2.bf16.msra.mxu0 0
        %1054 = vmatprep.subr.bf16.mxu0 0
        %1055 = vmatpush2.bf16.msra.mxu0 0
        %1056 = vmatprep.subr.bf16.mxu0 0
        %1057 = vmatpush2.bf16.msra.mxu0 0
        %1058 = vmatprep.subr.bf16.mxu0 0
        %1059 = vmatpush2.bf16.msra.mxu0 0
        %1060 = vmatprep.subr.bf16.mxu0 0
        %1061 = vmatpush2.bf16.msra.mxu0 0
        %1062 = vmatprep.subr.bf16.mxu0 0
        %1063 = vmatpush2.bf16.msra.mxu0 0
        %1064 = vmatprep.mubr.bf16.mxu0 0
        %1065 = vmatmul.mubr.bf16.gmra.mxu0 %v847
        %v1066 = vpop.f32.mrf.mxu0
        %v1067 = vadd.f32 %v433, %v1066
        %v1068 = vpop.f32.mrf.mxu0
        %v1069 = vadd.f32 %v433, %v1068
        %v1070 = vpop.f32.mrf.mxu0
        %v1071 = vadd.f32 %v438, %v1070
        %v1072 = vpop.f32.mrf.mxu0
        %v1073 = vadd.f32 %v438, %v1072
        %1074 = vdwg.mxu0
        %1075 = vmatprep.subr.bf16.mxu0 0
        %1076 = vmatpush1.bf16.msra.mxu0 0
        %1077 = vmatprep.subr.bf16.mxu0 0
        %1078 = vmatpush1.bf16.msra.mxu0 0
        %1079 = vmatprep.subr.bf16.mxu0 0
        %1080 = vmatpush1.bf16.msra.mxu0 0
        %1081 = vmatprep.subr.bf16.mxu0 0
        %1082 = vmatpush1.bf16.msra.mxu0 0
        %1083 = vmatprep.subr.bf16.mxu0 0
        %1084 = vmatpush1.bf16.msra.mxu0 0
        %1085 = vmatprep.subr.bf16.mxu0 %v872
        %1086 = vmatpush1.bf16.msra.mxu0 %v869
        %1087 = vmatprep.subr.bf16.mxu0 %v724
        %1088 = vmatpush1.bf16.msra.mxu0 %v723
        %1089 = vmatprep.subr.bf16.mxu0 %v692
        %1090 = vmatpush1.bf16.msra.mxu0 %v691
        %1091 = vmatprep.subr.bf16.mxu0 0
        %1092 = vmatpush2.bf16.msra.mxu0 0
        %1093 = vmatprep.subr.bf16.mxu0 0
        %1094 = vmatpush2.bf16.msra.mxu0 0
        %1095 = vmatprep.subr.bf16.mxu0 0
        %1096 = vmatpush2.bf16.msra.mxu0 0
        %1097 = vmatprep.subr.bf16.mxu0 0
        %1098 = vmatpush2.bf16.msra.mxu0 0
        %1099 = vmatprep.subr.bf16.mxu0 0
        %1100 = vmatpush2.bf16.msra.mxu0 0
        %1101 = vmatprep.subr.bf16.mxu0 0
        %1102 = vmatpush2.bf16.msra.mxu0 0
        %1103 = vmatprep.subr.bf16.mxu0 0
        %1104 = vmatpush2.bf16.msra.mxu0 0
        %1105 = vmatprep.subr.bf16.mxu0 0
        %1106 = vmatpush2.bf16.msra.mxu0 0
        %1107 = vmatprep.mubr.bf16.mxu0 0
        %1108 = vmatmul.mubr.bf16.gmra.mxu0 %v847
        %v1109 = vpop.f32.mrf.mxu0
        %v1110 = vadd.f32 %v433, %v1109
        %v1111 = vpop.f32.mrf.mxu0
        %v1112 = vadd.f32 %v433, %v1111
        %v1113 = vpop.f32.mrf.mxu0
        %v1114 = vadd.f32 %v438, %v1113
        %v1115 = vpop.f32.mrf.mxu0
        %v1116 = vadd.f32 %v438, %v1115
        %1117 = vdwg.mxu0
        %1118 = vmatprep.subr.bf16.mxu0 0
        %1119 = vmatpush1.bf16.msra.mxu0 0
        %1120 = vmatprep.subr.bf16.mxu0 0
        %1121 = vmatpush1.bf16.msra.mxu0 0
        %1122 = vmatprep.subr.bf16.mxu0 0
        %1123 = vmatpush1.bf16.msra.mxu0 0
        %1124 = vmatprep.subr.bf16.mxu0 0
        %1125 = vmatpush1.bf16.msra.mxu0 0
        %1126 = vmatprep.subr.bf16.mxu0 0
        %1127 = vmatpush1.bf16.msra.mxu0 0
        %1128 = vmatprep.subr.bf16.mxu0 %v878
        %1129 = vmatpush1.bf16.msra.mxu0 %v875
        %1130 = vmatprep.subr.bf16.mxu0 %v726
        %1131 = vmatpush1.bf16.msra.mxu0 %v725
        %1132 = vmatprep.subr.bf16.mxu0 %v694
        %1133 = vmatpush1.bf16.msra.mxu0 %v693
        %1134 = vmatprep.subr.bf16.mxu0 0
        %1135 = vmatpush2.bf16.msra.mxu0 0
        %1136 = vmatprep.subr.bf16.mxu0 0
        %1137 = vmatpush2.bf16.msra.mxu0 0
        %1138 = vmatprep.subr.bf16.mxu0 0
        %1139 = vmatpush2.bf16.msra.mxu0 0
        %1140 = vmatprep.subr.bf16.mxu0 0
        %1141 = vmatpush2.bf16.msra.mxu0 0
        %1142 = vmatprep.subr.bf16.mxu0 0
        %1143 = vmatpush2.bf16.msra.mxu0 0
        %1144 = vmatprep.subr.bf16.mxu0 0
        %1145 = vmatpush2.bf16.msra.mxu0 0
        %1146 = vmatprep.subr.bf16.mxu0 0
        %1147 = vmatpush2.bf16.msra.mxu0 0
        %1148 = vmatprep.subr.bf16.mxu0 0
        %1149 = vmatpush2.bf16.msra.mxu0 0
        %1150 = vmatprep.mubr.bf16.mxu0 0
        %1151 = vmatmul.mubr.bf16.gmra.mxu0 %v847
        %v1152 = vpop.f32.mrf.mxu0
        %v1153 = vadd.f32 %v433, %v1152
        %v1154 = vpop.f32.mrf.mxu0
        %v1155 = vadd.f32 %v433, %v1154
        %v1156 = vpop.f32.mrf.mxu0
        %v1157 = vadd.f32 %v438, %v1156
        %v1158 = vpop.f32.mrf.mxu0
        %v1159 = vadd.f32 %v438, %v1158
        %1160 = vdwg.mxu0
        %1161 = vmatprep.subr.bf16.mxu0 0
        %1162 = vmatpush1.bf16.msra.mxu0 0
        %1163 = vmatprep.subr.bf16.mxu0 0
        %1164 = vmatpush1.bf16.msra.mxu0 0
        %1165 = vmatprep.subr.bf16.mxu0 0
        %1166 = vmatpush1.bf16.msra.mxu0 0
        %1167 = vmatprep.subr.bf16.mxu0 0
        %1168 = vmatpush1.bf16.msra.mxu0 0
        %1169 = vmatprep.subr.bf16.mxu0 0
        %1170 = vmatpush1.bf16.msra.mxu0 0
        %1171 = vmatprep.subr.bf16.mxu0 %v884
        %1172 = vmatpush1.bf16.msra.mxu0 %v881
        %1173 = vmatprep.subr.bf16.mxu0 %v728
        %1174 = vmatpush1.bf16.msra.mxu0 %v727
        %1175 = vmatprep.subr.bf16.mxu0 %v696
        %1176 = vmatpush1.bf16.msra.mxu0 %v695
        %1177 = vmatprep.subr.bf16.mxu0 0
        %1178 = vmatpush2.bf16.msra.mxu0 0
        %1179 = vmatprep.subr.bf16.mxu0 0
        %1180 = vmatpush2.bf16.msra.mxu0 0
        %1181 = vmatprep.subr.bf16.mxu0 0
        %1182 = vmatpush2.bf16.msra.mxu0 0
        %1183 = vmatprep.subr.bf16.mxu0 0
        %1184 = vmatpush2.bf16.msra.mxu0 0
        %1185 = vmatprep.subr.bf16.mxu0 0
        %1186 = vmatpush2.bf16.msra.mxu0 0
        %1187 = vmatprep.subr.bf16.mxu0 0
        %1188 = vmatpush2.bf16.msra.mxu0 0
        %1189 = vmatprep.subr.bf16.mxu0 0
        %1190 = vmatpush2.bf16.msra.mxu0 0
        %1191 = vmatprep.subr.bf16.mxu0 0
        %1192 = vmatpush2.bf16.msra.mxu0 0
        %1193 = vmatprep.mubr.bf16.mxu0 0
        %1194 = vmatmul.mubr.bf16.gmra.mxu0 %v847
        %v1195 = vpop.f32.mrf.mxu0
        %v1196 = vadd.f32 %v433, %v1195
        %v1197 = vpop.f32.mrf.mxu0
        %v1198 = vadd.f32 %v433, %v1197
        %v1199 = vpop.f32.mrf.mxu0
        %v1200 = vadd.f32 %v438, %v1199
        %v1201 = vpop.f32.mrf.mxu0
        %v1202 = vadd.f32 %v438, %v1201
        %1203 = vdwg.mxu0
        %1204 = vmatprep.subr.bf16.mxu0 0
        %1205 = vmatpush1.bf16.msra.mxu0 0
        %1206 = vmatprep.subr.bf16.mxu0 0
        %1207 = vmatpush1.bf16.msra.mxu0 0
        %1208 = vmatprep.subr.bf16.mxu0 0
        %1209 = vmatpush1.bf16.msra.mxu0 0
        %1210 = vmatprep.subr.bf16.mxu0 0
        %1211 = vmatpush1.bf16.msra.mxu0 0
        %1212 = vmatprep.subr.bf16.mxu0 0
        %1213 = vmatpush1.bf16.msra.mxu0 0
        %1214 = vmatprep.subr.bf16.mxu0 %v890
        %1215 = vmatpush1.bf16.msra.mxu0 %v887
        %1216 = vmatprep.subr.bf16.mxu0 %v730
        %1217 = vmatpush1.bf16.msra.mxu0 %v729
        %1218 = vmatprep.subr.bf16.mxu0 %v698
        %1219 = vmatpush1.bf16.msra.mxu0 %v697
        %1220 = vmatprep.subr.bf16.mxu0 0
        %1221 = vmatpush2.bf16.msra.mxu0 0
        %1222 = vmatprep.subr.bf16.mxu0 0
        %1223 = vmatpush2.bf16.msra.mxu0 0
        %1224 = vmatprep.subr.bf16.mxu0 0
        %1225 = vmatpush2.bf16.msra.mxu0 0
        %1226 = vmatprep.subr.bf16.mxu0 0
        %1227 = vmatpush2.bf16.msra.mxu0 0
        %1228 = vmatprep.subr.bf16.mxu0 0
        %1229 = vmatpush2.bf16.msra.mxu0 0
        %1230 = vmatprep.subr.bf16.mxu0 0
        %1231 = vmatpush2.bf16.msra.mxu0 0
        %1232 = vmatprep.subr.bf16.mxu0 0
        %1233 = vmatpush2.bf16.msra.mxu0 0
        %1234 = vmatprep.subr.bf16.mxu0 0
        %1235 = vmatpush2.bf16.msra.mxu0 0
        %1236 = vmatprep.mubr.bf16.mxu0 0
        %1237 = vmatmul.mubr.bf16.gmra.mxu0 %v847
        %v1238 = vpop.f32.mrf.mxu0
        %v1239 = vadd.f32 %v433, %v1238
        %v1240 = vpop.f32.mrf.mxu0
        %v1241 = vadd.f32 %v433, %v1240
        %v1242 = vpop.f32.mrf.mxu0
        %v1243 = vadd.f32 %v438, %v1242
        %v1244 = vpop.f32.mrf.mxu0
        %v1245 = vadd.f32 %v438, %v1244
        %1246 = vdwg.mxu0
        %1247 = vmatprep.subr.bf16.mxu0 0
        %1248 = vmatpush1.bf16.msra.mxu0 0
        %1249 = vmatprep.subr.bf16.mxu0 0
        %1250 = vmatpush1.bf16.msra.mxu0 0
        %1251 = vmatprep.subr.bf16.mxu0 0
        %1252 = vmatpush1.bf16.msra.mxu0 0
        %1253 = vmatprep.subr.bf16.mxu0 0
        %1254 = vmatpush1.bf16.msra.mxu0 0
        %1255 = vmatprep.subr.bf16.mxu0 0
        %1256 = vmatpush1.bf16.msra.mxu0 0
        %1257 = vmatprep.subr.bf16.mxu0 %v896
        %1258 = vmatpush1.bf16.msra.mxu0 %v893
        %1259 = vmatprep.subr.bf16.mxu0 %v732
        %1260 = vmatpush1.bf16.msra.mxu0 %v731
        %1261 = vmatprep.subr.bf16.mxu0 %v700
        %1262 = vmatpush1.bf16.msra.mxu0 %v699
        %1263 = vmatprep.subr.bf16.mxu0 0
        %1264 = vmatpush2.bf16.msra.mxu0 0
        %1265 = vmatprep.subr.bf16.mxu0 0
        %1266 = vmatpush2.bf16.msra.mxu0 0
        %1267 = vmatprep.subr.bf16.mxu0 0
        %1268 = vmatpush2.bf16.msra.mxu0 0
        %1269 = vmatprep.subr.bf16.mxu0 0
        %1270 = vmatpush2.bf16.msra.mxu0 0
        %1271 = vmatprep.subr.bf16.mxu0 0
        %1272 = vmatpush2.bf16.msra.mxu0 0
        %1273 = vmatprep.subr.bf16.mxu0 0
        %1274 = vmatpush2.bf16.msra.mxu0 0
        %1275 = vmatprep.subr.bf16.mxu0 0
        %1276 = vmatpush2.bf16.msra.mxu0 0
        %1277 = vmatprep.subr.bf16.mxu0 0
        %1278 = vmatpush2.bf16.msra.mxu0 0
        %1279 = vmatprep.mubr.bf16.mxu0 0
        %1280 = vmatmul.mubr.bf16.gmra.mxu0 %v847
        %v1281 = vpop.f32.mrf.mxu0
        %v1282 = vadd.f32 %v433, %v1281
        %v1283 = vpop.f32.mrf.mxu0
        %v1284 = vadd.f32 %v433, %v1283
        %v1285 = vpop.f32.mrf.mxu0
        %v1286 = vadd.f32 %v438, %v1285
        %v1287 = vpop.f32.mrf.mxu0
        %v1288 = vadd.f32 %v438, %v1287
        %1289 = vdwg.mxu0
        %1290 = vmatprep.subr.bf16.mxu0 0
        %1291 = vmatpush1.bf16.msra.mxu0 0
        %1292 = vmatprep.subr.bf16.mxu0 0
        %1293 = vmatpush1.bf16.msra.mxu0 0
        %1294 = vmatprep.subr.bf16.mxu0 0
        %1295 = vmatpush1.bf16.msra.mxu0 0
        %1296 = vmatprep.subr.bf16.mxu0 0
        %1297 = vmatpush1.bf16.msra.mxu0 0
        %1298 = vmatprep.subr.bf16.mxu0 0
        %1299 = vmatpush1.bf16.msra.mxu0 0
        %1300 = vmatprep.subr.bf16.mxu0 %v902
        %1301 = vmatpush1.bf16.msra.mxu0 %v899
        %1302 = vmatprep.subr.bf16.mxu0 %v734
        %1303 = vmatpush1.bf16.msra.mxu0 %v733
        %1304 = vmatprep.subr.bf16.mxu0 %v702
        %1305 = vmatpush1.bf16.msra.mxu0 %v701
        %1306 = vmatprep.subr.bf16.mxu0 0
        %1307 = vmatpush2.bf16.msra.mxu0 0
        %1308 = vmatprep.subr.bf16.mxu0 0
        %1309 = vmatpush2.bf16.msra.mxu0 0
        %1310 = vmatprep.subr.bf16.mxu0 0
        %1311 = vmatpush2.bf16.msra.mxu0 0
        %1312 = vmatprep.subr.bf16.mxu0 0
        %1313 = vmatpush2.bf16.msra.mxu0 0
        %1314 = vmatprep.subr.bf16.mxu0 0
        %1315 = vmatpush2.bf16.msra.mxu0 0
        %1316 = vmatprep.subr.bf16.mxu0 0
        %1317 = vmatpush2.bf16.msra.mxu0 0
        %1318 = vmatprep.subr.bf16.mxu0 0
        %1319 = vmatpush2.bf16.msra.mxu0 0
        %1320 = vmatprep.subr.bf16.mxu0 0
        %1321 = vmatpush2.bf16.msra.mxu0 0
        %1322 = vmatprep.mubr.bf16.mxu0 0
        %1323 = vmatmul.mubr.bf16.gmra.mxu0 %v847
        %v1324 = vpop.f32.mrf.mxu0
        %v1325 = vadd.f32 %v433, %v1324
        %v1326 = vpop.f32.mrf.mxu0
        %v1327 = vadd.f32 %v433, %v1326
        %v1328 = vpop.f32.mrf.mxu0
        %v1329 = vadd.f32 %v438, %v1328
        %v1330 = vpop.f32.mrf.mxu0
        %v1331 = vadd.f32 %v438, %v1330
        %1332 = vdwg.mxu0
        %1333 = vmatprep.subr.bf16.mxu0 0
        %1334 = vmatpush1.bf16.msra.mxu0 0
        %1335 = vmatprep.subr.bf16.mxu0 0
        %1336 = vmatpush1.bf16.msra.mxu0 0
        %1337 = vmatprep.subr.bf16.mxu0 0
        %1338 = vmatpush1.bf16.msra.mxu0 0
        %1339 = vmatprep.subr.bf16.mxu0 0
        %1340 = vmatpush1.bf16.msra.mxu0 0
        %1341 = vmatprep.subr.bf16.mxu0 0
        %1342 = vmatpush1.bf16.msra.mxu0 0
        %1343 = vmatprep.subr.bf16.mxu0 %v908
        %1344 = vmatpush1.bf16.msra.mxu0 %v905
        %1345 = vmatprep.subr.bf16.mxu0 %v736
        %1346 = vmatpush1.bf16.msra.mxu0 %v735
        %1347 = vmatprep.subr.bf16.mxu0 %v704
        %1348 = vmatpush1.bf16.msra.mxu0 %v703
        %1349 = vmatprep.subr.bf16.mxu0 0
        %1350 = vmatpush2.bf16.msra.mxu0 0
        %1351 = vmatprep.subr.bf16.mxu0 0
        %1352 = vmatpush2.bf16.msra.mxu0 0
        %1353 = vmatprep.subr.bf16.mxu0 0
        %1354 = vmatpush2.bf16.msra.mxu0 0
        %1355 = vmatprep.subr.bf16.mxu0 0
        %1356 = vmatpush2.bf16.msra.mxu0 0
        %1357 = vmatprep.subr.bf16.mxu0 0
        %1358 = vmatpush2.bf16.msra.mxu0 0
        %1359 = vmatprep.subr.bf16.mxu0 0
        %1360 = vmatpush2.bf16.msra.mxu0 0
        %1361 = vmatprep.subr.bf16.mxu0 0
        %1362 = vmatpush2.bf16.msra.mxu0 0
        %1363 = vmatprep.subr.bf16.mxu0 0
        %1364 = vmatpush2.bf16.msra.mxu0 0
        %1365 = vmatprep.mubr.bf16.mxu0 0
        %1366 = vmatmul.mubr.bf16.gmra.mxu0 %v847
        %v1367 = vpop.f32.mrf.mxu0
        %v1368 = vadd.f32 %v433, %v1367
        %v1369 = vpop.f32.mrf.mxu0
        %v1370 = vadd.f32 %v433, %v1369
        %v1371 = vpop.f32.mrf.mxu0
        %v1372 = vadd.f32 %v438, %v1371
        %v1373 = vpop.f32.mrf.mxu0
        %v1374 = vadd.f32 %v438, %v1373
        %1375 = vdwg.mxu0
        %1376 = vmatprep.subr.bf16.mxu0 0
        %1377 = vmatpush1.bf16.msra.mxu0 0
        %1378 = vmatprep.subr.bf16.mxu0 0
        %1379 = vmatpush1.bf16.msra.mxu0 0
        %1380 = vmatprep.subr.bf16.mxu0 0
        %1381 = vmatpush1.bf16.msra.mxu0 0
        %1382 = vmatprep.subr.bf16.mxu0 0
        %1383 = vmatpush1.bf16.msra.mxu0 0
        %1384 = vmatprep.subr.bf16.mxu0 0
        %1385 = vmatpush1.bf16.msra.mxu0 0
        %1386 = vmatprep.subr.bf16.mxu0 %v914
        %1387 = vmatpush1.bf16.msra.mxu0 %v911
        %1388 = vmatprep.subr.bf16.mxu0 %v738
        %1389 = vmatpush1.bf16.msra.mxu0 %v737
        %1390 = vmatprep.subr.bf16.mxu0 %v706
        %1391 = vmatpush1.bf16.msra.mxu0 %v705
        %1392 = vmatprep.subr.bf16.mxu0 0
        %1393 = vmatpush2.bf16.msra.mxu0 0
        %1394 = vmatprep.subr.bf16.mxu0 0
        %1395 = vmatpush2.bf16.msra.mxu0 0
        %1396 = vmatprep.subr.bf16.mxu0 0
        %1397 = vmatpush2.bf16.msra.mxu0 0
        %1398 = vmatprep.subr.bf16.mxu0 0
        %1399 = vmatpush2.bf16.msra.mxu0 0
        %1400 = vmatprep.subr.bf16.mxu0 0
        %1401 = vmatpush2.bf16.msra.mxu0 0
        %1402 = vmatprep.subr.bf16.mxu0 0
        %1403 = vmatpush2.bf16.msra.mxu0 0
        %1404 = vmatprep.subr.bf16.mxu0 0
        %1405 = vmatpush2.bf16.msra.mxu0 0
        %1406 = vmatprep.subr.bf16.mxu0 0
        %1407 = vmatpush2.bf16.msra.mxu0 0
        %1408 = vmatprep.mubr.bf16.mxu0 0
        %1409 = vmatmul.mubr.bf16.gmra.mxu0 %v847
        %v1410 = vpop.f32.mrf.mxu0
        %v1411 = vadd.f32 %v433, %v1410
        %v1412 = vpop.f32.mrf.mxu0
        %v1413 = vadd.f32 %v433, %v1412
        %v1414 = vpop.f32.mrf.mxu0
        %v1415 = vadd.f32 %v438, %v1414
        %v1416 = vpop.f32.mrf.mxu0
        %v1417 = vadd.f32 %v438, %v1416
        %1418 = vdwg.mxu0
        %1419 = vmatprep.subr.bf16.mxu0 0
        %1420 = vmatpush1.bf16.msra.mxu0 0
        %1421 = vmatprep.subr.bf16.mxu0 0
        %1422 = vmatpush1.bf16.msra.mxu0 0
        %1423 = vmatprep.subr.bf16.mxu0 0
        %1424 = vmatpush1.bf16.msra.mxu0 0
        %1425 = vmatprep.subr.bf16.mxu0 0
        %1426 = vmatpush1.bf16.msra.mxu0 0
        %1427 = vmatprep.subr.bf16.mxu0 0
        %1428 = vmatpush1.bf16.msra.mxu0 0
        %1429 = vmatprep.subr.bf16.mxu0 %v920
        %1430 = vmatpush1.bf16.msra.mxu0 %v917
        %1431 = vmatprep.subr.bf16.mxu0 %v740
        %1432 = vmatpush1.bf16.msra.mxu0 %v739
        %1433 = vmatprep.subr.bf16.mxu0 %v708
        %1434 = vmatpush1.bf16.msra.mxu0 %v707
        %1435 = vmatprep.subr.bf16.mxu0 0
        %1436 = vmatpush2.bf16.msra.mxu0 0
        %1437 = vmatprep.subr.bf16.mxu0 0
        %1438 = vmatpush2.bf16.msra.mxu0 0
        %1439 = vmatprep.subr.bf16.mxu0 0
        %1440 = vmatpush2.bf16.msra.mxu0 0
        %1441 = vmatprep.subr.bf16.mxu0 0
        %1442 = vmatpush2.bf16.msra.mxu0 0
        %1443 = vmatprep.subr.bf16.mxu0 0
        %1444 = vmatpush2.bf16.msra.mxu0 0
        %1445 = vmatprep.subr.bf16.mxu0 0
        %1446 = vmatpush2.bf16.msra.mxu0 0
        %1447 = vmatprep.subr.bf16.mxu0 0
        %1448 = vmatpush2.bf16.msra.mxu0 0
        %1449 = vmatprep.subr.bf16.mxu0 0
        %1450 = vmatpush2.bf16.msra.mxu0 0
        %1451 = vmatprep.mubr.bf16.mxu0 0
        %1452 = vmatmul.mubr.bf16.gmra.mxu0 %v847
        %v1453 = vpop.f32.mrf.mxu0
        %v1454 = vadd.f32 %v433, %v1453
        %v1455 = vpop.f32.mrf.mxu0
        %v1456 = vadd.f32 %v433, %v1455
        %v1457 = vpop.f32.mrf.mxu0
        %v1458 = vadd.f32 %v438, %v1457
        %v1459 = vpop.f32.mrf.mxu0
        %v1460 = vadd.f32 %v438, %v1459
        %1461 = vdwg.mxu0
        %1462 = vmatprep.subr.bf16.mxu0 0
        %1463 = vmatpush1.bf16.msra.mxu0 0
        %1464 = vmatprep.subr.bf16.mxu0 0
        %1465 = vmatpush1.bf16.msra.mxu0 0
        %1466 = vmatprep.subr.bf16.mxu0 0
        %1467 = vmatpush1.bf16.msra.mxu0 0
        %1468 = vmatprep.subr.bf16.mxu0 0
        %1469 = vmatpush1.bf16.msra.mxu0 0
        %1470 = vmatprep.subr.bf16.mxu0 0
        %1471 = vmatpush1.bf16.msra.mxu0 0
        %1472 = vmatprep.subr.bf16.mxu0 %v926
        %1473 = vmatpush1.bf16.msra.mxu0 %v923
        %1474 = vmatprep.subr.bf16.mxu0 %v742
        %1475 = vmatpush1.bf16.msra.mxu0 %v741
        %1476 = vmatprep.subr.bf16.mxu0 %v710
        %1477 = vmatpush1.bf16.msra.mxu0 %v709
        %1478 = vmatprep.subr.bf16.mxu0 0
        %1479 = vmatpush2.bf16.msra.mxu0 0
        %1480 = vmatprep.subr.bf16.mxu0 0
        %1481 = vmatpush2.bf16.msra.mxu0 0
        %1482 = vmatprep.subr.bf16.mxu0 0
        %1483 = vmatpush2.bf16.msra.mxu0 0
        %1484 = vmatprep.subr.bf16.mxu0 0
        %1485 = vmatpush2.bf16.msra.mxu0 0
        %1486 = vmatprep.subr.bf16.mxu0 0
        %1487 = vmatpush2.bf16.msra.mxu0 0
        %1488 = vmatprep.subr.bf16.mxu0 0
        %1489 = vmatpush2.bf16.msra.mxu0 0
        %1490 = vmatprep.subr.bf16.mxu0 0
        %1491 = vmatpush2.bf16.msra.mxu0 0
        %1492 = vmatprep.subr.bf16.mxu0 0
        %1493 = vmatpush2.bf16.msra.mxu0 0
        %1494 = vmatprep.mubr.bf16.mxu0 0
        %1495 = vmatmul.mubr.bf16.gmra.mxu0 %v847
        %v1496 = vpop.f32.mrf.mxu0
        %v1497 = vadd.f32 %v433, %v1496
        %v1498 = vpop.f32.mrf.mxu0
        %v1499 = vadd.f32 %v433, %v1498
        %v1500 = vpop.f32.mrf.mxu0
        %v1501 = vadd.f32 %v438, %v1500
        %v1502 = vpop.f32.mrf.mxu0
        %v1503 = vadd.f32 %v438, %v1502
        %1504 = vdwg.mxu0
        %1505 = vmatprep.subr.bf16.mxu0 0
        %1506 = vmatpush1.bf16.msra.mxu0 0
        %1507 = vmatprep.subr.bf16.mxu0 0
        %1508 = vmatpush1.bf16.msra.mxu0 0
        %1509 = vmatprep.subr.bf16.mxu0 0
        %1510 = vmatpush1.bf16.msra.mxu0 0
        %1511 = vmatprep.subr.bf16.mxu0 0
        %1512 = vmatpush1.bf16.msra.mxu0 0
        %1513 = vmatprep.subr.bf16.mxu0 0
        %1514 = vmatpush1.bf16.msra.mxu0 0
        %1515 = vmatprep.subr.bf16.mxu0 %v932
        %1516 = vmatpush1.bf16.msra.mxu0 %v929
        %1517 = vmatprep.subr.bf16.mxu0 %v744
        %1518 = vmatpush1.bf16.msra.mxu0 %v743
        %1519 = vmatprep.subr.bf16.mxu0 %v712
        %1520 = vmatpush1.bf16.msra.mxu0 %v711
        %1521 = vmatprep.subr.bf16.mxu0 0
        %1522 = vmatpush2.bf16.msra.mxu0 0
        %1523 = vmatprep.subr.bf16.mxu0 0
        %1524 = vmatpush2.bf16.msra.mxu0 0
        %1525 = vmatprep.subr.bf16.mxu0 0
        %1526 = vmatpush2.bf16.msra.mxu0 0
        %1527 = vmatprep.subr.bf16.mxu0 0
        %1528 = vmatpush2.bf16.msra.mxu0 0
        %1529 = vmatprep.subr.bf16.mxu0 0
        %1530 = vmatpush2.bf16.msra.mxu0 0
        %1531 = vmatprep.subr.bf16.mxu0 0
        %1532 = vmatpush2.bf16.msra.mxu0 0
        %1533 = vmatprep.subr.bf16.mxu0 0
        %1534 = vmatpush2.bf16.msra.mxu0 0
        %1535 = vmatprep.subr.bf16.mxu0 0
        %1536 = vmatpush2.bf16.msra.mxu0 0
        %1537 = vmatprep.mubr.bf16.mxu0 0
        %1538 = vmatmul.mubr.bf16.gmra.mxu0 %v847
        %v1539 = vpop.f32.mrf.mxu0
        %v1540 = vadd.f32 %v433, %v1539
        %v1541 = vpop.f32.mrf.mxu0
        %v1542 = vadd.f32 %v433, %v1541
        %v1543 = vpop.f32.mrf.mxu0
        %v1544 = vadd.f32 %v438, %v1543
        %v1545 = vpop.f32.mrf.mxu0
        %v1546 = vadd.f32 %v438, %v1545
        %1547 = vdwg.mxu0
        %1548 = vmatprep.subr.bf16.mxu0 0
        %1549 = vmatpush1.bf16.msra.mxu0 0
        %1550 = vmatprep.subr.bf16.mxu0 0
        %1551 = vmatpush1.bf16.msra.mxu0 0
        %1552 = vmatprep.subr.bf16.mxu0 0
        %1553 = vmatpush1.bf16.msra.mxu0 0
        %1554 = vmatprep.subr.bf16.mxu0 0
        %1555 = vmatpush1.bf16.msra.mxu0 0
        %1556 = vmatprep.subr.bf16.mxu0 0
        %1557 = vmatpush1.bf16.msra.mxu0 0
        %1558 = vmatprep.subr.bf16.mxu0 %v938
        %1559 = vmatpush1.bf16.msra.mxu0 %v935
        %1560 = vmatprep.subr.bf16.mxu0 %v746
        %1561 = vmatpush1.bf16.msra.mxu0 %v745
        %1562 = vmatprep.subr.bf16.mxu0 %v714
        %1563 = vmatpush1.bf16.msra.mxu0 %v713
        %1564 = vmatprep.subr.bf16.mxu0 0
        %1565 = vmatpush2.bf16.msra.mxu0 0
        %1566 = vmatprep.subr.bf16.mxu0 0
        %1567 = vmatpush2.bf16.msra.mxu0 0
        %1568 = vmatprep.subr.bf16.mxu0 0
        %1569 = vmatpush2.bf16.msra.mxu0 0
        %1570 = vmatprep.subr.bf16.mxu0 0
        %1571 = vmatpush2.bf16.msra.mxu0 0
        %1572 = vmatprep.subr.bf16.mxu0 0
        %1573 = vmatpush2.bf16.msra.mxu0 0
        %1574 = vmatprep.subr.bf16.mxu0 0
        %1575 = vmatpush2.bf16.msra.mxu0 0
        %1576 = vmatprep.subr.bf16.mxu0 0
        %1577 = vmatpush2.bf16.msra.mxu0 0
        %1578 = vmatprep.subr.bf16.mxu0 0
        %1579 = vmatpush2.bf16.msra.mxu0 0
        %1580 = vmatprep.mubr.bf16.mxu0 0
        %1581 = vmatmul.mubr.bf16.gmra.mxu0 %v847
        %v1582 = vpop.f32.mrf.mxu0
        %v1583 = vadd.f32 %v433, %v1582
        %v1584 = vpop.f32.mrf.mxu0
        %v1585 = vadd.f32 %v433, %v1584
        %v1586 = vpop.f32.mrf.mxu0
        %v1587 = vadd.f32 %v438, %v1586
        %v1588 = vpop.f32.mrf.mxu0
        %v1589 = vadd.f32 %v438, %v1588
        %1590 = vdwg.mxu0
        %1591 = vmatprep.subr.bf16.mxu0 0
        %1592 = vmatpush1.bf16.msra.mxu0 0
        %1593 = vmatprep.subr.bf16.mxu0 0
        %1594 = vmatpush1.bf16.msra.mxu0 0
        %1595 = vmatprep.subr.bf16.mxu0 0
        %1596 = vmatpush1.bf16.msra.mxu0 0
        %1597 = vmatprep.subr.bf16.mxu0 0
        %1598 = vmatpush1.bf16.msra.mxu0 0
        %1599 = vmatprep.subr.bf16.mxu0 0
        %1600 = vmatpush1.bf16.msra.mxu0 0
        %1601 = vmatprep.subr.bf16.mxu0 %v944
        %1602 = vmatpush1.bf16.msra.mxu0 %v941
        %1603 = vmatprep.subr.bf16.mxu0 %v748
        %1604 = vmatpush1.bf16.msra.mxu0 %v747
        %1605 = vmatprep.subr.bf16.mxu0 %v716
        %1606 = vmatpush1.bf16.msra.mxu0 %v715
        %1607 = vmatprep.subr.bf16.mxu0 0
        %1608 = vmatpush2.bf16.msra.mxu0 0
        %1609 = vmatprep.subr.bf16.mxu0 0
        %1610 = vmatpush2.bf16.msra.mxu0 0
        %1611 = vmatprep.subr.bf16.mxu0 0
        %1612 = vmatpush2.bf16.msra.mxu0 0
        %1613 = vmatprep.subr.bf16.mxu0 0
        %1614 = vmatpush2.bf16.msra.mxu0 0
        %1615 = vmatprep.subr.bf16.mxu0 0
        %1616 = vmatpush2.bf16.msra.mxu0 0
        %1617 = vmatprep.subr.bf16.mxu0 0
        %1618 = vmatpush2.bf16.msra.mxu0 0
        %1619 = vmatprep.subr.bf16.mxu0 0
        %1620 = vmatpush2.bf16.msra.mxu0 0
        %1621 = vmatprep.subr.bf16.mxu0 0
        %1622 = vmatpush2.bf16.msra.mxu0 0
        %1623 = vmatprep.mubr.bf16.mxu0 0
        %1624 = vmatmul.mubr.bf16.gmra.mxu0 %v847
        %v1625 = vpop.f32.mrf.mxu0
        %v1626 = vadd.f32 %v433, %v1625
        %v1627 = vpop.f32.mrf.mxu0
        %v1628 = vadd.f32 %v433, %v1627
        %v1629 = vpop.f32.mrf.mxu0
        %v1630 = vadd.f32 %v438, %v1629
        %v1631 = vpop.f32.mrf.mxu0
        %v1632 = vadd.f32 %v438, %v1631
        %1633 = vdwg.mxu0
        %v1634 = vsub.f32 0.0, %v981
        %v1635 = vsub.f32 0.0, %v983
        %v1636 = vsub.f32 0.0, %v1024
        %v1637 = vsub.f32 0.0, %v1026
        %v1638 = vsub.f32 0.0, %v1067
        %v1639 = vsub.f32 0.0, %v1069
        %v1640 = vsub.f32 0.0, %v1110
        %v1641 = vsub.f32 0.0, %v1112
        %v1642 = vsub.f32 0.0, %v1153
        %v1643 = vsub.f32 0.0, %v1155
        %v1644 = vsub.f32 0.0, %v1196
        %v1645 = vsub.f32 0.0, %v1198
        %v1646 = vsub.f32 0.0, %v1239
        %v1647 = vsub.f32 0.0, %v1241
        %v1648 = vsub.f32 0.0, %v1282
        %v1649 = vsub.f32 0.0, %v1284
        %v1650 = vsub.f32 0.0, %v1325
        %v1651 = vsub.f32 0.0, %v1327
        %v1652 = vsub.f32 0.0, %v1368
        %v1653 = vsub.f32 0.0, %v1370
        %v1654 = vsub.f32 0.0, %v1411
        %v1655 = vsub.f32 0.0, %v1413
        %v1656 = vsub.f32 0.0, %v1454
        %v1657 = vsub.f32 0.0, %v1456
        %v1658 = vsub.f32 0.0, %v1497
        %v1659 = vsub.f32 0.0, %v1499
        %v1660 = vsub.f32 0.0, %v1540
        %v1661 = vsub.f32 0.0, %v1542
        %v1662 = vsub.f32 0.0, %v1583
        %v1663 = vsub.f32 0.0, %v1585
        %v1664 = vsub.f32 0.0, %v1626
        %v1665 = vsub.f32 0.0, %v1628
        %v1666 = vsub.f32 0.0, %v985
        %v1667 = vsub.f32 0.0, %v987
        %v1668 = vsub.f32 0.0, %v1028
        %v1669 = vsub.f32 0.0, %v1030
        %v1670 = vsub.f32 0.0, %v1071
        %v1671 = vsub.f32 0.0, %v1073
        %v1672 = vsub.f32 0.0, %v1114
        %v1673 = vsub.f32 0.0, %v1116
        %v1674 = vsub.f32 0.0, %v1157
        %v1675 = vsub.f32 0.0, %v1159
        %v1676 = vsub.f32 0.0, %v1200
        %v1677 = vsub.f32 0.0, %v1202
        %v1678 = vsub.f32 0.0, %v1243
        %v1679 = vsub.f32 0.0, %v1245
        %v1680 = vsub.f32 0.0, %v1286
        %v1681 = vsub.f32 0.0, %v1288
        %v1682 = vsub.f32 0.0, %v1329
        %v1683 = vsub.f32 0.0, %v1331
        %v1684 = vsub.f32 0.0, %v1372
        %v1685 = vsub.f32 0.0, %v1374
        %v1686 = vsub.f32 0.0, %v1415
        %v1687 = vsub.f32 0.0, %v1417
        %v1688 = vsub.f32 0.0, %v1458
        %v1689 = vsub.f32 0.0, %v1460
        %v1690 = vsub.f32 0.0, %v1501
        %v1691 = vsub.f32 0.0, %v1503
        %v1692 = vsub.f32 0.0, %v1544
        %v1693 = vsub.f32 0.0, %v1546
        %v1694 = vsub.f32 0.0, %v1587
        %v1695 = vsub.f32 0.0, %v1589
        %v1696 = vsub.f32 0.0, %v1630
        %v1697 = vsub.f32 0.0, %v1632
        %v1698 = vmul.f32 %v1634, 1.442695
        %v1699 = vpow.pop %v1698
        %v1700 = vmul.f32 %v1635, 1.442695
        %v1701 = vpow.pop %v1700
        %v1702 = vmul.f32 %v1636, 1.442695
        %v1703 = vpow.pop %v1702
        %v1704 = vmul.f32 %v1637, 1.442695
        %v1705 = vpow.pop %v1704
        %v1706 = vmul.f32 %v1638, 1.442695
        %v1707 = vpow.pop %v1706
        %v1708 = vmul.f32 %v1639, 1.442695
        %v1709 = vpow.pop %v1708
        %v1710 = vmul.f32 %v1640, 1.442695
        %v1711 = vpow.pop %v1710
        %v1712 = vmul.f32 %v1641, 1.442695
        %v1713 = vpow.pop %v1712
        %v1714 = vmul.f32 %v1642, 1.442695
        %v1715 = vpow.pop %v1714
        %v1716 = vmul.f32 %v1643, 1.442695
        %v1717 = vpow.pop %v1716
        %v1718 = vmul.f32 %v1644, 1.442695
        %v1719 = vpow.pop %v1718
        %v1720 = vmul.f32 %v1645, 1.442695
        %v1721 = vpow.pop %v1720
        %v1722 = vmul.f32 %v1646, 1.442695
        %v1723 = vpow.pop %v1722
        %v1724 = vmul.f32 %v1647, 1.442695
        %v1725 = vpow.pop %v1724
        %v1726 = vmul.f32 %v1648, 1.442695
        %v1727 = vpow.pop %v1726
        %v1728 = vmul.f32 %v1649, 1.442695
        %v1729 = vpow.pop %v1728
        %v1730 = vmul.f32 %v1650, 1.442695
        %v1731 = vpow.pop %v1730
        %v1732 = vmul.f32 %v1651, 1.442695
        %v1733 = vpow.pop %v1732
        %v1734 = vmul.f32 %v1652, 1.442695
        %v1735 = vpow.pop %v1734
        %v1736 = vmul.f32 %v1653, 1.442695
        %v1737 = vpow.pop %v1736
        %v1738 = vmul.f32 %v1654, 1.442695
        %v1739 = vpow.pop %v1738
        %v1740 = vmul.f32 %v1655, 1.442695
        %v1741 = vpow.pop %v1740
        %v1742 = vmul.f32 %v1656, 1.442695
        %v1743 = vpow.pop %v1742
        %v1744 = vmul.f32 %v1657, 1.442695
        %v1745 = vpow.pop %v1744
        %v1746 = vmul.f32 %v1658, 1.442695
        %v1747 = vpow.pop %v1746
        %v1748 = vmul.f32 %v1659, 1.442695
        %v1749 = vpow.pop %v1748
        %v1750 = vmul.f32 %v1660, 1.442695
        %v1751 = vpow.pop %v1750
        %v1752 = vmul.f32 %v1661, 1.442695
        %v1753 = vpow.pop %v1752
        %v1754 = vmul.f32 %v1662, 1.442695
        %v1755 = vpow.pop %v1754
        %v1756 = vmul.f32 %v1663, 1.442695
        %v1757 = vpow.pop %v1756
        %v1758 = vmul.f32 %v1664, 1.442695
        %v1759 = vpow.pop %v1758
        %v1760 = vmul.f32 %v1665, 1.442695
        %v1761 = vpow.pop %v1760
        %v1762 = vmul.f32 %v1666, 1.442695
        %v1763 = vpow.pop %v1762
        %v1764 = vmul.f32 %v1667, 1.442695
        %v1765 = vpow.pop %v1764
        %v1766 = vmul.f32 %v1668, 1.442695
        %v1767 = vpow.pop %v1766
        %v1768 = vmul.f32 %v1669, 1.442695
        %v1769 = vpow.pop %v1768
        %v1770 = vmul.f32 %v1670, 1.442695
        %v1771 = vpow.pop %v1770
        %v1772 = vmul.f32 %v1671, 1.442695
        %v1773 = vpow.pop %v1772
        %v1774 = vmul.f32 %v1672, 1.442695
        %v1775 = vpow.pop %v1774
        %v1776 = vmul.f32 %v1673, 1.442695
        %v1777 = vpow.pop %v1776
        %v1778 = vmul.f32 %v1674, 1.442695
        %v1779 = vpow.pop %v1778
        %v1780 = vmul.f32 %v1675, 1.442695
        %v1781 = vpow.pop %v1780
        %v1782 = vmul.f32 %v1676, 1.442695
        %v1783 = vpow.pop %v1782
        %v1784 = vmul.f32 %v1677, 1.442695
        %v1785 = vpow.pop %v1784
        %v1786 = vmul.f32 %v1678, 1.442695
        %v1787 = vpow.pop %v1786
        %v1788 = vmul.f32 %v1679, 1.442695
        %v1789 = vpow.pop %v1788
        %v1790 = vmul.f32 %v1680, 1.442695
        %v1791 = vpow.pop %v1790
        %v1792 = vmul.f32 %v1681, 1.442695
        %v1793 = vpow.pop %v1792
        %v1794 = vmul.f32 %v1682, 1.442695
        %v1795 = vpow.pop %v1794
        %v1796 = vmul.f32 %v1683, 1.442695
        %v1797 = vpow.pop %v1796
        %v1798 = vmul.f32 %v1684, 1.442695
        %v1799 = vpow.pop %v1798
        %v1800 = vmul.f32 %v1685, 1.442695
        %v1801 = vpow.pop %v1800
        %v1802 = vmul.f32 %v1686, 1.442695
        %v1803 = vpow.pop %v1802
        %v1804 = vmul.f32 %v1687, 1.442695
        %v1805 = vpow.pop %v1804
        %v1806 = vmul.f32 %v1688, 1.442695
        %v1807 = vpow.pop %v1806
        %v1808 = vmul.f32 %v1689, 1.442695
        %v1809 = vpow.pop %v1808
        %v1810 = vmul.f32 %v1690, 1.442695
        %v1811 = vpow.pop %v1810
        %v1812 = vmul.f32 %v1691, 1.442695
        %v1813 = vpow.pop %v1812
        %v1814 = vmul.f32 %v1692, 1.442695
        %v1815 = vpow.pop %v1814
        %v1816 = vmul.f32 %v1693, 1.442695
        %v1817 = vpow.pop %v1816
        %v1818 = vmul.f32 %v1694, 1.442695
        %v1819 = vpow.pop %v1818
        %v1820 = vmul.f32 %v1695, 1.442695
        %v1821 = vpow.pop %v1820
        %v1822 = vmul.f32 %v1696, 1.442695
        %v1823 = vpow.pop %v1822
        %v1824 = vmul.f32 %v1697, 1.442695
        %v1825 = vpow.pop %v1824
        %v1826 = vadd.f32 %v1699, 1.0
        %v1827 = vadd.f32 %v1701, 1.0
        %v1828 = vadd.f32 %v1703, 1.0
        %v1829 = vadd.f32 %v1705, 1.0
        %v1830 = vadd.f32 %v1707, 1.0
        %v1831 = vadd.f32 %v1709, 1.0
        %v1832 = vadd.f32 %v1711, 1.0
        %v1833 = vadd.f32 %v1713, 1.0
        %v1834 = vadd.f32 %v1715, 1.0
        %v1835 = vadd.f32 %v1717, 1.0
        %v1836 = vadd.f32 %v1719, 1.0
        %v1837 = vadd.f32 %v1721, 1.0
        %v1838 = vadd.f32 %v1723, 1.0
        %v1839 = vadd.f32 %v1725, 1.0
        %v1840 = vadd.f32 %v1727, 1.0
        %v1841 = vadd.f32 %v1729, 1.0
        %v1842 = vadd.f32 %v1731, 1.0
        %v1843 = vadd.f32 %v1733, 1.0
        %v1844 = vadd.f32 %v1735, 1.0
        %v1845 = vadd.f32 %v1737, 1.0
        %v1846 = vadd.f32 %v1739, 1.0
        %v1847 = vadd.f32 %v1741, 1.0
        %v1848 = vadd.f32 %v1743, 1.0
        %v1849 = vadd.f32 %v1745, 1.0
        %v1850 = vadd.f32 %v1747, 1.0
        %v1851 = vadd.f32 %v1749, 1.0
        %v1852 = vadd.f32 %v1751, 1.0
        %v1853 = vadd.f32 %v1753, 1.0
        %v1854 = vadd.f32 %v1755, 1.0
        %v1855 = vadd.f32 %v1757, 1.0
        %v1856 = vadd.f32 %v1759, 1.0
        %v1857 = vadd.f32 %v1761, 1.0
        %v1858 = vadd.f32 %v1763, 1.0
        %v1859 = vadd.f32 %v1765, 1.0
        %v1860 = vadd.f32 %v1767, 1.0
        %v1861 = vadd.f32 %v1769, 1.0
        %v1862 = vadd.f32 %v1771, 1.0
        %v1863 = vadd.f32 %v1773, 1.0
        %v1864 = vadd.f32 %v1775, 1.0
        %v1865 = vadd.f32 %v1777, 1.0
        %v1866 = vadd.f32 %v1779, 1.0
        %v1867 = vadd.f32 %v1781, 1.0
        %v1868 = vadd.f32 %v1783, 1.0
        %v1869 = vadd.f32 %v1785, 1.0
        %v1870 = vadd.f32 %v1787, 1.0
        %v1871 = vadd.f32 %v1789, 1.0
        %v1872 = vadd.f32 %v1791, 1.0
        %v1873 = vadd.f32 %v1793, 1.0
        %v1874 = vadd.f32 %v1795, 1.0
        %v1875 = vadd.f32 %v1797, 1.0
        %v1876 = vadd.f32 %v1799, 1.0
        %v1877 = vadd.f32 %v1801, 1.0
        %v1878 = vadd.f32 %v1803, 1.0
        %v1879 = vadd.f32 %v1805, 1.0
        %v1880 = vadd.f32 %v1807, 1.0
        %v1881 = vadd.f32 %v1809, 1.0
        %v1882 = vadd.f32 %v1811, 1.0
        %v1883 = vadd.f32 %v1813, 1.0
        %v1884 = vadd.f32 %v1815, 1.0
        %v1885 = vadd.f32 %v1817, 1.0
        %v1886 = vadd.f32 %v1819, 1.0
        %v1887 = vadd.f32 %v1821, 1.0
        %v1888 = vadd.f32 %v1823, 1.0
        %v1889 = vadd.f32 %v1825, 1.0
        %v1890 = vrcp.pop %v1826
        %v1891 = vmul.f32 1.0, %v1890
        %v1892 = vrcp.pop %v1827
        %v1893 = vmul.f32 1.0, %v1892
        %v1894 = vrcp.pop %v1828
        %v1895 = vmul.f32 1.0, %v1894
        %v1896 = vrcp.pop %v1829
        %v1897 = vmul.f32 1.0, %v1896
        %v1898 = vrcp.pop %v1830
        %v1899 = vmul.f32 1.0, %v1898
        %v1900 = vrcp.pop %v1831
        %v1901 = vmul.f32 1.0, %v1900
        %v1902 = vrcp.pop %v1832
        %v1903 = vmul.f32 1.0, %v1902
        %v1904 = vrcp.pop %v1833
        %v1905 = vmul.f32 1.0, %v1904
        %v1906 = vrcp.pop %v1834
        %v1907 = vmul.f32 1.0, %v1906
        %v1908 = vrcp.pop %v1835
        %v1909 = vmul.f32 1.0, %v1908
        %v1910 = vrcp.pop %v1836
        %v1911 = vmul.f32 1.0, %v1910
        %v1912 = vrcp.pop %v1837
        %v1913 = vmul.f32 1.0, %v1912
        %v1914 = vrcp.pop %v1838
        %v1915 = vmul.f32 1.0, %v1914
        %v1916 = vrcp.pop %v1839
        %v1917 = vmul.f32 1.0, %v1916
        %v1918 = vrcp.pop %v1840
        %v1919 = vmul.f32 1.0, %v1918
        %v1920 = vrcp.pop %v1841
        %v1921 = vmul.f32 1.0, %v1920
        %v1922 = vrcp.pop %v1842
        %v1923 = vmul.f32 1.0, %v1922
        %v1924 = vrcp.pop %v1843
        %v1925 = vmul.f32 1.0, %v1924
        %v1926 = vrcp.pop %v1844
        %v1927 = vmul.f32 1.0, %v1926
        %v1928 = vrcp.pop %v1845
        %v1929 = vmul.f32 1.0, %v1928
        %v1930 = vrcp.pop %v1846
        %v1931 = vmul.f32 1.0, %v1930
        %v1932 = vrcp.pop %v1847
        %v1933 = vmul.f32 1.0, %v1932
        %v1934 = vrcp.pop %v1848
        %v1935 = vmul.f32 1.0, %v1934
        %v1936 = vrcp.pop %v1849
        %v1937 = vmul.f32 1.0, %v1936
        %v1938 = vrcp.pop %v1850
        %v1939 = vmul.f32 1.0, %v1938
        %v1940 = vrcp.pop %v1851
        %v1941 = vmul.f32 1.0, %v1940
        %v1942 = vrcp.pop %v1852
        %v1943 = vmul.f32 1.0, %v1942
        %v1944 = vrcp.pop %v1853
        %v1945 = vmul.f32 1.0, %v1944
        %v1946 = vrcp.pop %v1854
        %v1947 = vmul.f32 1.0, %v1946
        %v1948 = vrcp.pop %v1855
        %v1949 = vmul.f32 1.0, %v1948
        %v1950 = vrcp.pop %v1856
        %v1951 = vmul.f32 1.0, %v1950
        %v1952 = vrcp.pop %v1857
        %v1953 = vmul.f32 1.0, %v1952
        %v1954 = vrcp.pop %v1858
        %v1955 = vmul.f32 1.0, %v1954
        %v1956 = vrcp.pop %v1859
        %v1957 = vmul.f32 1.0, %v1956
        %v1958 = vrcp.pop %v1860
        %v1959 = vmul.f32 1.0, %v1958
        %v1960 = vrcp.pop %v1861
        %v1961 = vmul.f32 1.0, %v1960
        %v1962 = vrcp.pop %v1862
        %v1963 = vmul.f32 1.0, %v1962
        %v1964 = vrcp.pop %v1863
        %v1965 = vmul.f32 1.0, %v1964
        %v1966 = vrcp.pop %v1864
        %v1967 = vmul.f32 1.0, %v1966
        %v1968 = vrcp.pop %v1865
        %v1969 = vmul.f32 1.0, %v1968
        %v1970 = vrcp.pop %v1866
        %v1971 = vmul.f32 1.0, %v1970
        %v1972 = vrcp.pop %v1867
        %v1973 = vmul.f32 1.0, %v1972
        %v1974 = vrcp.pop %v1868
        %v1975 = vmul.f32 1.0, %v1974
        %v1976 = vrcp.pop %v1869
        %v1977 = vmul.f32 1.0, %v1976
        %v1978 = vrcp.pop %v1870
        %v1979 = vmul.f32 1.0, %v1978
        %v1980 = vrcp.pop %v1871
        %v1981 = vmul.f32 1.0, %v1980
        %v1982 = vrcp.pop %v1872
        %v1983 = vmul.f32 1.0, %v1982
        %v1984 = vrcp.pop %v1873
        %v1985 = vmul.f32 1.0, %v1984
        %v1986 = vrcp.pop %v1874
        %v1987 = vmul.f32 1.0, %v1986
        %v1988 = vrcp.pop %v1875
        %v1989 = vmul.f32 1.0, %v1988
        %v1990 = vrcp.pop %v1876
        %v1991 = vmul.f32 1.0, %v1990
        %v1992 = vrcp.pop %v1877
        %v1993 = vmul.f32 1.0, %v1992
        %v1994 = vrcp.pop %v1878
        %v1995 = vmul.f32 1.0, %v1994
        %v1996 = vrcp.pop %v1879
        %v1997 = vmul.f32 1.0, %v1996
        %v1998 = vrcp.pop %v1880
        %v1999 = vmul.f32 1.0, %v1998
        %v2000 = vrcp.pop %v1881
        %v2001 = vmul.f32 1.0, %v2000
        %v2002 = vrcp.pop %v1882
        %v2003 = vmul.f32 1.0, %v2002
        %v2004 = vrcp.pop %v1883
        %v2005 = vmul.f32 1.0, %v2004
        %v2006 = vrcp.pop %v1884
        %v2007 = vmul.f32 1.0, %v2006
        %v2008 = vrcp.pop %v1885
        %v2009 = vmul.f32 1.0, %v2008
        %v2010 = vrcp.pop %v1886
        %v2011 = vmul.f32 1.0, %v2010
        %v2012 = vrcp.pop %v1887
        %v2013 = vmul.f32 1.0, %v2012
        %v2014 = vrcp.pop %v1888
        %v2015 = vmul.f32 1.0, %v2014
        %v2016 = vrcp.pop %v1889
        %v2017 = vmul.f32 1.0, %v2016
        %2018 = vst [vmem:[%s342] sm:$0xff] %v1891
        %2019 = vst [vmem:[%s342 + $0x8] sm:$0xff] %v1893
        %2020 = vst [vmem:[%s342 + $0x10] sm:$0xff] %v1895
        %2021 = vst [vmem:[%s342 + $0x18] sm:$0xff] %v1897
        %2022 = vst [vmem:[%s342 + $0x20] sm:$0xff] %v1899
        %2023 = vst [vmem:[%s342 + $0x28] sm:$0xff] %v1901
        %2024 = vst [vmem:[%s342 + $0x30] sm:$0xff] %v1903
        %2025 = vst [vmem:[%s342 + $0x38] sm:$0xff] %v1905
        %2026 = vst [vmem:[%s342 + $0x40] sm:$0xff] %v1907
        %2027 = vst [vmem:[%s342 + $0x48] sm:$0xff] %v1909
        %2028 = vst [vmem:[%s342 + $0x50] sm:$0xff] %v1911
        %2029 = vst [vmem:[%s342 + $0x58] sm:$0xff] %v1913
        %2030 = vst [vmem:[%s342 + $0x60] sm:$0xff] %v1915
        %2031 = vst [vmem:[%s342 + $0x68] sm:$0xff] %v1917
        %2032 = vst [vmem:[%s342 + $0x70] sm:$0xff] %v1919
        %2033 = vst [vmem:[%s342 + $0x78] sm:$0xff] %v1921
        %2034 = vst [vmem:[%s342 + $0x80] sm:$0xff] %v1923
        %2035 = vst [vmem:[%s342 + $0x88] sm:$0xff] %v1925
        %2036 = vst [vmem:[%s342 + $0x90] sm:$0xff] %v1927
        %2037 = vst [vmem:[%s342 + $0x98] sm:$0xff] %v1929
        %2038 = vst [vmem:[%s342 + $0xa0] sm:$0xff] %v1931
        %2039 = vst [vmem:[%s342 + $0xa8] sm:$0xff] %v1933
        %2040 = vst [vmem:[%s342 + $0xb0] sm:$0xff] %v1935
        %2041 = vst [vmem:[%s342 + $0xb8] sm:$0xff] %v1937
        %2042 = vst [vmem:[%s342 + $0xc0] sm:$0xff] %v1939
        %2043 = vst [vmem:[%s342 + $0xc8] sm:$0xff] %v1941
        %2044 = vst [vmem:[%s342 + $0xd0] sm:$0xff] %v1943
        %2045 = vst [vmem:[%s342 + $0xd8] sm:$0xff] %v1945
        %2046 = vst [vmem:[%s342 + $0xe0] sm:$0xff] %v1947
        %2047 = vst [vmem:[%s342 + $0xe8] sm:$0xff] %v1949
        %2048 = vst [vmem:[%s342 + $0xf0] sm:$0xff] %v1951
        %2049 = vst [vmem:[%s342 + $0xf8] sm:$0xff] %v1953
        %2050 = vst [vmem:[%s342 + $0x100] sm:$0xf] %v1955
        %2051 = vst [vmem:[%s342 + $0x108] sm:$0xf] %v1957
        %2052 = vst [vmem:[%s342 + $0x110] sm:$0xf] %v1959
        %2053 = vst [vmem:[%s342 + $0x118] sm:$0xf] %v1961
        %2054 = vst [vmem:[%s342 + $0x120] sm:$0xf] %v1963
        %2055 = vst [vmem:[%s342 + $0x128] sm:$0xf] %v1965
        %2056 = vst [vmem:[%s342 + $0x130] sm:$0xf] %v1967
        %2057 = vst [vmem:[%s342 + $0x138] sm:$0xf] %v1969
        %2058 = vst [vmem:[%s342 + $0x140] sm:$0xf] %v1971
        %2059 = vst [vmem:[%s342 + $0x148] sm:$0xf] %v1973
        %2060 = vst [vmem:[%s342 + $0x150] sm:$0xf] %v1975
        %2061 = vst [vmem:[%s342 + $0x158] sm:$0xf] %v1977
        %2062 = vst [vmem:[%s342 + $0x160] sm:$0xf] %v1979
        %2063 = vst [vmem:[%s342 + $0x168] sm:$0xf] %v1981
        %2064 = vst [vmem:[%s342 + $0x170] sm:$0xf] %v1983
        %2065 = vst [vmem:[%s342 + $0x178] sm:$0xf] %v1985
        %2066 = vst [vmem:[%s342 + $0x180] sm:$0xf] %v1987
        %2067 = vst [vmem:[%s342 + $0x188] sm:$0xf] %v1989
        %2068 = vst [vmem:[%s342 + $0x190] sm:$0xf] %v1991
        %2069 = vst [vmem:[%s342 + $0x198] sm:$0xf] %v1993
        %2070 = vst [vmem:[%s342 + $0x1a0] sm:$0xf] %v1995
        %2071 = vst [vmem:[%s342 + $0x1a8] sm:$0xf] %v1997
        %2072 = vst [vmem:[%s342 + $0x1b0] sm:$0xf] %v1999
        %2073 = vst [vmem:[%s342 + $0x1b8] sm:$0xf] %v2001
        %2074 = vst [vmem:[%s342 + $0x1c0] sm:$0xf] %v2003
        %2075 = vst [vmem:[%s342 + $0x1c8] sm:$0xf] %v2005
        %2076 = vst [vmem:[%s342 + $0x1d0] sm:$0xf] %v2007
        %2077 = vst [vmem:[%s342 + $0x1d8] sm:$0xf] %v2009
        %2078 = vst [vmem:[%s342 + $0x1e0] sm:$0xf] %v2011
        %2079 = vst [vmem:[%s342 + $0x1e8] sm:$0xf] %v2013
        %2080 = vst [vmem:[%s342 + $0x1f0] sm:$0xf] %v2015
        %2081 = vst [vmem:[%s342 + $0x1f8] sm:$0xf] %v2017
        %s2082 = sand.u32 %s90, 1
        %s2083 = sand.u32 %s90, 1
        %s2084 = smul.addr %s2083, 512
        %s2085 = scalar_lea.vmem [#allocation3], %s2084
        // Predicated region
        $region56: #{model_forward.17} parent=50 // pred_check
          %p2086 = pneg %p100
        $region57: #{model_forward.17} parent=50 // pred_check_branch
          %2088 = sbr.rel (%p2086) target = $region59
        $region58: #{model_forward.17} parent=50 // pred_region
          %s2089 = smul.u32 32, %s14
          %s2090 = smul.addr %s2089, 8
          %s2091 = scalar_lea.vmem %s3, %s2090
          // Predicated region
          $region60: #{model_forward.17} parent=58 // pred_check
            _
          $region61: #{model_forward.17} parent=58 // pred_check_branch
            %2093 = sbr.rel (0) target = $region63
          $region62: #{model_forward.17} parent=58 // pred_region
            // Predicated region
            $region64: #{model_forward.17} parent=62 // pred_check
              _
            $region65: #{model_forward.17} parent=62 // pred_check_branch
              %2095 = sbr.rel (0) target = $region67
            $region66: #{model_forward.17} parent=62 // pred_region
              loop: start=0, step=1, limit=1
              $region68: #{model_forward.17} parent=66 // loop_pre_header
                _
              $region69: #{model_forward.17} parent=66 // loop_header
                %s2097 = sphi 0, %s2101
                %p2098 = scmp.ge.s32.totalorder %s2097, 1
                %s2102 = sphi %s2085, %s2085
                %s2103 = sphi %s2091, %s2091
              $region70: #{model_forward.17} parent=66 // loop_header_branch
                %2100 = sbr.rel (%p2098) target = $region74
              $region71: #{model_forward.17} parent=66 // loop_body
                %v2104 = vld [vmem:[%s2102] sm:$0xff]
                %2105 = vst [vmem:[%s2103] sm:$0xff] %v2104
                %v2106 = vld [vmem:[%s2102 + $0x8] sm:$0xff]
                %2107 = vst [vmem:[%s2103 + $0x8] sm:$0xff] %v2106
                %v2108 = vld [vmem:[%s2102 + $0x10] sm:$0xff]
                %2109 = vst [vmem:[%s2103 + $0x10] sm:$0xff] %v2108
                %v2110 = vld [vmem:[%s2102 + $0x18] sm:$0xff]
                %2111 = vst [vmem:[%s2103 + $0x18] sm:$0xff] %v2110
                %v2112 = vld [vmem:[%s2102 + $0x20] sm:$0xff]
                %2113 = vst [vmem:[%s2103 + $0x20] sm:$0xff] %v2112
                %v2114 = vld [vmem:[%s2102 + $0x28] sm:$0xff]
                %2115 = vst [vmem:[%s2103 + $0x28] sm:$0xff] %v2114
                %v2116 = vld [vmem:[%s2102 + $0x30] sm:$0xff]
                %2117 = vst [vmem:[%s2103 + $0x30] sm:$0xff] %v2116
                %v2118 = vld [vmem:[%s2102 + $0x38] sm:$0xff]
                %2119 = vst [vmem:[%s2103 + $0x38] sm:$0xff] %v2118
                %v2120 = vld [vmem:[%s2102 + $0x40] sm:$0xff]
                %2121 = vst [vmem:[%s2103 + $0x40] sm:$0xff] %v2120
                %v2122 = vld [vmem:[%s2102 + $0x48] sm:$0xff]
                %2123 = vst [vmem:[%s2103 + $0x48] sm:$0xff] %v2122
                %v2124 = vld [vmem:[%s2102 + $0x50] sm:$0xff]
                %2125 = vst [vmem:[%s2103 + $0x50] sm:$0xff] %v2124
                %v2126 = vld [vmem:[%s2102 + $0x58] sm:$0xff]
                %2127 = vst [vmem:[%s2103 + $0x58] sm:$0xff] %v2126
                %v2128 = vld [vmem:[%s2102 + $0x60] sm:$0xff]
                %2129 = vst [vmem:[%s2103 + $0x60] sm:$0xff] %v2128
                %v2130 = vld [vmem:[%s2102 + $0x68] sm:$0xff]
                %2131 = vst [vmem:[%s2103 + $0x68] sm:$0xff] %v2130
                %v2132 = vld [vmem:[%s2102 + $0x70] sm:$0xff]
                %2133 = vst [vmem:[%s2103 + $0x70] sm:$0xff] %v2132
                %v2134 = vld [vmem:[%s2102 + $0x78] sm:$0xff]
                %2135 = vst [vmem:[%s2103 + $0x78] sm:$0xff] %v2134
                %v2136 = vld [vmem:[%s2102 + $0x80] sm:$0xff]
                %2137 = vst [vmem:[%s2103 + $0x80] sm:$0xff] %v2136
                %v2138 = vld [vmem:[%s2102 + $0x88] sm:$0xff]
                %2139 = vst [vmem:[%s2103 + $0x88] sm:$0xff] %v2138
                %v2140 = vld [vmem:[%s2102 + $0x90] sm:$0xff]
                %2141 = vst [vmem:[%s2103 + $0x90] sm:$0xff] %v2140
                %v2142 = vld [vmem:[%s2102 + $0x98] sm:$0xff]
                %2143 = vst [vmem:[%s2103 + $0x98] sm:$0xff] %v2142
                %v2144 = vld [vmem:[%s2102 + $0xa0] sm:$0xff]
                %2145 = vst [vmem:[%s2103 + $0xa0] sm:$0xff] %v2144
                %v2146 = vld [vmem:[%s2102 + $0xa8] sm:$0xff]
                %2147 = vst [vmem:[%s2103 + $0xa8] sm:$0xff] %v2146
                %v2148 = vld [vmem:[%s2102 + $0xb0] sm:$0xff]
                %2149 = vst [vmem:[%s2103 + $0xb0] sm:$0xff] %v2148
                %v2150 = vld [vmem:[%s2102 + $0xb8] sm:$0xff]
                %2151 = vst [vmem:[%s2103 + $0xb8] sm:$0xff] %v2150
                %v2152 = vld [vmem:[%s2102 + $0xc0] sm:$0xff]
                %2153 = vst [vmem:[%s2103 + $0xc0] sm:$0xff] %v2152
                %v2154 = vld [vmem:[%s2102 + $0xc8] sm:$0xff]
                %2155 = vst [vmem:[%s2103 + $0xc8] sm:$0xff] %v2154
                %v2156 = vld [vmem:[%s2102 + $0xd0] sm:$0xff]
                %2157 = vst [vmem:[%s2103 + $0xd0] sm:$0xff] %v2156
                %v2158 = vld [vmem:[%s2102 + $0xd8] sm:$0xff]
                %2159 = vst [vmem:[%s2103 + $0xd8] sm:$0xff] %v2158
                %v2160 = vld [vmem:[%s2102 + $0xe0] sm:$0xff]
                %2161 = vst [vmem:[%s2103 + $0xe0] sm:$0xff] %v2160
                %v2162 = vld [vmem:[%s2102 + $0xe8] sm:$0xff]
                %2163 = vst [vmem:[%s2103 + $0xe8] sm:$0xff] %v2162
                %v2164 = vld [vmem:[%s2102 + $0xf0] sm:$0xff]
                %2165 = vst [vmem:[%s2103 + $0xf0] sm:$0xff] %v2164
                %v2166 = vld [vmem:[%s2102 + $0xf8] sm:$0xff]
                %2167 = vst [vmem:[%s2103 + $0xf8] sm:$0xff] %v2166
                %v2168 = vld [vmem:[%s2102 + $0x100] sm:$0xff]
                %2169 = vst [vmem:[%s2103 + $0x200] sm:$0xff] %v2168
                %v2170 = vld [vmem:[%s2102 + $0x108] sm:$0xff]
                %2171 = vst [vmem:[%s2103 + $0x208] sm:$0xff] %v2170
                %v2172 = vld [vmem:[%s2102 + $0x110] sm:$0xff]
                %2173 = vst [vmem:[%s2103 + $0x210] sm:$0xff] %v2172
                %v2174 = vld [vmem:[%s2102 + $0x118] sm:$0xff]
                %2175 = vst [vmem:[%s2103 + $0x218] sm:$0xff] %v2174
                %v2176 = vld [vmem:[%s2102 + $0x120] sm:$0xff]
                %2177 = vst [vmem:[%s2103 + $0x220] sm:$0xff] %v2176
                %v2178 = vld [vmem:[%s2102 + $0x128] sm:$0xff]
                %2179 = vst [vmem:[%s2103 + $0x228] sm:$0xff] %v2178
                %v2180 = vld [vmem:[%s2102 + $0x130] sm:$0xff]
                %2181 = vst [vmem:[%s2103 + $0x230] sm:$0xff] %v2180
                %v2182 = vld [vmem:[%s2102 + $0x138] sm:$0xff]
                %2183 = vst [vmem:[%s2103 + $0x238] sm:$0xff] %v2182
                %v2184 = vld [vmem:[%s2102 + $0x140] sm:$0xff]
                %2185 = vst [vmem:[%s2103 + $0x240] sm:$0xff] %v2184
                %v2186 = vld [vmem:[%s2102 + $0x148] sm:$0xff]
                %2187 = vst [vmem:[%s2103 + $0x248] sm:$0xff] %v2186
                %v2188 = vld [vmem:[%s2102 + $0x150] sm:$0xff]
                %2189 = vst [vmem:[%s2103 + $0x250] sm:$0xff] %v2188
                %v2190 = vld [vmem:[%s2102 + $0x158] sm:$0xff]
                %2191 = vst [vmem:[%s2103 + $0x258] sm:$0xff] %v2190
                %v2192 = vld [vmem:[%s2102 + $0x160] sm:$0xff]
                %2193 = vst [vmem:[%s2103 + $0x260] sm:$0xff] %v2192
                %v2194 = vld [vmem:[%s2102 + $0x168] sm:$0xff]
                %2195 = vst [vmem:[%s2103 + $0x268] sm:$0xff] %v2194
                %v2196 = vld [vmem:[%s2102 + $0x170] sm:$0xff]
                %2197 = vst [vmem:[%s2103 + $0x270] sm:$0xff] %v2196
                %v2198 = vld [vmem:[%s2102 + $0x178] sm:$0xff]
                %2199 = vst [vmem:[%s2103 + $0x278] sm:$0xff] %v2198
                %v2200 = vld [vmem:[%s2102 + $0x180] sm:$0xff]
                %2201 = vst [vmem:[%s2103 + $0x280] sm:$0xff] %v2200
                %v2202 = vld [vmem:[%s2102 + $0x188] sm:$0xff]
                %2203 = vst [vmem:[%s2103 + $0x288] sm:$0xff] %v2202
                %v2204 = vld [vmem:[%s2102 + $0x190] sm:$0xff]
                %2205 = vst [vmem:[%s2103 + $0x290] sm:$0xff] %v2204
                %v2206 = vld [vmem:[%s2102 + $0x198] sm:$0xff]
                %2207 = vst [vmem:[%s2103 + $0x298] sm:$0xff] %v2206
                %v2208 = vld [vmem:[%s2102 + $0x1a0] sm:$0xff]
                %2209 = vst [vmem:[%s2103 + $0x2a0] sm:$0xff] %v2208
                %v2210 = vld [vmem:[%s2102 + $0x1a8] sm:$0xff]
                %2211 = vst [vmem:[%s2103 + $0x2a8] sm:$0xff] %v2210
                %v2212 = vld [vmem:[%s2102 + $0x1b0] sm:$0xff]
                %2213 = vst [vmem:[%s2103 + $0x2b0] sm:$0xff] %v2212
                %v2214 = vld [vmem:[%s2102 + $0x1b8] sm:$0xff]
                %2215 = vst [vmem:[%s2103 + $0x2b8] sm:$0xff] %v2214
                %v2216 = vld [vmem:[%s2102 + $0x1c0] sm:$0xff]
                %2217 = vst [vmem:[%s2103 + $0x2c0] sm:$0xff] %v2216
                %v2218 = vld [vmem:[%s2102 + $0x1c8] sm:$0xff]
                %2219 = vst [vmem:[%s2103 + $0x2c8] sm:$0xff] %v2218
                %v2220 = vld [vmem:[%s2102 + $0x1d0] sm:$0xff]
                %2221 = vst [vmem:[%s2103 + $0x2d0] sm:$0xff] %v2220
                %v2222 = vld [vmem:[%s2102 + $0x1d8] sm:$0xff]
                %2223 = vst [vmem:[%s2103 + $0x2d8] sm:$0xff] %v2222
                %v2224 = vld [vmem:[%s2102 + $0x1e0] sm:$0xff]
                %2225 = vst [vmem:[%s2103 + $0x2e0] sm:$0xff] %v2224
                %v2226 = vld [vmem:[%s2102 + $0x1e8] sm:$0xff]
                %2227 = vst [vmem:[%s2103 + $0x2e8] sm:$0xff] %v2226
                %v2228 = vld [vmem:[%s2102 + $0x1f0] sm:$0xff]
                %2229 = vst [vmem:[%s2103 + $0x2f0] sm:$0xff] %v2228
                %v2230 = vld [vmem:[%s2102 + $0x1f8] sm:$0xff]
                %2231 = vst [vmem:[%s2103 + $0x2f8] sm:$0xff] %v2230
              $region72: #{model_forward.17} parent=66 // loop_footer
                %s2101 = sadd.s32 1, %s2097
              $region73: #{model_forward.17} parent=66 // loop_footer_branch
                %2096 = sbr.rel target = $region69
              $region74: #{model_forward.17} parent=66 // loop_exit
                _
            $region67: #{model_forward.17} parent=62 // pred_fallthru
              _
            // Predicated region
            $region75: #{model_forward.17} parent=62 // pred_check
              _
            $region76: #{model_forward.17} parent=62 // pred_check_branch
              %2233 = sbr.rel target = $region78
            $region77: #{model_forward.17} parent=62 // pred_region
              _
            $region78: #{model_forward.17} parent=62 // pred_fallthru
              _
          $region63: #{model_forward.17} parent=58 // pred_fallthru
            _
          %2234 = vnop
        $region59: #{model_forward.17} parent=50 // pred_fallthru
          _
      $region51: #{model_forward.17} parent=5 // pred_fallthru
        _
      %p2235 = scmp.le.s32.totalorder 2, %s9
      // Predicated region
      $region79: #{model_forward.17} parent=5 // pred_check
        %p2236 = pneg %p2235
      $region80: #{model_forward.17} parent=5 // pred_check_branch
        %2238 = sbr.rel (%p2236) target = $region82
      $region81: #{model_forward.17} parent=5 // pred_region
        %s2239 = ssub.s32 %s9, 2
        // Predicated region
        $region83: #{model_forward.17} parent=81 // pred_check
          %p2240 = pneg %p106
        $region84: #{model_forward.17} parent=81 // pred_check_branch
          %2242 = sbr.rel (%p2240) target = $region86
        $region85: #{model_forward.17} parent=81 // pred_region
          %s2243 = sand.u32 %s91, 1
          %s2244 = sand.u32 %s91, 1
          %s2245 = smul.addr %s2244, 512
          %s2246 = scalar_lea.vmem [#allocation3], %s2245
        $region86: #{model_forward.17} parent=81 // pred_fallthru
          _
      $region82: #{model_forward.17} parent=5 // pred_fallthru
        _
    $region6: #{model_forward.17} parent=1 // loop_footer
      %s13 = sadd.s32 1, %s9
    $region7: #{model_forward.17} parent=1 // loop_footer_branch
      %8 = sbr.rel target = $region3
    $region8: #{model_forward.17} parent=1 // loop_exit
      _

</llo_original>
